<compile_context>
chip_gen: v7x
topology: tpu7x:2x2x1
jax: 0.10.0
libtpu: 0.0.40
codegen_flags: <defaults>
</compile_context>

<pallas_src>
import jax
import jax.numpy as jnp
from jax.experimental import pallas as pl
from jax.experimental.pallas import tpu as pltpu

MATMUL_DTYPE = jnp.float32      # set to jnp.bfloat16 on v6e/v7x for 2x MXU + half DMA
LANES = 128                     # pad output channels to this for lane-dense stores
VMEM_LIMIT = 32 * 1024 * 1024   # explicit scoped-VMEM request (safe on v5e/v6e/v7x)
CONV_TM_CAP = 256               # pooled-position tile (rows of the conv GEMM)
MLP_TB_CAP = 256                # batch tile for the fused MLP


def _pick_tile(m, cap):
    """Largest multiple-of-8 divisor of m that is <= cap (else m itself)."""
    if m <= cap:
        return m
    t = cap - (cap % 8)
    while t >= 8:
        if m % t == 0:
            return t
        t -= 8
    return m


# ----------------------------- Pallas kernels -----------------------------

def conv_pool_kernel(p_ref, w_ref, b_ref, o_ref):
    """Fused im2col-conv + bias + ReLU + 2x2 max-pool for one tile of pooled rows.

    p_ref: (4, TM, K)   pool-window members x pooled positions x 9*Cin
    w_ref: (K, 128)     zero-padded to 128 output lanes (lane-dense stores)
    b_ref: (1, 128)
    o_ref: (TM, 128)
    """
    four, tm, k = p_ref.shape
    # One long MXU matmul over all 4 pool members (better fill/drain
    # amortization than 4 short dots).  Leading-dim collapse is sublane-aligned
    # (tm is a multiple of 8), so the reshape is layout-free.
    p = p_ref[...].reshape(four * tm, k)
    y = jnp.dot(p, w_ref[...], preferred_element_type=jnp.float32)   # (4*TM, 128)
    # Max over the 2x2 pool window, then bias + ReLU applied ONCE (hoisted:
    # relu(max(.)+b) == max over members of relu(.+b) since b is shared).
    m01 = jnp.maximum(y[0 * tm:1 * tm], y[1 * tm:2 * tm])
    m23 = jnp.maximum(y[2 * tm:3 * tm], y[3 * tm:4 * tm])
    pooled = jnp.maximum(m01, m23)
    o_ref[...] = jnp.maximum(pooled + b_ref[...], 0.0).astype(o_ref.dtype)


def mlp_kernel(x_ref, w1_ref, b1_ref, w2_ref, b2_ref, o_ref):
    """Fused fc1 + bias + ReLU + fc2 + bias; hidden activation stays in VMEM."""
    h = jnp.dot(x_ref[...], w1_ref[...], preferred_element_type=jnp.float32)
    h = jnp.maximum(h + b1_ref[...], 0.0)
    y = jnp.dot(h.astype(w2_ref.dtype), w2_ref[...],
                preferred_element_type=jnp.float32)
    o_ref[...] = (y + b2_ref[...]).astype(o_ref.dtype)


# ------------------------------ call wrappers ------------------------------

def conv_pool(patches, w, b):
    _, m, k = patches.shape
    cp = w.shape[1]
    tm = _pick_tile(m, CONV_TM_CAP)
    return pl.pallas_call(
        conv_pool_kernel,
        out_shape=jax.ShapeDtypeStruct((m, cp), jnp.float32),
        grid=(m // tm,),
        in_specs=[
            pl.BlockSpec((4, tm, k), lambda i: (0, i, 0)),   # streamed patch tiles
            pl.BlockSpec((k, cp), lambda i: (0, 0)),         # resident weight
            pl.BlockSpec((1, cp), lambda i: (0, 0)),         # resident bias
        ],
        out_specs=pl.BlockSpec((tm, cp), lambda i: (i, 0)),
        compiler_params=pltpu.CompilerParams(
            dimension_semantics=("parallel",),
            vmem_limit_bytes=VMEM_LIMIT),
    )(patches.astype(MATMUL_DTYPE), w, b)


def mlp(x, w1, b1, w2, b2):
    m, k = x.shape
    h = w1.shape[1]
    n = w2.shape[1]
    tb = _pick_tile(m, MLP_TB_CAP)
    return pl.pallas_call(
        mlp_kernel,
        out_shape=jax.ShapeDtypeStruct((m, n), jnp.float32),
        grid=(m // tb,),
        in_specs=[
            pl.BlockSpec((tb, k), lambda i: (i, 0)),
            pl.BlockSpec((k, h), lambda i: (0, 0)),
            pl.BlockSpec((1, h), lambda i: (0, 0)),
            pl.BlockSpec((h, n), lambda i: (0, 0)),
            pl.BlockSpec((1, n), lambda i: (0, 0)),
        ],
        out_specs=pl.BlockSpec((tb, n), lambda i: (i, 0)),
        compiler_params=pltpu.CompilerParams(
            dimension_semantics=("parallel",),
            vmem_limit_bytes=VMEM_LIMIT),
    )(x.astype(MATMUL_DTYPE), w1, b1, w2, b2)


# --------------------------------- glue ------------------------------------

def im2col_pool(x_nhwc):
    """(N,H,W,C) -> (4, N*(H//2)*(W//2), 9*C) patches grouped by 2x2-pool member."""
    n, h, w, c = x_nhwc.shape
    xp = jnp.pad(x_nhwc, ((0, 0), (1, 1), (1, 1), (0, 0)))
    cols = []
    for kh in range(3):
        for kw in range(3):
            cols.append(xp[:, kh:kh + h, kw:kw + w, :])
    patches = jnp.concatenate(cols, axis=-1)              # (N,H,W,9C)
    hp, wp = h // 2, w // 2
    patches = patches.reshape(n, hp, 2, wp, 2, 9 * c)
    patches = patches.transpose(2, 4, 0, 1, 3, 5)         # (2,2,N,Hp,Wp,9C)
    return patches.reshape(4, n * hp * wp, 9 * c)
    # TODO(synk): build patches in-kernel from a VMEM-resident NHWC tile
    # (9 shifted slices) to avoid the 9x im2col materialization in HBM at
    # large batch sizes.


def prepare_params(params):
    """One-time repack of PyTorch-layout weights for the Pallas kernels."""
    def conv_weight(w_oihw):
        cout, cin, kh, kw = w_oihw.shape
        w = jnp.transpose(w_oihw, (2, 3, 1, 0)).reshape(kh * kw * cin, cout)
        return jnp.pad(w, ((0, 0), (0, LANES - cout))).astype(MATMUL_DTYPE)

    def pad_bias(b):
        return jnp.pad(b.reshape(1, -1),
                       ((0, 0), (0, LANES - b.shape[0]))).astype(jnp.float32)

    # fc1: PyTorch flattens NCHW (c,h,w); repack columns to NHWC-flatten order
    # (h,w,c) and zero-pad the channel axis 64 -> 128 so the lane-dense,
    # 128-channel conv2 output feeds fc1 without any slice or transpose.
    w_fc1 = params["fc1_w"].reshape(128, 64, 8, 8)            # (out, c, h, w)
    w_fc1 = jnp.transpose(w_fc1, (2, 3, 1, 0))                # (h, w, c, out)
    w_fc1 = jnp.pad(w_fc1, ((0, 0), (0, 0), (0, LANES - 64), (0, 0)))
    w_fc1 = w_fc1.reshape(8 * 8 * LANES, 128).astype(MATMUL_DTYPE)

    w_fc2 = jnp.pad(params["fc2_w"].T,
                    ((0, 0), (0, LANES - 10))).astype(MATMUL_DTYPE)

    return {
        "conv1_w": conv_weight(params["conv1_w"]),            # (27, 128)
        "conv1_b": pad_bias(params["conv1_b"]),               # (1, 128)
        "conv2_w": conv_weight(params["conv2_w"]),            # (288, 128)
        "conv2_b": pad_bias(params["conv2_b"]),
        "fc1_w": w_fc1,                                       # (8192, 128)
        "fc1_b": params["fc1_b"].reshape(1, 128).astype(jnp.float32),
        "fc2_w": w_fc2,                                       # (128, 128)
        "fc2_b": pad_bias(params["fc2_b"]),
    }


def simple_cnn_forward(x_nchw, prepared):
    n = x_nchw.shape[0]
    x = jnp.transpose(x_nchw, (0, 2, 3, 1))                   # NCHW -> NHWC (input only)

    # conv1 + relu + maxpool2   (output lane-padded to 128 channels; 32 valid)
    p1 = im2col_pool(x)                                       # (4, N*16*16, 27)
    y1 = conv_pool(p1, prepared["conv1_w"], prepared["conv1_b"])
    y1 = y1[:, :32].reshape(n, 16, 16, 32)                    # drop zero pad lanes

    # conv2 + relu + maxpool2   (keep 128-channel padded output; pad lanes are 0)
    p2 = im2col_pool(y1)                                      # (4, N*8*8, 288)
    y2 = conv_pool(p2, prepared["conv2_w"], prepared["conv2_b"])   # (N*64, 128)

    # NHWC flatten is a free reshape; fc1's weight was pre-permuted/padded to
    # match, so no activation transpose and no channel slice is needed here.
    flat = y2.reshape(n, 8 * 8 * LANES)                       # (N, 8192)

    out = mlp(flat, prepared["fc1_w"], prepared["fc1_b"],
              prepared["fc2_w"], prepared["fc2_b"])           # (N, 128)
    return out[:, :10]


def reference_forward(x_nchw, params):
    """Pure-JAX reference (matches PyTorch semantics)."""
    x = jnp.transpose(x_nchw, (0, 2, 3, 1))

    def conv_relu_pool(x, w_oihw, b):
        w_hwio = jnp.transpose(w_oihw, (2, 3, 1, 0))
        y = jax.lax.conv_general_dilated(
            x, w_hwio, (1, 1), ((1, 1), (1, 1)),
            dimension_numbers=("NHWC", "HWIO", "NHWC")) + b
        y = jax.nn.relu(y)
        return jax.lax.reduce_window(y, -jnp.inf, jax.lax.max,
                                     (1, 2, 2, 1), (1, 2, 2, 1), "VALID")

    y = conv_relu_pool(x, params["conv1_w"], params["conv1_b"])
    y = conv_relu_pool(y, params["conv2_w"], params["conv2_b"])
    flat = jnp.transpose(y, (0, 3, 1, 2)).reshape(x.shape[0], -1)
    h = jax.nn.relu(flat @ params["fc1_w"].T + params["fc1_b"])
    return h @ params["fc2_w"].T + params["fc2_b"]


# --------------------------------- main -------------------------------------

if __name__ == "__main__":
    key = jax.random.PRNGKey(0)
    ks = jax.random.split(key, 9)
    f32 = jnp.float32

    params = {
        # PyTorch layouts: Conv2d weight (Cout, Cin, KH, KW); Linear weight (out, in)
        "conv1_w": jax.random.normal(ks[0], (32, 3, 3, 3), f32) * 0.1,
        "conv1_b": jax.random.normal(ks[1], (32,), f32) * 0.1,
        "conv2_w": jax.random.normal(ks[2], (64, 32, 3, 3), f32) * 0.05,
        "conv2_b": jax.random.normal(ks[3], (64,), f32) * 0.05,
        "fc1_w": jax.random.normal(ks[4], (128, 64 * 8 * 8), f32) * 0.02,
        "fc1_b": jax.random.normal(ks[5], (128,), f32) * 0.02,
        "fc2_w": jax.random.normal(ks[6], (10, 128), f32) * 0.05,
        "fc2_b": jax.random.normal(ks[7], (10,), f32) * 0.05,
    }

    # Input: NCHW, batch=2, 3 channels, 32x32 (fc1 expects 64*8*8 after 2 pools).
    x = jax.random.normal(ks[8], (2, 3, 32, 32), f32)

    prepared = prepare_params(params)
    out = jax.block_until_ready(jax.jit(simple_cnn_forward)(x, prepared))
    ref = jax.block_until_ready(reference_forward(x, params))

    assert out.shape == (2, 10), out.shape
    assert jnp.allclose(out, ref, rtol=1e-3, atol=1e-3), (out, ref)
    print("KERNEL_OK")
</pallas_src>

<mosaic_0001>
module attributes {stable_mosaic.version = 11 : i64} {
  func.func @conv_pool_kernel(%arg0: i32, %arg1: memref<4x256x27xf32, #tpu.memory_space<vmem>>, %arg2: memref<27x128xf32, #tpu.memory_space<vmem>>, %arg3: memref<1x128xf32, #tpu.memory_space<vmem>>, %arg4: memref<256x128xf32, #tpu.memory_space<vmem>>) attributes {dimension_semantics = [#tpu.dimension_semantics<parallel>], iteration_bounds = array<i64: 2>, scalar_prefetch = 0 : i64, scratch_operands = 0 : i64, tpu.core_type = #tpu.core_type<tc>, window_params = [{transform_indices = @transform_0, window_bounds = array<i64: 4, 256, 27>}, {pipeline_mode = #tpu.pipeline_mode<synchronous>, transform_indices = @transform_1, window_bounds = array<i64: 27, 128>}, {pipeline_mode = #tpu.pipeline_mode<synchronous>, transform_indices = @transform_2, window_bounds = array<i64: 1, 128>}, {transform_indices = @transform_3, window_bounds = array<i64: 256, 128>}]} {
    %c0 = arith.constant 0 : index
    %c0_0 = arith.constant 0 : index
    %c0_1 = arith.constant 0 : index
    %0 = vector.load %arg1[%c0, %c0_0, %c0_1] : memref<4x256x27xf32, #tpu.memory_space<vmem>>, vector<4x256x27xf32>
    %1 = vector.shape_cast %0 : vector<4x256x27xf32> to vector<1024x27xf32>
    %c0_2 = arith.constant 0 : index
    %c0_3 = arith.constant 0 : index
    %2 = vector.load %arg2[%c0_2, %c0_3] : memref<27x128xf32, #tpu.memory_space<vmem>>, vector<27x128xf32>
    %cst = arith.constant dense<0.000000e+00> : vector<1024x128xf32>
    %3 = tpu.matmul %1, %2, %cst {dimension_numbers = #tpu.dot_dimension_numbers<[1], [0], [0], [1], [0, 0, 1, 1], [], []>} : vector<1024x27xf32>, vector<27x128xf32>, vector<1024x128xf32> -> vector<1024x128xf32>
    %4 = vector.extract_strided_slice %3 {offsets = [0, 0], sizes = [256, 128], strides = [1, 1]} : vector<1024x128xf32> to vector<256x128xf32>
    %5 = vector.extract_strided_slice %3 {offsets = [256, 0], sizes = [256, 128], strides = [1, 1]} : vector<1024x128xf32> to vector<256x128xf32>
    %6 = arith.maximumf %4, %5 : vector<256x128xf32>
    %7 = vector.extract_strided_slice %3 {offsets = [512, 0], sizes = [256, 128], strides = [1, 1]} : vector<1024x128xf32> to vector<256x128xf32>
    %8 = vector.extract_strided_slice %3 {offsets = [768, 0], sizes = [256, 128], strides = [1, 1]} : vector<1024x128xf32> to vector<256x128xf32>
    %9 = arith.maximumf %7, %8 : vector<256x128xf32>
    %10 = arith.maximumf %6, %9 : vector<256x128xf32>
    %c0_4 = arith.constant 0 : index
    %c0_5 = arith.constant 0 : index
    %11 = vector.load %arg3[%c0_4, %c0_5] : memref<1x128xf32, #tpu.memory_space<vmem>>, vector<1x128xf32>
    %12 = vector.broadcast %11 : vector<1x128xf32> to vector<256x128xf32>
    %13 = arith.addf %10, %12 : vector<256x128xf32>
    %cst_6 = arith.constant 0.000000e+00 : f32
    %14 = vector.broadcast %cst_6 : f32 to vector<256x128xf32>
    %15 = arith.maximumf %13, %14 : vector<256x128xf32>
    %c0_7 = arith.constant 0 : index
    %c0_8 = arith.constant 0 : index
    %16 = vector.load %arg4[%c0_7, %c0_8] : memref<256x128xf32, #tpu.memory_space<vmem>>, vector<256x128xf32>
    tpu.vector_store %arg4[%c0_7, %c0_8], %15 {strides = array<i32>} : memref<256x128xf32, #tpu.memory_space<vmem>>, vector<256x128xf32>,
    return
  }
  func.func @transform_0(%arg0: i32) -> (i32, i32, i32) {
    %c0_i32 = arith.constant 0 : i32
    %c0_i32_0 = arith.constant 0 : i32
    %c0_i32_1 = arith.constant 0 : i32
    return %c0_i32, %arg0, %c0_i32_0 : i32, i32, i32
  }
  func.func @transform_1(%arg0: i32) -> (i32, i32) {
    %c0_i32 = arith.constant 0 : i32
    %c0_i32_0 = arith.constant 0 : i32
    %c0_i32_1 = arith.constant 0 : i32
    return %c0_i32, %c0_i32_0 : i32, i32
  }
  func.func @transform_2(%arg0: i32) -> (i32, i32) {
    %c0_i32 = arith.constant 0 : i32
    %c0_i32_0 = arith.constant 0 : i32
    %c0_i32_1 = arith.constant 0 : i32
    return %c0_i32, %c0_i32_0 : i32, i32
  }
  func.func @transform_3(%arg0: i32) -> (i32, i32) {
    %c0_i32 = arith.constant 0 : i32
    %c0_i32_0 = arith.constant 0 : i32
    return %arg0, %c0_i32 : i32, i32
  }
}

module attributes {stable_mosaic.version = 11 : i64} {
  func.func @conv_pool_kernel(%arg0: i32, %arg1: memref<4x128x288xf32, #tpu.memory_space<vmem>>, %arg2: memref<288x128xf32, #tpu.memory_space<vmem>>, %arg3: memref<1x128xf32, #tpu.memory_space<vmem>>, %arg4: memref<128x128xf32, #tpu.memory_space<vmem>>) attributes {dimension_semantics = [#tpu.dimension_semantics<parallel>], iteration_bounds = array<i64: 1>, scalar_prefetch = 0 : i64, scratch_operands = 0 : i64, tpu.core_type = #tpu.core_type<tc>, window_params = [{transform_indices = @transform_0, window_bounds = array<i64: 4, 128, 288>}, {pipeline_mode = #tpu.pipeline_mode<synchronous>, transform_indices = @transform_1, window_bounds = array<i64: 288, 128>}, {pipeline_mode = #tpu.pipeline_mode<synchronous>, transform_indices = @transform_2, window_bounds = array<i64: 1, 128>}, {transform_indices = @transform_3, window_bounds = array<i64: 128, 128>}]} {
    %c0 = arith.constant 0 : index
    %c0_0 = arith.constant 0 : index
    %c0_1 = arith.constant 0 : index
    %0 = vector.load %arg1[%c0, %c0_0, %c0_1] : memref<4x128x288xf32, #tpu.memory_space<vmem>>, vector<4x128x288xf32>
    %1 = vector.shape_cast %0 : vector<4x128x288xf32> to vector<512x288xf32>
    %c0_2 = arith.constant 0 : index
    %c0_3 = arith.constant 0 : index
    %2 = vector.load %arg2[%c0_2, %c0_3] : memref<288x128xf32, #tpu.memory_space<vmem>>, vector<288x128xf32>
    %cst = arith.constant dense<0.000000e+00> : vector<512x128xf32>
    %3 = tpu.matmul %1, %2, %cst {dimension_numbers = #tpu.dot_dimension_numbers<[1], [0], [0], [1], [0, 0, 1, 1], [], []>} : vector<512x288xf32>, vector<288x128xf32>, vector<512x128xf32> -> vector<512x128xf32>
    %4 = vector.extract_strided_slice %3 {offsets = [0, 0], sizes = [128, 128], strides = [1, 1]} : vector<512x128xf32> to vector<128x128xf32>
    %5 = vector.extract_strided_slice %3 {offsets = [128, 0], sizes = [128, 128], strides = [1, 1]} : vector<512x128xf32> to vector<128x128xf32>
    %6 = arith.maximumf %4, %5 : vector<128x128xf32>
    %7 = vector.extract_strided_slice %3 {offsets = [256, 0], sizes = [128, 128], strides = [1, 1]} : vector<512x128xf32> to vector<128x128xf32>
    %8 = vector.extract_strided_slice %3 {offsets = [384, 0], sizes = [128, 128], strides = [1, 1]} : vector<512x128xf32> to vector<128x128xf32>
    %9 = arith.maximumf %7, %8 : vector<128x128xf32>
    %10 = arith.maximumf %6, %9 : vector<128x128xf32>
    %c0_4 = arith.constant 0 : index
    %c0_5 = arith.constant 0 : index
    %11 = vector.load %arg3[%c0_4, %c0_5] : memref<1x128xf32, #tpu.memory_space<vmem>>, vector<1x128xf32>
    %12 = vector.broadcast %11 : vector<1x128xf32> to vector<128x128xf32>
    %13 = arith.addf %10, %12 : vector<128x128xf32>
    %cst_6 = arith.constant 0.000000e+00 : f32
    %14 = vector.broadcast %cst_6 : f32 to vector<128x128xf32>
    %15 = arith.maximumf %13, %14 : vector<128x128xf32>
    %c0_7 = arith.constant 0 : index
    %c0_8 = arith.constant 0 : index
    %16 = vector.load %arg4[%c0_7, %c0_8] : memref<128x128xf32, #tpu.memory_space<vmem>>, vector<128x128xf32>
    tpu.vector_store %arg4[%c0_7, %c0_8], %15 {strides = array<i32>} : memref<128x128xf32, #tpu.memory_space<vmem>>, vector<128x128xf32>,
    return
  }
  func.func @transform_0(%arg0: i32) -> (i32, i32, i32) {
    %c0_i32 = arith.constant 0 : i32
    %c0_i32_0 = arith.constant 0 : i32
    %c0_i32_1 = arith.constant 0 : i32
    return %c0_i32, %arg0, %c0_i32_0 : i32, i32, i32
  }
  func.func @transform_1(%arg0: i32) -> (i32, i32) {
    %c0_i32 = arith.constant 0 : i32
    %c0_i32_0 = arith.constant 0 : i32
    %c0_i32_1 = arith.constant 0 : i32
    return %c0_i32, %c0_i32_0 : i32, i32
  }
  func.func @transform_2(%arg0: i32) -> (i32, i32) {
    %c0_i32 = arith.constant 0 : i32
    %c0_i32_0 = arith.constant 0 : i32
    %c0_i32_1 = arith.constant 0 : i32
    return %c0_i32, %c0_i32_0 : i32, i32
  }
  func.func @transform_3(%arg0: i32) -> (i32, i32) {
    %c0_i32 = arith.constant 0 : i32
    %c0_i32_0 = arith.constant 0 : i32
    return %arg0, %c0_i32 : i32, i32
  }
}

module attributes {stable_mosaic.version = 11 : i64} {
  func.func @mlp_kernel(%arg0: i32, %arg1: memref<2x8192xf32, #tpu.memory_space<vmem>>, %arg2: memref<8192x128xf32, #tpu.memory_space<vmem>>, %arg3: memref<1x128xf32, #tpu.memory_space<vmem>>, %arg4: memref<128x128xf32, #tpu.memory_space<vmem>>, %arg5: memref<1x128xf32, #tpu.memory_space<vmem>>, %arg6: memref<2x128xf32, #tpu.memory_space<vmem>>) attributes {dimension_semantics = [#tpu.dimension_semantics<parallel>], iteration_bounds = array<i64: 1>, scalar_prefetch = 0 : i64, scratch_operands = 0 : i64, tpu.core_type = #tpu.core_type<tc>, window_params = [{transform_indices = @transform_0, window_bounds = array<i64: 2, 8192>}, {pipeline_mode = #tpu.pipeline_mode<synchronous>, transform_indices = @transform_1, window_bounds = array<i64: 8192, 128>}, {pipeline_mode = #tpu.pipeline_mode<synchronous>, transform_indices = @transform_2, window_bounds = array<i64: 1, 128>}, {pipeline_mode = #tpu.pipeline_mode<synchronous>, transform_indices = @transform_3, window_bounds = array<i64: 128, 128>}, {pipeline_mode = #tpu.pipeline_mode<synchronous>, transform_indices = @transform_4, window_bounds = array<i64: 1, 128>}, {transform_indices = @transform_5, window_bounds = array<i64: 2, 128>}]} {
    %c0 = arith.constant 0 : index
    %c0_0 = arith.constant 0 : index
    %0 = vector.load %arg1[%c0, %c0_0] : memref<2x8192xf32, #tpu.memory_space<vmem>>, vector<2x8192xf32>
    %c0_1 = arith.constant 0 : index
    %c0_2 = arith.constant 0 : index
    %1 = vector.load %arg2[%c0_1, %c0_2] : memref<8192x128xf32, #tpu.memory_space<vmem>>, vector<8192x128xf32>
    %cst = arith.constant dense<0.000000e+00> : vector<2x128xf32>
    %2 = tpu.matmul %0, %1, %cst {dimension_numbers = #tpu.dot_dimension_numbers<[1], [0], [0], [1], [0, 0, 1, 1], [], []>} : vector<2x8192xf32>, vector<8192x128xf32>, vector<2x128xf32> -> vector<2x128xf32>
    %c0_3 = arith.constant 0 : index
    %c0_4 = arith.constant 0 : index
    %3 = vector.load %arg3[%c0_3, %c0_4] : memref<1x128xf32, #tpu.memory_space<vmem>>, vector<1x128xf32>
    %4 = vector.broadcast %3 : vector<1x128xf32> to vector<2x128xf32>
    %5 = arith.addf %2, %4 : vector<2x128xf32>
    %cst_5 = arith.constant 0.000000e+00 : f32
    %6 = vector.broadcast %cst_5 : f32 to vector<2x128xf32>
    %7 = arith.maximumf %5, %6 : vector<2x128xf32>
    %c0_6 = arith.constant 0 : index
    %c0_7 = arith.constant 0 : index
    %8 = vector.load %arg4[%c0_6, %c0_7] : memref<128x128xf32, #tpu.memory_space<vmem>>, vector<128x128xf32>
    %cst_8 = arith.constant dense<0.000000e+00> : vector<2x128xf32>
    %9 = tpu.matmul %7, %8, %cst_8 {dimension_numbers = #tpu.dot_dimension_numbers<[1], [0], [0], [1], [0, 0, 1, 1], [], []>} : vector<2x128xf32>, vector<128x128xf32>, vector<2x128xf32> -> vector<2x128xf32>
    %c0_9 = arith.constant 0 : index
    %c0_10 = arith.constant 0 : index
    %10 = vector.load %arg5[%c0_9, %c0_10] : memref<1x128xf32, #tpu.memory_space<vmem>>, vector<1x128xf32>
    %11 = vector.broadcast %10 : vector<1x128xf32> to vector<2x128xf32>
    %12 = arith.addf %9, %11 : vector<2x128xf32>
    %c0_11 = arith.constant 0 : index
    %c0_12 = arith.constant 0 : index
    %13 = vector.load %arg6[%c0_11, %c0_12] : memref<2x128xf32, #tpu.memory_space<vmem>>, vector<2x128xf32>
    tpu.vector_store %arg6[%c0_11, %c0_12], %12 {strides = array<i32>} : memref<2x128xf32, #tpu.memory_space<vmem>>, vector<2x128xf32>,
    return
  }
  func.func @transform_0(%arg0: i32) -> (i32, i32) {
    %c0_i32 = arith.constant 0 : i32
    %c0_i32_0 = arith.constant 0 : i32
    return %arg0, %c0_i32 : i32, i32
  }
  func.func @transform_1(%arg0: i32) -> (i32, i32) {
    %c0_i32 = arith.constant 0 : i32
    %c0_i32_0 = arith.constant 0 : i32
    %c0_i32_1 = arith.constant 0 : i32
    return %c0_i32, %c0_i32_0 : i32, i32
  }
  func.func @transform_2(%arg0: i32) -> (i32, i32) {
    %c0_i32 = arith.constant 0 : i32
    %c0_i32_0 = arith.constant 0 : i32
    %c0_i32_1 = arith.constant 0 : i32
    return %c0_i32, %c0_i32_0 : i32, i32
  }
  func.func @transform_3(%arg0: i32) -> (i32, i32) {
    %c0_i32 = arith.constant 0 : i32
    %c0_i32_0 = arith.constant 0 : i32
    %c0_i32_1 = arith.constant 0 : i32
    return %c0_i32, %c0_i32_0 : i32, i32
  }
  func.func @transform_4(%arg0: i32) -> (i32, i32) {
    %c0_i32 = arith.constant 0 : i32
    %c0_i32_0 = arith.constant 0 : i32
    %c0_i32_1 = arith.constant 0 : i32
    return %c0_i32, %c0_i32_0 : i32, i32
  }
  func.func @transform_5(%arg0: i32) -> (i32, i32) {
    %c0_i32 = arith.constant 0 : i32
    %c0_i32_0 = arith.constant 0 : i32
    return %arg0, %c0_i32 : i32, i32
  }
}

</mosaic_0001>

<llo_original>
// kernel: simple_cnn_forward.3
$region0: #{simple_cnn_forward.3}
  #allocation0 [shape = 'u32[]', space=smem, size = 0x4, offset = 0x4, fixed_abs, tag = 'smem constant byte address 0x4 - core index']
  #allocation1 [shape = 'u32[144,128]{1,0:T(1,128)}', space=vmem, size = 0x12000, scoped, tag = 'internal scratch']
  %s0 = inlined_call_operand.vmem [shape: f32[4,512,27], index: 0, kind: input, shape index: {}]
  %s1 = inlined_call_operand.vmem [shape: f32[27,128], index: 1, kind: input, shape index: {}]
  %s2 = inlined_call_operand.vmem [shape: f32[1,128], index: 2, kind: input, shape index: {}]
  %s3 = inlined_call_operand.vmem [shape: f32[512,128], index: 3, kind: output, shape index: {}]
  %s4 = sld [smem:[#allocation0]]
  $region83: #{simple_cnn_forward.3} parent=0
    _
  %s6 = ssub.s32 1, %s4
  %s7 = scalar_select 0, %s6, %s4
  $region1: #{simple_cnn_forward.3} parent=0
    #allocation2 [shape = 'u8[1048576]{0}', space=vmem, size = 0x100000, scoped, tag = 'input window, operand 0']
    loop: start=0, step=1, limit=4
    $region2: #{simple_cnn_forward.3} parent=1 // loop_pre_header
      _
    $region3: #{simple_cnn_forward.3} parent=1 // loop_header
      %s9 = sphi 0, %s13
      %p10 = scmp.ge.s32.totalorder %s9, 4
      %s19 = sphi 0, %s21
      %s22 = sphi 0, %s19
      %s23 = sphi 0, %s22
      %s39 = sphi 0, %s23
      %s43 = sphi 0, %s43
      %s45 = sphi 0, %s43
      %s46 = sphi 0, %s45
      %s60 = sphi 0, %s46
      %s64 = sphi 0, %s64
      %s66 = sphi 0, %s64
      %s67 = sphi 0, %s66
      %s81 = sphi 0, %s67
      %s87 = sphi 0, %s89
      %s90 = sphi 0, %s87
      %s91 = sphi 0, %s90
      %s107 = sphi 0, %s91
    $region4: #{simple_cnn_forward.3} parent=1 // loop_header_branch
      %12 = sbr.rel (%p10) target = $region8
    $region5: #{simple_cnn_forward.3} parent=1 // loop_body
      %s14 = ssub.s32 %s9, 1
      %s15 = ssub.s32 %s9, 2
      %s16 = sadd.s32 %s9, 1
      %s17 = ssub.s32 %s9, %s16
      %p18 = scmp.eq.s32.totalorder %s17, 0
      %s20 = sadd.s32 %s19, 1
      %s21 = scalar_select %p18, %s19, %s20
      %p24 = pneg %p18
      %p25 = scmp.eq.s32.totalorder %s9, 1
      %p26 = por %p24, %p25
      %p27 = scmp.ne.s32.totalorder %s19, %s22
      %p28 = scmp.eq.s32.totalorder %s9, 0
      %p29 = por %p27, %p28
      %p30 = scmp.ne.s32.totalorder %s19, %s22
      %p31 = scmp.eq.s32.totalorder %s14, 1
      %p32 = por %p30, %p31
      %p33 = scmp.ne.s32.totalorder %s22, %s23
      %p34 = scmp.eq.s32.totalorder %s14, 0
      %p35 = por %p33, %p34
      %p36 = scmp.ne.s32.totalorder %s22, %s23
      %p37 = scmp.eq.s32.totalorder %s15, 1
      %p38 = por %p36, %p37
      %p40 = scmp.ne.s32.totalorder %s23, %s39
      %p41 = scmp.eq.s32.totalorder %s15, 0
      %p42 = por %p40, %p41
      %s44 = sadd.s32 %s43, 1
      %p47 = scmp.eq.s32.totalorder %s9, 1
      %p48 = scmp.ne.s32.totalorder %s43, %s45
      %p49 = scmp.eq.s32.totalorder %s9, 0
      %p50 = por %p48, %p49
      %p51 = scmp.ne.s32.totalorder %s43, %s45
      %p52 = scmp.eq.s32.totalorder %s14, 1
      %p53 = por %p51, %p52
      %p54 = scmp.ne.s32.totalorder %s45, %s46
      %p55 = scmp.eq.s32.totalorder %s14, 0
      %p56 = por %p54, %p55
      %p57 = scmp.ne.s32.totalorder %s45, %s46
      %p58 = scmp.eq.s32.totalorder %s15, 1
      %p59 = por %p57, %p58
      %p61 = scmp.ne.s32.totalorder %s46, %s60
      %p62 = scmp.eq.s32.totalorder %s15, 0
      %p63 = por %p61, %p62
      %s65 = sadd.s32 %s64, 1
      %p68 = scmp.eq.s32.totalorder %s9, 1
      %p69 = scmp.ne.s32.totalorder %s64, %s66
      %p70 = scmp.eq.s32.totalorder %s9, 0
      %p71 = por %p69, %p70
      %p72 = scmp.ne.s32.totalorder %s64, %s66
      %p73 = scmp.eq.s32.totalorder %s14, 1
      %p74 = por %p72, %p73
      %p75 = scmp.ne.s32.totalorder %s66, %s67
      %p76 = scmp.eq.s32.totalorder %s14, 0
      %p77 = por %p75, %p76
      %p78 = scmp.ne.s32.totalorder %s66, %s67
      %p79 = scmp.eq.s32.totalorder %s15, 1
      %p80 = por %p78, %p79
      %p82 = scmp.ne.s32.totalorder %s67, %s81
      %p83 = scmp.eq.s32.totalorder %s15, 0
      %p84 = por %p82, %p83
      %s85 = ssub.s32 %s9, %s16
      %p86 = scmp.eq.s32.totalorder %s85, 0
      %s88 = sadd.s32 %s87, 1
      %s89 = scalar_select %p86, %s87, %s88
      %p92 = pneg %p86
      %p93 = scmp.eq.s32.totalorder %s9, 1
      %p94 = por %p92, %p93
      %p95 = scmp.ne.s32.totalorder %s87, %s90
      %p96 = scmp.eq.s32.totalorder %s9, 0
      %p97 = por %p95, %p96
      %p98 = scmp.ne.s32.totalorder %s87, %s90
      %p99 = scmp.eq.s32.totalorder %s14, 1
      %p100 = por %p98, %p99
      %p101 = scmp.ne.s32.totalorder %s90, %s91
      %p102 = scmp.eq.s32.totalorder %s14, 0
      %p103 = por %p101, %p102
      %p104 = scmp.ne.s32.totalorder %s90, %s91
      %p105 = scmp.eq.s32.totalorder %s15, 1
      %p106 = por %p104, %p105
      %p108 = scmp.ne.s32.totalorder %s91, %s107
      %p109 = scmp.eq.s32.totalorder %s15, 0
      %p110 = por %p108, %p109
      %p111 = scmp.le.s32.totalorder 1, %s9
      %p112 = scmp.lt.s32.totalorder %s9, 3
      %p113 = pnand %p111, %p112
      %p114 = pneg %p113
      // Predicated region
      $region9: #{simple_cnn_forward.3} parent=5 // pred_check
        _
      $region10: #{simple_cnn_forward.3} parent=5 // pred_check_branch
        %116 = sbr.rel (%p113) target = $region12
      $region11: #{simple_cnn_forward.3} parent=5 // pred_region
        %s117 = ssub.s32 %s9, 1
        // Predicated region
        $region13: #{simple_cnn_forward.3} parent=11 // pred_check
          %p118 = pneg %p56
        $region14: #{simple_cnn_forward.3} parent=11 // pred_check_branch
          %120 = sbr.rel (%p118) target = $region16
        $region15: #{simple_cnn_forward.3} parent=11 // pred_region
          _
        $region16: #{simple_cnn_forward.3} parent=11 // pred_fallthru
          _
        // Predicated region
        $region17: #{simple_cnn_forward.3} parent=11 // pred_check
          %p121 = pneg %p77
        $region18: #{simple_cnn_forward.3} parent=11 // pred_check_branch
          %123 = sbr.rel (%p121) target = $region20
        $region19: #{simple_cnn_forward.3} parent=11 // pred_region
          _
        $region20: #{simple_cnn_forward.3} parent=11 // pred_fallthru
          _
      $region12: #{simple_cnn_forward.3} parent=5 // pred_fallthru
        _
      %p124 = scmp.lt.s32.totalorder %s9, 2
      // Predicated region
      $region21: #{simple_cnn_forward.3} parent=5 // pred_check
        %p125 = pneg %p124
      $region22: #{simple_cnn_forward.3} parent=5 // pred_check_branch
        %127 = sbr.rel (%p125) target = $region24
      $region23: #{simple_cnn_forward.3} parent=5 // pred_region
        // Predicated region
        $region25: #{simple_cnn_forward.3} parent=23 // pred_check
          %p128 = pneg %p29
        $region26: #{simple_cnn_forward.3} parent=23 // pred_check_branch
          %130 = sbr.rel (%p128) target = $region28
        $region27: #{simple_cnn_forward.3} parent=23 // pred_region
          %s131 = sand.u32 %s19, 1
          %s132 = sand.u32 %s19, 1
          %s133 = smul.addr %s132, 1024
          %s134 = scalar_lea.vmem [#allocation2], %s133
          %s135 = smul.u32 32, %s9
          %s136 = smul.addr %s135, 8
          %s137 = scalar_lea.vmem %s0, %s136
          // Predicated region
          $region29: #{simple_cnn_forward.3} parent=27 // pred_check
            _
          $region30: #{simple_cnn_forward.3} parent=27 // pred_check_branch
            %139 = sbr.rel (0) target = $region32
          $region31: #{simple_cnn_forward.3} parent=27 // pred_region
            // Predicated region
            $region33: #{simple_cnn_forward.3} parent=31 // pred_check
              _
            $region34: #{simple_cnn_forward.3} parent=31 // pred_check_branch
              %141 = sbr.rel (0) target = $region36
            $region35: #{simple_cnn_forward.3} parent=31 // pred_region
              // Predicated region
              $region48: #{simple_cnn_forward.3} parent=35 // pred_check
                _
              $region49: #{simple_cnn_forward.3} parent=35 // pred_check_branch
                %410 = sbr.rel (0) target = $region51
              $region50: #{simple_cnn_forward.3} parent=35 // pred_region
                loop: start=0, step=1, limit=1
                $region52: #{simple_cnn_forward.3} parent=50 // loop_pre_header
                  _
                $region53: #{simple_cnn_forward.3} parent=50 // loop_header
                  %s412 = sphi 0, %s416
                  %p413 = scmp.ge.s32.totalorder %s412, 1
                  %s417 = sphi %s137, %s137
                  %s418 = sphi %s134, %s134
                $region54: #{simple_cnn_forward.3} parent=50 // loop_header_branch
                  %415 = sbr.rel (%p413) target = $region58
                $region55: #{simple_cnn_forward.3} parent=50 // loop_body
                  %v419 = vld [vmem:[%s417] sm:$0xff]
                  %420 = vst [vmem:[%s418] sm:$0xff] %v419
                  %v421 = vld [vmem:[%s417 + $0x8] sm:$0xff]
                  %422 = vst [vmem:[%s418 + $0x8] sm:$0xff] %v421
                  %v423 = vld [vmem:[%s417 + $0x10] sm:$0xff]
                  %424 = vst [vmem:[%s418 + $0x10] sm:$0xff] %v423
                  %v425 = vld [vmem:[%s417 + $0x18] sm:$0xff]
                  %426 = vst [vmem:[%s418 + $0x18] sm:$0xff] %v425
                  %v427 = vld [vmem:[%s417 + $0x20] sm:$0xff]
                  %428 = vst [vmem:[%s418 + $0x20] sm:$0xff] %v427
                  %v429 = vld [vmem:[%s417 + $0x28] sm:$0xff]
                  %430 = vst [vmem:[%s418 + $0x28] sm:$0xff] %v429
                  %v431 = vld [vmem:[%s417 + $0x30] sm:$0xff]
                  %432 = vst [vmem:[%s418 + $0x30] sm:$0xff] %v431
                  %v433 = vld [vmem:[%s417 + $0x38] sm:$0xff]
                  %434 = vst [vmem:[%s418 + $0x38] sm:$0xff] %v433
                  %v435 = vld [vmem:[%s417 + $0x40] sm:$0xff]
                  %436 = vst [vmem:[%s418 + $0x40] sm:$0xff] %v435
                  %v437 = vld [vmem:[%s417 + $0x48] sm:$0xff]
                  %438 = vst [vmem:[%s418 + $0x48] sm:$0xff] %v437
                  %v439 = vld [vmem:[%s417 + $0x50] sm:$0xff]
                  %440 = vst [vmem:[%s418 + $0x50] sm:$0xff] %v439
                  %v441 = vld [vmem:[%s417 + $0x58] sm:$0xff]
                  %442 = vst [vmem:[%s418 + $0x58] sm:$0xff] %v441
                  %v443 = vld [vmem:[%s417 + $0x60] sm:$0xff]
                  %444 = vst [vmem:[%s418 + $0x60] sm:$0xff] %v443
                  %v445 = vld [vmem:[%s417 + $0x68] sm:$0xff]
                  %446 = vst [vmem:[%s418 + $0x68] sm:$0xff] %v445
                  %v447 = vld [vmem:[%s417 + $0x70] sm:$0xff]
                  %448 = vst [vmem:[%s418 + $0x70] sm:$0xff] %v447
                  %v449 = vld [vmem:[%s417 + $0x78] sm:$0xff]
                  %450 = vst [vmem:[%s418 + $0x78] sm:$0xff] %v449
                  %v451 = vld [vmem:[%s417 + $0x80] sm:$0xff]
                  %452 = vst [vmem:[%s418 + $0x80] sm:$0xff] %v451
                  %v453 = vld [vmem:[%s417 + $0x88] sm:$0xff]
                  %454 = vst [vmem:[%s418 + $0x88] sm:$0xff] %v453
                  %v455 = vld [vmem:[%s417 + $0x90] sm:$0xff]
                  %456 = vst [vmem:[%s418 + $0x90] sm:$0xff] %v455
                  %v457 = vld [vmem:[%s417 + $0x98] sm:$0xff]
                  %458 = vst [vmem:[%s418 + $0x98] sm:$0xff] %v457
                  %v459 = vld [vmem:[%s417 + $0xa0] sm:$0xff]
                  %460 = vst [vmem:[%s418 + $0xa0] sm:$0xff] %v459
                  %v461 = vld [vmem:[%s417 + $0xa8] sm:$0xff]
                  %462 = vst [vmem:[%s418 + $0xa8] sm:$0xff] %v461
                  %v463 = vld [vmem:[%s417 + $0xb0] sm:$0xff]
                  %464 = vst [vmem:[%s418 + $0xb0] sm:$0xff] %v463
                  %v465 = vld [vmem:[%s417 + $0xb8] sm:$0xff]
                  %466 = vst [vmem:[%s418 + $0xb8] sm:$0xff] %v465
                  %v467 = vld [vmem:[%s417 + $0xc0] sm:$0xff]
                  %468 = vst [vmem:[%s418 + $0xc0] sm:$0xff] %v467
                  %v469 = vld [vmem:[%s417 + $0xc8] sm:$0xff]
                  %470 = vst [vmem:[%s418 + $0xc8] sm:$0xff] %v469
                  %v471 = vld [vmem:[%s417 + $0xd0] sm:$0xff]
                  %472 = vst [vmem:[%s418 + $0xd0] sm:$0xff] %v471
                  %v473 = vld [vmem:[%s417 + $0xd8] sm:$0xff]
                  %474 = vst [vmem:[%s418 + $0xd8] sm:$0xff] %v473
                  %v475 = vld [vmem:[%s417 + $0xe0] sm:$0xff]
                  %476 = vst [vmem:[%s418 + $0xe0] sm:$0xff] %v475
                  %v477 = vld [vmem:[%s417 + $0xe8] sm:$0xff]
                  %478 = vst [vmem:[%s418 + $0xe8] sm:$0xff] %v477
                  %v479 = vld [vmem:[%s417 + $0xf0] sm:$0xff]
                  %480 = vst [vmem:[%s418 + $0xf0] sm:$0xff] %v479
                  %v481 = vld [vmem:[%s417 + $0xf8] sm:$0xff]
                  %482 = vst [vmem:[%s418 + $0xf8] sm:$0xff] %v481
                  %v483 = vld [vmem:[%s417 + $0x200] sm:$0xff]
                  %484 = vst [vmem:[%s418 + $0x100] sm:$0xff] %v483
                  %v485 = vld [vmem:[%s417 + $0x208] sm:$0xff]
                  %486 = vst [vmem:[%s418 + $0x108] sm:$0xff] %v485
                  %v487 = vld [vmem:[%s417 + $0x210] sm:$0xff]
                  %488 = vst [vmem:[%s418 + $0x110] sm:$0xff] %v487
                  %v489 = vld [vmem:[%s417 + $0x218] sm:$0xff]
                  %490 = vst [vmem:[%s418 + $0x118] sm:$0xff] %v489
                  %v491 = vld [vmem:[%s417 + $0x220] sm:$0xff]
                  %492 = vst [vmem:[%s418 + $0x120] sm:$0xff] %v491
                  %v493 = vld [vmem:[%s417 + $0x228] sm:$0xff]
                  %494 = vst [vmem:[%s418 + $0x128] sm:$0xff] %v493
                  %v495 = vld [vmem:[%s417 + $0x230] sm:$0xff]
                  %496 = vst [vmem:[%s418 + $0x130] sm:$0xff] %v495
                  %v497 = vld [vmem:[%s417 + $0x238] sm:$0xff]
                  %498 = vst [vmem:[%s418 + $0x138] sm:$0xff] %v497
                  %v499 = vld [vmem:[%s417 + $0x240] sm:$0xff]
                  %500 = vst [vmem:[%s418 + $0x140] sm:$0xff] %v499
                  %v501 = vld [vmem:[%s417 + $0x248] sm:$0xff]
                  %502 = vst [vmem:[%s418 + $0x148] sm:$0xff] %v501
                  %v503 = vld [vmem:[%s417 + $0x250] sm:$0xff]
                  %504 = vst [vmem:[%s418 + $0x150] sm:$0xff] %v503
                  %v505 = vld [vmem:[%s417 + $0x258] sm:$0xff]
                  %506 = vst [vmem:[%s418 + $0x158] sm:$0xff] %v505
                  %v507 = vld [vmem:[%s417 + $0x260] sm:$0xff]
                  %508 = vst [vmem:[%s418 + $0x160] sm:$0xff] %v507
                  %v509 = vld [vmem:[%s417 + $0x268] sm:$0xff]
                  %510 = vst [vmem:[%s418 + $0x168] sm:$0xff] %v509
                  %v511 = vld [vmem:[%s417 + $0x270] sm:$0xff]
                  %512 = vst [vmem:[%s418 + $0x170] sm:$0xff] %v511
                  %v513 = vld [vmem:[%s417 + $0x278] sm:$0xff]
                  %514 = vst [vmem:[%s418 + $0x178] sm:$0xff] %v513
                  %v515 = vld [vmem:[%s417 + $0x280] sm:$0xff]
                  %516 = vst [vmem:[%s418 + $0x180] sm:$0xff] %v515
                  %v517 = vld [vmem:[%s417 + $0x288] sm:$0xff]
                  %518 = vst [vmem:[%s418 + $0x188] sm:$0xff] %v517
                  %v519 = vld [vmem:[%s417 + $0x290] sm:$0xff]
                  %520 = vst [vmem:[%s418 + $0x190] sm:$0xff] %v519
                  %v521 = vld [vmem:[%s417 + $0x298] sm:$0xff]
                  %522 = vst [vmem:[%s418 + $0x198] sm:$0xff] %v521
                  %v523 = vld [vmem:[%s417 + $0x2a0] sm:$0xff]
                  %524 = vst [vmem:[%s418 + $0x1a0] sm:$0xff] %v523
                  %v525 = vld [vmem:[%s417 + $0x2a8] sm:$0xff]
                  %526 = vst [vmem:[%s418 + $0x1a8] sm:$0xff] %v525
                  %v527 = vld [vmem:[%s417 + $0x2b0] sm:$0xff]
                  %528 = vst [vmem:[%s418 + $0x1b0] sm:$0xff] %v527
                  %v529 = vld [vmem:[%s417 + $0x2b8] sm:$0xff]
                  %530 = vst [vmem:[%s418 + $0x1b8] sm:$0xff] %v529
                  %v531 = vld [vmem:[%s417 + $0x2c0] sm:$0xff]
                  %532 = vst [vmem:[%s418 + $0x1c0] sm:$0xff] %v531
                  %v533 = vld [vmem:[%s417 + $0x2c8] sm:$0xff]
                  %534 = vst [vmem:[%s418 + $0x1c8] sm:$0xff] %v533
                  %v535 = vld [vmem:[%s417 + $0x2d0] sm:$0xff]
                  %536 = vst [vmem:[%s418 + $0x1d0] sm:$0xff] %v535
                  %v537 = vld [vmem:[%s417 + $0x2d8] sm:$0xff]
                  %538 = vst [vmem:[%s418 + $0x1d8] sm:$0xff] %v537
                  %v539 = vld [vmem:[%s417 + $0x2e0] sm:$0xff]
                  %540 = vst [vmem:[%s418 + $0x1e0] sm:$0xff] %v539
                  %v541 = vld [vmem:[%s417 + $0x2e8] sm:$0xff]
                  %542 = vst [vmem:[%s418 + $0x1e8] sm:$0xff] %v541
                  %v543 = vld [vmem:[%s417 + $0x2f0] sm:$0xff]
                  %544 = vst [vmem:[%s418 + $0x1f0] sm:$0xff] %v543
                  %v545 = vld [vmem:[%s417 + $0x2f8] sm:$0xff]
                  %546 = vst [vmem:[%s418 + $0x1f8] sm:$0xff] %v545
                  %v547 = vld [vmem:[%s417 + $0x400] sm:$0xff]
                  %548 = vst [vmem:[%s418 + $0x200] sm:$0xff] %v547
                  %v549 = vld [vmem:[%s417 + $0x408] sm:$0xff]
                  %550 = vst [vmem:[%s418 + $0x208] sm:$0xff] %v549
                  %v551 = vld [vmem:[%s417 + $0x410] sm:$0xff]
                  %552 = vst [vmem:[%s418 + $0x210] sm:$0xff] %v551
                  %v553 = vld [vmem:[%s417 + $0x418] sm:$0xff]
                  %554 = vst [vmem:[%s418 + $0x218] sm:$0xff] %v553
                  %v555 = vld [vmem:[%s417 + $0x420] sm:$0xff]
                  %556 = vst [vmem:[%s418 + $0x220] sm:$0xff] %v555
                  %v557 = vld [vmem:[%s417 + $0x428] sm:$0xff]
                  %558 = vst [vmem:[%s418 + $0x228] sm:$0xff] %v557
                  %v559 = vld [vmem:[%s417 + $0x430] sm:$0xff]
                  %560 = vst [vmem:[%s418 + $0x230] sm:$0xff] %v559
                  %v561 = vld [vmem:[%s417 + $0x438] sm:$0xff]
                  %562 = vst [vmem:[%s418 + $0x238] sm:$0xff] %v561
                  %v563 = vld [vmem:[%s417 + $0x440] sm:$0xff]
                  %564 = vst [vmem:[%s418 + $0x240] sm:$0xff] %v563
                  %v565 = vld [vmem:[%s417 + $0x448] sm:$0xff]
                  %566 = vst [vmem:[%s418 + $0x248] sm:$0xff] %v565
                  %v567 = vld [vmem:[%s417 + $0x450] sm:$0xff]
                  %568 = vst [vmem:[%s418 + $0x250] sm:$0xff] %v567
                  %v569 = vld [vmem:[%s417 + $0x458] sm:$0xff]
                  %570 = vst [vmem:[%s418 + $0x258] sm:$0xff] %v569
                  %v571 = vld [vmem:[%s417 + $0x460] sm:$0xff]
                  %572 = vst [vmem:[%s418 + $0x260] sm:$0xff] %v571
                  %v573 = vld [vmem:[%s417 + $0x468] sm:$0xff]
                  %574 = vst [vmem:[%s418 + $0x268] sm:$0xff] %v573
                  %v575 = vld [vmem:[%s417 + $0x470] sm:$0xff]
                  %576 = vst [vmem:[%s418 + $0x270] sm:$0xff] %v575
                  %v577 = vld [vmem:[%s417 + $0x478] sm:$0xff]
                  %578 = vst [vmem:[%s418 + $0x278] sm:$0xff] %v577
                  %v579 = vld [vmem:[%s417 + $0x480] sm:$0xff]
                  %580 = vst [vmem:[%s418 + $0x280] sm:$0xff] %v579
                  %v581 = vld [vmem:[%s417 + $0x488] sm:$0xff]
                  %582 = vst [vmem:[%s418 + $0x288] sm:$0xff] %v581
                  %v583 = vld [vmem:[%s417 + $0x490] sm:$0xff]
                  %584 = vst [vmem:[%s418 + $0x290] sm:$0xff] %v583
                  %v585 = vld [vmem:[%s417 + $0x498] sm:$0xff]
                  %586 = vst [vmem:[%s418 + $0x298] sm:$0xff] %v585
                  %v587 = vld [vmem:[%s417 + $0x4a0] sm:$0xff]
                  %588 = vst [vmem:[%s418 + $0x2a0] sm:$0xff] %v587
                  %v589 = vld [vmem:[%s417 + $0x4a8] sm:$0xff]
                  %590 = vst [vmem:[%s418 + $0x2a8] sm:$0xff] %v589
                  %v591 = vld [vmem:[%s417 + $0x4b0] sm:$0xff]
                  %592 = vst [vmem:[%s418 + $0x2b0] sm:$0xff] %v591
                  %v593 = vld [vmem:[%s417 + $0x4b8] sm:$0xff]
                  %594 = vst [vmem:[%s418 + $0x2b8] sm:$0xff] %v593
                  %v595 = vld [vmem:[%s417 + $0x4c0] sm:$0xff]
                  %596 = vst [vmem:[%s418 + $0x2c0] sm:$0xff] %v595
                  %v597 = vld [vmem:[%s417 + $0x4c8] sm:$0xff]
                  %598 = vst [vmem:[%s418 + $0x2c8] sm:$0xff] %v597
                  %v599 = vld [vmem:[%s417 + $0x4d0] sm:$0xff]
                  %600 = vst [vmem:[%s418 + $0x2d0] sm:$0xff] %v599
                  %v601 = vld [vmem:[%s417 + $0x4d8] sm:$0xff]
                  %602 = vst [vmem:[%s418 + $0x2d8] sm:$0xff] %v601
                  %v603 = vld [vmem:[%s417 + $0x4e0] sm:$0xff]
                  %604 = vst [vmem:[%s418 + $0x2e0] sm:$0xff] %v603
                  %v605 = vld [vmem:[%s417 + $0x4e8] sm:$0xff]
                  %606 = vst [vmem:[%s418 + $0x2e8] sm:$0xff] %v605
                  %v607 = vld [vmem:[%s417 + $0x4f0] sm:$0xff]
                  %608 = vst [vmem:[%s418 + $0x2f0] sm:$0xff] %v607
                  %v609 = vld [vmem:[%s417 + $0x4f8] sm:$0xff]
                  %610 = vst [vmem:[%s418 + $0x2f8] sm:$0xff] %v609
                  %v611 = vld [vmem:[%s417 + $0x600] sm:$0xff]
                  %612 = vst [vmem:[%s418 + $0x300] sm:$0xff] %v611
                  %v613 = vld [vmem:[%s417 + $0x608] sm:$0xff]
                  %614 = vst [vmem:[%s418 + $0x308] sm:$0xff] %v613
                  %v615 = vld [vmem:[%s417 + $0x610] sm:$0xff]
                  %616 = vst [vmem:[%s418 + $0x310] sm:$0xff] %v615
                  %v617 = vld [vmem:[%s417 + $0x618] sm:$0xff]
                  %618 = vst [vmem:[%s418 + $0x318] sm:$0xff] %v617
                  %v619 = vld [vmem:[%s417 + $0x620] sm:$0xff]
                  %620 = vst [vmem:[%s418 + $0x320] sm:$0xff] %v619
                  %v621 = vld [vmem:[%s417 + $0x628] sm:$0xff]
                  %622 = vst [vmem:[%s418 + $0x328] sm:$0xff] %v621
                  %v623 = vld [vmem:[%s417 + $0x630] sm:$0xff]
                  %624 = vst [vmem:[%s418 + $0x330] sm:$0xff] %v623
                  %v625 = vld [vmem:[%s417 + $0x638] sm:$0xff]
                  %626 = vst [vmem:[%s418 + $0x338] sm:$0xff] %v625
                  %v627 = vld [vmem:[%s417 + $0x640] sm:$0xff]
                  %628 = vst [vmem:[%s418 + $0x340] sm:$0xff] %v627
                  %v629 = vld [vmem:[%s417 + $0x648] sm:$0xff]
                  %630 = vst [vmem:[%s418 + $0x348] sm:$0xff] %v629
                  %v631 = vld [vmem:[%s417 + $0x650] sm:$0xff]
                  %632 = vst [vmem:[%s418 + $0x350] sm:$0xff] %v631
                  %v633 = vld [vmem:[%s417 + $0x658] sm:$0xff]
                  %634 = vst [vmem:[%s418 + $0x358] sm:$0xff] %v633
                  %v635 = vld [vmem:[%s417 + $0x660] sm:$0xff]
                  %636 = vst [vmem:[%s418 + $0x360] sm:$0xff] %v635
                  %v637 = vld [vmem:[%s417 + $0x668] sm:$0xff]
                  %638 = vst [vmem:[%s418 + $0x368] sm:$0xff] %v637
                  %v639 = vld [vmem:[%s417 + $0x670] sm:$0xff]
                  %640 = vst [vmem:[%s418 + $0x370] sm:$0xff] %v639
                  %v641 = vld [vmem:[%s417 + $0x678] sm:$0xff]
                  %642 = vst [vmem:[%s418 + $0x378] sm:$0xff] %v641
                  %v643 = vld [vmem:[%s417 + $0x680] sm:$0xff]
                  %644 = vst [vmem:[%s418 + $0x380] sm:$0xff] %v643
                  %v645 = vld [vmem:[%s417 + $0x688] sm:$0xff]
                  %646 = vst [vmem:[%s418 + $0x388] sm:$0xff] %v645
                  %v647 = vld [vmem:[%s417 + $0x690] sm:$0xff]
                  %648 = vst [vmem:[%s418 + $0x390] sm:$0xff] %v647
                  %v649 = vld [vmem:[%s417 + $0x698] sm:$0xff]
                  %650 = vst [vmem:[%s418 + $0x398] sm:$0xff] %v649
                  %v651 = vld [vmem:[%s417 + $0x6a0] sm:$0xff]
                  %652 = vst [vmem:[%s418 + $0x3a0] sm:$0xff] %v651
                  %v653 = vld [vmem:[%s417 + $0x6a8] sm:$0xff]
                  %654 = vst [vmem:[%s418 + $0x3a8] sm:$0xff] %v653
                  %v655 = vld [vmem:[%s417 + $0x6b0] sm:$0xff]
                  %656 = vst [vmem:[%s418 + $0x3b0] sm:$0xff] %v655
                  %v657 = vld [vmem:[%s417 + $0x6b8] sm:$0xff]
                  %658 = vst [vmem:[%s418 + $0x3b8] sm:$0xff] %v657
                  %v659 = vld [vmem:[%s417 + $0x6c0] sm:$0xff]
                  %660 = vst [vmem:[%s418 + $0x3c0] sm:$0xff] %v659
                  %v661 = vld [vmem:[%s417 + $0x6c8] sm:$0xff]
                  %662 = vst [vmem:[%s418 + $0x3c8] sm:$0xff] %v661
                  %v663 = vld [vmem:[%s417 + $0x6d0] sm:$0xff]
                  %664 = vst [vmem:[%s418 + $0x3d0] sm:$0xff] %v663
                  %v665 = vld [vmem:[%s417 + $0x6d8] sm:$0xff]
                  %666 = vst [vmem:[%s418 + $0x3d8] sm:$0xff] %v665
                  %v667 = vld [vmem:[%s417 + $0x6e0] sm:$0xff]
                  %668 = vst [vmem:[%s418 + $0x3e0] sm:$0xff] %v667
                  %v669 = vld [vmem:[%s417 + $0x6e8] sm:$0xff]
                  %670 = vst [vmem:[%s418 + $0x3e8] sm:$0xff] %v669
                  %v671 = vld [vmem:[%s417 + $0x6f0] sm:$0xff]
                  %672 = vst [vmem:[%s418 + $0x3f0] sm:$0xff] %v671
                  %v673 = vld [vmem:[%s417 + $0x6f8] sm:$0xff]
                  %674 = vst [vmem:[%s418 + $0x3f8] sm:$0xff] %v673
                $region56: #{simple_cnn_forward.3} parent=50 // loop_footer
                  %s416 = sadd.s32 1, %s412
                $region57: #{simple_cnn_forward.3} parent=50 // loop_footer_branch
                  %411 = sbr.rel target = $region53
                $region58: #{simple_cnn_forward.3} parent=50 // loop_exit
                  _
              $region51: #{simple_cnn_forward.3} parent=35 // pred_fallthru
                _
              // Predicated region
              $region59: #{simple_cnn_forward.3} parent=35 // pred_check
                _
              $region60: #{simple_cnn_forward.3} parent=35 // pred_check_branch
                %676 = sbr.rel target = $region62
              $region61: #{simple_cnn_forward.3} parent=35 // pred_region
                _
              $region62: #{simple_cnn_forward.3} parent=35 // pred_fallthru
                _
            $region36: #{simple_cnn_forward.3} parent=31 // pred_fallthru
              _
            // Predicated region
            $region37: #{simple_cnn_forward.3} parent=31 // pred_check
              _
            $region38: #{simple_cnn_forward.3} parent=31 // pred_check_branch
              %143 = sbr.rel target = $region40
            $region39: #{simple_cnn_forward.3} parent=31 // pred_region
              loop: start=0, step=1, limit=1
              $region41: #{simple_cnn_forward.3} parent=39 // loop_pre_header
                _
              $region42: #{simple_cnn_forward.3} parent=39 // loop_header
                %s146 = sphi 0, %s150
                %p147 = scmp.ge.s32.totalorder %s146, 1
                %s151 = sphi %s137, %s137
                %s152 = sphi %s134, %s134
              $region43: #{simple_cnn_forward.3} parent=39 // loop_header_branch
                %149 = sbr.rel (%p147) target = $region47
              $region44: #{simple_cnn_forward.3} parent=39 // loop_body
                %v153 = vld [vmem:[%s151] sm:$0xff]
                %154 = vst [vmem:[%s152] sm:$0xff] %v153
                %v155 = vld [vmem:[%s151 + $0x8] sm:$0xff]
                %156 = vst [vmem:[%s152 + $0x8] sm:$0xff] %v155
                %v157 = vld [vmem:[%s151 + $0x10] sm:$0xff]
                %158 = vst [vmem:[%s152 + $0x10] sm:$0xff] %v157
                %v159 = vld [vmem:[%s151 + $0x18] sm:$0xff]
                %160 = vst [vmem:[%s152 + $0x18] sm:$0xff] %v159
                %v161 = vld [vmem:[%s151 + $0x20] sm:$0xff]
                %162 = vst [vmem:[%s152 + $0x20] sm:$0xff] %v161
                %v163 = vld [vmem:[%s151 + $0x28] sm:$0xff]
                %164 = vst [vmem:[%s152 + $0x28] sm:$0xff] %v163
                %v165 = vld [vmem:[%s151 + $0x30] sm:$0xff]
                %166 = vst [vmem:[%s152 + $0x30] sm:$0xff] %v165
                %v167 = vld [vmem:[%s151 + $0x38] sm:$0xff]
                %168 = vst [vmem:[%s152 + $0x38] sm:$0xff] %v167
                %v169 = vld [vmem:[%s151 + $0x40] sm:$0xff]
                %170 = vst [vmem:[%s152 + $0x40] sm:$0xff] %v169
                %v171 = vld [vmem:[%s151 + $0x48] sm:$0xff]
                %172 = vst [vmem:[%s152 + $0x48] sm:$0xff] %v171
                %v173 = vld [vmem:[%s151 + $0x50] sm:$0xff]
                %174 = vst [vmem:[%s152 + $0x50] sm:$0xff] %v173
                %v175 = vld [vmem:[%s151 + $0x58] sm:$0xff]
                %176 = vst [vmem:[%s152 + $0x58] sm:$0xff] %v175
                %v177 = vld [vmem:[%s151 + $0x60] sm:$0xff]
                %178 = vst [vmem:[%s152 + $0x60] sm:$0xff] %v177
                %v179 = vld [vmem:[%s151 + $0x68] sm:$0xff]
                %180 = vst [vmem:[%s152 + $0x68] sm:$0xff] %v179
                %v181 = vld [vmem:[%s151 + $0x70] sm:$0xff]
                %182 = vst [vmem:[%s152 + $0x70] sm:$0xff] %v181
                %v183 = vld [vmem:[%s151 + $0x78] sm:$0xff]
                %184 = vst [vmem:[%s152 + $0x78] sm:$0xff] %v183
                %v185 = vld [vmem:[%s151 + $0x80] sm:$0xff]
                %186 = vst [vmem:[%s152 + $0x80] sm:$0xff] %v185
                %v187 = vld [vmem:[%s151 + $0x88] sm:$0xff]
                %188 = vst [vmem:[%s152 + $0x88] sm:$0xff] %v187
                %v189 = vld [vmem:[%s151 + $0x90] sm:$0xff]
                %190 = vst [vmem:[%s152 + $0x90] sm:$0xff] %v189
                %v191 = vld [vmem:[%s151 + $0x98] sm:$0xff]
                %192 = vst [vmem:[%s152 + $0x98] sm:$0xff] %v191
                %v193 = vld [vmem:[%s151 + $0xa0] sm:$0xff]
                %194 = vst [vmem:[%s152 + $0xa0] sm:$0xff] %v193
                %v195 = vld [vmem:[%s151 + $0xa8] sm:$0xff]
                %196 = vst [vmem:[%s152 + $0xa8] sm:$0xff] %v195
                %v197 = vld [vmem:[%s151 + $0xb0] sm:$0xff]
                %198 = vst [vmem:[%s152 + $0xb0] sm:$0xff] %v197
                %v199 = vld [vmem:[%s151 + $0xb8] sm:$0xff]
                %200 = vst [vmem:[%s152 + $0xb8] sm:$0xff] %v199
                %v201 = vld [vmem:[%s151 + $0xc0] sm:$0xff]
                %202 = vst [vmem:[%s152 + $0xc0] sm:$0xff] %v201
                %v203 = vld [vmem:[%s151 + $0xc8] sm:$0xff]
                %204 = vst [vmem:[%s152 + $0xc8] sm:$0xff] %v203
                %v205 = vld [vmem:[%s151 + $0xd0] sm:$0xff]
                %206 = vst [vmem:[%s152 + $0xd0] sm:$0xff] %v205
                %v207 = vld [vmem:[%s151 + $0xd8] sm:$0xff]
                %208 = vst [vmem:[%s152 + $0xd8] sm:$0xff] %v207
                %v209 = vld [vmem:[%s151 + $0xe0] sm:$0xff]
                %210 = vst [vmem:[%s152 + $0xe0] sm:$0xff] %v209
                %v211 = vld [vmem:[%s151 + $0xe8] sm:$0xff]
                %212 = vst [vmem:[%s152 + $0xe8] sm:$0xff] %v211
                %v213 = vld [vmem:[%s151 + $0xf0] sm:$0xff]
                %214 = vst [vmem:[%s152 + $0xf0] sm:$0xff] %v213
                %v215 = vld [vmem:[%s151 + $0xf8] sm:$0xff]
                %216 = vst [vmem:[%s152 + $0xf8] sm:$0xff] %v215
                %v217 = vld [vmem:[%s151 + $0x200] sm:$0xff]
                %218 = vst [vmem:[%s152 + $0x100] sm:$0xff] %v217
                %v219 = vld [vmem:[%s151 + $0x208] sm:$0xff]
                %220 = vst [vmem:[%s152 + $0x108] sm:$0xff] %v219
                %v221 = vld [vmem:[%s151 + $0x210] sm:$0xff]
                %222 = vst [vmem:[%s152 + $0x110] sm:$0xff] %v221
                %v223 = vld [vmem:[%s151 + $0x218] sm:$0xff]
                %224 = vst [vmem:[%s152 + $0x118] sm:$0xff] %v223
                %v225 = vld [vmem:[%s151 + $0x220] sm:$0xff]
                %226 = vst [vmem:[%s152 + $0x120] sm:$0xff] %v225
                %v227 = vld [vmem:[%s151 + $0x228] sm:$0xff]
                %228 = vst [vmem:[%s152 + $0x128] sm:$0xff] %v227
                %v229 = vld [vmem:[%s151 + $0x230] sm:$0xff]
                %230 = vst [vmem:[%s152 + $0x130] sm:$0xff] %v229
                %v231 = vld [vmem:[%s151 + $0x238] sm:$0xff]
                %232 = vst [vmem:[%s152 + $0x138] sm:$0xff] %v231
                %v233 = vld [vmem:[%s151 + $0x240] sm:$0xff]
                %234 = vst [vmem:[%s152 + $0x140] sm:$0xff] %v233
                %v235 = vld [vmem:[%s151 + $0x248] sm:$0xff]
                %236 = vst [vmem:[%s152 + $0x148] sm:$0xff] %v235
                %v237 = vld [vmem:[%s151 + $0x250] sm:$0xff]
                %238 = vst [vmem:[%s152 + $0x150] sm:$0xff] %v237
                %v239 = vld [vmem:[%s151 + $0x258] sm:$0xff]
                %240 = vst [vmem:[%s152 + $0x158] sm:$0xff] %v239
                %v241 = vld [vmem:[%s151 + $0x260] sm:$0xff]
                %242 = vst [vmem:[%s152 + $0x160] sm:$0xff] %v241
                %v243 = vld [vmem:[%s151 + $0x268] sm:$0xff]
                %244 = vst [vmem:[%s152 + $0x168] sm:$0xff] %v243
                %v245 = vld [vmem:[%s151 + $0x270] sm:$0xff]
                %246 = vst [vmem:[%s152 + $0x170] sm:$0xff] %v245
                %v247 = vld [vmem:[%s151 + $0x278] sm:$0xff]
                %248 = vst [vmem:[%s152 + $0x178] sm:$0xff] %v247
                %v249 = vld [vmem:[%s151 + $0x280] sm:$0xff]
                %250 = vst [vmem:[%s152 + $0x180] sm:$0xff] %v249
                %v251 = vld [vmem:[%s151 + $0x288] sm:$0xff]
                %252 = vst [vmem:[%s152 + $0x188] sm:$0xff] %v251
                %v253 = vld [vmem:[%s151 + $0x290] sm:$0xff]
                %254 = vst [vmem:[%s152 + $0x190] sm:$0xff] %v253
                %v255 = vld [vmem:[%s151 + $0x298] sm:$0xff]
                %256 = vst [vmem:[%s152 + $0x198] sm:$0xff] %v255
                %v257 = vld [vmem:[%s151 + $0x2a0] sm:$0xff]
                %258 = vst [vmem:[%s152 + $0x1a0] sm:$0xff] %v257
                %v259 = vld [vmem:[%s151 + $0x2a8] sm:$0xff]
                %260 = vst [vmem:[%s152 + $0x1a8] sm:$0xff] %v259
                %v261 = vld [vmem:[%s151 + $0x2b0] sm:$0xff]
                %262 = vst [vmem:[%s152 + $0x1b0] sm:$0xff] %v261
                %v263 = vld [vmem:[%s151 + $0x2b8] sm:$0xff]
                %264 = vst [vmem:[%s152 + $0x1b8] sm:$0xff] %v263
                %v265 = vld [vmem:[%s151 + $0x2c0] sm:$0xff]
                %266 = vst [vmem:[%s152 + $0x1c0] sm:$0xff] %v265
                %v267 = vld [vmem:[%s151 + $0x2c8] sm:$0xff]
                %268 = vst [vmem:[%s152 + $0x1c8] sm:$0xff] %v267
                %v269 = vld [vmem:[%s151 + $0x2d0] sm:$0xff]
                %270 = vst [vmem:[%s152 + $0x1d0] sm:$0xff] %v269
                %v271 = vld [vmem:[%s151 + $0x2d8] sm:$0xff]
                %272 = vst [vmem:[%s152 + $0x1d8] sm:$0xff] %v271
                %v273 = vld [vmem:[%s151 + $0x2e0] sm:$0xff]
                %274 = vst [vmem:[%s152 + $0x1e0] sm:$0xff] %v273
                %v275 = vld [vmem:[%s151 + $0x2e8] sm:$0xff]
                %276 = vst [vmem:[%s152 + $0x1e8] sm:$0xff] %v275
                %v277 = vld [vmem:[%s151 + $0x2f0] sm:$0xff]
                %278 = vst [vmem:[%s152 + $0x1f0] sm:$0xff] %v277
                %v279 = vld [vmem:[%s151 + $0x2f8] sm:$0xff]
                %280 = vst [vmem:[%s152 + $0x1f8] sm:$0xff] %v279
                %v281 = vld [vmem:[%s151 + $0x400] sm:$0xff]
                %282 = vst [vmem:[%s152 + $0x200] sm:$0xff] %v281
                %v283 = vld [vmem:[%s151 + $0x408] sm:$0xff]
                %284 = vst [vmem:[%s152 + $0x208] sm:$0xff] %v283
                %v285 = vld [vmem:[%s151 + $0x410] sm:$0xff]
                %286 = vst [vmem:[%s152 + $0x210] sm:$0xff] %v285
                %v287 = vld [vmem:[%s151 + $0x418] sm:$0xff]
                %288 = vst [vmem:[%s152 + $0x218] sm:$0xff] %v287
                %v289 = vld [vmem:[%s151 + $0x420] sm:$0xff]
                %290 = vst [vmem:[%s152 + $0x220] sm:$0xff] %v289
                %v291 = vld [vmem:[%s151 + $0x428] sm:$0xff]
                %292 = vst [vmem:[%s152 + $0x228] sm:$0xff] %v291
                %v293 = vld [vmem:[%s151 + $0x430] sm:$0xff]
                %294 = vst [vmem:[%s152 + $0x230] sm:$0xff] %v293
                %v295 = vld [vmem:[%s151 + $0x438] sm:$0xff]
                %296 = vst [vmem:[%s152 + $0x238] sm:$0xff] %v295
                %v297 = vld [vmem:[%s151 + $0x440] sm:$0xff]
                %298 = vst [vmem:[%s152 + $0x240] sm:$0xff] %v297
                %v299 = vld [vmem:[%s151 + $0x448] sm:$0xff]
                %300 = vst [vmem:[%s152 + $0x248] sm:$0xff] %v299
                %v301 = vld [vmem:[%s151 + $0x450] sm:$0xff]
                %302 = vst [vmem:[%s152 + $0x250] sm:$0xff] %v301
                %v303 = vld [vmem:[%s151 + $0x458] sm:$0xff]
                %304 = vst [vmem:[%s152 + $0x258] sm:$0xff] %v303
                %v305 = vld [vmem:[%s151 + $0x460] sm:$0xff]
                %306 = vst [vmem:[%s152 + $0x260] sm:$0xff] %v305
                %v307 = vld [vmem:[%s151 + $0x468] sm:$0xff]
                %308 = vst [vmem:[%s152 + $0x268] sm:$0xff] %v307
                %v309 = vld [vmem:[%s151 + $0x470] sm:$0xff]
                %310 = vst [vmem:[%s152 + $0x270] sm:$0xff] %v309
                %v311 = vld [vmem:[%s151 + $0x478] sm:$0xff]
                %312 = vst [vmem:[%s152 + $0x278] sm:$0xff] %v311
                %v313 = vld [vmem:[%s151 + $0x480] sm:$0xff]
                %314 = vst [vmem:[%s152 + $0x280] sm:$0xff] %v313
                %v315 = vld [vmem:[%s151 + $0x488] sm:$0xff]
                %316 = vst [vmem:[%s152 + $0x288] sm:$0xff] %v315
                %v317 = vld [vmem:[%s151 + $0x490] sm:$0xff]
                %318 = vst [vmem:[%s152 + $0x290] sm:$0xff] %v317
                %v319 = vld [vmem:[%s151 + $0x498] sm:$0xff]
                %320 = vst [vmem:[%s152 + $0x298] sm:$0xff] %v319
                %v321 = vld [vmem:[%s151 + $0x4a0] sm:$0xff]
                %322 = vst [vmem:[%s152 + $0x2a0] sm:$0xff] %v321
                %v323 = vld [vmem:[%s151 + $0x4a8] sm:$0xff]
                %324 = vst [vmem:[%s152 + $0x2a8] sm:$0xff] %v323
                %v325 = vld [vmem:[%s151 + $0x4b0] sm:$0xff]
                %326 = vst [vmem:[%s152 + $0x2b0] sm:$0xff] %v325
                %v327 = vld [vmem:[%s151 + $0x4b8] sm:$0xff]
                %328 = vst [vmem:[%s152 + $0x2b8] sm:$0xff] %v327
                %v329 = vld [vmem:[%s151 + $0x4c0] sm:$0xff]
                %330 = vst [vmem:[%s152 + $0x2c0] sm:$0xff] %v329
                %v331 = vld [vmem:[%s151 + $0x4c8] sm:$0xff]
                %332 = vst [vmem:[%s152 + $0x2c8] sm:$0xff] %v331
                %v333 = vld [vmem:[%s151 + $0x4d0] sm:$0xff]
                %334 = vst [vmem:[%s152 + $0x2d0] sm:$0xff] %v333
                %v335 = vld [vmem:[%s151 + $0x4d8] sm:$0xff]
                %336 = vst [vmem:[%s152 + $0x2d8] sm:$0xff] %v335
                %v337 = vld [vmem:[%s151 + $0x4e0] sm:$0xff]
                %338 = vst [vmem:[%s152 + $0x2e0] sm:$0xff] %v337
                %v339 = vld [vmem:[%s151 + $0x4e8] sm:$0xff]
                %340 = vst [vmem:[%s152 + $0x2e8] sm:$0xff] %v339
                %v341 = vld [vmem:[%s151 + $0x4f0] sm:$0xff]
                %342 = vst [vmem:[%s152 + $0x2f0] sm:$0xff] %v341
                %v343 = vld [vmem:[%s151 + $0x4f8] sm:$0xff]
                %344 = vst [vmem:[%s152 + $0x2f8] sm:$0xff] %v343
                %v345 = vld [vmem:[%s151 + $0x600] sm:$0xff]
                %346 = vst [vmem:[%s152 + $0x300] sm:$0xff] %v345
                %v347 = vld [vmem:[%s151 + $0x608] sm:$0xff]
                %348 = vst [vmem:[%s152 + $0x308] sm:$0xff] %v347
                %v349 = vld [vmem:[%s151 + $0x610] sm:$0xff]
                %350 = vst [vmem:[%s152 + $0x310] sm:$0xff] %v349
                %v351 = vld [vmem:[%s151 + $0x618] sm:$0xff]
                %352 = vst [vmem:[%s152 + $0x318] sm:$0xff] %v351
                %v353 = vld [vmem:[%s151 + $0x620] sm:$0xff]
                %354 = vst [vmem:[%s152 + $0x320] sm:$0xff] %v353
                %v355 = vld [vmem:[%s151 + $0x628] sm:$0xff]
                %356 = vst [vmem:[%s152 + $0x328] sm:$0xff] %v355
                %v357 = vld [vmem:[%s151 + $0x630] sm:$0xff]
                %358 = vst [vmem:[%s152 + $0x330] sm:$0xff] %v357
                %v359 = vld [vmem:[%s151 + $0x638] sm:$0xff]
                %360 = vst [vmem:[%s152 + $0x338] sm:$0xff] %v359
                %v361 = vld [vmem:[%s151 + $0x640] sm:$0xff]
                %362 = vst [vmem:[%s152 + $0x340] sm:$0xff] %v361
                %v363 = vld [vmem:[%s151 + $0x648] sm:$0xff]
                %364 = vst [vmem:[%s152 + $0x348] sm:$0xff] %v363
                %v365 = vld [vmem:[%s151 + $0x650] sm:$0xff]
                %366 = vst [vmem:[%s152 + $0x350] sm:$0xff] %v365
                %v367 = vld [vmem:[%s151 + $0x658] sm:$0xff]
                %368 = vst [vmem:[%s152 + $0x358] sm:$0xff] %v367
                %v369 = vld [vmem:[%s151 + $0x660] sm:$0xff]
                %370 = vst [vmem:[%s152 + $0x360] sm:$0xff] %v369
                %v371 = vld [vmem:[%s151 + $0x668] sm:$0xff]
                %372 = vst [vmem:[%s152 + $0x368] sm:$0xff] %v371
                %v373 = vld [vmem:[%s151 + $0x670] sm:$0xff]
                %374 = vst [vmem:[%s152 + $0x370] sm:$0xff] %v373
                %v375 = vld [vmem:[%s151 + $0x678] sm:$0xff]
                %376 = vst [vmem:[%s152 + $0x378] sm:$0xff] %v375
                %v377 = vld [vmem:[%s151 + $0x680] sm:$0xff]
                %378 = vst [vmem:[%s152 + $0x380] sm:$0xff] %v377
                %v379 = vld [vmem:[%s151 + $0x688] sm:$0xff]
                %380 = vst [vmem:[%s152 + $0x388] sm:$0xff] %v379
                %v381 = vld [vmem:[%s151 + $0x690] sm:$0xff]
                %382 = vst [vmem:[%s152 + $0x390] sm:$0xff] %v381
                %v383 = vld [vmem:[%s151 + $0x698] sm:$0xff]
                %384 = vst [vmem:[%s152 + $0x398] sm:$0xff] %v383
                %v385 = vld [vmem:[%s151 + $0x6a0] sm:$0xff]
                %386 = vst [vmem:[%s152 + $0x3a0] sm:$0xff] %v385
                %v387 = vld [vmem:[%s151 + $0x6a8] sm:$0xff]
                %388 = vst [vmem:[%s152 + $0x3a8] sm:$0xff] %v387
                %v389 = vld [vmem:[%s151 + $0x6b0] sm:$0xff]
                %390 = vst [vmem:[%s152 + $0x3b0] sm:$0xff] %v389
                %v391 = vld [vmem:[%s151 + $0x6b8] sm:$0xff]
                %392 = vst [vmem:[%s152 + $0x3b8] sm:$0xff] %v391
                %v393 = vld [vmem:[%s151 + $0x6c0] sm:$0xff]
                %394 = vst [vmem:[%s152 + $0x3c0] sm:$0xff] %v393
                %v395 = vld [vmem:[%s151 + $0x6c8] sm:$0xff]
                %396 = vst [vmem:[%s152 + $0x3c8] sm:$0xff] %v395
                %v397 = vld [vmem:[%s151 + $0x6d0] sm:$0xff]
                %398 = vst [vmem:[%s152 + $0x3d0] sm:$0xff] %v397
                %v399 = vld [vmem:[%s151 + $0x6d8] sm:$0xff]
                %400 = vst [vmem:[%s152 + $0x3d8] sm:$0xff] %v399
                %v401 = vld [vmem:[%s151 + $0x6e0] sm:$0xff]
                %402 = vst [vmem:[%s152 + $0x3e0] sm:$0xff] %v401
                %v403 = vld [vmem:[%s151 + $0x6e8] sm:$0xff]
                %404 = vst [vmem:[%s152 + $0x3e8] sm:$0xff] %v403
                %v405 = vld [vmem:[%s151 + $0x6f0] sm:$0xff]
                %406 = vst [vmem:[%s152 + $0x3f0] sm:$0xff] %v405
                %v407 = vld [vmem:[%s151 + $0x6f8] sm:$0xff]
                %408 = vst [vmem:[%s152 + $0x3f8] sm:$0xff] %v407
              $region45: #{simple_cnn_forward.3} parent=39 // loop_footer
                %s150 = sadd.s32 1, %s146
              $region46: #{simple_cnn_forward.3} parent=39 // loop_footer_branch
                %145 = sbr.rel target = $region42
              $region47: #{simple_cnn_forward.3} parent=39 // loop_exit
                _
            $region40: #{simple_cnn_forward.3} parent=31 // pred_fallthru
              _
          $region32: #{simple_cnn_forward.3} parent=27 // pred_fallthru
            _
          %677 = vnop
        $region28: #{simple_cnn_forward.3} parent=23 // pred_fallthru
          _
      $region24: #{simple_cnn_forward.3} parent=5 // pred_fallthru
        _
      %p678 = scmp.le.s32.totalorder 1, %s9
      %p679 = scmp.lt.s32.totalorder %s9, 3
      %p680 = pnand %p678, %p679
      %p681 = pneg %p680
      // Predicated region
      $region63: #{simple_cnn_forward.3} parent=5 // pred_check
        _
      $region64: #{simple_cnn_forward.3} parent=5 // pred_check_branch
        %683 = sbr.rel (%p680) target = $region66
      $region65: #{simple_cnn_forward.3} parent=5 // pred_region
        %s684 = ssub.s32 %s9, 1
        %s685 = sand.u32 %s22, 1
        %s686 = sand.u32 %s22, 1
        %s687 = smul.addr %s686, 1024
        %s688 = scalar_lea.vmem [#allocation2], %s687
        // Predicated region
        $region67: #{simple_cnn_forward.3} parent=65 // pred_check
          %p689 = pneg %p35
        $region68: #{simple_cnn_forward.3} parent=65 // pred_check_branch
          %691 = sbr.rel (%p689) target = $region70
        $region69: #{simple_cnn_forward.3} parent=65 // pred_region
          _
        $region70: #{simple_cnn_forward.3} parent=65 // pred_fallthru
          _
        %s692 = sand.u32 %s22, 1
        %s693 = sand.u32 %s22, 1
        %s694 = smul.addr %s693, 1024
        %s695 = scalar_lea.vmem [#allocation2], %s694
        %p696 = pneg %p35
        %p697 = pneg %p32
        %p698 = pneg %p56
        %p699 = pneg %p53
        %p700 = pneg %p77
        %p701 = pneg %p74
        %p702 = pneg %p103
        %p703 = pneg %p100
        %s704 = smul.u32 32, %s14
        %p705 = scmp.lt.s32.totalorder %s704, 63
        %s706 = scalar_select %p705, %s704, 63
        %s707 = smul.addr %s706, 8
        %s708 = scalar_lea.vmem %s3, %s707
        %s709 = smul.u32 32, %s14
        %s710 = smul.u32 32, %s14
        %p711 = scmp.lt.s32.totalorder %s710, 63
        %s712 = scalar_select %p711, %s710, 63
        %s713 = smul.addr %s712, 8
        %s714 = scalar_lea.vmem %s3, %s713
        %s715 = smul.u32 32, %s14
        %v716 = vld [vmem:[%s688] sm:$0xff]
        %v717 = vld [vmem:[%s688 + $0x8] sm:$0xff]
        %v718 = vld [vmem:[%s688 + $0x10] sm:$0xff]
        %v719 = vld [vmem:[%s688 + $0x18] sm:$0xff]
        %v720 = vld [vmem:[%s688 + $0x20] sm:$0xff]
        %v721 = vld [vmem:[%s688 + $0x28] sm:$0xff]
        %v722 = vld [vmem:[%s688 + $0x30] sm:$0xff]
        %v723 = vld [vmem:[%s688 + $0x38] sm:$0xff]
        %v724 = vld [vmem:[%s688 + $0x40] sm:$0xff]
        %v725 = vld [vmem:[%s688 + $0x48] sm:$0xff]
        %v726 = vld [vmem:[%s688 + $0x50] sm:$0xff]
        %v727 = vld [vmem:[%s688 + $0x58] sm:$0xff]
        %v728 = vld [vmem:[%s688 + $0x60] sm:$0xff]
        %v729 = vld [vmem:[%s688 + $0x68] sm:$0xff]
        %v730 = vld [vmem:[%s688 + $0x70] sm:$0xff]
        %v731 = vld [vmem:[%s688 + $0x78] sm:$0xff]
        %v732 = vld [vmem:[%s688 + $0x80] sm:$0xff]
        %v733 = vld [vmem:[%s688 + $0x88] sm:$0xff]
        %v734 = vld [vmem:[%s688 + $0x90] sm:$0xff]
        %v735 = vld [vmem:[%s688 + $0x98] sm:$0xff]
        %v736 = vld [vmem:[%s688 + $0xa0] sm:$0xff]
        %v737 = vld [vmem:[%s688 + $0xa8] sm:$0xff]
        %v738 = vld [vmem:[%s688 + $0xb0] sm:$0xff]
        %v739 = vld [vmem:[%s688 + $0xb8] sm:$0xff]
        %v740 = vld [vmem:[%s688 + $0xc0] sm:$0xff]
        %v741 = vld [vmem:[%s688 + $0xc8] sm:$0xff]
        %v742 = vld [vmem:[%s688 + $0xd0] sm:$0xff]
        %v743 = vld [vmem:[%s688 + $0xd8] sm:$0xff]
        %v744 = vld [vmem:[%s688 + $0xe0] sm:$0xff]
        %v745 = vld [vmem:[%s688 + $0xe8] sm:$0xff]
        %v746 = vld [vmem:[%s688 + $0xf0] sm:$0xff]
        %v747 = vld [vmem:[%s688 + $0xf8] sm:$0xff]
        %v748 = vld [vmem:[%s688 + $0x100] sm:$0xff]
        %v749 = vld [vmem:[%s688 + $0x108] sm:$0xff]
        %v750 = vld [vmem:[%s688 + $0x110] sm:$0xff]
        %v751 = vld [vmem:[%s688 + $0x118] sm:$0xff]
        %v752 = vld [vmem:[%s688 + $0x120] sm:$0xff]
        %v753 = vld [vmem:[%s688 + $0x128] sm:$0xff]
        %v754 = vld [vmem:[%s688 + $0x130] sm:$0xff]
        %v755 = vld [vmem:[%s688 + $0x138] sm:$0xff]
        %v756 = vld [vmem:[%s688 + $0x140] sm:$0xff]
        %v757 = vld [vmem:[%s688 + $0x148] sm:$0xff]
        %v758 = vld [vmem:[%s688 + $0x150] sm:$0xff]
        %v759 = vld [vmem:[%s688 + $0x158] sm:$0xff]
        %v760 = vld [vmem:[%s688 + $0x160] sm:$0xff]
        %v761 = vld [vmem:[%s688 + $0x168] sm:$0xff]
        %v762 = vld [vmem:[%s688 + $0x170] sm:$0xff]
        %v763 = vld [vmem:[%s688 + $0x178] sm:$0xff]
        %v764 = vld [vmem:[%s688 + $0x180] sm:$0xff]
        %v765 = vld [vmem:[%s688 + $0x188] sm:$0xff]
        %v766 = vld [vmem:[%s688 + $0x190] sm:$0xff]
        %v767 = vld [vmem:[%s688 + $0x198] sm:$0xff]
        %v768 = vld [vmem:[%s688 + $0x1a0] sm:$0xff]
        %v769 = vld [vmem:[%s688 + $0x1a8] sm:$0xff]
        %v770 = vld [vmem:[%s688 + $0x1b0] sm:$0xff]
        %v771 = vld [vmem:[%s688 + $0x1b8] sm:$0xff]
        %v772 = vld [vmem:[%s688 + $0x1c0] sm:$0xff]
        %v773 = vld [vmem:[%s688 + $0x1c8] sm:$0xff]
        %v774 = vld [vmem:[%s688 + $0x1d0] sm:$0xff]
        %v775 = vld [vmem:[%s688 + $0x1d8] sm:$0xff]
        %v776 = vld [vmem:[%s688 + $0x1e0] sm:$0xff]
        %v777 = vld [vmem:[%s688 + $0x1e8] sm:$0xff]
        %v778 = vld [vmem:[%s688 + $0x1f0] sm:$0xff]
        %v779 = vld [vmem:[%s688 + $0x1f8] sm:$0xff]
        %v780 = vld [vmem:[%s688 + $0x200] sm:$0xff]
        %v781 = vld [vmem:[%s688 + $0x208] sm:$0xff]
        %v782 = vld [vmem:[%s688 + $0x210] sm:$0xff]
        %v783 = vld [vmem:[%s688 + $0x218] sm:$0xff]
        %v784 = vld [vmem:[%s688 + $0x220] sm:$0xff]
        %v785 = vld [vmem:[%s688 + $0x228] sm:$0xff]
        %v786 = vld [vmem:[%s688 + $0x230] sm:$0xff]
        %v787 = vld [vmem:[%s688 + $0x238] sm:$0xff]
        %v788 = vld [vmem:[%s688 + $0x240] sm:$0xff]
        %v789 = vld [vmem:[%s688 + $0x248] sm:$0xff]
        %v790 = vld [vmem:[%s688 + $0x250] sm:$0xff]
        %v791 = vld [vmem:[%s688 + $0x258] sm:$0xff]
        %v792 = vld [vmem:[%s688 + $0x260] sm:$0xff]
        %v793 = vld [vmem:[%s688 + $0x268] sm:$0xff]
        %v794 = vld [vmem:[%s688 + $0x270] sm:$0xff]
        %v795 = vld [vmem:[%s688 + $0x278] sm:$0xff]
        %v796 = vld [vmem:[%s688 + $0x280] sm:$0xff]
        %v797 = vld [vmem:[%s688 + $0x288] sm:$0xff]
        %v798 = vld [vmem:[%s688 + $0x290] sm:$0xff]
        %v799 = vld [vmem:[%s688 + $0x298] sm:$0xff]
        %v800 = vld [vmem:[%s688 + $0x2a0] sm:$0xff]
        %v801 = vld [vmem:[%s688 + $0x2a8] sm:$0xff]
        %v802 = vld [vmem:[%s688 + $0x2b0] sm:$0xff]
        %v803 = vld [vmem:[%s688 + $0x2b8] sm:$0xff]
        %v804 = vld [vmem:[%s688 + $0x2c0] sm:$0xff]
        %v805 = vld [vmem:[%s688 + $0x2c8] sm:$0xff]
        %v806 = vld [vmem:[%s688 + $0x2d0] sm:$0xff]
        %v807 = vld [vmem:[%s688 + $0x2d8] sm:$0xff]
        %v808 = vld [vmem:[%s688 + $0x2e0] sm:$0xff]
        %v809 = vld [vmem:[%s688 + $0x2e8] sm:$0xff]
        %v810 = vld [vmem:[%s688 + $0x2f0] sm:$0xff]
        %v811 = vld [vmem:[%s688 + $0x2f8] sm:$0xff]
        %v812 = vld [vmem:[%s688 + $0x300] sm:$0xff]
        %v813 = vld [vmem:[%s688 + $0x308] sm:$0xff]
        %v814 = vld [vmem:[%s688 + $0x310] sm:$0xff]
        %v815 = vld [vmem:[%s688 + $0x318] sm:$0xff]
        %v816 = vld [vmem:[%s688 + $0x320] sm:$0xff]
        %v817 = vld [vmem:[%s688 + $0x328] sm:$0xff]
        %v818 = vld [vmem:[%s688 + $0x330] sm:$0xff]
        %v819 = vld [vmem:[%s688 + $0x338] sm:$0xff]
        %v820 = vld [vmem:[%s688 + $0x340] sm:$0xff]
        %v821 = vld [vmem:[%s688 + $0x348] sm:$0xff]
        %v822 = vld [vmem:[%s688 + $0x350] sm:$0xff]
        %v823 = vld [vmem:[%s688 + $0x358] sm:$0xff]
        %v824 = vld [vmem:[%s688 + $0x360] sm:$0xff]
        %v825 = vld [vmem:[%s688 + $0x368] sm:$0xff]
        %v826 = vld [vmem:[%s688 + $0x370] sm:$0xff]
        %v827 = vld [vmem:[%s688 + $0x378] sm:$0xff]
        %v828 = vld [vmem:[%s688 + $0x380] sm:$0xff]
        %v829 = vld [vmem:[%s688 + $0x388] sm:$0xff]
        %v830 = vld [vmem:[%s688 + $0x390] sm:$0xff]
        %v831 = vld [vmem:[%s688 + $0x398] sm:$0xff]
        %v832 = vld [vmem:[%s688 + $0x3a0] sm:$0xff]
        %v833 = vld [vmem:[%s688 + $0x3a8] sm:$0xff]
        %v834 = vld [vmem:[%s688 + $0x3b0] sm:$0xff]
        %v835 = vld [vmem:[%s688 + $0x3b8] sm:$0xff]
        %v836 = vld [vmem:[%s688 + $0x3c0] sm:$0xff]
        %v837 = vld [vmem:[%s688 + $0x3c8] sm:$0xff]
        %v838 = vld [vmem:[%s688 + $0x3d0] sm:$0xff]
        %v839 = vld [vmem:[%s688 + $0x3d8] sm:$0xff]
        %v840 = vld [vmem:[%s688 + $0x3e0] sm:$0xff]
        %v841 = vld [vmem:[%s688 + $0x3e8] sm:$0xff]
        %v842 = vld [vmem:[%s688 + $0x3f0] sm:$0xff]
        %v843 = vld [vmem:[%s688 + $0x3f8] sm:$0xff]
        %v844 = vld [vmem:[%s1] sm:$0xff]
        %v845 = vld [vmem:[%s1 + $0x8] sm:$0xff]
        %v846 = vld [vmem:[%s1 + $0x10] sm:$0xff]
        %v847 = vld [vmem:[%s1 + $0x18] sm:$0x7]
        %vm848 = vcmask 220160
        %v850 = vsel %vm848, %v716, 0
        %v853 = vsel %vm848, %v717, 0
        %v856 = vsel %vm848, %v718, 0
        %v859 = vsel %vm848, %v719, 0
        %v862 = vsel %vm848, %v720, 0
        %v865 = vsel %vm848, %v721, 0
        %v868 = vsel %vm848, %v722, 0
        %v871 = vsel %vm848, %v723, 0
        %v874 = vsel %vm848, %v724, 0
        %v877 = vsel %vm848, %v725, 0
        %v880 = vsel %vm848, %v726, 0
        %v883 = vsel %vm848, %v727, 0
        %v886 = vsel %vm848, %v728, 0
        %v889 = vsel %vm848, %v729, 0
        %v892 = vsel %vm848, %v730, 0
        %v895 = vsel %vm848, %v731, 0
        %v898 = vsel %vm848, %v732, 0
        %v901 = vsel %vm848, %v733, 0
        %v904 = vsel %vm848, %v734, 0
        %v907 = vsel %vm848, %v735, 0
        %v910 = vsel %vm848, %v736, 0
        %v913 = vsel %vm848, %v737, 0
        %v916 = vsel %vm848, %v738, 0
        %v919 = vsel %vm848, %v739, 0
        %v922 = vsel %vm848, %v740, 0
        %v925 = vsel %vm848, %v741, 0
        %v928 = vsel %vm848, %v742, 0
        %v931 = vsel %vm848, %v743, 0
        %v934 = vsel %vm848, %v744, 0
        %v937 = vsel %vm848, %v745, 0
        %v940 = vsel %vm848, %v746, 0
        %v943 = vsel %vm848, %v747, 0
        %v946 = vsel %vm848, %v748, 0
        %v949 = vsel %vm848, %v749, 0
        %v952 = vsel %vm848, %v750, 0
        %v955 = vsel %vm848, %v751, 0
        %v958 = vsel %vm848, %v752, 0
        %v961 = vsel %vm848, %v753, 0
        %v964 = vsel %vm848, %v754, 0
        %v967 = vsel %vm848, %v755, 0
        %v970 = vsel %vm848, %v756, 0
        %v973 = vsel %vm848, %v757, 0
        %v976 = vsel %vm848, %v758, 0
        %v979 = vsel %vm848, %v759, 0
        %v982 = vsel %vm848, %v760, 0
        %v985 = vsel %vm848, %v761, 0
        %v988 = vsel %vm848, %v762, 0
        %v991 = vsel %vm848, %v763, 0
        %v994 = vsel %vm848, %v764, 0
        %v997 = vsel %vm848, %v765, 0
        %v1000 = vsel %vm848, %v766, 0
        %v1003 = vsel %vm848, %v767, 0
        %v1006 = vsel %vm848, %v768, 0
        %v1009 = vsel %vm848, %v769, 0
        %v1012 = vsel %vm848, %v770, 0
        %v1015 = vsel %vm848, %v771, 0
        %v1018 = vsel %vm848, %v772, 0
        %v1021 = vsel %vm848, %v773, 0
        %v1024 = vsel %vm848, %v774, 0
        %v1027 = vsel %vm848, %v775, 0
        %v1030 = vsel %vm848, %v776, 0
        %v1033 = vsel %vm848, %v777, 0
        %v1036 = vsel %vm848, %v778, 0
        %v1039 = vsel %vm848, %v779, 0
        %v1042 = vsel %vm848, %v780, 0
        %v1045 = vsel %vm848, %v781, 0
        %v1048 = vsel %vm848, %v782, 0
        %v1051 = vsel %vm848, %v783, 0
        %v1054 = vsel %vm848, %v784, 0
        %v1057 = vsel %vm848, %v785, 0
        %v1060 = vsel %vm848, %v786, 0
        %v1063 = vsel %vm848, %v787, 0
        %v1066 = vsel %vm848, %v788, 0
        %v1069 = vsel %vm848, %v789, 0
        %v1072 = vsel %vm848, %v790, 0
        %v1075 = vsel %vm848, %v791, 0
        %v1078 = vsel %vm848, %v792, 0
        %v1081 = vsel %vm848, %v793, 0
        %v1084 = vsel %vm848, %v794, 0
        %v1087 = vsel %vm848, %v795, 0
        %v1090 = vsel %vm848, %v796, 0
        %v1093 = vsel %vm848, %v797, 0
        %v1096 = vsel %vm848, %v798, 0
        %v1099 = vsel %vm848, %v799, 0
        %v1102 = vsel %vm848, %v800, 0
        %v1105 = vsel %vm848, %v801, 0
        %v1108 = vsel %vm848, %v802, 0
        %v1111 = vsel %vm848, %v803, 0
        %v1114 = vsel %vm848, %v804, 0
        %v1117 = vsel %vm848, %v805, 0
        %v1120 = vsel %vm848, %v806, 0
        %v1123 = vsel %vm848, %v807, 0
        %v1126 = vsel %vm848, %v808, 0
        %v1129 = vsel %vm848, %v809, 0
        %v1132 = vsel %vm848, %v810, 0
        %v1135 = vsel %vm848, %v811, 0
        %v1138 = vsel %vm848, %v812, 0
        %v1141 = vsel %vm848, %v813, 0
        %v1144 = vsel %vm848, %v814, 0
        %v1147 = vsel %vm848, %v815, 0
        %v1150 = vsel %vm848, %v816, 0
        %v1153 = vsel %vm848, %v817, 0
        %v1156 = vsel %vm848, %v818, 0
        %v1159 = vsel %vm848, %v819, 0
        %v1162 = vsel %vm848, %v820, 0
        %v1165 = vsel %vm848, %v821, 0
        %v1168 = vsel %vm848, %v822, 0
        %v1171 = vsel %vm848, %v823, 0
        %v1174 = vsel %vm848, %v824, 0
        %v1177 = vsel %vm848, %v825, 0
        %v1180 = vsel %vm848, %v826, 0
        %v1183 = vsel %vm848, %v827, 0
        %v1186 = vsel %vm848, %v828, 0
        %v1189 = vsel %vm848, %v829, 0
        %v1192 = vsel %vm848, %v830, 0
        %v1195 = vsel %vm848, %v831, 0
        %v1198 = vsel %vm848, %v832, 0
        %v1201 = vsel %vm848, %v833, 0
        %v1204 = vsel %vm848, %v834, 0
        %v1207 = vsel %vm848, %v835, 0
        %v1210 = vsel %vm848, %v836, 0
        %v1213 = vsel %vm848, %v837, 0
        %v1216 = vsel %vm848, %v838, 0
        %v1219 = vsel %vm848, %v839, 0
        %v1222 = vsel %vm848, %v840, 0
        %v1225 = vsel %vm848, %v841, 0
        %v1228 = vsel %vm848, %v842, 0
        %v1231 = vsel %vm848, %v843, 0
        %vm1233 = vcmask 1042432
        %v1235 = vsel %vm1233, %v847, 0
        %1237 = vmatprep.subr.mxu0 0.0
        %1238 = vmatpush1.msra.mxu0 %v844
        %1239 = vmatprep.subr.mxu0 0.0
        %1240 = vmatpush1.msra.mxu0 %v845
        %1241 = vmatprep.subr.mxu0 0.0
        %1242 = vmatpush1.msra.mxu0 %v846
        %1243 = vmatprep.subr.mxu0 0.0
        %1244 = vmatpush1.msra.mxu0 %v1235
        %1245 = vmatprep.subr.mxu0 0.0
        %1246 = vmatpush1.msra.mxu0 0.0
        %1247 = vmatprep.subr.mxu0 0.0
        %1248 = vmatpush1.msra.mxu0 0.0
        %1249 = vmatprep.subr.mxu0 0.0
        %1250 = vmatpush1.msra.mxu0 0.0
        %1251 = vmatprep.subr.mxu0 0.0
        %1252 = vmatpush1.msra.mxu0 0.0
        %1253 = vmatprep.subr.mxu0 0.0
        %1254 = vmatpush1.msra.mxu0 0.0
        %1255 = vmatprep.subr.mxu0 0.0
        %1256 = vmatpush1.msra.mxu0 0.0
        %1257 = vmatprep.subr.mxu0 0.0
        %1258 = vmatpush1.msra.mxu0 0.0
        %1259 = vmatprep.subr.mxu0 0.0
        %1260 = vmatpush1.msra.mxu0 0.0
        %1261 = vmatprep.subr.mxu0 0.0
        %1262 = vmatpush1.msra.mxu0 0.0
        %1263 = vmatprep.subr.mxu0 0.0
        %1264 = vmatpush1.msra.mxu0 0.0
        %1265 = vmatprep.subr.mxu0 0.0
        %1266 = vmatpush1.msra.mxu0 0.0
        %1267 = vmatprep.subr.mxu0 0.0
        %1268 = vmatpush1.msra.mxu0 0.0
        %1269 = vmatprep.subr.mxu0 0.0
        %1270 = vmatpush1.msra.mxu0 0.0
        %1271 = vmatprep.subr.mxu0 0.0
        %1272 = vmatpush1.msra.mxu0 0.0
        %1273 = vmatprep.subr.mxu0 0.0
        %1274 = vmatpush1.msra.mxu0 0.0
        %1275 = vmatprep.subr.mxu0 0.0
        %1276 = vmatpush1.msra.mxu0 0.0
        %1277 = vmatprep.subr.mxu0 0.0
        %1278 = vmatpush1.msra.mxu0 0.0
        %1279 = vmatprep.subr.mxu0 0.0
        %1280 = vmatpush1.msra.mxu0 0.0
        %1281 = vmatprep.subr.mxu0 0.0
        %1282 = vmatpush1.msra.mxu0 0.0
        %1283 = vmatprep.subr.mxu0 0.0
        %1284 = vmatpush1.msra.mxu0 0.0
        %1285 = vmatprep.subr.mxu0 0.0
        %1286 = vmatpush1.msra.mxu0 0.0
        %1287 = vmatprep.subr.mxu0 0.0
        %1288 = vmatpush1.msra.mxu0 0.0
        %1289 = vmatprep.subr.mxu0 0.0
        %1290 = vmatpush1.msra.mxu0 0.0
        %1291 = vmatprep.subr.mxu0 0.0
        %1292 = vmatpush1.msra.mxu0 0.0
        %1293 = vmatprep.subr.mxu0 0.0
        %1294 = vmatpush1.msra.mxu0 0.0
        %1295 = vmatprep.subr.mxu0 0.0
        %1296 = vmatpush1.msra.mxu0 0.0
        %1297 = vmatprep.subr.mxu0 0.0
        %1298 = vmatpush1.msra.mxu0 0.0
        %1299 = vmatprep.subr.mxu0 0.0
        %1300 = vmatpush1.msra.mxu0 0.0
        %1301 = vmatprep.mubr.f32.mxu0 0.0
        %1302 = vmatmul.mubr.f32.gmra.mrb[0].mxu0 %v850
        %v1303 = vpop.f32.mrb[0].mxu0
        %v1304 = vadd.f32 0.0, %v1303
        %v1305 = vpop.f32.mrb[0].mxu0
        %1306 = vmatprep.mubr.f32.mxu0 0.0
        %1307 = vmatmul.mubr.f32.gmra.mrb[0].mxu0 %v853
        %v1308 = vpop.f32.mrb[0].mxu0
        %v1309 = vadd.f32 0.0, %v1308
        %v1310 = vpop.f32.mrb[0].mxu0
        %1311 = vmatprep.mubr.f32.mxu0 0.0
        %1312 = vmatmul.mubr.f32.gmra.mrb[0].mxu0 %v856
        %v1313 = vpop.f32.mrb[0].mxu0
        %v1314 = vadd.f32 0.0, %v1313
        %v1315 = vpop.f32.mrb[0].mxu0
        %1316 = vmatprep.mubr.f32.mxu0 0.0
        %1317 = vmatmul.mubr.f32.gmra.mrb[0].mxu0 %v859
        %v1318 = vpop.f32.mrb[0].mxu0
        %v1319 = vadd.f32 0.0, %v1318
        %v1320 = vpop.f32.mrb[0].mxu0
        %1321 = vmatprep.mubr.f32.mxu0 0.0
        %1322 = vmatmul.mubr.f32.gmra.mrb[0].mxu0 %v862
        %v1323 = vpop.f32.mrb[0].mxu0
        %v1324 = vadd.f32 0.0, %v1323
        %v1325 = vpop.f32.mrb[0].mxu0
        %1326 = vmatprep.mubr.f32.mxu0 0.0
        %1327 = vmatmul.mubr.f32.gmra.mrb[0].mxu0 %v865
        %v1328 = vpop.f32.mrb[0].mxu0
        %v1329 = vadd.f32 0.0, %v1328
        %v1330 = vpop.f32.mrb[0].mxu0
        %1331 = vmatprep.mubr.f32.mxu0 0.0
        %1332 = vmatmul.mubr.f32.gmra.mrb[0].mxu0 %v868
        %v1333 = vpop.f32.mrb[0].mxu0
        %v1334 = vadd.f32 0.0, %v1333
        %v1335 = vpop.f32.mrb[0].mxu0
        %1336 = vmatprep.mubr.f32.mxu0 0.0
        %1337 = vmatmul.mubr.f32.gmra.mrb[0].mxu0 %v871
        %v1338 = vpop.f32.mrb[0].mxu0
        %v1339 = vadd.f32 0.0, %v1338
        %v1340 = vpop.f32.mrb[0].mxu0
        %1341 = vmatprep.mubr.f32.mxu0 0.0
        %1342 = vmatmul.mubr.f32.gmra.mrb[0].mxu0 %v874
        %v1343 = vpop.f32.mrb[0].mxu0
        %v1344 = vadd.f32 0.0, %v1343
        %v1345 = vpop.f32.mrb[0].mxu0
        %1346 = vmatprep.mubr.f32.mxu0 0.0
        %1347 = vmatmul.mubr.f32.gmra.mrb[0].mxu0 %v877
        %v1348 = vpop.f32.mrb[0].mxu0
        %v1349 = vadd.f32 0.0, %v1348
        %v1350 = vpop.f32.mrb[0].mxu0
        %1351 = vmatprep.mubr.f32.mxu0 0.0
        %1352 = vmatmul.mubr.f32.gmra.mrb[0].mxu0 %v880
        %v1353 = vpop.f32.mrb[0].mxu0
        %v1354 = vadd.f32 0.0, %v1353
        %v1355 = vpop.f32.mrb[0].mxu0
        %1356 = vmatprep.mubr.f32.mxu0 0.0
        %1357 = vmatmul.mubr.f32.gmra.mrb[0].mxu0 %v883
        %v1358 = vpop.f32.mrb[0].mxu0
        %v1359 = vadd.f32 0.0, %v1358
        %v1360 = vpop.f32.mrb[0].mxu0
        %1361 = vmatprep.mubr.f32.mxu0 0.0
        %1362 = vmatmul.mubr.f32.gmra.mrb[0].mxu0 %v886
        %v1363 = vpop.f32.mrb[0].mxu0
        %v1364 = vadd.f32 0.0, %v1363
        %v1365 = vpop.f32.mrb[0].mxu0
        %1366 = vmatprep.mubr.f32.mxu0 0.0
        %1367 = vmatmul.mubr.f32.gmra.mrb[0].mxu0 %v889
        %v1368 = vpop.f32.mrb[0].mxu0
        %v1369 = vadd.f32 0.0, %v1368
        %v1370 = vpop.f32.mrb[0].mxu0
        %1371 = vmatprep.mubr.f32.mxu0 0.0
        %1372 = vmatmul.mubr.f32.gmra.mrb[0].mxu0 %v892
        %v1373 = vpop.f32.mrb[0].mxu0
        %v1374 = vadd.f32 0.0, %v1373
        %v1375 = vpop.f32.mrb[0].mxu0
        %1376 = vmatprep.mubr.f32.mxu0 0.0
        %1377 = vmatmul.mubr.f32.gmra.mrb[0].mxu0 %v895
        %v1378 = vpop.f32.mrb[0].mxu0
        %v1379 = vadd.f32 0.0, %v1378
        %v1380 = vpop.f32.mrb[0].mxu0
        %1381 = vmatprep.mubr.f32.mxu0 0.0
        %1382 = vmatmul.mubr.f32.gmra.mrb[0].mxu0 %v898
        %v1383 = vpop.f32.mrb[0].mxu0
        %v1384 = vadd.f32 0.0, %v1383
        %v1385 = vpop.f32.mrb[0].mxu0
        %1386 = vmatprep.mubr.f32.mxu0 0.0
        %1387 = vmatmul.mubr.f32.gmra.mrb[0].mxu0 %v901
        %v1388 = vpop.f32.mrb[0].mxu0
        %v1389 = vadd.f32 0.0, %v1388
        %v1390 = vpop.f32.mrb[0].mxu0
        %1391 = vmatprep.mubr.f32.mxu0 0.0
        %1392 = vmatmul.mubr.f32.gmra.mrb[0].mxu0 %v904
        %v1393 = vpop.f32.mrb[0].mxu0
        %v1394 = vadd.f32 0.0, %v1393
        %v1395 = vpop.f32.mrb[0].mxu0
        %1396 = vmatprep.mubr.f32.mxu0 0.0
        %1397 = vmatmul.mubr.f32.gmra.mrb[0].mxu0 %v907
        %v1398 = vpop.f32.mrb[0].mxu0
        %v1399 = vadd.f32 0.0, %v1398
        %v1400 = vpop.f32.mrb[0].mxu0
        %1401 = vmatprep.mubr.f32.mxu0 0.0
        %1402 = vmatmul.mubr.f32.gmra.mrb[0].mxu0 %v910
        %v1403 = vpop.f32.mrb[0].mxu0
        %v1404 = vadd.f32 0.0, %v1403
        %v1405 = vpop.f32.mrb[0].mxu0
        %1406 = vmatprep.mubr.f32.mxu0 0.0
        %1407 = vmatmul.mubr.f32.gmra.mrb[0].mxu0 %v913
        %v1408 = vpop.f32.mrb[0].mxu0
        %v1409 = vadd.f32 0.0, %v1408
        %v1410 = vpop.f32.mrb[0].mxu0
        %1411 = vmatprep.mubr.f32.mxu0 0.0
        %1412 = vmatmul.mubr.f32.gmra.mrb[0].mxu0 %v916
        %v1413 = vpop.f32.mrb[0].mxu0
        %v1414 = vadd.f32 0.0, %v1413
        %v1415 = vpop.f32.mrb[0].mxu0
        %1416 = vmatprep.mubr.f32.mxu0 0.0
        %1417 = vmatmul.mubr.f32.gmra.mrb[0].mxu0 %v919
        %v1418 = vpop.f32.mrb[0].mxu0
        %v1419 = vadd.f32 0.0, %v1418
        %v1420 = vpop.f32.mrb[0].mxu0
        %1421 = vmatprep.mubr.f32.mxu0 0.0
        %1422 = vmatmul.mubr.f32.gmra.mrb[0].mxu0 %v922
        %v1423 = vpop.f32.mrb[0].mxu0
        %v1424 = vadd.f32 0.0, %v1423
        %v1425 = vpop.f32.mrb[0].mxu0
        %1426 = vmatprep.mubr.f32.mxu0 0.0
        %1427 = vmatmul.mubr.f32.gmra.mrb[0].mxu0 %v925
        %v1428 = vpop.f32.mrb[0].mxu0
        %v1429 = vadd.f32 0.0, %v1428
        %v1430 = vpop.f32.mrb[0].mxu0
        %1431 = vmatprep.mubr.f32.mxu0 0.0
        %1432 = vmatmul.mubr.f32.gmra.mrb[0].mxu0 %v928
        %v1433 = vpop.f32.mrb[0].mxu0
        %v1434 = vadd.f32 0.0, %v1433
        %v1435 = vpop.f32.mrb[0].mxu0
        %1436 = vmatprep.mubr.f32.mxu0 0.0
        %1437 = vmatmul.mubr.f32.gmra.mrb[0].mxu0 %v931
        %v1438 = vpop.f32.mrb[0].mxu0
        %v1439 = vadd.f32 0.0, %v1438
        %v1440 = vpop.f32.mrb[0].mxu0
        %1441 = vmatprep.mubr.f32.mxu0 0.0
        %1442 = vmatmul.mubr.f32.gmra.mrb[0].mxu0 %v934
        %v1443 = vpop.f32.mrb[0].mxu0
        %v1444 = vadd.f32 0.0, %v1443
        %v1445 = vpop.f32.mrb[0].mxu0
        %1446 = vmatprep.mubr.f32.mxu0 0.0
        %1447 = vmatmul.mubr.f32.gmra.mrb[0].mxu0 %v937
        %v1448 = vpop.f32.mrb[0].mxu0
        %v1449 = vadd.f32 0.0, %v1448
        %v1450 = vpop.f32.mrb[0].mxu0
        %1451 = vmatprep.mubr.f32.mxu0 0.0
        %1452 = vmatmul.mubr.f32.gmra.mrb[0].mxu0 %v940
        %v1453 = vpop.f32.mrb[0].mxu0
        %v1454 = vadd.f32 0.0, %v1453
        %v1455 = vpop.f32.mrb[0].mxu0
        %1456 = vmatprep.mubr.f32.mxu0 0.0
        %1457 = vmatmul.mubr.f32.gmra.mrb[0].mxu0 %v943
        %v1458 = vpop.f32.mrb[0].mxu0
        %v1459 = vadd.f32 0.0, %v1458
        %v1460 = vpop.f32.mrb[0].mxu0
        %1461 = vmatprep.mubr.f32.mxu0 0.0
        %1462 = vmatmul.mubr.f32.gmra.mrb[0].mxu0 %v946
        %v1463 = vpop.f32.mrb[0].mxu0
        %v1464 = vadd.f32 0.0, %v1463
        %v1465 = vpop.f32.mrb[0].mxu0
        %1466 = vmatprep.mubr.f32.mxu0 0.0
        %1467 = vmatmul.mubr.f32.gmra.mrb[0].mxu0 %v949
        %v1468 = vpop.f32.mrb[0].mxu0
        %v1469 = vadd.f32 0.0, %v1468
        %v1470 = vpop.f32.mrb[0].mxu0
        %1471 = vmatprep.mubr.f32.mxu0 0.0
        %1472 = vmatmul.mubr.f32.gmra.mrb[0].mxu0 %v952
        %v1473 = vpop.f32.mrb[0].mxu0
        %v1474 = vadd.f32 0.0, %v1473
        %v1475 = vpop.f32.mrb[0].mxu0
        %1476 = vmatprep.mubr.f32.mxu0 0.0
        %1477 = vmatmul.mubr.f32.gmra.mrb[0].mxu0 %v955
        %v1478 = vpop.f32.mrb[0].mxu0
        %v1479 = vadd.f32 0.0, %v1478
        %v1480 = vpop.f32.mrb[0].mxu0
        %1481 = vmatprep.mubr.f32.mxu0 0.0
        %1482 = vmatmul.mubr.f32.gmra.mrb[0].mxu0 %v958
        %v1483 = vpop.f32.mrb[0].mxu0
        %v1484 = vadd.f32 0.0, %v1483
        %v1485 = vpop.f32.mrb[0].mxu0
        %1486 = vmatprep.mubr.f32.mxu0 0.0
        %1487 = vmatmul.mubr.f32.gmra.mrb[0].mxu0 %v961
        %v1488 = vpop.f32.mrb[0].mxu0
        %v1489 = vadd.f32 0.0, %v1488
        %v1490 = vpop.f32.mrb[0].mxu0
        %1491 = vmatprep.mubr.f32.mxu0 0.0
        %1492 = vmatmul.mubr.f32.gmra.mrb[0].mxu0 %v964
        %v1493 = vpop.f32.mrb[0].mxu0
        %v1494 = vadd.f32 0.0, %v1493
        %v1495 = vpop.f32.mrb[0].mxu0
        %1496 = vmatprep.mubr.f32.mxu0 0.0
        %1497 = vmatmul.mubr.f32.gmra.mrb[0].mxu0 %v967
        %v1498 = vpop.f32.mrb[0].mxu0
        %v1499 = vadd.f32 0.0, %v1498
        %v1500 = vpop.f32.mrb[0].mxu0
        %1501 = vmatprep.mubr.f32.mxu0 0.0
        %1502 = vmatmul.mubr.f32.gmra.mrb[0].mxu0 %v970
        %v1503 = vpop.f32.mrb[0].mxu0
        %v1504 = vadd.f32 0.0, %v1503
        %v1505 = vpop.f32.mrb[0].mxu0
        %1506 = vmatprep.mubr.f32.mxu0 0.0
        %1507 = vmatmul.mubr.f32.gmra.mrb[0].mxu0 %v973
        %v1508 = vpop.f32.mrb[0].mxu0
        %v1509 = vadd.f32 0.0, %v1508
        %v1510 = vpop.f32.mrb[0].mxu0
        %1511 = vmatprep.mubr.f32.mxu0 0.0
        %1512 = vmatmul.mubr.f32.gmra.mrb[0].mxu0 %v976
        %v1513 = vpop.f32.mrb[0].mxu0
        %v1514 = vadd.f32 0.0, %v1513
        %v1515 = vpop.f32.mrb[0].mxu0
        %1516 = vmatprep.mubr.f32.mxu0 0.0
        %1517 = vmatmul.mubr.f32.gmra.mrb[0].mxu0 %v979
        %v1518 = vpop.f32.mrb[0].mxu0
        %v1519 = vadd.f32 0.0, %v1518
        %v1520 = vpop.f32.mrb[0].mxu0
        %1521 = vmatprep.mubr.f32.mxu0 0.0
        %1522 = vmatmul.mubr.f32.gmra.mrb[0].mxu0 %v982
        %v1523 = vpop.f32.mrb[0].mxu0
        %v1524 = vadd.f32 0.0, %v1523
        %v1525 = vpop.f32.mrb[0].mxu0
        %1526 = vmatprep.mubr.f32.mxu0 0.0
        %1527 = vmatmul.mubr.f32.gmra.mrb[0].mxu0 %v985
        %v1528 = vpop.f32.mrb[0].mxu0
        %v1529 = vadd.f32 0.0, %v1528
        %v1530 = vpop.f32.mrb[0].mxu0
        %1531 = vmatprep.mubr.f32.mxu0 0.0
        %1532 = vmatmul.mubr.f32.gmra.mrb[0].mxu0 %v988
        %v1533 = vpop.f32.mrb[0].mxu0
        %v1534 = vadd.f32 0.0, %v1533
        %v1535 = vpop.f32.mrb[0].mxu0
        %1536 = vmatprep.mubr.f32.mxu0 0.0
        %1537 = vmatmul.mubr.f32.gmra.mrb[0].mxu0 %v991
        %v1538 = vpop.f32.mrb[0].mxu0
        %v1539 = vadd.f32 0.0, %v1538
        %v1540 = vpop.f32.mrb[0].mxu0
        %1541 = vmatprep.mubr.f32.mxu0 0.0
        %1542 = vmatmul.mubr.f32.gmra.mrb[0].mxu0 %v994
        %v1543 = vpop.f32.mrb[0].mxu0
        %v1544 = vadd.f32 0.0, %v1543
        %v1545 = vpop.f32.mrb[0].mxu0
        %1546 = vmatprep.mubr.f32.mxu0 0.0
        %1547 = vmatmul.mubr.f32.gmra.mrb[0].mxu0 %v997
        %v1548 = vpop.f32.mrb[0].mxu0
        %v1549 = vadd.f32 0.0, %v1548
        %v1550 = vpop.f32.mrb[0].mxu0
        %1551 = vmatprep.mubr.f32.mxu0 0.0
        %1552 = vmatmul.mubr.f32.gmra.mrb[0].mxu0 %v1000
        %v1553 = vpop.f32.mrb[0].mxu0
        %v1554 = vadd.f32 0.0, %v1553
        %v1555 = vpop.f32.mrb[0].mxu0
        %1556 = vmatprep.mubr.f32.mxu0 0.0
        %1557 = vmatmul.mubr.f32.gmra.mrb[0].mxu0 %v1003
        %v1558 = vpop.f32.mrb[0].mxu0
        %v1559 = vadd.f32 0.0, %v1558
        %v1560 = vpop.f32.mrb[0].mxu0
        %1561 = vmatprep.mubr.f32.mxu0 0.0
        %1562 = vmatmul.mubr.f32.gmra.mrb[0].mxu0 %v1006
        %v1563 = vpop.f32.mrb[0].mxu0
        %v1564 = vadd.f32 0.0, %v1563
        %v1565 = vpop.f32.mrb[0].mxu0
        %1566 = vmatprep.mubr.f32.mxu0 0.0
        %1567 = vmatmul.mubr.f32.gmra.mrb[0].mxu0 %v1009
        %v1568 = vpop.f32.mrb[0].mxu0
        %v1569 = vadd.f32 0.0, %v1568
        %v1570 = vpop.f32.mrb[0].mxu0
        %1571 = vmatprep.mubr.f32.mxu0 0.0
        %1572 = vmatmul.mubr.f32.gmra.mrb[0].mxu0 %v1012
        %v1573 = vpop.f32.mrb[0].mxu0
        %v1574 = vadd.f32 0.0, %v1573
        %v1575 = vpop.f32.mrb[0].mxu0
        %1576 = vmatprep.mubr.f32.mxu0 0.0
        %1577 = vmatmul.mubr.f32.gmra.mrb[0].mxu0 %v1015
        %v1578 = vpop.f32.mrb[0].mxu0
        %v1579 = vadd.f32 0.0, %v1578
        %v1580 = vpop.f32.mrb[0].mxu0
        %1581 = vmatprep.mubr.f32.mxu0 0.0
        %1582 = vmatmul.mubr.f32.gmra.mrb[0].mxu0 %v1018
        %v1583 = vpop.f32.mrb[0].mxu0
        %v1584 = vadd.f32 0.0, %v1583
        %v1585 = vpop.f32.mrb[0].mxu0
        %1586 = vmatprep.mubr.f32.mxu0 0.0
        %1587 = vmatmul.mubr.f32.gmra.mrb[0].mxu0 %v1021
        %v1588 = vpop.f32.mrb[0].mxu0
        %v1589 = vadd.f32 0.0, %v1588
        %v1590 = vpop.f32.mrb[0].mxu0
        %1591 = vmatprep.mubr.f32.mxu0 0.0
        %1592 = vmatmul.mubr.f32.gmra.mrb[0].mxu0 %v1024
        %v1593 = vpop.f32.mrb[0].mxu0
        %v1594 = vadd.f32 0.0, %v1593
        %v1595 = vpop.f32.mrb[0].mxu0
        %1596 = vmatprep.mubr.f32.mxu0 0.0
        %1597 = vmatmul.mubr.f32.gmra.mrb[0].mxu0 %v1027
        %v1598 = vpop.f32.mrb[0].mxu0
        %v1599 = vadd.f32 0.0, %v1598
        %v1600 = vpop.f32.mrb[0].mxu0
        %1601 = vmatprep.mubr.f32.mxu0 0.0
        %1602 = vmatmul.mubr.f32.gmra.mrb[0].mxu0 %v1030
        %v1603 = vpop.f32.mrb[0].mxu0
        %v1604 = vadd.f32 0.0, %v1603
        %v1605 = vpop.f32.mrb[0].mxu0
        %1606 = vmatprep.mubr.f32.mxu0 0.0
        %1607 = vmatmul.mubr.f32.gmra.mrb[0].mxu0 %v1033
        %v1608 = vpop.f32.mrb[0].mxu0
        %v1609 = vadd.f32 0.0, %v1608
        %v1610 = vpop.f32.mrb[0].mxu0
        %1611 = vmatprep.mubr.f32.mxu0 0.0
        %1612 = vmatmul.mubr.f32.gmra.mrb[0].mxu0 %v1036
        %v1613 = vpop.f32.mrb[0].mxu0
        %v1614 = vadd.f32 0.0, %v1613
        %v1615 = vpop.f32.mrb[0].mxu0
        %1616 = vmatprep.mubr.f32.mxu0 0.0
        %1617 = vmatmul.mubr.f32.gmra.mrb[0].mxu0 %v1039
        %v1618 = vpop.f32.mrb[0].mxu0
        %v1619 = vadd.f32 0.0, %v1618
        %v1620 = vpop.f32.mrb[0].mxu0
        %1621 = vmatprep.mubr.f32.mxu0 0.0
        %1622 = vmatmul.mubr.f32.gmra.mrb[0].mxu0 %v1042
        %v1623 = vpop.f32.mrb[0].mxu0
        %v1624 = vadd.f32 0.0, %v1623
        %v1625 = vpop.f32.mrb[0].mxu0
        %1626 = vmatprep.mubr.f32.mxu0 0.0
        %1627 = vmatmul.mubr.f32.gmra.mrb[0].mxu0 %v1045
        %v1628 = vpop.f32.mrb[0].mxu0
        %v1629 = vadd.f32 0.0, %v1628
        %v1630 = vpop.f32.mrb[0].mxu0
        %1631 = vmatprep.mubr.f32.mxu0 0.0
        %1632 = vmatmul.mubr.f32.gmra.mrb[0].mxu0 %v1048
        %v1633 = vpop.f32.mrb[0].mxu0
        %v1634 = vadd.f32 0.0, %v1633
        %v1635 = vpop.f32.mrb[0].mxu0
        %1636 = vmatprep.mubr.f32.mxu0 0.0
        %1637 = vmatmul.mubr.f32.gmra.mrb[0].mxu0 %v1051
        %v1638 = vpop.f32.mrb[0].mxu0
        %v1639 = vadd.f32 0.0, %v1638
        %v1640 = vpop.f32.mrb[0].mxu0
        %1641 = vmatprep.mubr.f32.mxu0 0.0
        %1642 = vmatmul.mubr.f32.gmra.mrb[0].mxu0 %v1054
        %v1643 = vpop.f32.mrb[0].mxu0
        %v1644 = vadd.f32 0.0, %v1643
        %v1645 = vpop.f32.mrb[0].mxu0
        %1646 = vmatprep.mubr.f32.mxu0 0.0
        %1647 = vmatmul.mubr.f32.gmra.mrb[0].mxu0 %v1057
        %v1648 = vpop.f32.mrb[0].mxu0
        %v1649 = vadd.f32 0.0, %v1648
        %v1650 = vpop.f32.mrb[0].mxu0
        %1651 = vmatprep.mubr.f32.mxu0 0.0
        %1652 = vmatmul.mubr.f32.gmra.mrb[0].mxu0 %v1060
        %v1653 = vpop.f32.mrb[0].mxu0
        %v1654 = vadd.f32 0.0, %v1653
        %v1655 = vpop.f32.mrb[0].mxu0
        %1656 = vmatprep.mubr.f32.mxu0 0.0
        %1657 = vmatmul.mubr.f32.gmra.mrb[0].mxu0 %v1063
        %v1658 = vpop.f32.mrb[0].mxu0
        %v1659 = vadd.f32 0.0, %v1658
        %v1660 = vpop.f32.mrb[0].mxu0
        %1661 = vmatprep.mubr.f32.mxu0 0.0
        %1662 = vmatmul.mubr.f32.gmra.mrb[0].mxu0 %v1066
        %v1663 = vpop.f32.mrb[0].mxu0
        %v1664 = vadd.f32 0.0, %v1663
        %v1665 = vpop.f32.mrb[0].mxu0
        %1666 = vmatprep.mubr.f32.mxu0 0.0
        %1667 = vmatmul.mubr.f32.gmra.mrb[0].mxu0 %v1069
        %v1668 = vpop.f32.mrb[0].mxu0
        %v1669 = vadd.f32 0.0, %v1668
        %v1670 = vpop.f32.mrb[0].mxu0
        %1671 = vmatprep.mubr.f32.mxu0 0.0
        %1672 = vmatmul.mubr.f32.gmra.mrb[0].mxu0 %v1072
        %v1673 = vpop.f32.mrb[0].mxu0
        %v1674 = vadd.f32 0.0, %v1673
        %v1675 = vpop.f32.mrb[0].mxu0
        %1676 = vmatprep.mubr.f32.mxu0 0.0
        %1677 = vmatmul.mubr.f32.gmra.mrb[0].mxu0 %v1075
        %v1678 = vpop.f32.mrb[0].mxu0
        %v1679 = vadd.f32 0.0, %v1678
        %v1680 = vpop.f32.mrb[0].mxu0
        %1681 = vmatprep.mubr.f32.mxu0 0.0
        %1682 = vmatmul.mubr.f32.gmra.mrb[0].mxu0 %v1078
        %v1683 = vpop.f32.mrb[0].mxu0
        %v1684 = vadd.f32 0.0, %v1683
        %v1685 = vpop.f32.mrb[0].mxu0
        %1686 = vmatprep.mubr.f32.mxu0 0.0
        %1687 = vmatmul.mubr.f32.gmra.mrb[0].mxu0 %v1081
        %v1688 = vpop.f32.mrb[0].mxu0
        %v1689 = vadd.f32 0.0, %v1688
        %v1690 = vpop.f32.mrb[0].mxu0
        %1691 = vmatprep.mubr.f32.mxu0 0.0
        %1692 = vmatmul.mubr.f32.gmra.mrb[0].mxu0 %v1084
        %v1693 = vpop.f32.mrb[0].mxu0
        %v1694 = vadd.f32 0.0, %v1693
        %v1695 = vpop.f32.mrb[0].mxu0
        %1696 = vmatprep.mubr.f32.mxu0 0.0
        %1697 = vmatmul.mubr.f32.gmra.mrb[0].mxu0 %v1087
        %v1698 = vpop.f32.mrb[0].mxu0
        %v1699 = vadd.f32 0.0, %v1698
        %v1700 = vpop.f32.mrb[0].mxu0
        %1701 = vmatprep.mubr.f32.mxu0 0.0
        %1702 = vmatmul.mubr.f32.gmra.mrb[0].mxu0 %v1090
        %v1703 = vpop.f32.mrb[0].mxu0
        %v1704 = vadd.f32 0.0, %v1703
        %v1705 = vpop.f32.mrb[0].mxu0
        %1706 = vmatprep.mubr.f32.mxu0 0.0
        %1707 = vmatmul.mubr.f32.gmra.mrb[0].mxu0 %v1093
        %v1708 = vpop.f32.mrb[0].mxu0
        %v1709 = vadd.f32 0.0, %v1708
        %v1710 = vpop.f32.mrb[0].mxu0
        %1711 = vmatprep.mubr.f32.mxu0 0.0
        %1712 = vmatmul.mubr.f32.gmra.mrb[0].mxu0 %v1096
        %v1713 = vpop.f32.mrb[0].mxu0
        %v1714 = vadd.f32 0.0, %v1713
        %v1715 = vpop.f32.mrb[0].mxu0
        %1716 = vmatprep.mubr.f32.mxu0 0.0
        %1717 = vmatmul.mubr.f32.gmra.mrb[0].mxu0 %v1099
        %v1718 = vpop.f32.mrb[0].mxu0
        %v1719 = vadd.f32 0.0, %v1718
        %v1720 = vpop.f32.mrb[0].mxu0
        %1721 = vmatprep.mubr.f32.mxu0 0.0
        %1722 = vmatmul.mubr.f32.gmra.mrb[0].mxu0 %v1102
        %v1723 = vpop.f32.mrb[0].mxu0
        %v1724 = vadd.f32 0.0, %v1723
        %v1725 = vpop.f32.mrb[0].mxu0
        %1726 = vmatprep.mubr.f32.mxu0 0.0
        %1727 = vmatmul.mubr.f32.gmra.mrb[0].mxu0 %v1105
        %v1728 = vpop.f32.mrb[0].mxu0
        %v1729 = vadd.f32 0.0, %v1728
        %v1730 = vpop.f32.mrb[0].mxu0
        %1731 = vmatprep.mubr.f32.mxu0 0.0
        %1732 = vmatmul.mubr.f32.gmra.mrb[0].mxu0 %v1108
        %v1733 = vpop.f32.mrb[0].mxu0
        %v1734 = vadd.f32 0.0, %v1733
        %v1735 = vpop.f32.mrb[0].mxu0
        %1736 = vmatprep.mubr.f32.mxu0 0.0
        %1737 = vmatmul.mubr.f32.gmra.mrb[0].mxu0 %v1111
        %v1738 = vpop.f32.mrb[0].mxu0
        %v1739 = vadd.f32 0.0, %v1738
        %v1740 = vpop.f32.mrb[0].mxu0
        %1741 = vmatprep.mubr.f32.mxu0 0.0
        %1742 = vmatmul.mubr.f32.gmra.mrb[0].mxu0 %v1114
        %v1743 = vpop.f32.mrb[0].mxu0
        %v1744 = vadd.f32 0.0, %v1743
        %v1745 = vpop.f32.mrb[0].mxu0
        %1746 = vmatprep.mubr.f32.mxu0 0.0
        %1747 = vmatmul.mubr.f32.gmra.mrb[0].mxu0 %v1117
        %v1748 = vpop.f32.mrb[0].mxu0
        %v1749 = vadd.f32 0.0, %v1748
        %v1750 = vpop.f32.mrb[0].mxu0
        %1751 = vmatprep.mubr.f32.mxu0 0.0
        %1752 = vmatmul.mubr.f32.gmra.mrb[0].mxu0 %v1120
        %v1753 = vpop.f32.mrb[0].mxu0
        %v1754 = vadd.f32 0.0, %v1753
        %v1755 = vpop.f32.mrb[0].mxu0
        %1756 = vmatprep.mubr.f32.mxu0 0.0
        %1757 = vmatmul.mubr.f32.gmra.mrb[0].mxu0 %v1123
        %v1758 = vpop.f32.mrb[0].mxu0
        %v1759 = vadd.f32 0.0, %v1758
        %v1760 = vpop.f32.mrb[0].mxu0
        %1761 = vmatprep.mubr.f32.mxu0 0.0
        %1762 = vmatmul.mubr.f32.gmra.mrb[0].mxu0 %v1126
        %v1763 = vpop.f32.mrb[0].mxu0
        %v1764 = vadd.f32 0.0, %v1763
        %v1765 = vpop.f32.mrb[0].mxu0
        %1766 = vmatprep.mubr.f32.mxu0 0.0
        %1767 = vmatmul.mubr.f32.gmra.mrb[0].mxu0 %v1129
        %v1768 = vpop.f32.mrb[0].mxu0
        %v1769 = vadd.f32 0.0, %v1768
        %v1770 = vpop.f32.mrb[0].mxu0
        %1771 = vmatprep.mubr.f32.mxu0 0.0
        %1772 = vmatmul.mubr.f32.gmra.mrb[0].mxu0 %v1132
        %v1773 = vpop.f32.mrb[0].mxu0
        %v1774 = vadd.f32 0.0, %v1773
        %v1775 = vpop.f32.mrb[0].mxu0
        %1776 = vmatprep.mubr.f32.mxu0 0.0
        %1777 = vmatmul.mubr.f32.gmra.mrb[0].mxu0 %v1135
        %v1778 = vpop.f32.mrb[0].mxu0
        %v1779 = vadd.f32 0.0, %v1778
        %v1780 = vpop.f32.mrb[0].mxu0
        %1781 = vmatprep.mubr.f32.mxu0 0.0
        %1782 = vmatmul.mubr.f32.gmra.mrb[0].mxu0 %v1138
        %v1783 = vpop.f32.mrb[0].mxu0
        %v1784 = vadd.f32 0.0, %v1783
        %v1785 = vpop.f32.mrb[0].mxu0
        %1786 = vmatprep.mubr.f32.mxu0 0.0
        %1787 = vmatmul.mubr.f32.gmra.mrb[0].mxu0 %v1141
        %v1788 = vpop.f32.mrb[0].mxu0
        %v1789 = vadd.f32 0.0, %v1788
        %v1790 = vpop.f32.mrb[0].mxu0
        %1791 = vmatprep.mubr.f32.mxu0 0.0
        %1792 = vmatmul.mubr.f32.gmra.mrb[0].mxu0 %v1144
        %v1793 = vpop.f32.mrb[0].mxu0
        %v1794 = vadd.f32 0.0, %v1793
        %v1795 = vpop.f32.mrb[0].mxu0
        %1796 = vmatprep.mubr.f32.mxu0 0.0
        %1797 = vmatmul.mubr.f32.gmra.mrb[0].mxu0 %v1147
        %v1798 = vpop.f32.mrb[0].mxu0
        %v1799 = vadd.f32 0.0, %v1798
        %v1800 = vpop.f32.mrb[0].mxu0
        %1801 = vmatprep.mubr.f32.mxu0 0.0
        %1802 = vmatmul.mubr.f32.gmra.mrb[0].mxu0 %v1150
        %v1803 = vpop.f32.mrb[0].mxu0
        %v1804 = vadd.f32 0.0, %v1803
        %v1805 = vpop.f32.mrb[0].mxu0
        %1806 = vmatprep.mubr.f32.mxu0 0.0
        %1807 = vmatmul.mubr.f32.gmra.mrb[0].mxu0 %v1153
        %v1808 = vpop.f32.mrb[0].mxu0
        %v1809 = vadd.f32 0.0, %v1808
        %v1810 = vpop.f32.mrb[0].mxu0
        %1811 = vmatprep.mubr.f32.mxu0 0.0
        %1812 = vmatmul.mubr.f32.gmra.mrb[0].mxu0 %v1156
        %v1813 = vpop.f32.mrb[0].mxu0
        %v1814 = vadd.f32 0.0, %v1813
        %v1815 = vpop.f32.mrb[0].mxu0
        %1816 = vmatprep.mubr.f32.mxu0 0.0
        %1817 = vmatmul.mubr.f32.gmra.mrb[0].mxu0 %v1159
        %v1818 = vpop.f32.mrb[0].mxu0
        %v1819 = vadd.f32 0.0, %v1818
        %v1820 = vpop.f32.mrb[0].mxu0
        %1821 = vmatprep.mubr.f32.mxu0 0.0
        %1822 = vmatmul.mubr.f32.gmra.mrb[0].mxu0 %v1162
        %v1823 = vpop.f32.mrb[0].mxu0
        %v1824 = vadd.f32 0.0, %v1823
        %v1825 = vpop.f32.mrb[0].mxu0
        %1826 = vmatprep.mubr.f32.mxu0 0.0
        %1827 = vmatmul.mubr.f32.gmra.mrb[0].mxu0 %v1165
        %v1828 = vpop.f32.mrb[0].mxu0
        %v1829 = vadd.f32 0.0, %v1828
        %v1830 = vpop.f32.mrb[0].mxu0
        %1831 = vmatprep.mubr.f32.mxu0 0.0
        %1832 = vmatmul.mubr.f32.gmra.mrb[0].mxu0 %v1168
        %v1833 = vpop.f32.mrb[0].mxu0
        %v1834 = vadd.f32 0.0, %v1833
        %v1835 = vpop.f32.mrb[0].mxu0
        %1836 = vmatprep.mubr.f32.mxu0 0.0
        %1837 = vmatmul.mubr.f32.gmra.mrb[0].mxu0 %v1171
        %v1838 = vpop.f32.mrb[0].mxu0
        %v1839 = vadd.f32 0.0, %v1838
        %v1840 = vpop.f32.mrb[0].mxu0
        %1841 = vmatprep.mubr.f32.mxu0 0.0
        %1842 = vmatmul.mubr.f32.gmra.mrb[0].mxu0 %v1174
        %v1843 = vpop.f32.mrb[0].mxu0
        %v1844 = vadd.f32 0.0, %v1843
        %v1845 = vpop.f32.mrb[0].mxu0
        %1846 = vmatprep.mubr.f32.mxu0 0.0
        %1847 = vmatmul.mubr.f32.gmra.mrb[0].mxu0 %v1177
        %v1848 = vpop.f32.mrb[0].mxu0
        %v1849 = vadd.f32 0.0, %v1848
        %v1850 = vpop.f32.mrb[0].mxu0
        %1851 = vmatprep.mubr.f32.mxu0 0.0
        %1852 = vmatmul.mubr.f32.gmra.mrb[0].mxu0 %v1180
        %v1853 = vpop.f32.mrb[0].mxu0
        %v1854 = vadd.f32 0.0, %v1853
        %v1855 = vpop.f32.mrb[0].mxu0
        %1856 = vmatprep.mubr.f32.mxu0 0.0
        %1857 = vmatmul.mubr.f32.gmra.mrb[0].mxu0 %v1183
        %v1858 = vpop.f32.mrb[0].mxu0
        %v1859 = vadd.f32 0.0, %v1858
        %v1860 = vpop.f32.mrb[0].mxu0
        %1861 = vmatprep.mubr.f32.mxu0 0.0
        %1862 = vmatmul.mubr.f32.gmra.mrb[0].mxu0 %v1186
        %v1863 = vpop.f32.mrb[0].mxu0
        %v1864 = vadd.f32 0.0, %v1863
        %v1865 = vpop.f32.mrb[0].mxu0
        %1866 = vmatprep.mubr.f32.mxu0 0.0
        %1867 = vmatmul.mubr.f32.gmra.mrb[0].mxu0 %v1189
        %v1868 = vpop.f32.mrb[0].mxu0
        %v1869 = vadd.f32 0.0, %v1868
        %v1870 = vpop.f32.mrb[0].mxu0
        %1871 = vmatprep.mubr.f32.mxu0 0.0
        %1872 = vmatmul.mubr.f32.gmra.mrb[0].mxu0 %v1192
        %v1873 = vpop.f32.mrb[0].mxu0
        %v1874 = vadd.f32 0.0, %v1873
        %v1875 = vpop.f32.mrb[0].mxu0
        %1876 = vmatprep.mubr.f32.mxu0 0.0
        %1877 = vmatmul.mubr.f32.gmra.mrb[0].mxu0 %v1195
        %v1878 = vpop.f32.mrb[0].mxu0
        %v1879 = vadd.f32 0.0, %v1878
        %v1880 = vpop.f32.mrb[0].mxu0
        %1881 = vmatprep.mubr.f32.mxu0 0.0
        %1882 = vmatmul.mubr.f32.gmra.mrb[0].mxu0 %v1198
        %v1883 = vpop.f32.mrb[0].mxu0
        %v1884 = vadd.f32 0.0, %v1883
        %v1885 = vpop.f32.mrb[0].mxu0
        %1886 = vmatprep.mubr.f32.mxu0 0.0
        %1887 = vmatmul.mubr.f32.gmra.mrb[0].mxu0 %v1201
        %v1888 = vpop.f32.mrb[0].mxu0
        %v1889 = vadd.f32 0.0, %v1888
        %v1890 = vpop.f32.mrb[0].mxu0
        %1891 = vmatprep.mubr.f32.mxu0 0.0
        %1892 = vmatmul.mubr.f32.gmra.mrb[0].mxu0 %v1204
        %v1893 = vpop.f32.mrb[0].mxu0
        %v1894 = vadd.f32 0.0, %v1893
        %v1895 = vpop.f32.mrb[0].mxu0
        %1896 = vmatprep.mubr.f32.mxu0 0.0
        %1897 = vmatmul.mubr.f32.gmra.mrb[0].mxu0 %v1207
        %v1898 = vpop.f32.mrb[0].mxu0
        %v1899 = vadd.f32 0.0, %v1898
        %v1900 = vpop.f32.mrb[0].mxu0
        %1901 = vmatprep.mubr.f32.mxu0 0.0
        %1902 = vmatmul.mubr.f32.gmra.mrb[0].mxu0 %v1210
        %v1903 = vpop.f32.mrb[0].mxu0
        %v1904 = vadd.f32 0.0, %v1903
        %v1905 = vpop.f32.mrb[0].mxu0
        %1906 = vmatprep.mubr.f32.mxu0 0.0
        %1907 = vmatmul.mubr.f32.gmra.mrb[0].mxu0 %v1213
        %v1908 = vpop.f32.mrb[0].mxu0
        %v1909 = vadd.f32 0.0, %v1908
        %v1910 = vpop.f32.mrb[0].mxu0
        %1911 = vmatprep.mubr.f32.mxu0 0.0
        %1912 = vmatmul.mubr.f32.gmra.mrb[0].mxu0 %v1216
        %v1913 = vpop.f32.mrb[0].mxu0
        %v1914 = vadd.f32 0.0, %v1913
        %v1915 = vpop.f32.mrb[0].mxu0
        %1916 = vmatprep.mubr.f32.mxu0 0.0
        %1917 = vmatmul.mubr.f32.gmra.mrb[0].mxu0 %v1219
        %v1918 = vpop.f32.mrb[0].mxu0
        %v1919 = vadd.f32 0.0, %v1918
        %v1920 = vpop.f32.mrb[0].mxu0
        %1921 = vmatprep.mubr.f32.mxu0 0.0
        %1922 = vmatmul.mubr.f32.gmra.mrb[0].mxu0 %v1222
        %v1923 = vpop.f32.mrb[0].mxu0
        %v1924 = vadd.f32 0.0, %v1923
        %v1925 = vpop.f32.mrb[0].mxu0
        %1926 = vmatprep.mubr.f32.mxu0 0.0
        %1927 = vmatmul.mubr.f32.gmra.mrb[0].mxu0 %v1225
        %v1928 = vpop.f32.mrb[0].mxu0
        %v1929 = vadd.f32 0.0, %v1928
        %v1930 = vpop.f32.mrb[0].mxu0
        %1931 = vmatprep.mubr.f32.mxu0 0.0
        %1932 = vmatmul.mubr.f32.gmra.mrb[0].mxu0 %v1228
        %v1933 = vpop.f32.mrb[0].mxu0
        %v1934 = vadd.f32 0.0, %v1933
        %v1935 = vpop.f32.mrb[0].mxu0
        %1936 = vmatprep.mubr.f32.mxu0 0.0
        %1937 = vmatmul.mubr.f32.gmra.mrb[0].mxu0 %v1231
        %v1938 = vpop.f32.mrb[0].mxu0
        %v1939 = vadd.f32 0.0, %v1938
        %v1940 = vpop.f32.mrb[0].mxu0
        %1941 = vdwg.mxu0
        %v1942 = vmax.f32 %v1304, %v1464
        %v1943 = vmax.f32 %v1309, %v1469
        %v1944 = vmax.f32 %v1314, %v1474
        %v1945 = vmax.f32 %v1319, %v1479
        %v1946 = vmax.f32 %v1324, %v1484
        %v1947 = vmax.f32 %v1329, %v1489
        %v1948 = vmax.f32 %v1334, %v1494
        %v1949 = vmax.f32 %v1339, %v1499
        %v1950 = vmax.f32 %v1344, %v1504
        %v1951 = vmax.f32 %v1349, %v1509
        %v1952 = vmax.f32 %v1354, %v1514
        %v1953 = vmax.f32 %v1359, %v1519
        %v1954 = vmax.f32 %v1364, %v1524
        %v1955 = vmax.f32 %v1369, %v1529
        %v1956 = vmax.f32 %v1374, %v1534
        %v1957 = vmax.f32 %v1379, %v1539
        %v1958 = vmax.f32 %v1384, %v1544
        %v1959 = vmax.f32 %v1389, %v1549
        %v1960 = vmax.f32 %v1394, %v1554
        %v1961 = vmax.f32 %v1399, %v1559
        %v1962 = vmax.f32 %v1404, %v1564
        %v1963 = vmax.f32 %v1409, %v1569
        %v1964 = vmax.f32 %v1414, %v1574
        %v1965 = vmax.f32 %v1419, %v1579
        %v1966 = vmax.f32 %v1424, %v1584
        %v1967 = vmax.f32 %v1429, %v1589
        %v1968 = vmax.f32 %v1434, %v1594
        %v1969 = vmax.f32 %v1439, %v1599
        %v1970 = vmax.f32 %v1444, %v1604
        %v1971 = vmax.f32 %v1449, %v1609
        %v1972 = vmax.f32 %v1454, %v1614
        %v1973 = vmax.f32 %v1459, %v1619
        %v1974 = vmax.f32 %v1624, %v1784
        %v1975 = vmax.f32 %v1629, %v1789
        %v1976 = vmax.f32 %v1634, %v1794
        %v1977 = vmax.f32 %v1639, %v1799
        %v1978 = vmax.f32 %v1644, %v1804
        %v1979 = vmax.f32 %v1649, %v1809
        %v1980 = vmax.f32 %v1654, %v1814
        %v1981 = vmax.f32 %v1659, %v1819
        %v1982 = vmax.f32 %v1664, %v1824
        %v1983 = vmax.f32 %v1669, %v1829
        %v1984 = vmax.f32 %v1674, %v1834
        %v1985 = vmax.f32 %v1679, %v1839
        %v1986 = vmax.f32 %v1684, %v1844
        %v1987 = vmax.f32 %v1689, %v1849
        %v1988 = vmax.f32 %v1694, %v1854
        %v1989 = vmax.f32 %v1699, %v1859
        %v1990 = vmax.f32 %v1704, %v1864
        %v1991 = vmax.f32 %v1709, %v1869
        %v1992 = vmax.f32 %v1714, %v1874
        %v1993 = vmax.f32 %v1719, %v1879
        %v1994 = vmax.f32 %v1724, %v1884
        %v1995 = vmax.f32 %v1729, %v1889
        %v1996 = vmax.f32 %v1734, %v1894
        %v1997 = vmax.f32 %v1739, %v1899
        %v1998 = vmax.f32 %v1744, %v1904
        %v1999 = vmax.f32 %v1749, %v1909
        %v2000 = vmax.f32 %v1754, %v1914
        %v2001 = vmax.f32 %v1759, %v1919
        %v2002 = vmax.f32 %v1764, %v1924
        %v2003 = vmax.f32 %v1769, %v1929
        %v2004 = vmax.f32 %v1774, %v1934
        %v2005 = vmax.f32 %v1779, %v1939
        %v2006 = vmax.f32 %v1942, %v1974
        %v2007 = vmax.f32 %v1943, %v1975
        %v2008 = vmax.f32 %v1944, %v1976
        %v2009 = vmax.f32 %v1945, %v1977
        %v2010 = vmax.f32 %v1946, %v1978
        %v2011 = vmax.f32 %v1947, %v1979
        %v2012 = vmax.f32 %v1948, %v1980
        %v2013 = vmax.f32 %v1949, %v1981
        %v2014 = vmax.f32 %v1950, %v1982
        %v2015 = vmax.f32 %v1951, %v1983
        %v2016 = vmax.f32 %v1952, %v1984
        %v2017 = vmax.f32 %v1953, %v1985
        %v2018 = vmax.f32 %v1954, %v1986
        %v2019 = vmax.f32 %v1955, %v1987
        %v2020 = vmax.f32 %v1956, %v1988
        %v2021 = vmax.f32 %v1957, %v1989
        %v2022 = vmax.f32 %v1958, %v1990
        %v2023 = vmax.f32 %v1959, %v1991
        %v2024 = vmax.f32 %v1960, %v1992
        %v2025 = vmax.f32 %v1961, %v1993
        %v2026 = vmax.f32 %v1962, %v1994
        %v2027 = vmax.f32 %v1963, %v1995
        %v2028 = vmax.f32 %v1964, %v1996
        %v2029 = vmax.f32 %v1965, %v1997
        %v2030 = vmax.f32 %v1966, %v1998
        %v2031 = vmax.f32 %v1967, %v1999
        %v2032 = vmax.f32 %v1968, %v2000
        %v2033 = vmax.f32 %v1969, %v2001
        %v2034 = vmax.f32 %v1970, %v2002
        %v2035 = vmax.f32 %v1971, %v2003
        %v2036 = vmax.f32 %v1972, %v2004
        %v2037 = vmax.f32 %v1973, %v2005
        %v2038 = vld [vmem:[%s2] sm:$0x1]
        %v2040 = vlaneseq
        %v2041 = vshrl.u32 %v2040, 7
        %v2042 = vsub.s32 0, %v2041
        %v2043 = vrot.slane %v2038, %v2042
        %v2045 = vadd.f32 %v2006, %v2043
        %v2046 = vadd.f32 %v2007, %v2043
        %v2047 = vadd.f32 %v2008, %v2043
        %v2048 = vadd.f32 %v2009, %v2043
        %v2049 = vadd.f32 %v2010, %v2043
        %v2050 = vadd.f32 %v2011, %v2043
        %v2051 = vadd.f32 %v2012, %v2043
        %v2052 = vadd.f32 %v2013, %v2043
        %v2053 = vadd.f32 %v2014, %v2043
        %v2054 = vadd.f32 %v2015, %v2043
        %v2055 = vadd.f32 %v2016, %v2043
        %v2056 = vadd.f32 %v2017, %v2043
        %v2057 = vadd.f32 %v2018, %v2043
        %v2058 = vadd.f32 %v2019, %v2043
        %v2059 = vadd.f32 %v2020, %v2043
        %v2060 = vadd.f32 %v2021, %v2043
        %v2061 = vadd.f32 %v2022, %v2043
        %v2062 = vadd.f32 %v2023, %v2043
        %v2063 = vadd.f32 %v2024, %v2043
        %v2064 = vadd.f32 %v2025, %v2043
        %v2065 = vadd.f32 %v2026, %v2043
        %v2066 = vadd.f32 %v2027, %v2043
        %v2067 = vadd.f32 %v2028, %v2043
        %v2068 = vadd.f32 %v2029, %v2043
        %v2069 = vadd.f32 %v2030, %v2043
        %v2070 = vadd.f32 %v2031, %v2043
        %v2071 = vadd.f32 %v2032, %v2043
        %v2072 = vadd.f32 %v2033, %v2043
        %v2073 = vadd.f32 %v2034, %v2043
        %v2074 = vadd.f32 %v2035, %v2043
        %v2075 = vadd.f32 %v2036, %v2043
        %v2076 = vadd.f32 %v2037, %v2043
        %v2077 = vmax.f32 %v2045, 0.0
        %v2078 = vmax.f32 %v2046, 0.0
        %v2079 = vmax.f32 %v2047, 0.0
        %v2080 = vmax.f32 %v2048, 0.0
        %v2081 = vmax.f32 %v2049, 0.0
        %v2082 = vmax.f32 %v2050, 0.0
        %v2083 = vmax.f32 %v2051, 0.0
        %v2084 = vmax.f32 %v2052, 0.0
        %v2085 = vmax.f32 %v2053, 0.0
        %v2086 = vmax.f32 %v2054, 0.0
        %v2087 = vmax.f32 %v2055, 0.0
        %v2088 = vmax.f32 %v2056, 0.0
        %v2089 = vmax.f32 %v2057, 0.0
        %v2090 = vmax.f32 %v2058, 0.0
        %v2091 = vmax.f32 %v2059, 0.0
        %v2092 = vmax.f32 %v2060, 0.0
        %v2093 = vmax.f32 %v2061, 0.0
        %v2094 = vmax.f32 %v2062, 0.0
        %v2095 = vmax.f32 %v2063, 0.0
        %v2096 = vmax.f32 %v2064, 0.0
        %v2097 = vmax.f32 %v2065, 0.0
        %v2098 = vmax.f32 %v2066, 0.0
        %v2099 = vmax.f32 %v2067, 0.0
        %v2100 = vmax.f32 %v2068, 0.0
        %v2101 = vmax.f32 %v2069, 0.0
        %v2102 = vmax.f32 %v2070, 0.0
        %v2103 = vmax.f32 %v2071, 0.0
        %v2104 = vmax.f32 %v2072, 0.0
        %v2105 = vmax.f32 %v2073, 0.0
        %v2106 = vmax.f32 %v2074, 0.0
        %v2107 = vmax.f32 %v2075, 0.0
        %v2108 = vmax.f32 %v2076, 0.0
        %2109 = vst [vmem:[%s714] sm:$0xff] %v2077
        %2110 = vst [vmem:[%s714 + $0x8] sm:$0xff] %v2078
        %2111 = vst [vmem:[%s714 + $0x10] sm:$0xff] %v2079
        %2112 = vst [vmem:[%s714 + $0x18] sm:$0xff] %v2080
        %2113 = vst [vmem:[%s714 + $0x20] sm:$0xff] %v2081
        %2114 = vst [vmem:[%s714 + $0x28] sm:$0xff] %v2082
        %2115 = vst [vmem:[%s714 + $0x30] sm:$0xff] %v2083
        %2116 = vst [vmem:[%s714 + $0x38] sm:$0xff] %v2084
        %2117 = vst [vmem:[%s714 + $0x40] sm:$0xff] %v2085
        %2118 = vst [vmem:[%s714 + $0x48] sm:$0xff] %v2086
        %2119 = vst [vmem:[%s714 + $0x50] sm:$0xff] %v2087
        %2120 = vst [vmem:[%s714 + $0x58] sm:$0xff] %v2088
        %2121 = vst [vmem:[%s714 + $0x60] sm:$0xff] %v2089
        %2122 = vst [vmem:[%s714 + $0x68] sm:$0xff] %v2090
        %2123 = vst [vmem:[%s714 + $0x70] sm:$0xff] %v2091
        %2124 = vst [vmem:[%s714 + $0x78] sm:$0xff] %v2092
        %2125 = vst [vmem:[%s714 + $0x80] sm:$0xff] %v2093
        %2126 = vst [vmem:[%s714 + $0x88] sm:$0xff] %v2094
        %2127 = vst [vmem:[%s714 + $0x90] sm:$0xff] %v2095
        %2128 = vst [vmem:[%s714 + $0x98] sm:$0xff] %v2096
        %2129 = vst [vmem:[%s714 + $0xa0] sm:$0xff] %v2097
        %2130 = vst [vmem:[%s714 + $0xa8] sm:$0xff] %v2098
        %2131 = vst [vmem:[%s714 + $0xb0] sm:$0xff] %v2099
        %2132 = vst [vmem:[%s714 + $0xb8] sm:$0xff] %v2100
        %2133 = vst [vmem:[%s714 + $0xc0] sm:$0xff] %v2101
        %2134 = vst [vmem:[%s714 + $0xc8] sm:$0xff] %v2102
        %2135 = vst [vmem:[%s714 + $0xd0] sm:$0xff] %v2103
        %2136 = vst [vmem:[%s714 + $0xd8] sm:$0xff] %v2104
        %2137 = vst [vmem:[%s714 + $0xe0] sm:$0xff] %v2105
        %2138 = vst [vmem:[%s714 + $0xe8] sm:$0xff] %v2106
        %2139 = vst [vmem:[%s714 + $0xf0] sm:$0xff] %v2107
        %2140 = vst [vmem:[%s714 + $0xf8] sm:$0xff] %v2108
        %s2141 = smul.u32 32, %s14
        %p2142 = scmp.lt.s32.totalorder %s2141, 63
        %s2143 = scalar_select %p2142, %s2141, 63
        %s2144 = smul.addr %s2143, 8
        %s2145 = scalar_lea.vmem %s3, %s2144
        // Predicated region
        $region71: #{simple_cnn_forward.3} parent=65 // pred_check
          %p2146 = pneg %p100
        $region72: #{simple_cnn_forward.3} parent=65 // pred_check_branch
          %2148 = sbr.rel (%p2146) target = $region74
        $region73: #{simple_cnn_forward.3} parent=65 // pred_region
          %s2149 = smul.u32 32, %s14
        $region74: #{simple_cnn_forward.3} parent=65 // pred_fallthru
          _
      $region66: #{simple_cnn_forward.3} parent=5 // pred_fallthru
        _
      %p2150 = scmp.le.s32.totalorder 2, %s9
      // Predicated region
      $region75: #{simple_cnn_forward.3} parent=5 // pred_check
        %p2151 = pneg %p2150
      $region76: #{simple_cnn_forward.3} parent=5 // pred_check_branch
        %2153 = sbr.rel (%p2151) target = $region78
      $region77: #{simple_cnn_forward.3} parent=5 // pred_region
        %s2154 = ssub.s32 %s9, 2
        // Predicated region
        $region79: #{simple_cnn_forward.3} parent=77 // pred_check
          %p2155 = pneg %p106
        $region80: #{simple_cnn_forward.3} parent=77 // pred_check_branch
          %2157 = sbr.rel (%p2155) target = $region82
        $region81: #{simple_cnn_forward.3} parent=77 // pred_region
          %s2158 = smul.u32 32, %s15
          %p2159 = scmp.lt.s32.totalorder %s2158, 63
          %s2160 = scalar_select %p2159, %s2158, 63
          %s2161 = smul.addr %s2160, 8
          %s2162 = scalar_lea.vmem %s3, %s2161
        $region82: #{simple_cnn_forward.3} parent=77 // pred_fallthru
          _
      $region78: #{simple_cnn_forward.3} parent=5 // pred_fallthru
        _
    $region6: #{simple_cnn_forward.3} parent=1 // loop_footer
      %s13 = sadd.s32 1, %s9
    $region7: #{simple_cnn_forward.3} parent=1 // loop_footer_branch
      %8 = sbr.rel target = $region3
    $region8: #{simple_cnn_forward.3} parent=1 // loop_exit
      _

// kernel: simple_cnn_forward.4
$region0: #{simple_cnn_forward.4}
  #allocation0 [shape = 'u32[]', space=smem, size = 0x4, offset = 0x4, fixed_abs, tag = 'smem constant byte address 0x4 - core index']
  #allocation1 [shape = 'u32[144,128]{1,0:T(1,128)}', space=vmem, size = 0x12000, scoped, tag = 'internal scratch']
  %s0 = inlined_call_operand.vmem [shape: f32[4,128,288], index: 0, kind: input, shape index: {}]
  %s1 = inlined_call_operand.vmem [shape: f32[288,128], index: 1, kind: input, shape index: {}]
  %s2 = inlined_call_operand.vmem [shape: f32[1,128], index: 2, kind: input, shape index: {}]
  %s3 = inlined_call_operand.vmem [shape: f32[128,128], index: 3, kind: output, shape index: {}]
  %s4 = sld [smem:[#allocation0]]
  $region22: #{simple_cnn_forward.4} parent=0
    _
  %s6 = ssub.s32 1, %s4
  %s7 = scalar_select 0, %s6, %s4
  // Predicated region
  $region2: #{simple_cnn_forward.4} parent=0 // pred_check
    _
  $region3: #{simple_cnn_forward.4} parent=0 // pred_check_branch
    %9 = sbr.rel (0) target = $region5
  $region4: #{simple_cnn_forward.4} parent=0 // pred_region
    _
  $region5: #{simple_cnn_forward.4} parent=0 // pred_fallthru
    _
  // Predicated region
  $region6: #{simple_cnn_forward.4} parent=0 // pred_check
    _
  $region7: #{simple_cnn_forward.4} parent=0 // pred_check_branch
    %11 = sbr.rel (0) target = $region9
  $region8: #{simple_cnn_forward.4} parent=0 // pred_region
    _
  $region9: #{simple_cnn_forward.4} parent=0 // pred_fallthru
    _
  // Predicated region
  $region10: #{simple_cnn_forward.4} parent=0 // pred_check
    _
  $region11: #{simple_cnn_forward.4} parent=0 // pred_check_branch
    %13 = sbr.rel (0) target = $region13
  $region12: #{simple_cnn_forward.4} parent=0 // pred_region
    _
  $region13: #{simple_cnn_forward.4} parent=0 // pred_fallthru
    _
  %v14 = vld [vmem:[%s0] sm:$0xff]
  %v15 = vld [vmem:[%s0 + $0x8] sm:$0xff]
  %v16 = vld [vmem:[%s0 + $0x10] sm:$0xff]
  %v17 = vld [vmem:[%s0 + $0x18] sm:$0xff]
  %v18 = vld [vmem:[%s0 + $0x20] sm:$0xff]
  %v19 = vld [vmem:[%s0 + $0x28] sm:$0xff]
  %v20 = vld [vmem:[%s0 + $0x30] sm:$0xff]
  %v21 = vld [vmem:[%s0 + $0x38] sm:$0xff]
  %v22 = vld [vmem:[%s0 + $0x40] sm:$0xff]
  %v23 = vld [vmem:[%s0 + $0x48] sm:$0xff]
  %v24 = vld [vmem:[%s0 + $0x50] sm:$0xff]
  %v25 = vld [vmem:[%s0 + $0x58] sm:$0xff]
  %v26 = vld [vmem:[%s0 + $0x60] sm:$0xff]
  %v27 = vld [vmem:[%s0 + $0x68] sm:$0xff]
  %v28 = vld [vmem:[%s0 + $0x70] sm:$0xff]
  %v29 = vld [vmem:[%s0 + $0x78] sm:$0xff]
  %v30 = vld [vmem:[%s0 + $0x80] sm:$0xff]
  %v31 = vld [vmem:[%s0 + $0x88] sm:$0xff]
  %v32 = vld [vmem:[%s0 + $0x90] sm:$0xff]
  %v33 = vld [vmem:[%s0 + $0x98] sm:$0xff]
  %v34 = vld [vmem:[%s0 + $0xa0] sm:$0xff]
  %v35 = vld [vmem:[%s0 + $0xa8] sm:$0xff]
  %v36 = vld [vmem:[%s0 + $0xb0] sm:$0xff]
  %v37 = vld [vmem:[%s0 + $0xb8] sm:$0xff]
  %v38 = vld [vmem:[%s0 + $0xc0] sm:$0xff]
  %v39 = vld [vmem:[%s0 + $0xc8] sm:$0xff]
  %v40 = vld [vmem:[%s0 + $0xd0] sm:$0xff]
  %v41 = vld [vmem:[%s0 + $0xd8] sm:$0xff]
  %v42 = vld [vmem:[%s0 + $0xe0] sm:$0xff]
  %v43 = vld [vmem:[%s0 + $0xe8] sm:$0xff]
  %v44 = vld [vmem:[%s0 + $0xf0] sm:$0xff]
  %v45 = vld [vmem:[%s0 + $0xf8] sm:$0xff]
  %v46 = vld [vmem:[%s0 + $0x100] sm:$0xff]
  %v47 = vld [vmem:[%s0 + $0x108] sm:$0xff]
  %v48 = vld [vmem:[%s0 + $0x110] sm:$0xff]
  %v49 = vld [vmem:[%s0 + $0x118] sm:$0xff]
  %v50 = vld [vmem:[%s0 + $0x120] sm:$0xff]
  %v51 = vld [vmem:[%s0 + $0x128] sm:$0xff]
  %v52 = vld [vmem:[%s0 + $0x130] sm:$0xff]
  %v53 = vld [vmem:[%s0 + $0x138] sm:$0xff]
  %v54 = vld [vmem:[%s0 + $0x140] sm:$0xff]
  %v55 = vld [vmem:[%s0 + $0x148] sm:$0xff]
  %v56 = vld [vmem:[%s0 + $0x150] sm:$0xff]
  %v57 = vld [vmem:[%s0 + $0x158] sm:$0xff]
  %v58 = vld [vmem:[%s0 + $0x160] sm:$0xff]
  %v59 = vld [vmem:[%s0 + $0x168] sm:$0xff]
  %v60 = vld [vmem:[%s0 + $0x170] sm:$0xff]
  %v61 = vld [vmem:[%s0 + $0x178] sm:$0xff]
  %v62 = vld [vmem:[%s0 + $0x180] sm:$0xff]
  %v63 = vld [vmem:[%s0 + $0x188] sm:$0xff]
  %v64 = vld [vmem:[%s0 + $0x190] sm:$0xff]
  %v65 = vld [vmem:[%s0 + $0x198] sm:$0xff]
  %v66 = vld [vmem:[%s0 + $0x1a0] sm:$0xff]
  %v67 = vld [vmem:[%s0 + $0x1a8] sm:$0xff]
  %v68 = vld [vmem:[%s0 + $0x1b0] sm:$0xff]
  %v69 = vld [vmem:[%s0 + $0x1b8] sm:$0xff]
  %v70 = vld [vmem:[%s0 + $0x1c0] sm:$0xff]
  %v71 = vld [vmem:[%s0 + $0x1c8] sm:$0xff]
  %v72 = vld [vmem:[%s0 + $0x1d0] sm:$0xff]
  %v73 = vld [vmem:[%s0 + $0x1d8] sm:$0xff]
  %v74 = vld [vmem:[%s0 + $0x1e0] sm:$0xff]
  %v75 = vld [vmem:[%s0 + $0x1e8] sm:$0xff]
  %v76 = vld [vmem:[%s0 + $0x1f0] sm:$0xff]
  %v77 = vld [vmem:[%s0 + $0x1f8] sm:$0xff]
  %v78 = vld [vmem:[%s0 + $0x200] sm:$0xff]
  %v79 = vld [vmem:[%s0 + $0x208] sm:$0xff]
  %v80 = vld [vmem:[%s0 + $0x210] sm:$0xff]
  %v81 = vld [vmem:[%s0 + $0x218] sm:$0xff]
  %v82 = vld [vmem:[%s0 + $0x220] sm:$0xff]
  %v83 = vld [vmem:[%s0 + $0x228] sm:$0xff]
  %v84 = vld [vmem:[%s0 + $0x230] sm:$0xff]
  %v85 = vld [vmem:[%s0 + $0x238] sm:$0xff]
  %v86 = vld [vmem:[%s0 + $0x240] sm:$0xff]
  %v87 = vld [vmem:[%s0 + $0x248] sm:$0xff]
  %v88 = vld [vmem:[%s0 + $0x250] sm:$0xff]
  %v89 = vld [vmem:[%s0 + $0x258] sm:$0xff]
  %v90 = vld [vmem:[%s0 + $0x260] sm:$0xff]
  %v91 = vld [vmem:[%s0 + $0x268] sm:$0xff]
  %v92 = vld [vmem:[%s0 + $0x270] sm:$0xff]
  %v93 = vld [vmem:[%s0 + $0x278] sm:$0xff]
  %v94 = vld [vmem:[%s0 + $0x280] sm:$0xff]
  %v95 = vld [vmem:[%s0 + $0x288] sm:$0xff]
  %v96 = vld [vmem:[%s0 + $0x290] sm:$0xff]
  %v97 = vld [vmem:[%s0 + $0x298] sm:$0xff]
  %v98 = vld [vmem:[%s0 + $0x2a0] sm:$0xff]
  %v99 = vld [vmem:[%s0 + $0x2a8] sm:$0xff]
  %v100 = vld [vmem:[%s0 + $0x2b0] sm:$0xff]
  %v101 = vld [vmem:[%s0 + $0x2b8] sm:$0xff]
  %v102 = vld [vmem:[%s0 + $0x2c0] sm:$0xff]
  %v103 = vld [vmem:[%s0 + $0x2c8] sm:$0xff]
  %v104 = vld [vmem:[%s0 + $0x2d0] sm:$0xff]
  %v105 = vld [vmem:[%s0 + $0x2d8] sm:$0xff]
  %v106 = vld [vmem:[%s0 + $0x2e0] sm:$0xff]
  %v107 = vld [vmem:[%s0 + $0x2e8] sm:$0xff]
  %v108 = vld [vmem:[%s0 + $0x2f0] sm:$0xff]
  %v109 = vld [vmem:[%s0 + $0x2f8] sm:$0xff]
  %v110 = vld [vmem:[%s0 + $0x300] sm:$0xff]
  %v111 = vld [vmem:[%s0 + $0x308] sm:$0xff]
  %v112 = vld [vmem:[%s0 + $0x310] sm:$0xff]
  %v113 = vld [vmem:[%s0 + $0x318] sm:$0xff]
  %v114 = vld [vmem:[%s0 + $0x320] sm:$0xff]
  %v115 = vld [vmem:[%s0 + $0x328] sm:$0xff]
  %v116 = vld [vmem:[%s0 + $0x330] sm:$0xff]
  %v117 = vld [vmem:[%s0 + $0x338] sm:$0xff]
  %v118 = vld [vmem:[%s0 + $0x340] sm:$0xff]
  %v119 = vld [vmem:[%s0 + $0x348] sm:$0xff]
  %v120 = vld [vmem:[%s0 + $0x350] sm:$0xff]
  %v121 = vld [vmem:[%s0 + $0x358] sm:$0xff]
  %v122 = vld [vmem:[%s0 + $0x360] sm:$0xff]
  %v123 = vld [vmem:[%s0 + $0x368] sm:$0xff]
  %v124 = vld [vmem:[%s0 + $0x370] sm:$0xff]
  %v125 = vld [vmem:[%s0 + $0x378] sm:$0xff]
  %v126 = vld [vmem:[%s0 + $0x380] sm:$0xff]
  %v127 = vld [vmem:[%s0 + $0x388] sm:$0xff]
  %v128 = vld [vmem:[%s0 + $0x390] sm:$0xff]
  %v129 = vld [vmem:[%s0 + $0x398] sm:$0xff]
  %v130 = vld [vmem:[%s0 + $0x3a0] sm:$0xff]
  %v131 = vld [vmem:[%s0 + $0x3a8] sm:$0xff]
  %v132 = vld [vmem:[%s0 + $0x3b0] sm:$0xff]
  %v133 = vld [vmem:[%s0 + $0x3b8] sm:$0xff]
  %v134 = vld [vmem:[%s0 + $0x3c0] sm:$0xff]
  %v135 = vld [vmem:[%s0 + $0x3c8] sm:$0xff]
  %v136 = vld [vmem:[%s0 + $0x3d0] sm:$0xff]
  %v137 = vld [vmem:[%s0 + $0x3d8] sm:$0xff]
  %v138 = vld [vmem:[%s0 + $0x3e0] sm:$0xff]
  %v139 = vld [vmem:[%s0 + $0x3e8] sm:$0xff]
  %v140 = vld [vmem:[%s0 + $0x3f0] sm:$0xff]
  %v141 = vld [vmem:[%s0 + $0x3f8] sm:$0xff]
  %v142 = vld [vmem:[%s0 + $0x400] sm:$0xff]
  %v143 = vld [vmem:[%s0 + $0x408] sm:$0xff]
  %v144 = vld [vmem:[%s0 + $0x410] sm:$0xff]
  %v145 = vld [vmem:[%s0 + $0x418] sm:$0xff]
  %v146 = vld [vmem:[%s0 + $0x420] sm:$0xff]
  %v147 = vld [vmem:[%s0 + $0x428] sm:$0xff]
  %v148 = vld [vmem:[%s0 + $0x430] sm:$0xff]
  %v149 = vld [vmem:[%s0 + $0x438] sm:$0xff]
  %v150 = vld [vmem:[%s0 + $0x440] sm:$0xff]
  %v151 = vld [vmem:[%s0 + $0x448] sm:$0xff]
  %v152 = vld [vmem:[%s0 + $0x450] sm:$0xff]
  %v153 = vld [vmem:[%s0 + $0x458] sm:$0xff]
  %v154 = vld [vmem:[%s0 + $0x460] sm:$0xff]
  %v155 = vld [vmem:[%s0 + $0x468] sm:$0xff]
  %v156 = vld [vmem:[%s0 + $0x470] sm:$0xff]
  %v157 = vld [vmem:[%s0 + $0x478] sm:$0xff]
  %v158 = vld [vmem:[%s0 + $0x480] sm:$0xff]
  %v159 = vld [vmem:[%s0 + $0x488] sm:$0xff]
  %v160 = vld [vmem:[%s0 + $0x490] sm:$0xff]
  %v161 = vld [vmem:[%s0 + $0x498] sm:$0xff]
  %v162 = vld [vmem:[%s0 + $0x4a0] sm:$0xff]
  %v163 = vld [vmem:[%s0 + $0x4a8] sm:$0xff]
  %v164 = vld [vmem:[%s0 + $0x4b0] sm:$0xff]
  %v165 = vld [vmem:[%s0 + $0x4b8] sm:$0xff]
  %v166 = vld [vmem:[%s0 + $0x4c0] sm:$0xff]
  %v167 = vld [vmem:[%s0 + $0x4c8] sm:$0xff]
  %v168 = vld [vmem:[%s0 + $0x4d0] sm:$0xff]
  %v169 = vld [vmem:[%s0 + $0x4d8] sm:$0xff]
  %v170 = vld [vmem:[%s0 + $0x4e0] sm:$0xff]
  %v171 = vld [vmem:[%s0 + $0x4e8] sm:$0xff]
  %v172 = vld [vmem:[%s0 + $0x4f0] sm:$0xff]
  %v173 = vld [vmem:[%s0 + $0x4f8] sm:$0xff]
  %v174 = vld [vmem:[%s0 + $0x500] sm:$0xff]
  %v175 = vld [vmem:[%s0 + $0x508] sm:$0xff]
  %v176 = vld [vmem:[%s0 + $0x510] sm:$0xff]
  %v177 = vld [vmem:[%s0 + $0x518] sm:$0xff]
  %v178 = vld [vmem:[%s0 + $0x520] sm:$0xff]
  %v179 = vld [vmem:[%s0 + $0x528] sm:$0xff]
  %v180 = vld [vmem:[%s0 + $0x530] sm:$0xff]
  %v181 = vld [vmem:[%s0 + $0x538] sm:$0xff]
  %v182 = vld [vmem:[%s0 + $0x540] sm:$0xff]
  %v183 = vld [vmem:[%s0 + $0x548] sm:$0xff]
  %v184 = vld [vmem:[%s0 + $0x550] sm:$0xff]
  %v185 = vld [vmem:[%s0 + $0x558] sm:$0xff]
  %v186 = vld [vmem:[%s0 + $0x560] sm:$0xff]
  %v187 = vld [vmem:[%s0 + $0x568] sm:$0xff]
  %v188 = vld [vmem:[%s0 + $0x570] sm:$0xff]
  %v189 = vld [vmem:[%s0 + $0x578] sm:$0xff]
  %v190 = vld [vmem:[%s0 + $0x580] sm:$0xff]
  %v191 = vld [vmem:[%s0 + $0x588] sm:$0xff]
  %v192 = vld [vmem:[%s0 + $0x590] sm:$0xff]
  %v193 = vld [vmem:[%s0 + $0x598] sm:$0xff]
  %v194 = vld [vmem:[%s0 + $0x5a0] sm:$0xff]
  %v195 = vld [vmem:[%s0 + $0x5a8] sm:$0xff]
  %v196 = vld [vmem:[%s0 + $0x5b0] sm:$0xff]
  %v197 = vld [vmem:[%s0 + $0x5b8] sm:$0xff]
  %v198 = vld [vmem:[%s0 + $0x5c0] sm:$0xff]
  %v199 = vld [vmem:[%s0 + $0x5c8] sm:$0xff]
  %v200 = vld [vmem:[%s0 + $0x5d0] sm:$0xff]
  %v201 = vld [vmem:[%s0 + $0x5d8] sm:$0xff]
  %v202 = vld [vmem:[%s0 + $0x5e0] sm:$0xff]
  %v203 = vld [vmem:[%s0 + $0x5e8] sm:$0xff]
  %v204 = vld [vmem:[%s0 + $0x5f0] sm:$0xff]
  %v205 = vld [vmem:[%s0 + $0x5f8] sm:$0xff]
  %v206 = vld [vmem:[%s1] sm:$0xff]
  %v207 = vld [vmem:[%s1 + $0x8] sm:$0xff]
  %v208 = vld [vmem:[%s1 + $0x10] sm:$0xff]
  %v209 = vld [vmem:[%s1 + $0x18] sm:$0xff]
  %v210 = vld [vmem:[%s1 + $0x20] sm:$0xff]
  %v211 = vld [vmem:[%s1 + $0x28] sm:$0xff]
  %v212 = vld [vmem:[%s1 + $0x30] sm:$0xff]
  %v213 = vld [vmem:[%s1 + $0x38] sm:$0xff]
  %v214 = vld [vmem:[%s1 + $0x40] sm:$0xff]
  %v215 = vld [vmem:[%s1 + $0x48] sm:$0xff]
  %v216 = vld [vmem:[%s1 + $0x50] sm:$0xff]
  %v217 = vld [vmem:[%s1 + $0x58] sm:$0xff]
  %v218 = vld [vmem:[%s1 + $0x60] sm:$0xff]
  %v219 = vld [vmem:[%s1 + $0x68] sm:$0xff]
  %v220 = vld [vmem:[%s1 + $0x70] sm:$0xff]
  %v221 = vld [vmem:[%s1 + $0x78] sm:$0xff]
  %v222 = vld [vmem:[%s1 + $0x80] sm:$0xff]
  %v223 = vld [vmem:[%s1 + $0x88] sm:$0xff]
  %v224 = vld [vmem:[%s1 + $0x90] sm:$0xff]
  %v225 = vld [vmem:[%s1 + $0x98] sm:$0xff]
  %v226 = vld [vmem:[%s1 + $0xa0] sm:$0xff]
  %v227 = vld [vmem:[%s1 + $0xa8] sm:$0xff]
  %v228 = vld [vmem:[%s1 + $0xb0] sm:$0xff]
  %v229 = vld [vmem:[%s1 + $0xb8] sm:$0xff]
  %v230 = vld [vmem:[%s1 + $0xc0] sm:$0xff]
  %v231 = vld [vmem:[%s1 + $0xc8] sm:$0xff]
  %v232 = vld [vmem:[%s1 + $0xd0] sm:$0xff]
  %v233 = vld [vmem:[%s1 + $0xd8] sm:$0xff]
  %v234 = vld [vmem:[%s1 + $0xe0] sm:$0xff]
  %v235 = vld [vmem:[%s1 + $0xe8] sm:$0xff]
  %v236 = vld [vmem:[%s1 + $0xf0] sm:$0xff]
  %v237 = vld [vmem:[%s1 + $0xf8] sm:$0xff]
  %v238 = vld [vmem:[%s1 + $0x100] sm:$0xff]
  %v239 = vld [vmem:[%s1 + $0x108] sm:$0xff]
  %v240 = vld [vmem:[%s1 + $0x110] sm:$0xff]
  %v241 = vld [vmem:[%s1 + $0x118] sm:$0xff]
  %vm242 = vcmask 261120
  %v244 = vsel %vm242, %v16, 0
  %v247 = vsel %vm242, %v19, 0
  %v250 = vsel %vm242, %v22, 0
  %v253 = vsel %vm242, %v25, 0
  %v256 = vsel %vm242, %v28, 0
  %v259 = vsel %vm242, %v31, 0
  %v262 = vsel %vm242, %v34, 0
  %v265 = vsel %vm242, %v37, 0
  %v268 = vsel %vm242, %v40, 0
  %v271 = vsel %vm242, %v43, 0
  %v274 = vsel %vm242, %v46, 0
  %v277 = vsel %vm242, %v49, 0
  %v280 = vsel %vm242, %v52, 0
  %v283 = vsel %vm242, %v55, 0
  %v286 = vsel %vm242, %v58, 0
  %v289 = vsel %vm242, %v61, 0
  %v292 = vsel %vm242, %v64, 0
  %v295 = vsel %vm242, %v67, 0
  %v298 = vsel %vm242, %v70, 0
  %v301 = vsel %vm242, %v73, 0
  %v304 = vsel %vm242, %v76, 0
  %v307 = vsel %vm242, %v79, 0
  %v310 = vsel %vm242, %v82, 0
  %v313 = vsel %vm242, %v85, 0
  %v316 = vsel %vm242, %v88, 0
  %v319 = vsel %vm242, %v91, 0
  %v322 = vsel %vm242, %v94, 0
  %v325 = vsel %vm242, %v97, 0
  %v328 = vsel %vm242, %v100, 0
  %v331 = vsel %vm242, %v103, 0
  %v334 = vsel %vm242, %v106, 0
  %v337 = vsel %vm242, %v109, 0
  %v340 = vsel %vm242, %v112, 0
  %v343 = vsel %vm242, %v115, 0
  %v346 = vsel %vm242, %v118, 0
  %v349 = vsel %vm242, %v121, 0
  %v352 = vsel %vm242, %v124, 0
  %v355 = vsel %vm242, %v127, 0
  %v358 = vsel %vm242, %v130, 0
  %v361 = vsel %vm242, %v133, 0
  %v364 = vsel %vm242, %v136, 0
  %v367 = vsel %vm242, %v139, 0
  %v370 = vsel %vm242, %v142, 0
  %v373 = vsel %vm242, %v145, 0
  %v376 = vsel %vm242, %v148, 0
  %v379 = vsel %vm242, %v151, 0
  %v382 = vsel %vm242, %v154, 0
  %v385 = vsel %vm242, %v157, 0
  %v388 = vsel %vm242, %v160, 0
  %v391 = vsel %vm242, %v163, 0
  %v394 = vsel %vm242, %v166, 0
  %v397 = vsel %vm242, %v169, 0
  %v400 = vsel %vm242, %v172, 0
  %v403 = vsel %vm242, %v175, 0
  %v406 = vsel %vm242, %v178, 0
  %v409 = vsel %vm242, %v181, 0
  %v412 = vsel %vm242, %v184, 0
  %v415 = vsel %vm242, %v187, 0
  %v418 = vsel %vm242, %v190, 0
  %v421 = vsel %vm242, %v193, 0
  %v424 = vsel %vm242, %v196, 0
  %v427 = vsel %vm242, %v199, 0
  %v430 = vsel %vm242, %v202, 0
  %v433 = vsel %vm242, %v205, 0
  %435 = vmatprep.subr.mxu0 0.0
  %436 = vmatpush1.msra.mxu0 %v206
  %437 = vmatprep.subr.mxu0 0.0
  %438 = vmatpush1.msra.mxu0 %v207
  %439 = vmatprep.subr.mxu0 0.0
  %440 = vmatpush1.msra.mxu0 %v208
  %441 = vmatprep.subr.mxu0 0.0
  %442 = vmatpush1.msra.mxu0 %v209
  %443 = vmatprep.subr.mxu0 0.0
  %444 = vmatpush1.msra.mxu0 %v210
  %445 = vmatprep.subr.mxu0 0.0
  %446 = vmatpush1.msra.mxu0 %v211
  %447 = vmatprep.subr.mxu0 0.0
  %448 = vmatpush1.msra.mxu0 %v212
  %449 = vmatprep.subr.mxu0 0.0
  %450 = vmatpush1.msra.mxu0 %v213
  %451 = vmatprep.subr.mxu0 0.0
  %452 = vmatpush1.msra.mxu0 %v214
  %453 = vmatprep.subr.mxu0 0.0
  %454 = vmatpush1.msra.mxu0 %v215
  %455 = vmatprep.subr.mxu0 0.0
  %456 = vmatpush1.msra.mxu0 %v216
  %457 = vmatprep.subr.mxu0 0.0
  %458 = vmatpush1.msra.mxu0 %v217
  %459 = vmatprep.subr.mxu0 0.0
  %460 = vmatpush1.msra.mxu0 %v218
  %461 = vmatprep.subr.mxu0 0.0
  %462 = vmatpush1.msra.mxu0 %v219
  %463 = vmatprep.subr.mxu0 0.0
  %464 = vmatpush1.msra.mxu0 %v220
  %465 = vmatprep.subr.mxu0 0.0
  %466 = vmatpush1.msra.mxu0 %v221
  %467 = vmatprep.subr.mxu0 0.0
  %468 = vmatpush1.msra.mxu0 %v222
  %469 = vmatprep.subr.mxu0 0.0
  %470 = vmatpush1.msra.mxu0 %v223
  %471 = vmatprep.subr.mxu0 0.0
  %472 = vmatpush1.msra.mxu0 %v224
  %473 = vmatprep.subr.mxu0 0.0
  %474 = vmatpush1.msra.mxu0 %v225
  %475 = vmatprep.subr.mxu0 0.0
  %476 = vmatpush1.msra.mxu0 %v226
  %477 = vmatprep.subr.mxu0 0.0
  %478 = vmatpush1.msra.mxu0 %v227
  %479 = vmatprep.subr.mxu0 0.0
  %480 = vmatpush1.msra.mxu0 %v228
  %481 = vmatprep.subr.mxu0 0.0
  %482 = vmatpush1.msra.mxu0 %v229
  %483 = vmatprep.subr.mxu0 0.0
  %484 = vmatpush1.msra.mxu0 %v230
  %485 = vmatprep.subr.mxu0 0.0
  %486 = vmatpush1.msra.mxu0 %v231
  %487 = vmatprep.subr.mxu0 0.0
  %488 = vmatpush1.msra.mxu0 %v232
  %489 = vmatprep.subr.mxu0 0.0
  %490 = vmatpush1.msra.mxu0 %v233
  %491 = vmatprep.subr.mxu0 0.0
  %492 = vmatpush1.msra.mxu0 %v234
  %493 = vmatprep.subr.mxu0 0.0
  %494 = vmatpush1.msra.mxu0 %v235
  %495 = vmatprep.subr.mxu0 0.0
  %496 = vmatpush1.msra.mxu0 %v236
  %497 = vmatprep.subr.mxu0 0.0
  %498 = vmatpush1.msra.mxu0 %v237
  %499 = vmatprep.mubr.f32.mxu0 %v15
  %500 = vmatmul.mubr.f32.gmra.mrb[0].mxu0 %v14
  %v501 = vpop.f32.mrb[0].mxu0
  %v502 = vadd.f32 0.0, %v501
  %v503 = vpop.f32.mrb[0].mxu0
  %504 = vmatprep.mubr.f32.mxu0 %v18
  %505 = vmatmul.mubr.f32.gmra.mrb[0].mxu0 %v17
  %v506 = vpop.f32.mrb[0].mxu0
  %v507 = vadd.f32 0.0, %v506
  %v508 = vpop.f32.mrb[0].mxu0
  %509 = vmatprep.mubr.f32.mxu0 %v21
  %510 = vmatmul.mubr.f32.gmra.mrb[0].mxu0 %v20
  %v511 = vpop.f32.mrb[0].mxu0
  %v512 = vadd.f32 0.0, %v511
  %v513 = vpop.f32.mrb[0].mxu0
  %514 = vmatprep.mubr.f32.mxu0 %v24
  %515 = vmatmul.mubr.f32.gmra.mrb[0].mxu0 %v23
  %v516 = vpop.f32.mrb[0].mxu0
  %v517 = vadd.f32 0.0, %v516
  %v518 = vpop.f32.mrb[0].mxu0
  %519 = vmatprep.mubr.f32.mxu0 %v27
  %520 = vmatmul.mubr.f32.gmra.mrb[0].mxu0 %v26
  %v521 = vpop.f32.mrb[0].mxu0
  %v522 = vadd.f32 0.0, %v521
  %v523 = vpop.f32.mrb[0].mxu0
  %524 = vmatprep.mubr.f32.mxu0 %v30
  %525 = vmatmul.mubr.f32.gmra.mrb[0].mxu0 %v29
  %v526 = vpop.f32.mrb[0].mxu0
  %v527 = vadd.f32 0.0, %v526
  %v528 = vpop.f32.mrb[0].mxu0
  %529 = vmatprep.mubr.f32.mxu0 %v33
  %530 = vmatmul.mubr.f32.gmra.mrb[0].mxu0 %v32
  %v531 = vpop.f32.mrb[0].mxu0
  %v532 = vadd.f32 0.0, %v531
  %v533 = vpop.f32.mrb[0].mxu0
  %534 = vmatprep.mubr.f32.mxu0 %v36
  %535 = vmatmul.mubr.f32.gmra.mrb[0].mxu0 %v35
  %v536 = vpop.f32.mrb[0].mxu0
  %v537 = vadd.f32 0.0, %v536
  %v538 = vpop.f32.mrb[0].mxu0
  %539 = vmatprep.mubr.f32.mxu0 %v39
  %540 = vmatmul.mubr.f32.gmra.mrb[0].mxu0 %v38
  %v541 = vpop.f32.mrb[0].mxu0
  %v542 = vadd.f32 0.0, %v541
  %v543 = vpop.f32.mrb[0].mxu0
  %544 = vmatprep.mubr.f32.mxu0 %v42
  %545 = vmatmul.mubr.f32.gmra.mrb[0].mxu0 %v41
  %v546 = vpop.f32.mrb[0].mxu0
  %v547 = vadd.f32 0.0, %v546
  %v548 = vpop.f32.mrb[0].mxu0
  %549 = vmatprep.mubr.f32.mxu0 %v45
  %550 = vmatmul.mubr.f32.gmra.mrb[0].mxu0 %v44
  %v551 = vpop.f32.mrb[0].mxu0
  %v552 = vadd.f32 0.0, %v551
  %v553 = vpop.f32.mrb[0].mxu0
  %554 = vmatprep.mubr.f32.mxu0 %v48
  %555 = vmatmul.mubr.f32.gmra.mrb[0].mxu0 %v47
  %v556 = vpop.f32.mrb[0].mxu0
  %v557 = vadd.f32 0.0, %v556
  %v558 = vpop.f32.mrb[0].mxu0
  %559 = vmatprep.mubr.f32.mxu0 %v51
  %560 = vmatmul.mubr.f32.gmra.mrb[0].mxu0 %v50
  %v561 = vpop.f32.mrb[0].mxu0
  %v562 = vadd.f32 0.0, %v561
  %v563 = vpop.f32.mrb[0].mxu0
  %564 = vmatprep.mubr.f32.mxu0 %v54
  %565 = vmatmul.mubr.f32.gmra.mrb[0].mxu0 %v53
  %v566 = vpop.f32.mrb[0].mxu0
  %v567 = vadd.f32 0.0, %v566
  %v568 = vpop.f32.mrb[0].mxu0
  %569 = vmatprep.mubr.f32.mxu0 %v57
  %570 = vmatmul.mubr.f32.gmra.mrb[0].mxu0 %v56
  %v571 = vpop.f32.mrb[0].mxu0
  %v572 = vadd.f32 0.0, %v571
  %v573 = vpop.f32.mrb[0].mxu0
  %574 = vmatprep.mubr.f32.mxu0 %v60
  %575 = vmatmul.mubr.f32.gmra.mrb[0].mxu0 %v59
  %v576 = vpop.f32.mrb[0].mxu0
  %v577 = vadd.f32 0.0, %v576
  %v578 = vpop.f32.mrb[0].mxu0
  %579 = vmatprep.mubr.f32.mxu0 %v63
  %580 = vmatmul.mubr.f32.gmra.mrb[0].mxu0 %v62
  %v581 = vpop.f32.mrb[0].mxu0
  %v582 = vadd.f32 0.0, %v581
  %v583 = vpop.f32.mrb[0].mxu0
  %584 = vmatprep.mubr.f32.mxu0 %v66
  %585 = vmatmul.mubr.f32.gmra.mrb[0].mxu0 %v65
  %v586 = vpop.f32.mrb[0].mxu0
  %v587 = vadd.f32 0.0, %v586
  %v588 = vpop.f32.mrb[0].mxu0
  %589 = vmatprep.mubr.f32.mxu0 %v69
  %590 = vmatmul.mubr.f32.gmra.mrb[0].mxu0 %v68
  %v591 = vpop.f32.mrb[0].mxu0
  %v592 = vadd.f32 0.0, %v591
  %v593 = vpop.f32.mrb[0].mxu0
  %594 = vmatprep.mubr.f32.mxu0 %v72
  %595 = vmatmul.mubr.f32.gmra.mrb[0].mxu0 %v71
  %v596 = vpop.f32.mrb[0].mxu0
  %v597 = vadd.f32 0.0, %v596
  %v598 = vpop.f32.mrb[0].mxu0
  %599 = vmatprep.mubr.f32.mxu0 %v75
  %600 = vmatmul.mubr.f32.gmra.mrb[0].mxu0 %v74
  %v601 = vpop.f32.mrb[0].mxu0
  %v602 = vadd.f32 0.0, %v601
  %v603 = vpop.f32.mrb[0].mxu0
  %604 = vmatprep.mubr.f32.mxu0 %v78
  %605 = vmatmul.mubr.f32.gmra.mrb[0].mxu0 %v77
  %v606 = vpop.f32.mrb[0].mxu0
  %v607 = vadd.f32 0.0, %v606
  %v608 = vpop.f32.mrb[0].mxu0
  %609 = vmatprep.mubr.f32.mxu0 %v81
  %610 = vmatmul.mubr.f32.gmra.mrb[0].mxu0 %v80
  %v611 = vpop.f32.mrb[0].mxu0
  %v612 = vadd.f32 0.0, %v611
  %v613 = vpop.f32.mrb[0].mxu0
  %614 = vmatprep.mubr.f32.mxu0 %v84
  %615 = vmatmul.mubr.f32.gmra.mrb[0].mxu0 %v83
  %v616 = vpop.f32.mrb[0].mxu0
  %v617 = vadd.f32 0.0, %v616
  %v618 = vpop.f32.mrb[0].mxu0
  %619 = vmatprep.mubr.f32.mxu0 %v87
  %620 = vmatmul.mubr.f32.gmra.mrb[0].mxu0 %v86
  %v621 = vpop.f32.mrb[0].mxu0
  %v622 = vadd.f32 0.0, %v621
  %v623 = vpop.f32.mrb[0].mxu0
  %624 = vmatprep.mubr.f32.mxu0 %v90
  %625 = vmatmul.mubr.f32.gmra.mrb[0].mxu0 %v89
  %v626 = vpop.f32.mrb[0].mxu0
  %v627 = vadd.f32 0.0, %v626
  %v628 = vpop.f32.mrb[0].mxu0
  %629 = vmatprep.mubr.f32.mxu0 %v93
  %630 = vmatmul.mubr.f32.gmra.mrb[0].mxu0 %v92
  %v631 = vpop.f32.mrb[0].mxu0
  %v632 = vadd.f32 0.0, %v631
  %v633 = vpop.f32.mrb[0].mxu0
  %634 = vmatprep.mubr.f32.mxu0 %v96
  %635 = vmatmul.mubr.f32.gmra.mrb[0].mxu0 %v95
  %v636 = vpop.f32.mrb[0].mxu0
  %v637 = vadd.f32 0.0, %v636
  %v638 = vpop.f32.mrb[0].mxu0
  %639 = vmatprep.mubr.f32.mxu0 %v99
  %640 = vmatmul.mubr.f32.gmra.mrb[0].mxu0 %v98
  %v641 = vpop.f32.mrb[0].mxu0
  %v642 = vadd.f32 0.0, %v641
  %v643 = vpop.f32.mrb[0].mxu0
  %644 = vmatprep.mubr.f32.mxu0 %v102
  %645 = vmatmul.mubr.f32.gmra.mrb[0].mxu0 %v101
  %v646 = vpop.f32.mrb[0].mxu0
  %v647 = vadd.f32 0.0, %v646
  %v648 = vpop.f32.mrb[0].mxu0
  %649 = vmatprep.mubr.f32.mxu0 %v105
  %650 = vmatmul.mubr.f32.gmra.mrb[0].mxu0 %v104
  %v651 = vpop.f32.mrb[0].mxu0
  %v652 = vadd.f32 0.0, %v651
  %v653 = vpop.f32.mrb[0].mxu0
  %654 = vmatprep.mubr.f32.mxu0 %v108
  %655 = vmatmul.mubr.f32.gmra.mrb[0].mxu0 %v107
  %v656 = vpop.f32.mrb[0].mxu0
  %v657 = vadd.f32 0.0, %v656
  %v658 = vpop.f32.mrb[0].mxu0
  %659 = vmatprep.mubr.f32.mxu0 %v111
  %660 = vmatmul.mubr.f32.gmra.mrb[0].mxu0 %v110
  %v661 = vpop.f32.mrb[0].mxu0
  %v662 = vadd.f32 0.0, %v661
  %v663 = vpop.f32.mrb[0].mxu0
  %664 = vmatprep.mubr.f32.mxu0 %v114
  %665 = vmatmul.mubr.f32.gmra.mrb[0].mxu0 %v113
  %v666 = vpop.f32.mrb[0].mxu0
  %v667 = vadd.f32 0.0, %v666
  %v668 = vpop.f32.mrb[0].mxu0
  %669 = vmatprep.mubr.f32.mxu0 %v117
  %670 = vmatmul.mubr.f32.gmra.mrb[0].mxu0 %v116
  %v671 = vpop.f32.mrb[0].mxu0
  %v672 = vadd.f32 0.0, %v671
  %v673 = vpop.f32.mrb[0].mxu0
  %674 = vmatprep.mubr.f32.mxu0 %v120
  %675 = vmatmul.mubr.f32.gmra.mrb[0].mxu0 %v119
  %v676 = vpop.f32.mrb[0].mxu0
  %v677 = vadd.f32 0.0, %v676
  %v678 = vpop.f32.mrb[0].mxu0
  %679 = vmatprep.mubr.f32.mxu0 %v123
  %680 = vmatmul.mubr.f32.gmra.mrb[0].mxu0 %v122
  %v681 = vpop.f32.mrb[0].mxu0
  %v682 = vadd.f32 0.0, %v681
  %v683 = vpop.f32.mrb[0].mxu0
  %684 = vmatprep.mubr.f32.mxu0 %v126
  %685 = vmatmul.mubr.f32.gmra.mrb[0].mxu0 %v125
  %v686 = vpop.f32.mrb[0].mxu0
  %v687 = vadd.f32 0.0, %v686
  %v688 = vpop.f32.mrb[0].mxu0
  %689 = vmatprep.mubr.f32.mxu0 %v129
  %690 = vmatmul.mubr.f32.gmra.mrb[0].mxu0 %v128
  %v691 = vpop.f32.mrb[0].mxu0
  %v692 = vadd.f32 0.0, %v691
  %v693 = vpop.f32.mrb[0].mxu0
  %694 = vmatprep.mubr.f32.mxu0 %v132
  %695 = vmatmul.mubr.f32.gmra.mrb[0].mxu0 %v131
  %v696 = vpop.f32.mrb[0].mxu0
  %v697 = vadd.f32 0.0, %v696
  %v698 = vpop.f32.mrb[0].mxu0
  %699 = vmatprep.mubr.f32.mxu0 %v135
  %700 = vmatmul.mubr.f32.gmra.mrb[0].mxu0 %v134
  %v701 = vpop.f32.mrb[0].mxu0
  %v702 = vadd.f32 0.0, %v701
  %v703 = vpop.f32.mrb[0].mxu0
  %704 = vmatprep.mubr.f32.mxu0 %v138
  %705 = vmatmul.mubr.f32.gmra.mrb[0].mxu0 %v137
  %v706 = vpop.f32.mrb[0].mxu0
  %v707 = vadd.f32 0.0, %v706
  %v708 = vpop.f32.mrb[0].mxu0
  %709 = vmatprep.mubr.f32.mxu0 %v141
  %710 = vmatmul.mubr.f32.gmra.mrb[0].mxu0 %v140
  %v711 = vpop.f32.mrb[0].mxu0
  %v712 = vadd.f32 0.0, %v711
  %v713 = vpop.f32.mrb[0].mxu0
  %714 = vmatprep.mubr.f32.mxu0 %v144
  %715 = vmatmul.mubr.f32.gmra.mrb[0].mxu0 %v143
  %v716 = vpop.f32.mrb[0].mxu0
  %v717 = vadd.f32 0.0, %v716
  %v718 = vpop.f32.mrb[0].mxu0
  %719 = vmatprep.mubr.f32.mxu0 %v147
  %720 = vmatmul.mubr.f32.gmra.mrb[0].mxu0 %v146
  %v721 = vpop.f32.mrb[0].mxu0
  %v722 = vadd.f32 0.0, %v721
  %v723 = vpop.f32.mrb[0].mxu0
  %724 = vmatprep.mubr.f32.mxu0 %v150
  %725 = vmatmul.mubr.f32.gmra.mrb[0].mxu0 %v149
  %v726 = vpop.f32.mrb[0].mxu0
  %v727 = vadd.f32 0.0, %v726
  %v728 = vpop.f32.mrb[0].mxu0
  %729 = vmatprep.mubr.f32.mxu0 %v153
  %730 = vmatmul.mubr.f32.gmra.mrb[0].mxu0 %v152
  %v731 = vpop.f32.mrb[0].mxu0
  %v732 = vadd.f32 0.0, %v731
  %v733 = vpop.f32.mrb[0].mxu0
  %734 = vmatprep.mubr.f32.mxu0 %v156
  %735 = vmatmul.mubr.f32.gmra.mrb[0].mxu0 %v155
  %v736 = vpop.f32.mrb[0].mxu0
  %v737 = vadd.f32 0.0, %v736
  %v738 = vpop.f32.mrb[0].mxu0
  %739 = vmatprep.mubr.f32.mxu0 %v159
  %740 = vmatmul.mubr.f32.gmra.mrb[0].mxu0 %v158
  %v741 = vpop.f32.mrb[0].mxu0
  %v742 = vadd.f32 0.0, %v741
  %v743 = vpop.f32.mrb[0].mxu0
  %744 = vmatprep.mubr.f32.mxu0 %v162
  %745 = vmatmul.mubr.f32.gmra.mrb[0].mxu0 %v161
  %v746 = vpop.f32.mrb[0].mxu0
  %v747 = vadd.f32 0.0, %v746
  %v748 = vpop.f32.mrb[0].mxu0
  %749 = vmatprep.mubr.f32.mxu0 %v165
  %750 = vmatmul.mubr.f32.gmra.mrb[0].mxu0 %v164
  %v751 = vpop.f32.mrb[0].mxu0
  %v752 = vadd.f32 0.0, %v751
  %v753 = vpop.f32.mrb[0].mxu0
  %754 = vmatprep.mubr.f32.mxu0 %v168
  %755 = vmatmul.mubr.f32.gmra.mrb[0].mxu0 %v167
  %v756 = vpop.f32.mrb[0].mxu0
  %v757 = vadd.f32 0.0, %v756
  %v758 = vpop.f32.mrb[0].mxu0
  %759 = vmatprep.mubr.f32.mxu0 %v171
  %760 = vmatmul.mubr.f32.gmra.mrb[0].mxu0 %v170
  %v761 = vpop.f32.mrb[0].mxu0
  %v762 = vadd.f32 0.0, %v761
  %v763 = vpop.f32.mrb[0].mxu0
  %764 = vmatprep.mubr.f32.mxu0 %v174
  %765 = vmatmul.mubr.f32.gmra.mrb[0].mxu0 %v173
  %v766 = vpop.f32.mrb[0].mxu0
  %v767 = vadd.f32 0.0, %v766
  %v768 = vpop.f32.mrb[0].mxu0
  %769 = vmatprep.mubr.f32.mxu0 %v177
  %770 = vmatmul.mubr.f32.gmra.mrb[0].mxu0 %v176
  %v771 = vpop.f32.mrb[0].mxu0
  %v772 = vadd.f32 0.0, %v771
  %v773 = vpop.f32.mrb[0].mxu0
  %774 = vmatprep.mubr.f32.mxu0 %v180
  %775 = vmatmul.mubr.f32.gmra.mrb[0].mxu0 %v179
  %v776 = vpop.f32.mrb[0].mxu0
  %v777 = vadd.f32 0.0, %v776
  %v778 = vpop.f32.mrb[0].mxu0
  %779 = vmatprep.mubr.f32.mxu0 %v183
  %780 = vmatmul.mubr.f32.gmra.mrb[0].mxu0 %v182
  %v781 = vpop.f32.mrb[0].mxu0
  %v782 = vadd.f32 0.0, %v781
  %v783 = vpop.f32.mrb[0].mxu0
  %784 = vmatprep.mubr.f32.mxu0 %v186
  %785 = vmatmul.mubr.f32.gmra.mrb[0].mxu0 %v185
  %v786 = vpop.f32.mrb[0].mxu0
  %v787 = vadd.f32 0.0, %v786
  %v788 = vpop.f32.mrb[0].mxu0
  %789 = vmatprep.mubr.f32.mxu0 %v189
  %790 = vmatmul.mubr.f32.gmra.mrb[0].mxu0 %v188
  %v791 = vpop.f32.mrb[0].mxu0
  %v792 = vadd.f32 0.0, %v791
  %v793 = vpop.f32.mrb[0].mxu0
  %794 = vmatprep.mubr.f32.mxu0 %v192
  %795 = vmatmul.mubr.f32.gmra.mrb[0].mxu0 %v191
  %v796 = vpop.f32.mrb[0].mxu0
  %v797 = vadd.f32 0.0, %v796
  %v798 = vpop.f32.mrb[0].mxu0
  %799 = vmatprep.mubr.f32.mxu0 %v195
  %800 = vmatmul.mubr.f32.gmra.mrb[0].mxu0 %v194
  %v801 = vpop.f32.mrb[0].mxu0
  %v802 = vadd.f32 0.0, %v801
  %v803 = vpop.f32.mrb[0].mxu0
  %804 = vmatprep.mubr.f32.mxu0 %v198
  %805 = vmatmul.mubr.f32.gmra.mrb[0].mxu0 %v197
  %v806 = vpop.f32.mrb[0].mxu0
  %v807 = vadd.f32 0.0, %v806
  %v808 = vpop.f32.mrb[0].mxu0
  %809 = vmatprep.mubr.f32.mxu0 %v201
  %810 = vmatmul.mubr.f32.gmra.mrb[0].mxu0 %v200
  %v811 = vpop.f32.mrb[0].mxu0
  %v812 = vadd.f32 0.0, %v811
  %v813 = vpop.f32.mrb[0].mxu0
  %814 = vmatprep.mubr.f32.mxu0 %v204
  %815 = vmatmul.mubr.f32.gmra.mrb[0].mxu0 %v203
  %v816 = vpop.f32.mrb[0].mxu0
  %v817 = vadd.f32 0.0, %v816
  %v818 = vpop.f32.mrb[0].mxu0
  %819 = vdwg.mxu0
  %820 = vmatprep.subr.mxu0 0.0
  %821 = vmatpush1.msra.mxu0 %v238
  %822 = vmatprep.subr.mxu0 0.0
  %823 = vmatpush1.msra.mxu0 %v239
  %824 = vmatprep.subr.mxu0 0.0
  %825 = vmatpush1.msra.mxu0 %v240
  %826 = vmatprep.subr.mxu0 0.0
  %827 = vmatpush1.msra.mxu0 %v241
  %828 = vmatprep.subr.mxu0 0.0
  %829 = vmatpush1.msra.mxu0 0.0
  %830 = vmatprep.subr.mxu0 0.0
  %831 = vmatpush1.msra.mxu0 0.0
  %832 = vmatprep.subr.mxu0 0.0
  %833 = vmatpush1.msra.mxu0 0.0
  %834 = vmatprep.subr.mxu0 0.0
  %835 = vmatpush1.msra.mxu0 0.0
  %836 = vmatprep.subr.mxu0 0.0
  %837 = vmatpush1.msra.mxu0 0.0
  %838 = vmatprep.subr.mxu0 0.0
  %839 = vmatpush1.msra.mxu0 0.0
  %840 = vmatprep.subr.mxu0 0.0
  %841 = vmatpush1.msra.mxu0 0.0
  %842 = vmatprep.subr.mxu0 0.0
  %843 = vmatpush1.msra.mxu0 0.0
  %844 = vmatprep.subr.mxu0 0.0
  %845 = vmatpush1.msra.mxu0 0.0
  %846 = vmatprep.subr.mxu0 0.0
  %847 = vmatpush1.msra.mxu0 0.0
  %848 = vmatprep.subr.mxu0 0.0
  %849 = vmatpush1.msra.mxu0 0.0
  %850 = vmatprep.subr.mxu0 0.0
  %851 = vmatpush1.msra.mxu0 0.0
  %852 = vmatprep.subr.mxu0 0.0
  %853 = vmatpush1.msra.mxu0 0.0
  %854 = vmatprep.subr.mxu0 0.0
  %855 = vmatpush1.msra.mxu0 0.0
  %856 = vmatprep.subr.mxu0 0.0
  %857 = vmatpush1.msra.mxu0 0.0
  %858 = vmatprep.subr.mxu0 0.0
  %859 = vmatpush1.msra.mxu0 0.0
  %860 = vmatprep.subr.mxu0 0.0
  %861 = vmatpush1.msra.mxu0 0.0
  %862 = vmatprep.subr.mxu0 0.0
  %863 = vmatpush1.msra.mxu0 0.0
  %864 = vmatprep.subr.mxu0 0.0
  %865 = vmatpush1.msra.mxu0 0.0
  %866 = vmatprep.subr.mxu0 0.0
  %867 = vmatpush1.msra.mxu0 0.0
  %868 = vmatprep.subr.mxu0 0.0
  %869 = vmatpush1.msra.mxu0 0.0
  %870 = vmatprep.subr.mxu0 0.0
  %871 = vmatpush1.msra.mxu0 0.0
  %872 = vmatprep.subr.mxu0 0.0
  %873 = vmatpush1.msra.mxu0 0.0
  %874 = vmatprep.subr.mxu0 0.0
  %875 = vmatpush1.msra.mxu0 0.0
  %876 = vmatprep.subr.mxu0 0.0
  %877 = vmatpush1.msra.mxu0 0.0
  %878 = vmatprep.subr.mxu0 0.0
  %879 = vmatpush1.msra.mxu0 0.0
  %880 = vmatprep.subr.mxu0 0.0
  %881 = vmatpush1.msra.mxu0 0.0
  %882 = vmatprep.subr.mxu0 0.0
  %883 = vmatpush1.msra.mxu0 0.0
  %884 = vmatprep.mubr.f32.mxu0 0.0
  %885 = vmatmul.mubr.f32.gmra.mrb[0].mxu0 %v244
  %v886 = vpop.f32.mrb[0].mxu0
  %v887 = vadd.f32 %v502, %v886
  %v888 = vpop.f32.mrb[0].mxu0
  %889 = vmatprep.mubr.f32.mxu0 0.0
  %890 = vmatmul.mubr.f32.gmra.mrb[0].mxu0 %v247
  %v891 = vpop.f32.mrb[0].mxu0
  %v892 = vadd.f32 %v507, %v891
  %v893 = vpop.f32.mrb[0].mxu0
  %894 = vmatprep.mubr.f32.mxu0 0.0
  %895 = vmatmul.mubr.f32.gmra.mrb[0].mxu0 %v250
  %v896 = vpop.f32.mrb[0].mxu0
  %v897 = vadd.f32 %v512, %v896
  %v898 = vpop.f32.mrb[0].mxu0
  %899 = vmatprep.mubr.f32.mxu0 0.0
  %900 = vmatmul.mubr.f32.gmra.mrb[0].mxu0 %v253
  %v901 = vpop.f32.mrb[0].mxu0
  %v902 = vadd.f32 %v517, %v901
  %v903 = vpop.f32.mrb[0].mxu0
  %904 = vmatprep.mubr.f32.mxu0 0.0
  %905 = vmatmul.mubr.f32.gmra.mrb[0].mxu0 %v256
  %v906 = vpop.f32.mrb[0].mxu0
  %v907 = vadd.f32 %v522, %v906
  %v908 = vpop.f32.mrb[0].mxu0
  %909 = vmatprep.mubr.f32.mxu0 0.0
  %910 = vmatmul.mubr.f32.gmra.mrb[0].mxu0 %v259
  %v911 = vpop.f32.mrb[0].mxu0
  %v912 = vadd.f32 %v527, %v911
  %v913 = vpop.f32.mrb[0].mxu0
  %914 = vmatprep.mubr.f32.mxu0 0.0
  %915 = vmatmul.mubr.f32.gmra.mrb[0].mxu0 %v262
  %v916 = vpop.f32.mrb[0].mxu0
  %v917 = vadd.f32 %v532, %v916
  %v918 = vpop.f32.mrb[0].mxu0
  %919 = vmatprep.mubr.f32.mxu0 0.0
  %920 = vmatmul.mubr.f32.gmra.mrb[0].mxu0 %v265
  %v921 = vpop.f32.mrb[0].mxu0
  %v922 = vadd.f32 %v537, %v921
  %v923 = vpop.f32.mrb[0].mxu0
  %924 = vmatprep.mubr.f32.mxu0 0.0
  %925 = vmatmul.mubr.f32.gmra.mrb[0].mxu0 %v268
  %v926 = vpop.f32.mrb[0].mxu0
  %v927 = vadd.f32 %v542, %v926
  %v928 = vpop.f32.mrb[0].mxu0
  %929 = vmatprep.mubr.f32.mxu0 0.0
  %930 = vmatmul.mubr.f32.gmra.mrb[0].mxu0 %v271
  %v931 = vpop.f32.mrb[0].mxu0
  %v932 = vadd.f32 %v547, %v931
  %v933 = vpop.f32.mrb[0].mxu0
  %934 = vmatprep.mubr.f32.mxu0 0.0
  %935 = vmatmul.mubr.f32.gmra.mrb[0].mxu0 %v274
  %v936 = vpop.f32.mrb[0].mxu0
  %v937 = vadd.f32 %v552, %v936
  %v938 = vpop.f32.mrb[0].mxu0
  %939 = vmatprep.mubr.f32.mxu0 0.0
  %940 = vmatmul.mubr.f32.gmra.mrb[0].mxu0 %v277
  %v941 = vpop.f32.mrb[0].mxu0
  %v942 = vadd.f32 %v557, %v941
  %v943 = vpop.f32.mrb[0].mxu0
  %944 = vmatprep.mubr.f32.mxu0 0.0
  %945 = vmatmul.mubr.f32.gmra.mrb[0].mxu0 %v280
  %v946 = vpop.f32.mrb[0].mxu0
  %v947 = vadd.f32 %v562, %v946
  %v948 = vpop.f32.mrb[0].mxu0
  %949 = vmatprep.mubr.f32.mxu0 0.0
  %950 = vmatmul.mubr.f32.gmra.mrb[0].mxu0 %v283
  %v951 = vpop.f32.mrb[0].mxu0
  %v952 = vadd.f32 %v567, %v951
  %v953 = vpop.f32.mrb[0].mxu0
  %954 = vmatprep.mubr.f32.mxu0 0.0
  %955 = vmatmul.mubr.f32.gmra.mrb[0].mxu0 %v286
  %v956 = vpop.f32.mrb[0].mxu0
  %v957 = vadd.f32 %v572, %v956
  %v958 = vpop.f32.mrb[0].mxu0
  %959 = vmatprep.mubr.f32.mxu0 0.0
  %960 = vmatmul.mubr.f32.gmra.mrb[0].mxu0 %v289
  %v961 = vpop.f32.mrb[0].mxu0
  %v962 = vadd.f32 %v577, %v961
  %v963 = vpop.f32.mrb[0].mxu0
  %964 = vmatprep.mubr.f32.mxu0 0.0
  %965 = vmatmul.mubr.f32.gmra.mrb[0].mxu0 %v292
  %v966 = vpop.f32.mrb[0].mxu0
  %v967 = vadd.f32 %v582, %v966
  %v968 = vpop.f32.mrb[0].mxu0
  %969 = vmatprep.mubr.f32.mxu0 0.0
  %970 = vmatmul.mubr.f32.gmra.mrb[0].mxu0 %v295
  %v971 = vpop.f32.mrb[0].mxu0
  %v972 = vadd.f32 %v587, %v971
  %v973 = vpop.f32.mrb[0].mxu0
  %974 = vmatprep.mubr.f32.mxu0 0.0
  %975 = vmatmul.mubr.f32.gmra.mrb[0].mxu0 %v298
  %v976 = vpop.f32.mrb[0].mxu0
  %v977 = vadd.f32 %v592, %v976
  %v978 = vpop.f32.mrb[0].mxu0
  %979 = vmatprep.mubr.f32.mxu0 0.0
  %980 = vmatmul.mubr.f32.gmra.mrb[0].mxu0 %v301
  %v981 = vpop.f32.mrb[0].mxu0
  %v982 = vadd.f32 %v597, %v981
  %v983 = vpop.f32.mrb[0].mxu0
  %984 = vmatprep.mubr.f32.mxu0 0.0
  %985 = vmatmul.mubr.f32.gmra.mrb[0].mxu0 %v304
  %v986 = vpop.f32.mrb[0].mxu0
  %v987 = vadd.f32 %v602, %v986
  %v988 = vpop.f32.mrb[0].mxu0
  %989 = vmatprep.mubr.f32.mxu0 0.0
  %990 = vmatmul.mubr.f32.gmra.mrb[0].mxu0 %v307
  %v991 = vpop.f32.mrb[0].mxu0
  %v992 = vadd.f32 %v607, %v991
  %v993 = vpop.f32.mrb[0].mxu0
  %994 = vmatprep.mubr.f32.mxu0 0.0
  %995 = vmatmul.mubr.f32.gmra.mrb[0].mxu0 %v310
  %v996 = vpop.f32.mrb[0].mxu0
  %v997 = vadd.f32 %v612, %v996
  %v998 = vpop.f32.mrb[0].mxu0
  %999 = vmatprep.mubr.f32.mxu0 0.0
  %1000 = vmatmul.mubr.f32.gmra.mrb[0].mxu0 %v313
  %v1001 = vpop.f32.mrb[0].mxu0
  %v1002 = vadd.f32 %v617, %v1001
  %v1003 = vpop.f32.mrb[0].mxu0
  %1004 = vmatprep.mubr.f32.mxu0 0.0
  %1005 = vmatmul.mubr.f32.gmra.mrb[0].mxu0 %v316
  %v1006 = vpop.f32.mrb[0].mxu0
  %v1007 = vadd.f32 %v622, %v1006
  %v1008 = vpop.f32.mrb[0].mxu0
  %1009 = vmatprep.mubr.f32.mxu0 0.0
  %1010 = vmatmul.mubr.f32.gmra.mrb[0].mxu0 %v319
  %v1011 = vpop.f32.mrb[0].mxu0
  %v1012 = vadd.f32 %v627, %v1011
  %v1013 = vpop.f32.mrb[0].mxu0
  %1014 = vmatprep.mubr.f32.mxu0 0.0
  %1015 = vmatmul.mubr.f32.gmra.mrb[0].mxu0 %v322
  %v1016 = vpop.f32.mrb[0].mxu0
  %v1017 = vadd.f32 %v632, %v1016
  %v1018 = vpop.f32.mrb[0].mxu0
  %1019 = vmatprep.mubr.f32.mxu0 0.0
  %1020 = vmatmul.mubr.f32.gmra.mrb[0].mxu0 %v325
  %v1021 = vpop.f32.mrb[0].mxu0
  %v1022 = vadd.f32 %v637, %v1021
  %v1023 = vpop.f32.mrb[0].mxu0
  %1024 = vmatprep.mubr.f32.mxu0 0.0
  %1025 = vmatmul.mubr.f32.gmra.mrb[0].mxu0 %v328
  %v1026 = vpop.f32.mrb[0].mxu0
  %v1027 = vadd.f32 %v642, %v1026
  %v1028 = vpop.f32.mrb[0].mxu0
  %1029 = vmatprep.mubr.f32.mxu0 0.0
  %1030 = vmatmul.mubr.f32.gmra.mrb[0].mxu0 %v331
  %v1031 = vpop.f32.mrb[0].mxu0
  %v1032 = vadd.f32 %v647, %v1031
  %v1033 = vpop.f32.mrb[0].mxu0
  %1034 = vmatprep.mubr.f32.mxu0 0.0
  %1035 = vmatmul.mubr.f32.gmra.mrb[0].mxu0 %v334
  %v1036 = vpop.f32.mrb[0].mxu0
  %v1037 = vadd.f32 %v652, %v1036
  %v1038 = vpop.f32.mrb[0].mxu0
  %1039 = vmatprep.mubr.f32.mxu0 0.0
  %1040 = vmatmul.mubr.f32.gmra.mrb[0].mxu0 %v337
  %v1041 = vpop.f32.mrb[0].mxu0
  %v1042 = vadd.f32 %v657, %v1041
  %v1043 = vpop.f32.mrb[0].mxu0
  %1044 = vmatprep.mubr.f32.mxu0 0.0
  %1045 = vmatmul.mubr.f32.gmra.mrb[0].mxu0 %v340
  %v1046 = vpop.f32.mrb[0].mxu0
  %v1047 = vadd.f32 %v662, %v1046
  %v1048 = vpop.f32.mrb[0].mxu0
  %1049 = vmatprep.mubr.f32.mxu0 0.0
  %1050 = vmatmul.mubr.f32.gmra.mrb[0].mxu0 %v343
  %v1051 = vpop.f32.mrb[0].mxu0
  %v1052 = vadd.f32 %v667, %v1051
  %v1053 = vpop.f32.mrb[0].mxu0
  %1054 = vmatprep.mubr.f32.mxu0 0.0
  %1055 = vmatmul.mubr.f32.gmra.mrb[0].mxu0 %v346
  %v1056 = vpop.f32.mrb[0].mxu0
  %v1057 = vadd.f32 %v672, %v1056
  %v1058 = vpop.f32.mrb[0].mxu0
  %1059 = vmatprep.mubr.f32.mxu0 0.0
  %1060 = vmatmul.mubr.f32.gmra.mrb[0].mxu0 %v349
  %v1061 = vpop.f32.mrb[0].mxu0
  %v1062 = vadd.f32 %v677, %v1061
  %v1063 = vpop.f32.mrb[0].mxu0
  %1064 = vmatprep.mubr.f32.mxu0 0.0
  %1065 = vmatmul.mubr.f32.gmra.mrb[0].mxu0 %v352
  %v1066 = vpop.f32.mrb[0].mxu0
  %v1067 = vadd.f32 %v682, %v1066
  %v1068 = vpop.f32.mrb[0].mxu0
  %1069 = vmatprep.mubr.f32.mxu0 0.0
  %1070 = vmatmul.mubr.f32.gmra.mrb[0].mxu0 %v355
  %v1071 = vpop.f32.mrb[0].mxu0
  %v1072 = vadd.f32 %v687, %v1071
  %v1073 = vpop.f32.mrb[0].mxu0
  %1074 = vmatprep.mubr.f32.mxu0 0.0
  %1075 = vmatmul.mubr.f32.gmra.mrb[0].mxu0 %v358
  %v1076 = vpop.f32.mrb[0].mxu0
  %v1077 = vadd.f32 %v692, %v1076
  %v1078 = vpop.f32.mrb[0].mxu0
  %1079 = vmatprep.mubr.f32.mxu0 0.0
  %1080 = vmatmul.mubr.f32.gmra.mrb[0].mxu0 %v361
  %v1081 = vpop.f32.mrb[0].mxu0
  %v1082 = vadd.f32 %v697, %v1081
  %v1083 = vpop.f32.mrb[0].mxu0
  %1084 = vmatprep.mubr.f32.mxu0 0.0
  %1085 = vmatmul.mubr.f32.gmra.mrb[0].mxu0 %v364
  %v1086 = vpop.f32.mrb[0].mxu0
  %v1087 = vadd.f32 %v702, %v1086
  %v1088 = vpop.f32.mrb[0].mxu0
  %1089 = vmatprep.mubr.f32.mxu0 0.0
  %1090 = vmatmul.mubr.f32.gmra.mrb[0].mxu0 %v367
  %v1091 = vpop.f32.mrb[0].mxu0
  %v1092 = vadd.f32 %v707, %v1091
  %v1093 = vpop.f32.mrb[0].mxu0
  %1094 = vmatprep.mubr.f32.mxu0 0.0
  %1095 = vmatmul.mubr.f32.gmra.mrb[0].mxu0 %v370
  %v1096 = vpop.f32.mrb[0].mxu0
  %v1097 = vadd.f32 %v712, %v1096
  %v1098 = vpop.f32.mrb[0].mxu0
  %1099 = vmatprep.mubr.f32.mxu0 0.0
  %1100 = vmatmul.mubr.f32.gmra.mrb[0].mxu0 %v373
  %v1101 = vpop.f32.mrb[0].mxu0
  %v1102 = vadd.f32 %v717, %v1101
  %v1103 = vpop.f32.mrb[0].mxu0
  %1104 = vmatprep.mubr.f32.mxu0 0.0
  %1105 = vmatmul.mubr.f32.gmra.mrb[0].mxu0 %v376
  %v1106 = vpop.f32.mrb[0].mxu0
  %v1107 = vadd.f32 %v722, %v1106
  %v1108 = vpop.f32.mrb[0].mxu0
  %1109 = vmatprep.mubr.f32.mxu0 0.0
  %1110 = vmatmul.mubr.f32.gmra.mrb[0].mxu0 %v379
  %v1111 = vpop.f32.mrb[0].mxu0
  %v1112 = vadd.f32 %v727, %v1111
  %v1113 = vpop.f32.mrb[0].mxu0
  %1114 = vmatprep.mubr.f32.mxu0 0.0
  %1115 = vmatmul.mubr.f32.gmra.mrb[0].mxu0 %v382
  %v1116 = vpop.f32.mrb[0].mxu0
  %v1117 = vadd.f32 %v732, %v1116
  %v1118 = vpop.f32.mrb[0].mxu0
  %1119 = vmatprep.mubr.f32.mxu0 0.0
  %1120 = vmatmul.mubr.f32.gmra.mrb[0].mxu0 %v385
  %v1121 = vpop.f32.mrb[0].mxu0
  %v1122 = vadd.f32 %v737, %v1121
  %v1123 = vpop.f32.mrb[0].mxu0
  %1124 = vmatprep.mubr.f32.mxu0 0.0
  %1125 = vmatmul.mubr.f32.gmra.mrb[0].mxu0 %v388
  %v1126 = vpop.f32.mrb[0].mxu0
  %v1127 = vadd.f32 %v742, %v1126
  %v1128 = vpop.f32.mrb[0].mxu0
  %1129 = vmatprep.mubr.f32.mxu0 0.0
  %1130 = vmatmul.mubr.f32.gmra.mrb[0].mxu0 %v391
  %v1131 = vpop.f32.mrb[0].mxu0
  %v1132 = vadd.f32 %v747, %v1131
  %v1133 = vpop.f32.mrb[0].mxu0
  %1134 = vmatprep.mubr.f32.mxu0 0.0
  %1135 = vmatmul.mubr.f32.gmra.mrb[0].mxu0 %v394
  %v1136 = vpop.f32.mrb[0].mxu0
  %v1137 = vadd.f32 %v752, %v1136
  %v1138 = vpop.f32.mrb[0].mxu0
  %1139 = vmatprep.mubr.f32.mxu0 0.0
  %1140 = vmatmul.mubr.f32.gmra.mrb[0].mxu0 %v397
  %v1141 = vpop.f32.mrb[0].mxu0
  %v1142 = vadd.f32 %v757, %v1141
  %v1143 = vpop.f32.mrb[0].mxu0
  %1144 = vmatprep.mubr.f32.mxu0 0.0
  %1145 = vmatmul.mubr.f32.gmra.mrb[0].mxu0 %v400
  %v1146 = vpop.f32.mrb[0].mxu0
  %v1147 = vadd.f32 %v762, %v1146
  %v1148 = vpop.f32.mrb[0].mxu0
  %1149 = vmatprep.mubr.f32.mxu0 0.0
  %1150 = vmatmul.mubr.f32.gmra.mrb[0].mxu0 %v403
  %v1151 = vpop.f32.mrb[0].mxu0
  %v1152 = vadd.f32 %v767, %v1151
  %v1153 = vpop.f32.mrb[0].mxu0
  %1154 = vmatprep.mubr.f32.mxu0 0.0
  %1155 = vmatmul.mubr.f32.gmra.mrb[0].mxu0 %v406
  %v1156 = vpop.f32.mrb[0].mxu0
  %v1157 = vadd.f32 %v772, %v1156
  %v1158 = vpop.f32.mrb[0].mxu0
  %1159 = vmatprep.mubr.f32.mxu0 0.0
  %1160 = vmatmul.mubr.f32.gmra.mrb[0].mxu0 %v409
  %v1161 = vpop.f32.mrb[0].mxu0
  %v1162 = vadd.f32 %v777, %v1161
  %v1163 = vpop.f32.mrb[0].mxu0
  %1164 = vmatprep.mubr.f32.mxu0 0.0
  %1165 = vmatmul.mubr.f32.gmra.mrb[0].mxu0 %v412
  %v1166 = vpop.f32.mrb[0].mxu0
  %v1167 = vadd.f32 %v782, %v1166
  %v1168 = vpop.f32.mrb[0].mxu0
  %1169 = vmatprep.mubr.f32.mxu0 0.0
  %1170 = vmatmul.mubr.f32.gmra.mrb[0].mxu0 %v415
  %v1171 = vpop.f32.mrb[0].mxu0
  %v1172 = vadd.f32 %v787, %v1171
  %v1173 = vpop.f32.mrb[0].mxu0
  %1174 = vmatprep.mubr.f32.mxu0 0.0
  %1175 = vmatmul.mubr.f32.gmra.mrb[0].mxu0 %v418
  %v1176 = vpop.f32.mrb[0].mxu0
  %v1177 = vadd.f32 %v792, %v1176
  %v1178 = vpop.f32.mrb[0].mxu0
  %1179 = vmatprep.mubr.f32.mxu0 0.0
  %1180 = vmatmul.mubr.f32.gmra.mrb[0].mxu0 %v421
  %v1181 = vpop.f32.mrb[0].mxu0
  %v1182 = vadd.f32 %v797, %v1181
  %v1183 = vpop.f32.mrb[0].mxu0
  %1184 = vmatprep.mubr.f32.mxu0 0.0
  %1185 = vmatmul.mubr.f32.gmra.mrb[0].mxu0 %v424
  %v1186 = vpop.f32.mrb[0].mxu0
  %v1187 = vadd.f32 %v802, %v1186
  %v1188 = vpop.f32.mrb[0].mxu0
  %1189 = vmatprep.mubr.f32.mxu0 0.0
  %1190 = vmatmul.mubr.f32.gmra.mrb[0].mxu0 %v427
  %v1191 = vpop.f32.mrb[0].mxu0
  %v1192 = vadd.f32 %v807, %v1191
  %v1193 = vpop.f32.mrb[0].mxu0
  %1194 = vmatprep.mubr.f32.mxu0 0.0
  %1195 = vmatmul.mubr.f32.gmra.mrb[0].mxu0 %v430
  %v1196 = vpop.f32.mrb[0].mxu0
  %v1197 = vadd.f32 %v812, %v1196
  %v1198 = vpop.f32.mrb[0].mxu0
  %1199 = vmatprep.mubr.f32.mxu0 0.0
  %1200 = vmatmul.mubr.f32.gmra.mrb[0].mxu0 %v433
  %v1201 = vpop.f32.mrb[0].mxu0
  %v1202 = vadd.f32 %v817, %v1201
  %v1203 = vpop.f32.mrb[0].mxu0
  %1204 = vdwg.mxu0
  %v1205 = vmax.f32 %v887, %v967
  %v1206 = vmax.f32 %v892, %v972
  %v1207 = vmax.f32 %v897, %v977
  %v1208 = vmax.f32 %v902, %v982
  %v1209 = vmax.f32 %v907, %v987
  %v1210 = vmax.f32 %v912, %v992
  %v1211 = vmax.f32 %v917, %v997
  %v1212 = vmax.f32 %v922, %v1002
  %v1213 = vmax.f32 %v927, %v1007
  %v1214 = vmax.f32 %v932, %v1012
  %v1215 = vmax.f32 %v937, %v1017
  %v1216 = vmax.f32 %v942, %v1022
  %v1217 = vmax.f32 %v947, %v1027
  %v1218 = vmax.f32 %v952, %v1032
  %v1219 = vmax.f32 %v957, %v1037
  %v1220 = vmax.f32 %v962, %v1042
  %v1221 = vmax.f32 %v1047, %v1127
  %v1222 = vmax.f32 %v1052, %v1132
  %v1223 = vmax.f32 %v1057, %v1137
  %v1224 = vmax.f32 %v1062, %v1142
  %v1225 = vmax.f32 %v1067, %v1147
  %v1226 = vmax.f32 %v1072, %v1152
  %v1227 = vmax.f32 %v1077, %v1157
  %v1228 = vmax.f32 %v1082, %v1162
  %v1229 = vmax.f32 %v1087, %v1167
  %v1230 = vmax.f32 %v1092, %v1172
  %v1231 = vmax.f32 %v1097, %v1177
  %v1232 = vmax.f32 %v1102, %v1182
  %v1233 = vmax.f32 %v1107, %v1187
  %v1234 = vmax.f32 %v1112, %v1192
  %v1235 = vmax.f32 %v1117, %v1197
  %v1236 = vmax.f32 %v1122, %v1202
  %v1237 = vmax.f32 %v1205, %v1221
  %v1238 = vmax.f32 %v1206, %v1222
  %v1239 = vmax.f32 %v1207, %v1223
  %v1240 = vmax.f32 %v1208, %v1224
  %v1241 = vmax.f32 %v1209, %v1225
  %v1242 = vmax.f32 %v1210, %v1226
  %v1243 = vmax.f32 %v1211, %v1227
  %v1244 = vmax.f32 %v1212, %v1228
  %v1245 = vmax.f32 %v1213, %v1229
  %v1246 = vmax.f32 %v1214, %v1230
  %v1247 = vmax.f32 %v1215, %v1231
  %v1248 = vmax.f32 %v1216, %v1232
  %v1249 = vmax.f32 %v1217, %v1233
  %v1250 = vmax.f32 %v1218, %v1234
  %v1251 = vmax.f32 %v1219, %v1235
  %v1252 = vmax.f32 %v1220, %v1236
  %v1253 = vld [vmem:[%s2] sm:$0x1]
  %v1255 = vlaneseq
  %v1256 = vshrl.u32 %v1255, 7
  %v1257 = vsub.s32 0, %v1256
  %v1258 = vrot.slane %v1253, %v1257
  %v1260 = vadd.f32 %v1237, %v1258
  %v1261 = vadd.f32 %v1238, %v1258
  %v1262 = vadd.f32 %v1239, %v1258
  %v1263 = vadd.f32 %v1240, %v1258
  %v1264 = vadd.f32 %v1241, %v1258
  %v1265 = vadd.f32 %v1242, %v1258
  %v1266 = vadd.f32 %v1243, %v1258
  %v1267 = vadd.f32 %v1244, %v1258
  %v1268 = vadd.f32 %v1245, %v1258
  %v1269 = vadd.f32 %v1246, %v1258
  %v1270 = vadd.f32 %v1247, %v1258
  %v1271 = vadd.f32 %v1248, %v1258
  %v1272 = vadd.f32 %v1249, %v1258
  %v1273 = vadd.f32 %v1250, %v1258
  %v1274 = vadd.f32 %v1251, %v1258
  %v1275 = vadd.f32 %v1252, %v1258
  %v1276 = vmax.f32 %v1260, 0.0
  %v1277 = vmax.f32 %v1261, 0.0
  %v1278 = vmax.f32 %v1262, 0.0
  %v1279 = vmax.f32 %v1263, 0.0
  %v1280 = vmax.f32 %v1264, 0.0
  %v1281 = vmax.f32 %v1265, 0.0
  %v1282 = vmax.f32 %v1266, 0.0
  %v1283 = vmax.f32 %v1267, 0.0
  %v1284 = vmax.f32 %v1268, 0.0
  %v1285 = vmax.f32 %v1269, 0.0
  %v1286 = vmax.f32 %v1270, 0.0
  %v1287 = vmax.f32 %v1271, 0.0
  %v1288 = vmax.f32 %v1272, 0.0
  %v1289 = vmax.f32 %v1273, 0.0
  %v1290 = vmax.f32 %v1274, 0.0
  %v1291 = vmax.f32 %v1275, 0.0
  %1292 = vst [vmem:[%s3] sm:$0xff] %v1276
  %1293 = vst [vmem:[%s3 + $0x8] sm:$0xff] %v1277
  %1294 = vst [vmem:[%s3 + $0x10] sm:$0xff] %v1278
  %1295 = vst [vmem:[%s3 + $0x18] sm:$0xff] %v1279
  %1296 = vst [vmem:[%s3 + $0x20] sm:$0xff] %v1280
  %1297 = vst [vmem:[%s3 + $0x28] sm:$0xff] %v1281
  %1298 = vst [vmem:[%s3 + $0x30] sm:$0xff] %v1282
  %1299 = vst [vmem:[%s3 + $0x38] sm:$0xff] %v1283
  %1300 = vst [vmem:[%s3 + $0x40] sm:$0xff] %v1284
  %1301 = vst [vmem:[%s3 + $0x48] sm:$0xff] %v1285
  %1302 = vst [vmem:[%s3 + $0x50] sm:$0xff] %v1286
  %1303 = vst [vmem:[%s3 + $0x58] sm:$0xff] %v1287
  %1304 = vst [vmem:[%s3 + $0x60] sm:$0xff] %v1288
  %1305 = vst [vmem:[%s3 + $0x68] sm:$0xff] %v1289
  %1306 = vst [vmem:[%s3 + $0x70] sm:$0xff] %v1290
  %1307 = vst [vmem:[%s3 + $0x78] sm:$0xff] %v1291
  // Predicated region
  $region14: #{simple_cnn_forward.4} parent=0 // pred_check
    _
  $region15: #{simple_cnn_forward.4} parent=0 // pred_check_branch
    %1309 = sbr.rel (0) target = $region17
  $region16: #{simple_cnn_forward.4} parent=0 // pred_region
    _
  $region17: #{simple_cnn_forward.4} parent=0 // pred_fallthru
    _
  // Predicated region
  $region18: #{simple_cnn_forward.4} parent=0 // pred_check
    _
  $region19: #{simple_cnn_forward.4} parent=0 // pred_check_branch
    %1311 = sbr.rel (0) target = $region21
  $region20: #{simple_cnn_forward.4} parent=0 // pred_region
    _
  $region21: #{simple_cnn_forward.4} parent=0 // pred_fallthru
    _

// kernel: simple_cnn_forward.5
$region0: #{simple_cnn_forward.5}
  #allocation0 [shape = 'u32[]', space=smem, size = 0x4, offset = 0x4, fixed_abs, tag = 'smem constant byte address 0x4 - core index']
  #allocation1 [shape = 'u32[144,128]{1,0:T(1,128)}', space=vmem, size = 0x12000, scoped, tag = 'internal scratch']
  %s0 = inlined_call_operand.vmem [shape: f32[2,8192], index: 0, kind: input, shape index: {}]
  %s1 = inlined_call_operand.vmem [shape: f32[8192,128], index: 1, kind: input, shape index: {}]
  %s2 = inlined_call_operand.vmem [shape: f32[1,128], index: 2, kind: input, shape index: {}]
  %s3 = inlined_call_operand.vmem [shape: f32[128,128], index: 3, kind: input, shape index: {}]
  %s4 = inlined_call_operand.vmem [shape: f32[1,128], index: 4, kind: input, shape index: {}]
  %s5 = inlined_call_operand.hbm [shape: f32[2,128], index: 5, kind: output, shape index: {}]
  %s6 = sld [smem:[#allocation0]]
  $region30: #{simple_cnn_forward.5} parent=0
    _
  %s8 = ssub.s32 1, %s6
  %s9 = scalar_select 0, %s8, %s6
  $region1: #{simple_cnn_forward.5} parent=0
    #allocation2 [shape = 'u8[1024]{0}', space=vmem, size = 0x400, scoped, tag = 'output window, operand 0, single buffered']
    #allocation3 [shape = 's32[1]{0}', space=sflag, size = 0x4, scoped, tag = 'scoped memory for simple_cnn_forward.5']
    %10 = vsyncpa [#allocation3], 0
    // Predicated region
    $region2: #{simple_cnn_forward.5} parent=1 // pred_check
      _
    $region3: #{simple_cnn_forward.5} parent=1 // pred_check_branch
      %12 = sbr.rel (0) target = $region5
    $region4: #{simple_cnn_forward.5} parent=1 // pred_region
      _
    $region5: #{simple_cnn_forward.5} parent=1 // pred_fallthru
      _
    // Predicated region
    $region6: #{simple_cnn_forward.5} parent=1 // pred_check
      _
    $region7: #{simple_cnn_forward.5} parent=1 // pred_check_branch
      %14 = sbr.rel (0) target = $region9
    $region8: #{simple_cnn_forward.5} parent=1 // pred_region
      _
    $region9: #{simple_cnn_forward.5} parent=1 // pred_fallthru
      _
    // Predicated region
    $region10: #{simple_cnn_forward.5} parent=1 // pred_check
      _
    $region11: #{simple_cnn_forward.5} parent=1 // pred_check_branch
      %16 = sbr.rel (0) target = $region13
    $region12: #{simple_cnn_forward.5} parent=1 // pred_region
      _
    $region13: #{simple_cnn_forward.5} parent=1 // pred_fallthru
      _
    // Predicated region
    $region14: #{simple_cnn_forward.5} parent=1 // pred_check
      _
    $region15: #{simple_cnn_forward.5} parent=1 // pred_check_branch
      %18 = sbr.rel (0) target = $region17
    $region16: #{simple_cnn_forward.5} parent=1 // pred_region
      _
    $region17: #{simple_cnn_forward.5} parent=1 // pred_fallthru
      _
    // Predicated region
    $region18: #{simple_cnn_forward.5} parent=1 // pred_check
      _
    $region19: #{simple_cnn_forward.5} parent=1 // pred_check_branch
      %20 = sbr.rel (0) target = $region21
    $region20: #{simple_cnn_forward.5} parent=1 // pred_region
      _
    $region21: #{simple_cnn_forward.5} parent=1 // pred_fallthru
      _
    %v21 = vld [vmem:[%s0] sm:$0xff]
    %v22 = vld [vmem:[%s0 + $0x8] sm:$0xff]
    %v23 = vld [vmem:[%s0 + $0x10] sm:$0xff]
    %v24 = vld [vmem:[%s0 + $0x18] sm:$0xff]
    %v25 = vld [vmem:[%s0 + $0x20] sm:$0xff]
    %v26 = vld [vmem:[%s0 + $0x28] sm:$0xff]
    %v27 = vld [vmem:[%s0 + $0x30] sm:$0xff]
    %v28 = vld [vmem:[%s0 + $0x38] sm:$0xff]
    %v29 = vld [vmem:[%s0 + $0x40] sm:$0xff]
    %v30 = vld [vmem:[%s0 + $0x48] sm:$0xff]
    %v31 = vld [vmem:[%s0 + $0x50] sm:$0xff]
    %v32 = vld [vmem:[%s0 + $0x58] sm:$0xff]
    %v33 = vld [vmem:[%s0 + $0x60] sm:$0xff]
    %v34 = vld [vmem:[%s0 + $0x68] sm:$0xff]
    %v35 = vld [vmem:[%s0 + $0x70] sm:$0xff]
    %v36 = vld [vmem:[%s0 + $0x78] sm:$0xff]
    %v37 = vld [vmem:[%s1] sm:$0xff]
    %v38 = vld [vmem:[%s1 + $0x8] sm:$0xff]
    %v39 = vld [vmem:[%s1 + $0x10] sm:$0xff]
    %v40 = vld [vmem:[%s1 + $0x18] sm:$0xff]
    %v41 = vld [vmem:[%s1 + $0x20] sm:$0xff]
    %v42 = vld [vmem:[%s1 + $0x28] sm:$0xff]
    %v43 = vld [vmem:[%s1 + $0x30] sm:$0xff]
    %v44 = vld [vmem:[%s1 + $0x38] sm:$0xff]
    %v45 = vld [vmem:[%s1 + $0x40] sm:$0xff]
    %v46 = vld [vmem:[%s1 + $0x48] sm:$0xff]
    %v47 = vld [vmem:[%s1 + $0x50] sm:$0xff]
    %v48 = vld [vmem:[%s1 + $0x58] sm:$0xff]
    %v49 = vld [vmem:[%s1 + $0x60] sm:$0xff]
    %v50 = vld [vmem:[%s1 + $0x68] sm:$0xff]
    %v51 = vld [vmem:[%s1 + $0x70] sm:$0xff]
    %v52 = vld [vmem:[%s1 + $0x78] sm:$0xff]
    %v53 = vld [vmem:[%s1 + $0x80] sm:$0xff]
    %v54 = vld [vmem:[%s1 + $0x88] sm:$0xff]
    %v55 = vld [vmem:[%s1 + $0x90] sm:$0xff]
    %v56 = vld [vmem:[%s1 + $0x98] sm:$0xff]
    %v57 = vld [vmem:[%s1 + $0xa0] sm:$0xff]
    %v58 = vld [vmem:[%s1 + $0xa8] sm:$0xff]
    %v59 = vld [vmem:[%s1 + $0xb0] sm:$0xff]
    %v60 = vld [vmem:[%s1 + $0xb8] sm:$0xff]
    %v61 = vld [vmem:[%s1 + $0xc0] sm:$0xff]
    %v62 = vld [vmem:[%s1 + $0xc8] sm:$0xff]
    %v63 = vld [vmem:[%s1 + $0xd0] sm:$0xff]
    %v64 = vld [vmem:[%s1 + $0xd8] sm:$0xff]
    %v65 = vld [vmem:[%s1 + $0xe0] sm:$0xff]
    %v66 = vld [vmem:[%s1 + $0xe8] sm:$0xff]
    %v67 = vld [vmem:[%s1 + $0xf0] sm:$0xff]
    %v68 = vld [vmem:[%s1 + $0xf8] sm:$0xff]
    %v69 = vld [vmem:[%s1 + $0x100] sm:$0xff]
    %v70 = vld [vmem:[%s1 + $0x108] sm:$0xff]
    %v71 = vld [vmem:[%s1 + $0x110] sm:$0xff]
    %v72 = vld [vmem:[%s1 + $0x118] sm:$0xff]
    %v73 = vld [vmem:[%s1 + $0x120] sm:$0xff]
    %v74 = vld [vmem:[%s1 + $0x128] sm:$0xff]
    %v75 = vld [vmem:[%s1 + $0x130] sm:$0xff]
    %v76 = vld [vmem:[%s1 + $0x138] sm:$0xff]
    %v77 = vld [vmem:[%s1 + $0x140] sm:$0xff]
    %v78 = vld [vmem:[%s1 + $0x148] sm:$0xff]
    %v79 = vld [vmem:[%s1 + $0x150] sm:$0xff]
    %v80 = vld [vmem:[%s1 + $0x158] sm:$0xff]
    %v81 = vld [vmem:[%s1 + $0x160] sm:$0xff]
    %v82 = vld [vmem:[%s1 + $0x168] sm:$0xff]
    %v83 = vld [vmem:[%s1 + $0x170] sm:$0xff]
    %v84 = vld [vmem:[%s1 + $0x178] sm:$0xff]
    %v85 = vld [vmem:[%s1 + $0x180] sm:$0xff]
    %v86 = vld [vmem:[%s1 + $0x188] sm:$0xff]
    %v87 = vld [vmem:[%s1 + $0x190] sm:$0xff]
    %v88 = vld [vmem:[%s1 + $0x198] sm:$0xff]
    %v89 = vld [vmem:[%s1 + $0x1a0] sm:$0xff]
    %v90 = vld [vmem:[%s1 + $0x1a8] sm:$0xff]
    %v91 = vld [vmem:[%s1 + $0x1b0] sm:$0xff]
    %v92 = vld [vmem:[%s1 + $0x1b8] sm:$0xff]
    %v93 = vld [vmem:[%s1 + $0x1c0] sm:$0xff]
    %v94 = vld [vmem:[%s1 + $0x1c8] sm:$0xff]
    %v95 = vld [vmem:[%s1 + $0x1d0] sm:$0xff]
    %v96 = vld [vmem:[%s1 + $0x1d8] sm:$0xff]
    %v97 = vld [vmem:[%s1 + $0x1e0] sm:$0xff]
    %v98 = vld [vmem:[%s1 + $0x1e8] sm:$0xff]
    %v99 = vld [vmem:[%s1 + $0x1f0] sm:$0xff]
    %v100 = vld [vmem:[%s1 + $0x1f8] sm:$0xff]
    %v101 = vld [vmem:[%s1 + $0x200] sm:$0xff]
    %v102 = vld [vmem:[%s1 + $0x208] sm:$0xff]
    %v103 = vld [vmem:[%s1 + $0x210] sm:$0xff]
    %v104 = vld [vmem:[%s1 + $0x218] sm:$0xff]
    %v105 = vld [vmem:[%s1 + $0x220] sm:$0xff]
    %v106 = vld [vmem:[%s1 + $0x228] sm:$0xff]
    %v107 = vld [vmem:[%s1 + $0x230] sm:$0xff]
    %v108 = vld [vmem:[%s1 + $0x238] sm:$0xff]
    %v109 = vld [vmem:[%s1 + $0x240] sm:$0xff]
    %v110 = vld [vmem:[%s1 + $0x248] sm:$0xff]
    %v111 = vld [vmem:[%s1 + $0x250] sm:$0xff]
    %v112 = vld [vmem:[%s1 + $0x258] sm:$0xff]
    %v113 = vld [vmem:[%s1 + $0x260] sm:$0xff]
    %v114 = vld [vmem:[%s1 + $0x268] sm:$0xff]
    %v115 = vld [vmem:[%s1 + $0x270] sm:$0xff]
    %v116 = vld [vmem:[%s1 + $0x278] sm:$0xff]
    %v117 = vld [vmem:[%s1 + $0x280] sm:$0xff]
    %v118 = vld [vmem:[%s1 + $0x288] sm:$0xff]
    %v119 = vld [vmem:[%s1 + $0x290] sm:$0xff]
    %v120 = vld [vmem:[%s1 + $0x298] sm:$0xff]
    %v121 = vld [vmem:[%s1 + $0x2a0] sm:$0xff]
    %v122 = vld [vmem:[%s1 + $0x2a8] sm:$0xff]
    %v123 = vld [vmem:[%s1 + $0x2b0] sm:$0xff]
    %v124 = vld [vmem:[%s1 + $0x2b8] sm:$0xff]
    %v125 = vld [vmem:[%s1 + $0x2c0] sm:$0xff]
    %v126 = vld [vmem:[%s1 + $0x2c8] sm:$0xff]
    %v127 = vld [vmem:[%s1 + $0x2d0] sm:$0xff]
    %v128 = vld [vmem:[%s1 + $0x2d8] sm:$0xff]
    %v129 = vld [vmem:[%s1 + $0x2e0] sm:$0xff]
    %v130 = vld [vmem:[%s1 + $0x2e8] sm:$0xff]
    %v131 = vld [vmem:[%s1 + $0x2f0] sm:$0xff]
    %v132 = vld [vmem:[%s1 + $0x2f8] sm:$0xff]
    %v133 = vld [vmem:[%s1 + $0x300] sm:$0xff]
    %v134 = vld [vmem:[%s1 + $0x308] sm:$0xff]
    %v135 = vld [vmem:[%s1 + $0x310] sm:$0xff]
    %v136 = vld [vmem:[%s1 + $0x318] sm:$0xff]
    %v137 = vld [vmem:[%s1 + $0x320] sm:$0xff]
    %v138 = vld [vmem:[%s1 + $0x328] sm:$0xff]
    %v139 = vld [vmem:[%s1 + $0x330] sm:$0xff]
    %v140 = vld [vmem:[%s1 + $0x338] sm:$0xff]
    %v141 = vld [vmem:[%s1 + $0x340] sm:$0xff]
    %v142 = vld [vmem:[%s1 + $0x348] sm:$0xff]
    %v143 = vld [vmem:[%s1 + $0x350] sm:$0xff]
    %v144 = vld [vmem:[%s1 + $0x358] sm:$0xff]
    %v145 = vld [vmem:[%s1 + $0x360] sm:$0xff]
    %v146 = vld [vmem:[%s1 + $0x368] sm:$0xff]
    %v147 = vld [vmem:[%s1 + $0x370] sm:$0xff]
    %v148 = vld [vmem:[%s1 + $0x378] sm:$0xff]
    %v149 = vld [vmem:[%s1 + $0x380] sm:$0xff]
    %v150 = vld [vmem:[%s1 + $0x388] sm:$0xff]
    %v151 = vld [vmem:[%s1 + $0x390] sm:$0xff]
    %v152 = vld [vmem:[%s1 + $0x398] sm:$0xff]
    %v153 = vld [vmem:[%s1 + $0x3a0] sm:$0xff]
    %v154 = vld [vmem:[%s1 + $0x3a8] sm:$0xff]
    %v155 = vld [vmem:[%s1 + $0x3b0] sm:$0xff]
    %v156 = vld [vmem:[%s1 + $0x3b8] sm:$0xff]
    %v157 = vld [vmem:[%s1 + $0x3c0] sm:$0xff]
    %v158 = vld [vmem:[%s1 + $0x3c8] sm:$0xff]
    %v159 = vld [vmem:[%s1 + $0x3d0] sm:$0xff]
    %v160 = vld [vmem:[%s1 + $0x3d8] sm:$0xff]
    %v161 = vld [vmem:[%s1 + $0x3e0] sm:$0xff]
    %v162 = vld [vmem:[%s1 + $0x3e8] sm:$0xff]
    %v163 = vld [vmem:[%s1 + $0x3f0] sm:$0xff]
    %v164 = vld [vmem:[%s1 + $0x3f8] sm:$0xff]
    %v165 = vld [vmem:[%s1 + $0x400] sm:$0xff]
    %v166 = vld [vmem:[%s1 + $0x408] sm:$0xff]
    %v167 = vld [vmem:[%s1 + $0x410] sm:$0xff]
    %v168 = vld [vmem:[%s1 + $0x418] sm:$0xff]
    %v169 = vld [vmem:[%s1 + $0x420] sm:$0xff]
    %v170 = vld [vmem:[%s1 + $0x428] sm:$0xff]
    %v171 = vld [vmem:[%s1 + $0x430] sm:$0xff]
    %v172 = vld [vmem:[%s1 + $0x438] sm:$0xff]
    %v173 = vld [vmem:[%s1 + $0x440] sm:$0xff]
    %v174 = vld [vmem:[%s1 + $0x448] sm:$0xff]
    %v175 = vld [vmem:[%s1 + $0x450] sm:$0xff]
    %v176 = vld [vmem:[%s1 + $0x458] sm:$0xff]
    %v177 = vld [vmem:[%s1 + $0x460] sm:$0xff]
    %v178 = vld [vmem:[%s1 + $0x468] sm:$0xff]
    %v179 = vld [vmem:[%s1 + $0x470] sm:$0xff]
    %v180 = vld [vmem:[%s1 + $0x478] sm:$0xff]
    %v181 = vld [vmem:[%s1 + $0x480] sm:$0xff]
    %v182 = vld [vmem:[%s1 + $0x488] sm:$0xff]
    %v183 = vld [vmem:[%s1 + $0x490] sm:$0xff]
    %v184 = vld [vmem:[%s1 + $0x498] sm:$0xff]
    %v185 = vld [vmem:[%s1 + $0x4a0] sm:$0xff]
    %v186 = vld [vmem:[%s1 + $0x4a8] sm:$0xff]
    %v187 = vld [vmem:[%s1 + $0x4b0] sm:$0xff]
    %v188 = vld [vmem:[%s1 + $0x4b8] sm:$0xff]
    %v189 = vld [vmem:[%s1 + $0x4c0] sm:$0xff]
    %v190 = vld [vmem:[%s1 + $0x4c8] sm:$0xff]
    %v191 = vld [vmem:[%s1 + $0x4d0] sm:$0xff]
    %v192 = vld [vmem:[%s1 + $0x4d8] sm:$0xff]
    %v193 = vld [vmem:[%s1 + $0x4e0] sm:$0xff]
    %v194 = vld [vmem:[%s1 + $0x4e8] sm:$0xff]
    %v195 = vld [vmem:[%s1 + $0x4f0] sm:$0xff]
    %v196 = vld [vmem:[%s1 + $0x4f8] sm:$0xff]
    %v197 = vld [vmem:[%s1 + $0x500] sm:$0xff]
    %v198 = vld [vmem:[%s1 + $0x508] sm:$0xff]
    %v199 = vld [vmem:[%s1 + $0x510] sm:$0xff]
    %v200 = vld [vmem:[%s1 + $0x518] sm:$0xff]
    %v201 = vld [vmem:[%s1 + $0x520] sm:$0xff]
    %v202 = vld [vmem:[%s1 + $0x528] sm:$0xff]
    %v203 = vld [vmem:[%s1 + $0x530] sm:$0xff]
    %v204 = vld [vmem:[%s1 + $0x538] sm:$0xff]
    %v205 = vld [vmem:[%s1 + $0x540] sm:$0xff]
    %v206 = vld [vmem:[%s1 + $0x548] sm:$0xff]
    %v207 = vld [vmem:[%s1 + $0x550] sm:$0xff]
    %v208 = vld [vmem:[%s1 + $0x558] sm:$0xff]
    %v209 = vld [vmem:[%s1 + $0x560] sm:$0xff]
    %v210 = vld [vmem:[%s1 + $0x568] sm:$0xff]
    %v211 = vld [vmem:[%s1 + $0x570] sm:$0xff]
    %v212 = vld [vmem:[%s1 + $0x578] sm:$0xff]
    %v213 = vld [vmem:[%s1 + $0x580] sm:$0xff]
    %v214 = vld [vmem:[%s1 + $0x588] sm:$0xff]
    %v215 = vld [vmem:[%s1 + $0x590] sm:$0xff]
    %v216 = vld [vmem:[%s1 + $0x598] sm:$0xff]
    %v217 = vld [vmem:[%s1 + $0x5a0] sm:$0xff]
    %v218 = vld [vmem:[%s1 + $0x5a8] sm:$0xff]
    %v219 = vld [vmem:[%s1 + $0x5b0] sm:$0xff]
    %v220 = vld [vmem:[%s1 + $0x5b8] sm:$0xff]
    %v221 = vld [vmem:[%s1 + $0x5c0] sm:$0xff]
    %v222 = vld [vmem:[%s1 + $0x5c8] sm:$0xff]
    %v223 = vld [vmem:[%s1 + $0x5d0] sm:$0xff]
    %v224 = vld [vmem:[%s1 + $0x5d8] sm:$0xff]
    %v225 = vld [vmem:[%s1 + $0x5e0] sm:$0xff]
    %v226 = vld [vmem:[%s1 + $0x5e8] sm:$0xff]
    %v227 = vld [vmem:[%s1 + $0x5f0] sm:$0xff]
    %v228 = vld [vmem:[%s1 + $0x5f8] sm:$0xff]
    %v229 = vld [vmem:[%s1 + $0x600] sm:$0xff]
    %v230 = vld [vmem:[%s1 + $0x608] sm:$0xff]
    %v231 = vld [vmem:[%s1 + $0x610] sm:$0xff]
    %v232 = vld [vmem:[%s1 + $0x618] sm:$0xff]
    %v233 = vld [vmem:[%s1 + $0x620] sm:$0xff]
    %v234 = vld [vmem:[%s1 + $0x628] sm:$0xff]
    %v235 = vld [vmem:[%s1 + $0x630] sm:$0xff]
    %v236 = vld [vmem:[%s1 + $0x638] sm:$0xff]
    %v237 = vld [vmem:[%s1 + $0x640] sm:$0xff]
    %v238 = vld [vmem:[%s1 + $0x648] sm:$0xff]
    %v239 = vld [vmem:[%s1 + $0x650] sm:$0xff]
    %v240 = vld [vmem:[%s1 + $0x658] sm:$0xff]
    %v241 = vld [vmem:[%s1 + $0x660] sm:$0xff]
    %v242 = vld [vmem:[%s1 + $0x668] sm:$0xff]
    %v243 = vld [vmem:[%s1 + $0x670] sm:$0xff]
    %v244 = vld [vmem:[%s1 + $0x678] sm:$0xff]
    %v245 = vld [vmem:[%s1 + $0x680] sm:$0xff]
    %v246 = vld [vmem:[%s1 + $0x688] sm:$0xff]
    %v247 = vld [vmem:[%s1 + $0x690] sm:$0xff]
    %v248 = vld [vmem:[%s1 + $0x698] sm:$0xff]
    %v249 = vld [vmem:[%s1 + $0x6a0] sm:$0xff]
    %v250 = vld [vmem:[%s1 + $0x6a8] sm:$0xff]
    %v251 = vld [vmem:[%s1 + $0x6b0] sm:$0xff]
    %v252 = vld [vmem:[%s1 + $0x6b8] sm:$0xff]
    %v253 = vld [vmem:[%s1 + $0x6c0] sm:$0xff]
    %v254 = vld [vmem:[%s1 + $0x6c8] sm:$0xff]
    %v255 = vld [vmem:[%s1 + $0x6d0] sm:$0xff]
    %v256 = vld [vmem:[%s1 + $0x6d8] sm:$0xff]
    %v257 = vld [vmem:[%s1 + $0x6e0] sm:$0xff]
    %v258 = vld [vmem:[%s1 + $0x6e8] sm:$0xff]
    %v259 = vld [vmem:[%s1 + $0x6f0] sm:$0xff]
    %v260 = vld [vmem:[%s1 + $0x6f8] sm:$0xff]
    %v261 = vld [vmem:[%s1 + $0x700] sm:$0xff]
    %v262 = vld [vmem:[%s1 + $0x708] sm:$0xff]
    %v263 = vld [vmem:[%s1 + $0x710] sm:$0xff]
    %v264 = vld [vmem:[%s1 + $0x718] sm:$0xff]
    %v265 = vld [vmem:[%s1 + $0x720] sm:$0xff]
    %v266 = vld [vmem:[%s1 + $0x728] sm:$0xff]
    %v267 = vld [vmem:[%s1 + $0x730] sm:$0xff]
    %v268 = vld [vmem:[%s1 + $0x738] sm:$0xff]
    %v269 = vld [vmem:[%s1 + $0x740] sm:$0xff]
    %v270 = vld [vmem:[%s1 + $0x748] sm:$0xff]
    %v271 = vld [vmem:[%s1 + $0x750] sm:$0xff]
    %v272 = vld [vmem:[%s1 + $0x758] sm:$0xff]
    %v273 = vld [vmem:[%s1 + $0x760] sm:$0xff]
    %v274 = vld [vmem:[%s1 + $0x768] sm:$0xff]
    %v275 = vld [vmem:[%s1 + $0x770] sm:$0xff]
    %v276 = vld [vmem:[%s1 + $0x778] sm:$0xff]
    %v277 = vld [vmem:[%s1 + $0x780] sm:$0xff]
    %v278 = vld [vmem:[%s1 + $0x788] sm:$0xff]
    %v279 = vld [vmem:[%s1 + $0x790] sm:$0xff]
    %v280 = vld [vmem:[%s1 + $0x798] sm:$0xff]
    %v281 = vld [vmem:[%s1 + $0x7a0] sm:$0xff]
    %v282 = vld [vmem:[%s1 + $0x7a8] sm:$0xff]
    %v283 = vld [vmem:[%s1 + $0x7b0] sm:$0xff]
    %v284 = vld [vmem:[%s1 + $0x7b8] sm:$0xff]
    %v285 = vld [vmem:[%s1 + $0x7c0] sm:$0xff]
    %v286 = vld [vmem:[%s1 + $0x7c8] sm:$0xff]
    %v287 = vld [vmem:[%s1 + $0x7d0] sm:$0xff]
    %v288 = vld [vmem:[%s1 + $0x7d8] sm:$0xff]
    %v289 = vld [vmem:[%s1 + $0x7e0] sm:$0xff]
    %v290 = vld [vmem:[%s1 + $0x7e8] sm:$0xff]
    %v291 = vld [vmem:[%s1 + $0x7f0] sm:$0xff]
    %v292 = vld [vmem:[%s1 + $0x7f8] sm:$0xff]
    %v293 = vld [vmem:[%s1 + $0x800] sm:$0xff]
    %v294 = vld [vmem:[%s1 + $0x808] sm:$0xff]
    %v295 = vld [vmem:[%s1 + $0x810] sm:$0xff]
    %v296 = vld [vmem:[%s1 + $0x818] sm:$0xff]
    %v297 = vld [vmem:[%s1 + $0x820] sm:$0xff]
    %v298 = vld [vmem:[%s1 + $0x828] sm:$0xff]
    %v299 = vld [vmem:[%s1 + $0x830] sm:$0xff]
    %v300 = vld [vmem:[%s1 + $0x838] sm:$0xff]
    %v301 = vld [vmem:[%s1 + $0x840] sm:$0xff]
    %v302 = vld [vmem:[%s1 + $0x848] sm:$0xff]
    %v303 = vld [vmem:[%s1 + $0x850] sm:$0xff]
    %v304 = vld [vmem:[%s1 + $0x858] sm:$0xff]
    %v305 = vld [vmem:[%s1 + $0x860] sm:$0xff]
    %v306 = vld [vmem:[%s1 + $0x868] sm:$0xff]
    %v307 = vld [vmem:[%s1 + $0x870] sm:$0xff]
    %v308 = vld [vmem:[%s1 + $0x878] sm:$0xff]
    %v309 = vld [vmem:[%s1 + $0x880] sm:$0xff]
    %v310 = vld [vmem:[%s1 + $0x888] sm:$0xff]
    %v311 = vld [vmem:[%s1 + $0x890] sm:$0xff]
    %v312 = vld [vmem:[%s1 + $0x898] sm:$0xff]
    %v313 = vld [vmem:[%s1 + $0x8a0] sm:$0xff]
    %v314 = vld [vmem:[%s1 + $0x8a8] sm:$0xff]
    %v315 = vld [vmem:[%s1 + $0x8b0] sm:$0xff]
    %v316 = vld [vmem:[%s1 + $0x8b8] sm:$0xff]
    %v317 = vld [vmem:[%s1 + $0x8c0] sm:$0xff]
    %v318 = vld [vmem:[%s1 + $0x8c8] sm:$0xff]
    %v319 = vld [vmem:[%s1 + $0x8d0] sm:$0xff]
    %v320 = vld [vmem:[%s1 + $0x8d8] sm:$0xff]
    %v321 = vld [vmem:[%s1 + $0x8e0] sm:$0xff]
    %v322 = vld [vmem:[%s1 + $0x8e8] sm:$0xff]
    %v323 = vld [vmem:[%s1 + $0x8f0] sm:$0xff]
    %v324 = vld [vmem:[%s1 + $0x8f8] sm:$0xff]
    %v325 = vld [vmem:[%s1 + $0x900] sm:$0xff]
    %v326 = vld [vmem:[%s1 + $0x908] sm:$0xff]
    %v327 = vld [vmem:[%s1 + $0x910] sm:$0xff]
    %v328 = vld [vmem:[%s1 + $0x918] sm:$0xff]
    %v329 = vld [vmem:[%s1 + $0x920] sm:$0xff]
    %v330 = vld [vmem:[%s1 + $0x928] sm:$0xff]
    %v331 = vld [vmem:[%s1 + $0x930] sm:$0xff]
    %v332 = vld [vmem:[%s1 + $0x938] sm:$0xff]
    %v333 = vld [vmem:[%s1 + $0x940] sm:$0xff]
    %v334 = vld [vmem:[%s1 + $0x948] sm:$0xff]
    %v335 = vld [vmem:[%s1 + $0x950] sm:$0xff]
    %v336 = vld [vmem:[%s1 + $0x958] sm:$0xff]
    %v337 = vld [vmem:[%s1 + $0x960] sm:$0xff]
    %v338 = vld [vmem:[%s1 + $0x968] sm:$0xff]
    %v339 = vld [vmem:[%s1 + $0x970] sm:$0xff]
    %v340 = vld [vmem:[%s1 + $0x978] sm:$0xff]
    %v341 = vld [vmem:[%s1 + $0x980] sm:$0xff]
    %v342 = vld [vmem:[%s1 + $0x988] sm:$0xff]
    %v343 = vld [vmem:[%s1 + $0x990] sm:$0xff]
    %v344 = vld [vmem:[%s1 + $0x998] sm:$0xff]
    %v345 = vld [vmem:[%s1 + $0x9a0] sm:$0xff]
    %v346 = vld [vmem:[%s1 + $0x9a8] sm:$0xff]
    %v347 = vld [vmem:[%s1 + $0x9b0] sm:$0xff]
    %v348 = vld [vmem:[%s1 + $0x9b8] sm:$0xff]
    %v349 = vld [vmem:[%s1 + $0x9c0] sm:$0xff]
    %v350 = vld [vmem:[%s1 + $0x9c8] sm:$0xff]
    %v351 = vld [vmem:[%s1 + $0x9d0] sm:$0xff]
    %v352 = vld [vmem:[%s1 + $0x9d8] sm:$0xff]
    %v353 = vld [vmem:[%s1 + $0x9e0] sm:$0xff]
    %v354 = vld [vmem:[%s1 + $0x9e8] sm:$0xff]
    %v355 = vld [vmem:[%s1 + $0x9f0] sm:$0xff]
    %v356 = vld [vmem:[%s1 + $0x9f8] sm:$0xff]
    %v357 = vld [vmem:[%s1 + $0xa00] sm:$0xff]
    %v358 = vld [vmem:[%s1 + $0xa08] sm:$0xff]
    %v359 = vld [vmem:[%s1 + $0xa10] sm:$0xff]
    %v360 = vld [vmem:[%s1 + $0xa18] sm:$0xff]
    %v361 = vld [vmem:[%s1 + $0xa20] sm:$0xff]
    %v362 = vld [vmem:[%s1 + $0xa28] sm:$0xff]
    %v363 = vld [vmem:[%s1 + $0xa30] sm:$0xff]
    %v364 = vld [vmem:[%s1 + $0xa38] sm:$0xff]
    %v365 = vld [vmem:[%s1 + $0xa40] sm:$0xff]
    %v366 = vld [vmem:[%s1 + $0xa48] sm:$0xff]
    %v367 = vld [vmem:[%s1 + $0xa50] sm:$0xff]
    %v368 = vld [vmem:[%s1 + $0xa58] sm:$0xff]
    %v369 = vld [vmem:[%s1 + $0xa60] sm:$0xff]
    %v370 = vld [vmem:[%s1 + $0xa68] sm:$0xff]
    %v371 = vld [vmem:[%s1 + $0xa70] sm:$0xff]
    %v372 = vld [vmem:[%s1 + $0xa78] sm:$0xff]
    %v373 = vld [vmem:[%s1 + $0xa80] sm:$0xff]
    %v374 = vld [vmem:[%s1 + $0xa88] sm:$0xff]
    %v375 = vld [vmem:[%s1 + $0xa90] sm:$0xff]
    %v376 = vld [vmem:[%s1 + $0xa98] sm:$0xff]
    %v377 = vld [vmem:[%s1 + $0xaa0] sm:$0xff]
    %v378 = vld [vmem:[%s1 + $0xaa8] sm:$0xff]
    %v379 = vld [vmem:[%s1 + $0xab0] sm:$0xff]
    %v380 = vld [vmem:[%s1 + $0xab8] sm:$0xff]
    %v381 = vld [vmem:[%s1 + $0xac0] sm:$0xff]
    %v382 = vld [vmem:[%s1 + $0xac8] sm:$0xff]
    %v383 = vld [vmem:[%s1 + $0xad0] sm:$0xff]
    %v384 = vld [vmem:[%s1 + $0xad8] sm:$0xff]
    %v385 = vld [vmem:[%s1 + $0xae0] sm:$0xff]
    %v386 = vld [vmem:[%s1 + $0xae8] sm:$0xff]
    %v387 = vld [vmem:[%s1 + $0xaf0] sm:$0xff]
    %v388 = vld [vmem:[%s1 + $0xaf8] sm:$0xff]
    %v389 = vld [vmem:[%s1 + $0xb00] sm:$0xff]
    %v390 = vld [vmem:[%s1 + $0xb08] sm:$0xff]
    %v391 = vld [vmem:[%s1 + $0xb10] sm:$0xff]
    %v392 = vld [vmem:[%s1 + $0xb18] sm:$0xff]
    %v393 = vld [vmem:[%s1 + $0xb20] sm:$0xff]
    %v394 = vld [vmem:[%s1 + $0xb28] sm:$0xff]
    %v395 = vld [vmem:[%s1 + $0xb30] sm:$0xff]
    %v396 = vld [vmem:[%s1 + $0xb38] sm:$0xff]
    %v397 = vld [vmem:[%s1 + $0xb40] sm:$0xff]
    %v398 = vld [vmem:[%s1 + $0xb48] sm:$0xff]
    %v399 = vld [vmem:[%s1 + $0xb50] sm:$0xff]
    %v400 = vld [vmem:[%s1 + $0xb58] sm:$0xff]
    %v401 = vld [vmem:[%s1 + $0xb60] sm:$0xff]
    %v402 = vld [vmem:[%s1 + $0xb68] sm:$0xff]
    %v403 = vld [vmem:[%s1 + $0xb70] sm:$0xff]
    %v404 = vld [vmem:[%s1 + $0xb78] sm:$0xff]
    %v405 = vld [vmem:[%s1 + $0xb80] sm:$0xff]
    %v406 = vld [vmem:[%s1 + $0xb88] sm:$0xff]
    %v407 = vld [vmem:[%s1 + $0xb90] sm:$0xff]
    %v408 = vld [vmem:[%s1 + $0xb98] sm:$0xff]
    %v409 = vld [vmem:[%s1 + $0xba0] sm:$0xff]
    %v410 = vld [vmem:[%s1 + $0xba8] sm:$0xff]
    %v411 = vld [vmem:[%s1 + $0xbb0] sm:$0xff]
    %v412 = vld [vmem:[%s1 + $0xbb8] sm:$0xff]
    %v413 = vld [vmem:[%s1 + $0xbc0] sm:$0xff]
    %v414 = vld [vmem:[%s1 + $0xbc8] sm:$0xff]
    %v415 = vld [vmem:[%s1 + $0xbd0] sm:$0xff]
    %v416 = vld [vmem:[%s1 + $0xbd8] sm:$0xff]
    %v417 = vld [vmem:[%s1 + $0xbe0] sm:$0xff]
    %v418 = vld [vmem:[%s1 + $0xbe8] sm:$0xff]
    %v419 = vld [vmem:[%s1 + $0xbf0] sm:$0xff]
    %v420 = vld [vmem:[%s1 + $0xbf8] sm:$0xff]
    %v421 = vld [vmem:[%s1 + $0xc00] sm:$0xff]
    %v422 = vld [vmem:[%s1 + $0xc08] sm:$0xff]
    %v423 = vld [vmem:[%s1 + $0xc10] sm:$0xff]
    %v424 = vld [vmem:[%s1 + $0xc18] sm:$0xff]
    %v425 = vld [vmem:[%s1 + $0xc20] sm:$0xff]
    %v426 = vld [vmem:[%s1 + $0xc28] sm:$0xff]
    %v427 = vld [vmem:[%s1 + $0xc30] sm:$0xff]
    %v428 = vld [vmem:[%s1 + $0xc38] sm:$0xff]
    %v429 = vld [vmem:[%s1 + $0xc40] sm:$0xff]
    %v430 = vld [vmem:[%s1 + $0xc48] sm:$0xff]
    %v431 = vld [vmem:[%s1 + $0xc50] sm:$0xff]
    %v432 = vld [vmem:[%s1 + $0xc58] sm:$0xff]
    %v433 = vld [vmem:[%s1 + $0xc60] sm:$0xff]
    %v434 = vld [vmem:[%s1 + $0xc68] sm:$0xff]
    %v435 = vld [vmem:[%s1 + $0xc70] sm:$0xff]
    %v436 = vld [vmem:[%s1 + $0xc78] sm:$0xff]
    %v437 = vld [vmem:[%s1 + $0xc80] sm:$0xff]
    %v438 = vld [vmem:[%s1 + $0xc88] sm:$0xff]
    %v439 = vld [vmem:[%s1 + $0xc90] sm:$0xff]
    %v440 = vld [vmem:[%s1 + $0xc98] sm:$0xff]
    %v441 = vld [vmem:[%s1 + $0xca0] sm:$0xff]
    %v442 = vld [vmem:[%s1 + $0xca8] sm:$0xff]
    %v443 = vld [vmem:[%s1 + $0xcb0] sm:$0xff]
    %v444 = vld [vmem:[%s1 + $0xcb8] sm:$0xff]
    %v445 = vld [vmem:[%s1 + $0xcc0] sm:$0xff]
    %v446 = vld [vmem:[%s1 + $0xcc8] sm:$0xff]
    %v447 = vld [vmem:[%s1 + $0xcd0] sm:$0xff]
    %v448 = vld [vmem:[%s1 + $0xcd8] sm:$0xff]
    %v449 = vld [vmem:[%s1 + $0xce0] sm:$0xff]
    %v450 = vld [vmem:[%s1 + $0xce8] sm:$0xff]
    %v451 = vld [vmem:[%s1 + $0xcf0] sm:$0xff]
    %v452 = vld [vmem:[%s1 + $0xcf8] sm:$0xff]
    %v453 = vld [vmem:[%s1 + $0xd00] sm:$0xff]
    %v454 = vld [vmem:[%s1 + $0xd08] sm:$0xff]
    %v455 = vld [vmem:[%s1 + $0xd10] sm:$0xff]
    %v456 = vld [vmem:[%s1 + $0xd18] sm:$0xff]
    %v457 = vld [vmem:[%s1 + $0xd20] sm:$0xff]
    %v458 = vld [vmem:[%s1 + $0xd28] sm:$0xff]
    %v459 = vld [vmem:[%s1 + $0xd30] sm:$0xff]
    %v460 = vld [vmem:[%s1 + $0xd38] sm:$0xff]
    %v461 = vld [vmem:[%s1 + $0xd40] sm:$0xff]
    %v462 = vld [vmem:[%s1 + $0xd48] sm:$0xff]
    %v463 = vld [vmem:[%s1 + $0xd50] sm:$0xff]
    %v464 = vld [vmem:[%s1 + $0xd58] sm:$0xff]
    %v465 = vld [vmem:[%s1 + $0xd60] sm:$0xff]
    %v466 = vld [vmem:[%s1 + $0xd68] sm:$0xff]
    %v467 = vld [vmem:[%s1 + $0xd70] sm:$0xff]
    %v468 = vld [vmem:[%s1 + $0xd78] sm:$0xff]
    %v469 = vld [vmem:[%s1 + $0xd80] sm:$0xff]
    %v470 = vld [vmem:[%s1 + $0xd88] sm:$0xff]
    %v471 = vld [vmem:[%s1 + $0xd90] sm:$0xff]
    %v472 = vld [vmem:[%s1 + $0xd98] sm:$0xff]
    %v473 = vld [vmem:[%s1 + $0xda0] sm:$0xff]
    %v474 = vld [vmem:[%s1 + $0xda8] sm:$0xff]
    %v475 = vld [vmem:[%s1 + $0xdb0] sm:$0xff]
    %v476 = vld [vmem:[%s1 + $0xdb8] sm:$0xff]
    %v477 = vld [vmem:[%s1 + $0xdc0] sm:$0xff]
    %v478 = vld [vmem:[%s1 + $0xdc8] sm:$0xff]
    %v479 = vld [vmem:[%s1 + $0xdd0] sm:$0xff]
    %v480 = vld [vmem:[%s1 + $0xdd8] sm:$0xff]
    %v481 = vld [vmem:[%s1 + $0xde0] sm:$0xff]
    %v482 = vld [vmem:[%s1 + $0xde8] sm:$0xff]
    %v483 = vld [vmem:[%s1 + $0xdf0] sm:$0xff]
    %v484 = vld [vmem:[%s1 + $0xdf8] sm:$0xff]
    %v485 = vld [vmem:[%s1 + $0xe00] sm:$0xff]
    %v486 = vld [vmem:[%s1 + $0xe08] sm:$0xff]
    %v487 = vld [vmem:[%s1 + $0xe10] sm:$0xff]
    %v488 = vld [vmem:[%s1 + $0xe18] sm:$0xff]
    %v489 = vld [vmem:[%s1 + $0xe20] sm:$0xff]
    %v490 = vld [vmem:[%s1 + $0xe28] sm:$0xff]
    %v491 = vld [vmem:[%s1 + $0xe30] sm:$0xff]
    %v492 = vld [vmem:[%s1 + $0xe38] sm:$0xff]
    %v493 = vld [vmem:[%s1 + $0xe40] sm:$0xff]
    %v494 = vld [vmem:[%s1 + $0xe48] sm:$0xff]
    %v495 = vld [vmem:[%s1 + $0xe50] sm:$0xff]
    %v496 = vld [vmem:[%s1 + $0xe58] sm:$0xff]
    %v497 = vld [vmem:[%s1 + $0xe60] sm:$0xff]
    %v498 = vld [vmem:[%s1 + $0xe68] sm:$0xff]
    %v499 = vld [vmem:[%s1 + $0xe70] sm:$0xff]
    %v500 = vld [vmem:[%s1 + $0xe78] sm:$0xff]
    %v501 = vld [vmem:[%s1 + $0xe80] sm:$0xff]
    %v502 = vld [vmem:[%s1 + $0xe88] sm:$0xff]
    %v503 = vld [vmem:[%s1 + $0xe90] sm:$0xff]
    %v504 = vld [vmem:[%s1 + $0xe98] sm:$0xff]
    %v505 = vld [vmem:[%s1 + $0xea0] sm:$0xff]
    %v506 = vld [vmem:[%s1 + $0xea8] sm:$0xff]
    %v507 = vld [vmem:[%s1 + $0xeb0] sm:$0xff]
    %v508 = vld [vmem:[%s1 + $0xeb8] sm:$0xff]
    %v509 = vld [vmem:[%s1 + $0xec0] sm:$0xff]
    %v510 = vld [vmem:[%s1 + $0xec8] sm:$0xff]
    %v511 = vld [vmem:[%s1 + $0xed0] sm:$0xff]
    %v512 = vld [vmem:[%s1 + $0xed8] sm:$0xff]
    %v513 = vld [vmem:[%s1 + $0xee0] sm:$0xff]
    %v514 = vld [vmem:[%s1 + $0xee8] sm:$0xff]
    %v515 = vld [vmem:[%s1 + $0xef0] sm:$0xff]
    %v516 = vld [vmem:[%s1 + $0xef8] sm:$0xff]
    %v517 = vld [vmem:[%s1 + $0xf00] sm:$0xff]
    %v518 = vld [vmem:[%s1 + $0xf08] sm:$0xff]
    %v519 = vld [vmem:[%s1 + $0xf10] sm:$0xff]
    %v520 = vld [vmem:[%s1 + $0xf18] sm:$0xff]
    %v521 = vld [vmem:[%s1 + $0xf20] sm:$0xff]
    %v522 = vld [vmem:[%s1 + $0xf28] sm:$0xff]
    %v523 = vld [vmem:[%s1 + $0xf30] sm:$0xff]
    %v524 = vld [vmem:[%s1 + $0xf38] sm:$0xff]
    %v525 = vld [vmem:[%s1 + $0xf40] sm:$0xff]
    %v526 = vld [vmem:[%s1 + $0xf48] sm:$0xff]
    %v527 = vld [vmem:[%s1 + $0xf50] sm:$0xff]
    %v528 = vld [vmem:[%s1 + $0xf58] sm:$0xff]
    %v529 = vld [vmem:[%s1 + $0xf60] sm:$0xff]
    %v530 = vld [vmem:[%s1 + $0xf68] sm:$0xff]
    %v531 = vld [vmem:[%s1 + $0xf70] sm:$0xff]
    %v532 = vld [vmem:[%s1 + $0xf78] sm:$0xff]
    %v533 = vld [vmem:[%s1 + $0xf80] sm:$0xff]
    %v534 = vld [vmem:[%s1 + $0xf88] sm:$0xff]
    %v535 = vld [vmem:[%s1 + $0xf90] sm:$0xff]
    %v536 = vld [vmem:[%s1 + $0xf98] sm:$0xff]
    %v537 = vld [vmem:[%s1 + $0xfa0] sm:$0xff]
    %v538 = vld [vmem:[%s1 + $0xfa8] sm:$0xff]
    %v539 = vld [vmem:[%s1 + $0xfb0] sm:$0xff]
    %v540 = vld [vmem:[%s1 + $0xfb8] sm:$0xff]
    %v541 = vld [vmem:[%s1 + $0xfc0] sm:$0xff]
    %v542 = vld [vmem:[%s1 + $0xfc8] sm:$0xff]
    %v543 = vld [vmem:[%s1 + $0xfd0] sm:$0xff]
    %v544 = vld [vmem:[%s1 + $0xfd8] sm:$0xff]
    %v545 = vld [vmem:[%s1 + $0xfe0] sm:$0xff]
    %v546 = vld [vmem:[%s1 + $0xfe8] sm:$0xff]
    %v547 = vld [vmem:[%s1 + $0xff0] sm:$0xff]
    %v548 = vld [vmem:[%s1 + $0xff8] sm:$0xff]
    %v549 = vld [vmem:[%s1 + $0x1000] sm:$0xff]
    %v550 = vld [vmem:[%s1 + $0x1008] sm:$0xff]
    %v551 = vld [vmem:[%s1 + $0x1010] sm:$0xff]
    %v552 = vld [vmem:[%s1 + $0x1018] sm:$0xff]
    %v553 = vld [vmem:[%s1 + $0x1020] sm:$0xff]
    %v554 = vld [vmem:[%s1 + $0x1028] sm:$0xff]
    %v555 = vld [vmem:[%s1 + $0x1030] sm:$0xff]
    %v556 = vld [vmem:[%s1 + $0x1038] sm:$0xff]
    %v557 = vld [vmem:[%s1 + $0x1040] sm:$0xff]
    %v558 = vld [vmem:[%s1 + $0x1048] sm:$0xff]
    %v559 = vld [vmem:[%s1 + $0x1050] sm:$0xff]
    %v560 = vld [vmem:[%s1 + $0x1058] sm:$0xff]
    %v561 = vld [vmem:[%s1 + $0x1060] sm:$0xff]
    %v562 = vld [vmem:[%s1 + $0x1068] sm:$0xff]
    %v563 = vld [vmem:[%s1 + $0x1070] sm:$0xff]
    %v564 = vld [vmem:[%s1 + $0x1078] sm:$0xff]
    %v565 = vld [vmem:[%s1 + $0x1080] sm:$0xff]
    %v566 = vld [vmem:[%s1 + $0x1088] sm:$0xff]
    %v567 = vld [vmem:[%s1 + $0x1090] sm:$0xff]
    %v568 = vld [vmem:[%s1 + $0x1098] sm:$0xff]
    %v569 = vld [vmem:[%s1 + $0x10a0] sm:$0xff]
    %v570 = vld [vmem:[%s1 + $0x10a8] sm:$0xff]
    %v571 = vld [vmem:[%s1 + $0x10b0] sm:$0xff]
    %v572 = vld [vmem:[%s1 + $0x10b8] sm:$0xff]
    %v573 = vld [vmem:[%s1 + $0x10c0] sm:$0xff]
    %v574 = vld [vmem:[%s1 + $0x10c8] sm:$0xff]
    %v575 = vld [vmem:[%s1 + $0x10d0] sm:$0xff]
    %v576 = vld [vmem:[%s1 + $0x10d8] sm:$0xff]
    %v577 = vld [vmem:[%s1 + $0x10e0] sm:$0xff]
    %v578 = vld [vmem:[%s1 + $0x10e8] sm:$0xff]
    %v579 = vld [vmem:[%s1 + $0x10f0] sm:$0xff]
    %v580 = vld [vmem:[%s1 + $0x10f8] sm:$0xff]
    %v581 = vld [vmem:[%s1 + $0x1100] sm:$0xff]
    %v582 = vld [vmem:[%s1 + $0x1108] sm:$0xff]
    %v583 = vld [vmem:[%s1 + $0x1110] sm:$0xff]
    %v584 = vld [vmem:[%s1 + $0x1118] sm:$0xff]
    %v585 = vld [vmem:[%s1 + $0x1120] sm:$0xff]
    %v586 = vld [vmem:[%s1 + $0x1128] sm:$0xff]
    %v587 = vld [vmem:[%s1 + $0x1130] sm:$0xff]
    %v588 = vld [vmem:[%s1 + $0x1138] sm:$0xff]
    %v589 = vld [vmem:[%s1 + $0x1140] sm:$0xff]
    %v590 = vld [vmem:[%s1 + $0x1148] sm:$0xff]
    %v591 = vld [vmem:[%s1 + $0x1150] sm:$0xff]
    %v592 = vld [vmem:[%s1 + $0x1158] sm:$0xff]
    %v593 = vld [vmem:[%s1 + $0x1160] sm:$0xff]
    %v594 = vld [vmem:[%s1 + $0x1168] sm:$0xff]
    %v595 = vld [vmem:[%s1 + $0x1170] sm:$0xff]
    %v596 = vld [vmem:[%s1 + $0x1178] sm:$0xff]
    %v597 = vld [vmem:[%s1 + $0x1180] sm:$0xff]
    %v598 = vld [vmem:[%s1 + $0x1188] sm:$0xff]
    %v599 = vld [vmem:[%s1 + $0x1190] sm:$0xff]
    %v600 = vld [vmem:[%s1 + $0x1198] sm:$0xff]
    %v601 = vld [vmem:[%s1 + $0x11a0] sm:$0xff]
    %v602 = vld [vmem:[%s1 + $0x11a8] sm:$0xff]
    %v603 = vld [vmem:[%s1 + $0x11b0] sm:$0xff]
    %v604 = vld [vmem:[%s1 + $0x11b8] sm:$0xff]
    %v605 = vld [vmem:[%s1 + $0x11c0] sm:$0xff]
    %v606 = vld [vmem:[%s1 + $0x11c8] sm:$0xff]
    %v607 = vld [vmem:[%s1 + $0x11d0] sm:$0xff]
    %v608 = vld [vmem:[%s1 + $0x11d8] sm:$0xff]
    %v609 = vld [vmem:[%s1 + $0x11e0] sm:$0xff]
    %v610 = vld [vmem:[%s1 + $0x11e8] sm:$0xff]
    %v611 = vld [vmem:[%s1 + $0x11f0] sm:$0xff]
    %v612 = vld [vmem:[%s1 + $0x11f8] sm:$0xff]
    %v613 = vld [vmem:[%s1 + $0x1200] sm:$0xff]
    %v614 = vld [vmem:[%s1 + $0x1208] sm:$0xff]
    %v615 = vld [vmem:[%s1 + $0x1210] sm:$0xff]
    %v616 = vld [vmem:[%s1 + $0x1218] sm:$0xff]
    %v617 = vld [vmem:[%s1 + $0x1220] sm:$0xff]
    %v618 = vld [vmem:[%s1 + $0x1228] sm:$0xff]
    %v619 = vld [vmem:[%s1 + $0x1230] sm:$0xff]
    %v620 = vld [vmem:[%s1 + $0x1238] sm:$0xff]
    %v621 = vld [vmem:[%s1 + $0x1240] sm:$0xff]
    %v622 = vld [vmem:[%s1 + $0x1248] sm:$0xff]
    %v623 = vld [vmem:[%s1 + $0x1250] sm:$0xff]
    %v624 = vld [vmem:[%s1 + $0x1258] sm:$0xff]
    %v625 = vld [vmem:[%s1 + $0x1260] sm:$0xff]
    %v626 = vld [vmem:[%s1 + $0x1268] sm:$0xff]
    %v627 = vld [vmem:[%s1 + $0x1270] sm:$0xff]
    %v628 = vld [vmem:[%s1 + $0x1278] sm:$0xff]
    %v629 = vld [vmem:[%s1 + $0x1280] sm:$0xff]
    %v630 = vld [vmem:[%s1 + $0x1288] sm:$0xff]
    %v631 = vld [vmem:[%s1 + $0x1290] sm:$0xff]
    %v632 = vld [vmem:[%s1 + $0x1298] sm:$0xff]
    %v633 = vld [vmem:[%s1 + $0x12a0] sm:$0xff]
    %v634 = vld [vmem:[%s1 + $0x12a8] sm:$0xff]
    %v635 = vld [vmem:[%s1 + $0x12b0] sm:$0xff]
    %v636 = vld [vmem:[%s1 + $0x12b8] sm:$0xff]
    %v637 = vld [vmem:[%s1 + $0x12c0] sm:$0xff]
    %v638 = vld [vmem:[%s1 + $0x12c8] sm:$0xff]
    %v639 = vld [vmem:[%s1 + $0x12d0] sm:$0xff]
    %v640 = vld [vmem:[%s1 + $0x12d8] sm:$0xff]
    %v641 = vld [vmem:[%s1 + $0x12e0] sm:$0xff]
    %v642 = vld [vmem:[%s1 + $0x12e8] sm:$0xff]
    %v643 = vld [vmem:[%s1 + $0x12f0] sm:$0xff]
    %v644 = vld [vmem:[%s1 + $0x12f8] sm:$0xff]
    %v645 = vld [vmem:[%s1 + $0x1300] sm:$0xff]
    %v646 = vld [vmem:[%s1 + $0x1308] sm:$0xff]
    %v647 = vld [vmem:[%s1 + $0x1310] sm:$0xff]
    %v648 = vld [vmem:[%s1 + $0x1318] sm:$0xff]
    %v649 = vld [vmem:[%s1 + $0x1320] sm:$0xff]
    %v650 = vld [vmem:[%s1 + $0x1328] sm:$0xff]
    %v651 = vld [vmem:[%s1 + $0x1330] sm:$0xff]
    %v652 = vld [vmem:[%s1 + $0x1338] sm:$0xff]
    %v653 = vld [vmem:[%s1 + $0x1340] sm:$0xff]
    %v654 = vld [vmem:[%s1 + $0x1348] sm:$0xff]
    %v655 = vld [vmem:[%s1 + $0x1350] sm:$0xff]
    %v656 = vld [vmem:[%s1 + $0x1358] sm:$0xff]
    %v657 = vld [vmem:[%s1 + $0x1360] sm:$0xff]
    %v658 = vld [vmem:[%s1 + $0x1368] sm:$0xff]
    %v659 = vld [vmem:[%s1 + $0x1370] sm:$0xff]
    %v660 = vld [vmem:[%s1 + $0x1378] sm:$0xff]
    %v661 = vld [vmem:[%s1 + $0x1380] sm:$0xff]
    %v662 = vld [vmem:[%s1 + $0x1388] sm:$0xff]
    %v663 = vld [vmem:[%s1 + $0x1390] sm:$0xff]
    %v664 = vld [vmem:[%s1 + $0x1398] sm:$0xff]
    %v665 = vld [vmem:[%s1 + $0x13a0] sm:$0xff]
    %v666 = vld [vmem:[%s1 + $0x13a8] sm:$0xff]
    %v667 = vld [vmem:[%s1 + $0x13b0] sm:$0xff]
    %v668 = vld [vmem:[%s1 + $0x13b8] sm:$0xff]
    %v669 = vld [vmem:[%s1 + $0x13c0] sm:$0xff]
    %v670 = vld [vmem:[%s1 + $0x13c8] sm:$0xff]
    %v671 = vld [vmem:[%s1 + $0x13d0] sm:$0xff]
    %v672 = vld [vmem:[%s1 + $0x13d8] sm:$0xff]
    %v673 = vld [vmem:[%s1 + $0x13e0] sm:$0xff]
    %v674 = vld [vmem:[%s1 + $0x13e8] sm:$0xff]
    %v675 = vld [vmem:[%s1 + $0x13f0] sm:$0xff]
    %v676 = vld [vmem:[%s1 + $0x13f8] sm:$0xff]
    %v677 = vld [vmem:[%s1 + $0x1400] sm:$0xff]
    %v678 = vld [vmem:[%s1 + $0x1408] sm:$0xff]
    %v679 = vld [vmem:[%s1 + $0x1410] sm:$0xff]
    %v680 = vld [vmem:[%s1 + $0x1418] sm:$0xff]
    %v681 = vld [vmem:[%s1 + $0x1420] sm:$0xff]
    %v682 = vld [vmem:[%s1 + $0x1428] sm:$0xff]
    %v683 = vld [vmem:[%s1 + $0x1430] sm:$0xff]
    %v684 = vld [vmem:[%s1 + $0x1438] sm:$0xff]
    %v685 = vld [vmem:[%s1 + $0x1440] sm:$0xff]
    %v686 = vld [vmem:[%s1 + $0x1448] sm:$0xff]
    %v687 = vld [vmem:[%s1 + $0x1450] sm:$0xff]
    %v688 = vld [vmem:[%s1 + $0x1458] sm:$0xff]
    %v689 = vld [vmem:[%s1 + $0x1460] sm:$0xff]
    %v690 = vld [vmem:[%s1 + $0x1468] sm:$0xff]
    %v691 = vld [vmem:[%s1 + $0x1470] sm:$0xff]
    %v692 = vld [vmem:[%s1 + $0x1478] sm:$0xff]
    %v693 = vld [vmem:[%s1 + $0x1480] sm:$0xff]
    %v694 = vld [vmem:[%s1 + $0x1488] sm:$0xff]
    %v695 = vld [vmem:[%s1 + $0x1490] sm:$0xff]
    %v696 = vld [vmem:[%s1 + $0x1498] sm:$0xff]
    %v697 = vld [vmem:[%s1 + $0x14a0] sm:$0xff]
    %v698 = vld [vmem:[%s1 + $0x14a8] sm:$0xff]
    %v699 = vld [vmem:[%s1 + $0x14b0] sm:$0xff]
    %v700 = vld [vmem:[%s1 + $0x14b8] sm:$0xff]
    %v701 = vld [vmem:[%s1 + $0x14c0] sm:$0xff]
    %v702 = vld [vmem:[%s1 + $0x14c8] sm:$0xff]
    %v703 = vld [vmem:[%s1 + $0x14d0] sm:$0xff]
    %v704 = vld [vmem:[%s1 + $0x14d8] sm:$0xff]
    %v705 = vld [vmem:[%s1 + $0x14e0] sm:$0xff]
    %v706 = vld [vmem:[%s1 + $0x14e8] sm:$0xff]
    %v707 = vld [vmem:[%s1 + $0x14f0] sm:$0xff]
    %v708 = vld [vmem:[%s1 + $0x14f8] sm:$0xff]
    %v709 = vld [vmem:[%s1 + $0x1500] sm:$0xff]
    %v710 = vld [vmem:[%s1 + $0x1508] sm:$0xff]
    %v711 = vld [vmem:[%s1 + $0x1510] sm:$0xff]
    %v712 = vld [vmem:[%s1 + $0x1518] sm:$0xff]
    %v713 = vld [vmem:[%s1 + $0x1520] sm:$0xff]
    %v714 = vld [vmem:[%s1 + $0x1528] sm:$0xff]
    %v715 = vld [vmem:[%s1 + $0x1530] sm:$0xff]
    %v716 = vld [vmem:[%s1 + $0x1538] sm:$0xff]
    %v717 = vld [vmem:[%s1 + $0x1540] sm:$0xff]
    %v718 = vld [vmem:[%s1 + $0x1548] sm:$0xff]
    %v719 = vld [vmem:[%s1 + $0x1550] sm:$0xff]
    %v720 = vld [vmem:[%s1 + $0x1558] sm:$0xff]
    %v721 = vld [vmem:[%s1 + $0x1560] sm:$0xff]
    %v722 = vld [vmem:[%s1 + $0x1568] sm:$0xff]
    %v723 = vld [vmem:[%s1 + $0x1570] sm:$0xff]
    %v724 = vld [vmem:[%s1 + $0x1578] sm:$0xff]
    %v725 = vld [vmem:[%s1 + $0x1580] sm:$0xff]
    %v726 = vld [vmem:[%s1 + $0x1588] sm:$0xff]
    %v727 = vld [vmem:[%s1 + $0x1590] sm:$0xff]
    %v728 = vld [vmem:[%s1 + $0x1598] sm:$0xff]
    %v729 = vld [vmem:[%s1 + $0x15a0] sm:$0xff]
    %v730 = vld [vmem:[%s1 + $0x15a8] sm:$0xff]
    %v731 = vld [vmem:[%s1 + $0x15b0] sm:$0xff]
    %v732 = vld [vmem:[%s1 + $0x15b8] sm:$0xff]
    %v733 = vld [vmem:[%s1 + $0x15c0] sm:$0xff]
    %v734 = vld [vmem:[%s1 + $0x15c8] sm:$0xff]
    %v735 = vld [vmem:[%s1 + $0x15d0] sm:$0xff]
    %v736 = vld [vmem:[%s1 + $0x15d8] sm:$0xff]
    %v737 = vld [vmem:[%s1 + $0x15e0] sm:$0xff]
    %v738 = vld [vmem:[%s1 + $0x15e8] sm:$0xff]
    %v739 = vld [vmem:[%s1 + $0x15f0] sm:$0xff]
    %v740 = vld [vmem:[%s1 + $0x15f8] sm:$0xff]
    %v741 = vld [vmem:[%s1 + $0x1600] sm:$0xff]
    %v742 = vld [vmem:[%s1 + $0x1608] sm:$0xff]
    %v743 = vld [vmem:[%s1 + $0x1610] sm:$0xff]
    %v744 = vld [vmem:[%s1 + $0x1618] sm:$0xff]
    %v745 = vld [vmem:[%s1 + $0x1620] sm:$0xff]
    %v746 = vld [vmem:[%s1 + $0x1628] sm:$0xff]
    %v747 = vld [vmem:[%s1 + $0x1630] sm:$0xff]
    %v748 = vld [vmem:[%s1 + $0x1638] sm:$0xff]
    %v749 = vld [vmem:[%s1 + $0x1640] sm:$0xff]
    %v750 = vld [vmem:[%s1 + $0x1648] sm:$0xff]
    %v751 = vld [vmem:[%s1 + $0x1650] sm:$0xff]
    %v752 = vld [vmem:[%s1 + $0x1658] sm:$0xff]
    %v753 = vld [vmem:[%s1 + $0x1660] sm:$0xff]
    %v754 = vld [vmem:[%s1 + $0x1668] sm:$0xff]
    %v755 = vld [vmem:[%s1 + $0x1670] sm:$0xff]
    %v756 = vld [vmem:[%s1 + $0x1678] sm:$0xff]
    %v757 = vld [vmem:[%s1 + $0x1680] sm:$0xff]
    %v758 = vld [vmem:[%s1 + $0x1688] sm:$0xff]
    %v759 = vld [vmem:[%s1 + $0x1690] sm:$0xff]
    %v760 = vld [vmem:[%s1 + $0x1698] sm:$0xff]
    %v761 = vld [vmem:[%s1 + $0x16a0] sm:$0xff]
    %v762 = vld [vmem:[%s1 + $0x16a8] sm:$0xff]
    %v763 = vld [vmem:[%s1 + $0x16b0] sm:$0xff]
    %v764 = vld [vmem:[%s1 + $0x16b8] sm:$0xff]
    %v765 = vld [vmem:[%s1 + $0x16c0] sm:$0xff]
    %v766 = vld [vmem:[%s1 + $0x16c8] sm:$0xff]
    %v767 = vld [vmem:[%s1 + $0x16d0] sm:$0xff]
    %v768 = vld [vmem:[%s1 + $0x16d8] sm:$0xff]
    %v769 = vld [vmem:[%s1 + $0x16e0] sm:$0xff]
    %v770 = vld [vmem:[%s1 + $0x16e8] sm:$0xff]
    %v771 = vld [vmem:[%s1 + $0x16f0] sm:$0xff]
    %v772 = vld [vmem:[%s1 + $0x16f8] sm:$0xff]
    %v773 = vld [vmem:[%s1 + $0x1700] sm:$0xff]
    %v774 = vld [vmem:[%s1 + $0x1708] sm:$0xff]
    %v775 = vld [vmem:[%s1 + $0x1710] sm:$0xff]
    %v776 = vld [vmem:[%s1 + $0x1718] sm:$0xff]
    %v777 = vld [vmem:[%s1 + $0x1720] sm:$0xff]
    %v778 = vld [vmem:[%s1 + $0x1728] sm:$0xff]
    %v779 = vld [vmem:[%s1 + $0x1730] sm:$0xff]
    %v780 = vld [vmem:[%s1 + $0x1738] sm:$0xff]
    %v781 = vld [vmem:[%s1 + $0x1740] sm:$0xff]
    %v782 = vld [vmem:[%s1 + $0x1748] sm:$0xff]
    %v783 = vld [vmem:[%s1 + $0x1750] sm:$0xff]
    %v784 = vld [vmem:[%s1 + $0x1758] sm:$0xff]
    %v785 = vld [vmem:[%s1 + $0x1760] sm:$0xff]
    %v786 = vld [vmem:[%s1 + $0x1768] sm:$0xff]
    %v787 = vld [vmem:[%s1 + $0x1770] sm:$0xff]
    %v788 = vld [vmem:[%s1 + $0x1778] sm:$0xff]
    %v789 = vld [vmem:[%s1 + $0x1780] sm:$0xff]
    %v790 = vld [vmem:[%s1 + $0x1788] sm:$0xff]
    %v791 = vld [vmem:[%s1 + $0x1790] sm:$0xff]
    %v792 = vld [vmem:[%s1 + $0x1798] sm:$0xff]
    %v793 = vld [vmem:[%s1 + $0x17a0] sm:$0xff]
    %v794 = vld [vmem:[%s1 + $0x17a8] sm:$0xff]
    %v795 = vld [vmem:[%s1 + $0x17b0] sm:$0xff]
    %v796 = vld [vmem:[%s1 + $0x17b8] sm:$0xff]
    %v797 = vld [vmem:[%s1 + $0x17c0] sm:$0xff]
    %v798 = vld [vmem:[%s1 + $0x17c8] sm:$0xff]
    %v799 = vld [vmem:[%s1 + $0x17d0] sm:$0xff]
    %v800 = vld [vmem:[%s1 + $0x17d8] sm:$0xff]
    %v801 = vld [vmem:[%s1 + $0x17e0] sm:$0xff]
    %v802 = vld [vmem:[%s1 + $0x17e8] sm:$0xff]
    %v803 = vld [vmem:[%s1 + $0x17f0] sm:$0xff]
    %v804 = vld [vmem:[%s1 + $0x17f8] sm:$0xff]
    %v805 = vld [vmem:[%s1 + $0x1800] sm:$0xff]
    %v806 = vld [vmem:[%s1 + $0x1808] sm:$0xff]
    %v807 = vld [vmem:[%s1 + $0x1810] sm:$0xff]
    %v808 = vld [vmem:[%s1 + $0x1818] sm:$0xff]
    %v809 = vld [vmem:[%s1 + $0x1820] sm:$0xff]
    %v810 = vld [vmem:[%s1 + $0x1828] sm:$0xff]
    %v811 = vld [vmem:[%s1 + $0x1830] sm:$0xff]
    %v812 = vld [vmem:[%s1 + $0x1838] sm:$0xff]
    %v813 = vld [vmem:[%s1 + $0x1840] sm:$0xff]
    %v814 = vld [vmem:[%s1 + $0x1848] sm:$0xff]
    %v815 = vld [vmem:[%s1 + $0x1850] sm:$0xff]
    %v816 = vld [vmem:[%s1 + $0x1858] sm:$0xff]
    %v817 = vld [vmem:[%s1 + $0x1860] sm:$0xff]
    %v818 = vld [vmem:[%s1 + $0x1868] sm:$0xff]
    %v819 = vld [vmem:[%s1 + $0x1870] sm:$0xff]
    %v820 = vld [vmem:[%s1 + $0x1878] sm:$0xff]
    %v821 = vld [vmem:[%s1 + $0x1880] sm:$0xff]
    %v822 = vld [vmem:[%s1 + $0x1888] sm:$0xff]
    %v823 = vld [vmem:[%s1 + $0x1890] sm:$0xff]
    %v824 = vld [vmem:[%s1 + $0x1898] sm:$0xff]
    %v825 = vld [vmem:[%s1 + $0x18a0] sm:$0xff]
    %v826 = vld [vmem:[%s1 + $0x18a8] sm:$0xff]
    %v827 = vld [vmem:[%s1 + $0x18b0] sm:$0xff]
    %v828 = vld [vmem:[%s1 + $0x18b8] sm:$0xff]
    %v829 = vld [vmem:[%s1 + $0x18c0] sm:$0xff]
    %v830 = vld [vmem:[%s1 + $0x18c8] sm:$0xff]
    %v831 = vld [vmem:[%s1 + $0x18d0] sm:$0xff]
    %v832 = vld [vmem:[%s1 + $0x18d8] sm:$0xff]
    %v833 = vld [vmem:[%s1 + $0x18e0] sm:$0xff]
    %v834 = vld [vmem:[%s1 + $0x18e8] sm:$0xff]
    %v835 = vld [vmem:[%s1 + $0x18f0] sm:$0xff]
    %v836 = vld [vmem:[%s1 + $0x18f8] sm:$0xff]
    %v837 = vld [vmem:[%s1 + $0x1900] sm:$0xff]
    %v838 = vld [vmem:[%s1 + $0x1908] sm:$0xff]
    %v839 = vld [vmem:[%s1 + $0x1910] sm:$0xff]
    %v840 = vld [vmem:[%s1 + $0x1918] sm:$0xff]
    %v841 = vld [vmem:[%s1 + $0x1920] sm:$0xff]
    %v842 = vld [vmem:[%s1 + $0x1928] sm:$0xff]
    %v843 = vld [vmem:[%s1 + $0x1930] sm:$0xff]
    %v844 = vld [vmem:[%s1 + $0x1938] sm:$0xff]
    %v845 = vld [vmem:[%s1 + $0x1940] sm:$0xff]
    %v846 = vld [vmem:[%s1 + $0x1948] sm:$0xff]
    %v847 = vld [vmem:[%s1 + $0x1950] sm:$0xff]
    %v848 = vld [vmem:[%s1 + $0x1958] sm:$0xff]
    %v849 = vld [vmem:[%s1 + $0x1960] sm:$0xff]
    %v850 = vld [vmem:[%s1 + $0x1968] sm:$0xff]
    %v851 = vld [vmem:[%s1 + $0x1970] sm:$0xff]
    %v852 = vld [vmem:[%s1 + $0x1978] sm:$0xff]
    %v853 = vld [vmem:[%s1 + $0x1980] sm:$0xff]
    %v854 = vld [vmem:[%s1 + $0x1988] sm:$0xff]
    %v855 = vld [vmem:[%s1 + $0x1990] sm:$0xff]
    %v856 = vld [vmem:[%s1 + $0x1998] sm:$0xff]
    %v857 = vld [vmem:[%s1 + $0x19a0] sm:$0xff]
    %v858 = vld [vmem:[%s1 + $0x19a8] sm:$0xff]
    %v859 = vld [vmem:[%s1 + $0x19b0] sm:$0xff]
    %v860 = vld [vmem:[%s1 + $0x19b8] sm:$0xff]
    %v861 = vld [vmem:[%s1 + $0x19c0] sm:$0xff]
    %v862 = vld [vmem:[%s1 + $0x19c8] sm:$0xff]
    %v863 = vld [vmem:[%s1 + $0x19d0] sm:$0xff]
    %v864 = vld [vmem:[%s1 + $0x19d8] sm:$0xff]
    %v865 = vld [vmem:[%s1 + $0x19e0] sm:$0xff]
    %v866 = vld [vmem:[%s1 + $0x19e8] sm:$0xff]
    %v867 = vld [vmem:[%s1 + $0x19f0] sm:$0xff]
    %v868 = vld [vmem:[%s1 + $0x19f8] sm:$0xff]
    %v869 = vld [vmem:[%s1 + $0x1a00] sm:$0xff]
    %v870 = vld [vmem:[%s1 + $0x1a08] sm:$0xff]
    %v871 = vld [vmem:[%s1 + $0x1a10] sm:$0xff]
    %v872 = vld [vmem:[%s1 + $0x1a18] sm:$0xff]
    %v873 = vld [vmem:[%s1 + $0x1a20] sm:$0xff]
    %v874 = vld [vmem:[%s1 + $0x1a28] sm:$0xff]
    %v875 = vld [vmem:[%s1 + $0x1a30] sm:$0xff]
    %v876 = vld [vmem:[%s1 + $0x1a38] sm:$0xff]
    %v877 = vld [vmem:[%s1 + $0x1a40] sm:$0xff]
    %v878 = vld [vmem:[%s1 + $0x1a48] sm:$0xff]
    %v879 = vld [vmem:[%s1 + $0x1a50] sm:$0xff]
    %v880 = vld [vmem:[%s1 + $0x1a58] sm:$0xff]
    %v881 = vld [vmem:[%s1 + $0x1a60] sm:$0xff]
    %v882 = vld [vmem:[%s1 + $0x1a68] sm:$0xff]
    %v883 = vld [vmem:[%s1 + $0x1a70] sm:$0xff]
    %v884 = vld [vmem:[%s1 + $0x1a78] sm:$0xff]
    %v885 = vld [vmem:[%s1 + $0x1a80] sm:$0xff]
    %v886 = vld [vmem:[%s1 + $0x1a88] sm:$0xff]
    %v887 = vld [vmem:[%s1 + $0x1a90] sm:$0xff]
    %v888 = vld [vmem:[%s1 + $0x1a98] sm:$0xff]
    %v889 = vld [vmem:[%s1 + $0x1aa0] sm:$0xff]
    %v890 = vld [vmem:[%s1 + $0x1aa8] sm:$0xff]
    %v891 = vld [vmem:[%s1 + $0x1ab0] sm:$0xff]
    %v892 = vld [vmem:[%s1 + $0x1ab8] sm:$0xff]
    %v893 = vld [vmem:[%s1 + $0x1ac0] sm:$0xff]
    %v894 = vld [vmem:[%s1 + $0x1ac8] sm:$0xff]
    %v895 = vld [vmem:[%s1 + $0x1ad0] sm:$0xff]
    %v896 = vld [vmem:[%s1 + $0x1ad8] sm:$0xff]
    %v897 = vld [vmem:[%s1 + $0x1ae0] sm:$0xff]
    %v898 = vld [vmem:[%s1 + $0x1ae8] sm:$0xff]
    %v899 = vld [vmem:[%s1 + $0x1af0] sm:$0xff]
    %v900 = vld [vmem:[%s1 + $0x1af8] sm:$0xff]
    %v901 = vld [vmem:[%s1 + $0x1b00] sm:$0xff]
    %v902 = vld [vmem:[%s1 + $0x1b08] sm:$0xff]
    %v903 = vld [vmem:[%s1 + $0x1b10] sm:$0xff]
    %v904 = vld [vmem:[%s1 + $0x1b18] sm:$0xff]
    %v905 = vld [vmem:[%s1 + $0x1b20] sm:$0xff]
    %v906 = vld [vmem:[%s1 + $0x1b28] sm:$0xff]
    %v907 = vld [vmem:[%s1 + $0x1b30] sm:$0xff]
    %v908 = vld [vmem:[%s1 + $0x1b38] sm:$0xff]
    %v909 = vld [vmem:[%s1 + $0x1b40] sm:$0xff]
    %v910 = vld [vmem:[%s1 + $0x1b48] sm:$0xff]
    %v911 = vld [vmem:[%s1 + $0x1b50] sm:$0xff]
    %v912 = vld [vmem:[%s1 + $0x1b58] sm:$0xff]
    %v913 = vld [vmem:[%s1 + $0x1b60] sm:$0xff]
    %v914 = vld [vmem:[%s1 + $0x1b68] sm:$0xff]
    %v915 = vld [vmem:[%s1 + $0x1b70] sm:$0xff]
    %v916 = vld [vmem:[%s1 + $0x1b78] sm:$0xff]
    %v917 = vld [vmem:[%s1 + $0x1b80] sm:$0xff]
    %v918 = vld [vmem:[%s1 + $0x1b88] sm:$0xff]
    %v919 = vld [vmem:[%s1 + $0x1b90] sm:$0xff]
    %v920 = vld [vmem:[%s1 + $0x1b98] sm:$0xff]
    %v921 = vld [vmem:[%s1 + $0x1ba0] sm:$0xff]
    %v922 = vld [vmem:[%s1 + $0x1ba8] sm:$0xff]
    %v923 = vld [vmem:[%s1 + $0x1bb0] sm:$0xff]
    %v924 = vld [vmem:[%s1 + $0x1bb8] sm:$0xff]
    %v925 = vld [vmem:[%s1 + $0x1bc0] sm:$0xff]
    %v926 = vld [vmem:[%s1 + $0x1bc8] sm:$0xff]
    %v927 = vld [vmem:[%s1 + $0x1bd0] sm:$0xff]
    %v928 = vld [vmem:[%s1 + $0x1bd8] sm:$0xff]
    %v929 = vld [vmem:[%s1 + $0x1be0] sm:$0xff]
    %v930 = vld [vmem:[%s1 + $0x1be8] sm:$0xff]
    %v931 = vld [vmem:[%s1 + $0x1bf0] sm:$0xff]
    %v932 = vld [vmem:[%s1 + $0x1bf8] sm:$0xff]
    %v933 = vld [vmem:[%s1 + $0x1c00] sm:$0xff]
    %v934 = vld [vmem:[%s1 + $0x1c08] sm:$0xff]
    %v935 = vld [vmem:[%s1 + $0x1c10] sm:$0xff]
    %v936 = vld [vmem:[%s1 + $0x1c18] sm:$0xff]
    %v937 = vld [vmem:[%s1 + $0x1c20] sm:$0xff]
    %v938 = vld [vmem:[%s1 + $0x1c28] sm:$0xff]
    %v939 = vld [vmem:[%s1 + $0x1c30] sm:$0xff]
    %v940 = vld [vmem:[%s1 + $0x1c38] sm:$0xff]
    %v941 = vld [vmem:[%s1 + $0x1c40] sm:$0xff]
    %v942 = vld [vmem:[%s1 + $0x1c48] sm:$0xff]
    %v943 = vld [vmem:[%s1 + $0x1c50] sm:$0xff]
    %v944 = vld [vmem:[%s1 + $0x1c58] sm:$0xff]
    %v945 = vld [vmem:[%s1 + $0x1c60] sm:$0xff]
    %v946 = vld [vmem:[%s1 + $0x1c68] sm:$0xff]
    %v947 = vld [vmem:[%s1 + $0x1c70] sm:$0xff]
    %v948 = vld [vmem:[%s1 + $0x1c78] sm:$0xff]
    %v949 = vld [vmem:[%s1 + $0x1c80] sm:$0xff]
    %v950 = vld [vmem:[%s1 + $0x1c88] sm:$0xff]
    %v951 = vld [vmem:[%s1 + $0x1c90] sm:$0xff]
    %v952 = vld [vmem:[%s1 + $0x1c98] sm:$0xff]
    %v953 = vld [vmem:[%s1 + $0x1ca0] sm:$0xff]
    %v954 = vld [vmem:[%s1 + $0x1ca8] sm:$0xff]
    %v955 = vld [vmem:[%s1 + $0x1cb0] sm:$0xff]
    %v956 = vld [vmem:[%s1 + $0x1cb8] sm:$0xff]
    %v957 = vld [vmem:[%s1 + $0x1cc0] sm:$0xff]
    %v958 = vld [vmem:[%s1 + $0x1cc8] sm:$0xff]
    %v959 = vld [vmem:[%s1 + $0x1cd0] sm:$0xff]
    %v960 = vld [vmem:[%s1 + $0x1cd8] sm:$0xff]
    %v961 = vld [vmem:[%s1 + $0x1ce0] sm:$0xff]
    %v962 = vld [vmem:[%s1 + $0x1ce8] sm:$0xff]
    %v963 = vld [vmem:[%s1 + $0x1cf0] sm:$0xff]
    %v964 = vld [vmem:[%s1 + $0x1cf8] sm:$0xff]
    %v965 = vld [vmem:[%s1 + $0x1d00] sm:$0xff]
    %v966 = vld [vmem:[%s1 + $0x1d08] sm:$0xff]
    %v967 = vld [vmem:[%s1 + $0x1d10] sm:$0xff]
    %v968 = vld [vmem:[%s1 + $0x1d18] sm:$0xff]
    %v969 = vld [vmem:[%s1 + $0x1d20] sm:$0xff]
    %v970 = vld [vmem:[%s1 + $0x1d28] sm:$0xff]
    %v971 = vld [vmem:[%s1 + $0x1d30] sm:$0xff]
    %v972 = vld [vmem:[%s1 + $0x1d38] sm:$0xff]
    %v973 = vld [vmem:[%s1 + $0x1d40] sm:$0xff]
    %v974 = vld [vmem:[%s1 + $0x1d48] sm:$0xff]
    %v975 = vld [vmem:[%s1 + $0x1d50] sm:$0xff]
    %v976 = vld [vmem:[%s1 + $0x1d58] sm:$0xff]
    %v977 = vld [vmem:[%s1 + $0x1d60] sm:$0xff]
    %v978 = vld [vmem:[%s1 + $0x1d68] sm:$0xff]
    %v979 = vld [vmem:[%s1 + $0x1d70] sm:$0xff]
    %v980 = vld [vmem:[%s1 + $0x1d78] sm:$0xff]
    %v981 = vld [vmem:[%s1 + $0x1d80] sm:$0xff]
    %v982 = vld [vmem:[%s1 + $0x1d88] sm:$0xff]
    %v983 = vld [vmem:[%s1 + $0x1d90] sm:$0xff]
    %v984 = vld [vmem:[%s1 + $0x1d98] sm:$0xff]
    %v985 = vld [vmem:[%s1 + $0x1da0] sm:$0xff]
    %v986 = vld [vmem:[%s1 + $0x1da8] sm:$0xff]
    %v987 = vld [vmem:[%s1 + $0x1db0] sm:$0xff]
    %v988 = vld [vmem:[%s1 + $0x1db8] sm:$0xff]
    %v989 = vld [vmem:[%s1 + $0x1dc0] sm:$0xff]
    %v990 = vld [vmem:[%s1 + $0x1dc8] sm:$0xff]
    %v991 = vld [vmem:[%s1 + $0x1dd0] sm:$0xff]
    %v992 = vld [vmem:[%s1 + $0x1dd8] sm:$0xff]
    %v993 = vld [vmem:[%s1 + $0x1de0] sm:$0xff]
    %v994 = vld [vmem:[%s1 + $0x1de8] sm:$0xff]
    %v995 = vld [vmem:[%s1 + $0x1df0] sm:$0xff]
    %v996 = vld [vmem:[%s1 + $0x1df8] sm:$0xff]
    %v997 = vld [vmem:[%s1 + $0x1e00] sm:$0xff]
    %v998 = vld [vmem:[%s1 + $0x1e08] sm:$0xff]
    %v999 = vld [vmem:[%s1 + $0x1e10] sm:$0xff]
    %v1000 = vld [vmem:[%s1 + $0x1e18] sm:$0xff]
    %v1001 = vld [vmem:[%s1 + $0x1e20] sm:$0xff]
    %v1002 = vld [vmem:[%s1 + $0x1e28] sm:$0xff]
    %v1003 = vld [vmem:[%s1 + $0x1e30] sm:$0xff]
    %v1004 = vld [vmem:[%s1 + $0x1e38] sm:$0xff]
    %v1005 = vld [vmem:[%s1 + $0x1e40] sm:$0xff]
    %v1006 = vld [vmem:[%s1 + $0x1e48] sm:$0xff]
    %v1007 = vld [vmem:[%s1 + $0x1e50] sm:$0xff]
    %v1008 = vld [vmem:[%s1 + $0x1e58] sm:$0xff]
    %v1009 = vld [vmem:[%s1 + $0x1e60] sm:$0xff]
    %v1010 = vld [vmem:[%s1 + $0x1e68] sm:$0xff]
    %v1011 = vld [vmem:[%s1 + $0x1e70] sm:$0xff]
    %v1012 = vld [vmem:[%s1 + $0x1e78] sm:$0xff]
    %v1013 = vld [vmem:[%s1 + $0x1e80] sm:$0xff]
    %v1014 = vld [vmem:[%s1 + $0x1e88] sm:$0xff]
    %v1015 = vld [vmem:[%s1 + $0x1e90] sm:$0xff]
    %v1016 = vld [vmem:[%s1 + $0x1e98] sm:$0xff]
    %v1017 = vld [vmem:[%s1 + $0x1ea0] sm:$0xff]
    %v1018 = vld [vmem:[%s1 + $0x1ea8] sm:$0xff]
    %v1019 = vld [vmem:[%s1 + $0x1eb0] sm:$0xff]
    %v1020 = vld [vmem:[%s1 + $0x1eb8] sm:$0xff]
    %v1021 = vld [vmem:[%s1 + $0x1ec0] sm:$0xff]
    %v1022 = vld [vmem:[%s1 + $0x1ec8] sm:$0xff]
    %v1023 = vld [vmem:[%s1 + $0x1ed0] sm:$0xff]
    %v1024 = vld [vmem:[%s1 + $0x1ed8] sm:$0xff]
    %v1025 = vld [vmem:[%s1 + $0x1ee0] sm:$0xff]
    %v1026 = vld [vmem:[%s1 + $0x1ee8] sm:$0xff]
    %v1027 = vld [vmem:[%s1 + $0x1ef0] sm:$0xff]
    %v1028 = vld [vmem:[%s1 + $0x1ef8] sm:$0xff]
    %v1029 = vld [vmem:[%s1 + $0x1f00] sm:$0xff]
    %v1030 = vld [vmem:[%s1 + $0x1f08] sm:$0xff]
    %v1031 = vld [vmem:[%s1 + $0x1f10] sm:$0xff]
    %v1032 = vld [vmem:[%s1 + $0x1f18] sm:$0xff]
    %v1033 = vld [vmem:[%s1 + $0x1f20] sm:$0xff]
    %v1034 = vld [vmem:[%s1 + $0x1f28] sm:$0xff]
    %v1035 = vld [vmem:[%s1 + $0x1f30] sm:$0xff]
    %v1036 = vld [vmem:[%s1 + $0x1f38] sm:$0xff]
    %v1037 = vld [vmem:[%s1 + $0x1f40] sm:$0xff]
    %v1038 = vld [vmem:[%s1 + $0x1f48] sm:$0xff]
    %v1039 = vld [vmem:[%s1 + $0x1f50] sm:$0xff]
    %v1040 = vld [vmem:[%s1 + $0x1f58] sm:$0xff]
    %v1041 = vld [vmem:[%s1 + $0x1f60] sm:$0xff]
    %v1042 = vld [vmem:[%s1 + $0x1f68] sm:$0xff]
    %v1043 = vld [vmem:[%s1 + $0x1f70] sm:$0xff]
    %v1044 = vld [vmem:[%s1 + $0x1f78] sm:$0xff]
    %v1045 = vld [vmem:[%s1 + $0x1f80] sm:$0xff]
    %v1046 = vld [vmem:[%s1 + $0x1f88] sm:$0xff]
    %v1047 = vld [vmem:[%s1 + $0x1f90] sm:$0xff]
    %v1048 = vld [vmem:[%s1 + $0x1f98] sm:$0xff]
    %v1049 = vld [vmem:[%s1 + $0x1fa0] sm:$0xff]
    %v1050 = vld [vmem:[%s1 + $0x1fa8] sm:$0xff]
    %v1051 = vld [vmem:[%s1 + $0x1fb0] sm:$0xff]
    %v1052 = vld [vmem:[%s1 + $0x1fb8] sm:$0xff]
    %v1053 = vld [vmem:[%s1 + $0x1fc0] sm:$0xff]
    %v1054 = vld [vmem:[%s1 + $0x1fc8] sm:$0xff]
    %v1055 = vld [vmem:[%s1 + $0x1fd0] sm:$0xff]
    %v1056 = vld [vmem:[%s1 + $0x1fd8] sm:$0xff]
    %v1057 = vld [vmem:[%s1 + $0x1fe0] sm:$0xff]
    %v1058 = vld [vmem:[%s1 + $0x1fe8] sm:$0xff]
    %v1059 = vld [vmem:[%s1 + $0x1ff0] sm:$0xff]
    %v1060 = vld [vmem:[%s1 + $0x1ff8] sm:$0xff]
    %v1061 = vld [vmem:[%s2] sm:$0x1]
    %v1063 = vlaneseq
    %v1064 = vshrl.u32 %v1063, 7
    %v1065 = vsub.s32 0, %v1064
    %v1066 = vrot.slane %v1061, %v1065
    %v1084 = vcombine.high %v21, %v21
    %v1086 = vunpack.c.l.s4 1983009808
    %v1087 = vunpack.c.0.s8 %v1086
    %v1088 = vlaneseq
    %v1089 = vshrl.u32 %v1088, 7
    %v1090 = vsub.s32 %v1087, %v1089
    %v1091 = vrot.slane %v21, %v1090
    %v1093 = vunpack.c.l.s4 1983009808
    %v1094 = vunpack.c.0.s8 %v1093
    %v1095 = vlaneseq
    %v1096 = vshrl.u32 %v1095, 7
    %v1097 = vsub.s32 %v1094, %v1096
    %v1098 = vrot.slane %v1084, %v1097
    %v1099 = vcombine.high %v1091, %v1091
    %v1100 = vcombine.high %v1098, %v1098
    %v1101 = vcombine.high %v22, %v22
    %v1103 = vunpack.c.l.s4 1983009808
    %v1104 = vunpack.c.0.s8 %v1103
    %v1105 = vlaneseq
    %v1106 = vshrl.u32 %v1105, 7
    %v1107 = vsub.s32 %v1104, %v1106
    %v1108 = vrot.slane %v22, %v1107
    %v1110 = vunpack.c.l.s4 1983009808
    %v1111 = vunpack.c.0.s8 %v1110
    %v1112 = vlaneseq
    %v1113 = vshrl.u32 %v1112, 7
    %v1114 = vsub.s32 %v1111, %v1113
    %v1115 = vrot.slane %v1101, %v1114
    %v1116 = vcombine.high %v1108, %v1108
    %v1117 = vcombine.high %v1115, %v1115
    %v1118 = vcombine.high %v23, %v23
    %v1120 = vunpack.c.l.s4 1983009808
    %v1121 = vunpack.c.0.s8 %v1120
    %v1122 = vlaneseq
    %v1123 = vshrl.u32 %v1122, 7
    %v1124 = vsub.s32 %v1121, %v1123
    %v1125 = vrot.slane %v23, %v1124
    %v1127 = vunpack.c.l.s4 1983009808
    %v1128 = vunpack.c.0.s8 %v1127
    %v1129 = vlaneseq
    %v1130 = vshrl.u32 %v1129, 7
    %v1131 = vsub.s32 %v1128, %v1130
    %v1132 = vrot.slane %v1118, %v1131
    %v1133 = vcombine.high %v1125, %v1125
    %v1134 = vcombine.high %v1132, %v1132
    %v1135 = vcombine.high %v24, %v24
    %v1137 = vunpack.c.l.s4 1983009808
    %v1138 = vunpack.c.0.s8 %v1137
    %v1139 = vlaneseq
    %v1140 = vshrl.u32 %v1139, 7
    %v1141 = vsub.s32 %v1138, %v1140
    %v1142 = vrot.slane %v24, %v1141
    %v1144 = vunpack.c.l.s4 1983009808
    %v1145 = vunpack.c.0.s8 %v1144
    %v1146 = vlaneseq
    %v1147 = vshrl.u32 %v1146, 7
    %v1148 = vsub.s32 %v1145, %v1147
    %v1149 = vrot.slane %v1135, %v1148
    %v1150 = vcombine.high %v1142, %v1142
    %v1151 = vcombine.high %v1149, %v1149
    %v1152 = vcombine.high %v25, %v25
    %v1154 = vunpack.c.l.s4 1983009808
    %v1155 = vunpack.c.0.s8 %v1154
    %v1156 = vlaneseq
    %v1157 = vshrl.u32 %v1156, 7
    %v1158 = vsub.s32 %v1155, %v1157
    %v1159 = vrot.slane %v25, %v1158
    %v1161 = vunpack.c.l.s4 1983009808
    %v1162 = vunpack.c.0.s8 %v1161
    %v1163 = vlaneseq
    %v1164 = vshrl.u32 %v1163, 7
    %v1165 = vsub.s32 %v1162, %v1164
    %v1166 = vrot.slane %v1152, %v1165
    %v1167 = vcombine.high %v1159, %v1159
    %v1168 = vcombine.high %v1166, %v1166
    %v1169 = vcombine.high %v26, %v26
    %v1171 = vunpack.c.l.s4 1983009808
    %v1172 = vunpack.c.0.s8 %v1171
    %v1173 = vlaneseq
    %v1174 = vshrl.u32 %v1173, 7
    %v1175 = vsub.s32 %v1172, %v1174
    %v1176 = vrot.slane %v26, %v1175
    %v1178 = vunpack.c.l.s4 1983009808
    %v1179 = vunpack.c.0.s8 %v1178
    %v1180 = vlaneseq
    %v1181 = vshrl.u32 %v1180, 7
    %v1182 = vsub.s32 %v1179, %v1181
    %v1183 = vrot.slane %v1169, %v1182
    %v1184 = vcombine.high %v1176, %v1176
    %v1185 = vcombine.high %v1183, %v1183
    %v1186 = vcombine.high %v27, %v27
    %v1188 = vunpack.c.l.s4 1983009808
    %v1189 = vunpack.c.0.s8 %v1188
    %v1190 = vlaneseq
    %v1191 = vshrl.u32 %v1190, 7
    %v1192 = vsub.s32 %v1189, %v1191
    %v1193 = vrot.slane %v27, %v1192
    %v1195 = vunpack.c.l.s4 1983009808
    %v1196 = vunpack.c.0.s8 %v1195
    %v1197 = vlaneseq
    %v1198 = vshrl.u32 %v1197, 7
    %v1199 = vsub.s32 %v1196, %v1198
    %v1200 = vrot.slane %v1186, %v1199
    %v1201 = vcombine.high %v1193, %v1193
    %v1202 = vcombine.high %v1200, %v1200
    %v1203 = vcombine.high %v28, %v28
    %v1205 = vunpack.c.l.s4 1983009808
    %v1206 = vunpack.c.0.s8 %v1205
    %v1207 = vlaneseq
    %v1208 = vshrl.u32 %v1207, 7
    %v1209 = vsub.s32 %v1206, %v1208
    %v1210 = vrot.slane %v28, %v1209
    %v1212 = vunpack.c.l.s4 1983009808
    %v1213 = vunpack.c.0.s8 %v1212
    %v1214 = vlaneseq
    %v1215 = vshrl.u32 %v1214, 7
    %v1216 = vsub.s32 %v1213, %v1215
    %v1217 = vrot.slane %v1203, %v1216
    %v1218 = vcombine.high %v1210, %v1210
    %v1219 = vcombine.high %v1217, %v1217
    %v1220 = vcombine.high %v29, %v29
    %v1222 = vunpack.c.l.s4 1983009808
    %v1223 = vunpack.c.0.s8 %v1222
    %v1224 = vlaneseq
    %v1225 = vshrl.u32 %v1224, 7
    %v1226 = vsub.s32 %v1223, %v1225
    %v1227 = vrot.slane %v29, %v1226
    %v1229 = vunpack.c.l.s4 1983009808
    %v1230 = vunpack.c.0.s8 %v1229
    %v1231 = vlaneseq
    %v1232 = vshrl.u32 %v1231, 7
    %v1233 = vsub.s32 %v1230, %v1232
    %v1234 = vrot.slane %v1220, %v1233
    %v1235 = vcombine.high %v1227, %v1227
    %v1236 = vcombine.high %v1234, %v1234
    %v1237 = vcombine.high %v30, %v30
    %v1239 = vunpack.c.l.s4 1983009808
    %v1240 = vunpack.c.0.s8 %v1239
    %v1241 = vlaneseq
    %v1242 = vshrl.u32 %v1241, 7
    %v1243 = vsub.s32 %v1240, %v1242
    %v1244 = vrot.slane %v30, %v1243
    %v1246 = vunpack.c.l.s4 1983009808
    %v1247 = vunpack.c.0.s8 %v1246
    %v1248 = vlaneseq
    %v1249 = vshrl.u32 %v1248, 7
    %v1250 = vsub.s32 %v1247, %v1249
    %v1251 = vrot.slane %v1237, %v1250
    %v1252 = vcombine.high %v1244, %v1244
    %v1253 = vcombine.high %v1251, %v1251
    %v1254 = vcombine.high %v31, %v31
    %v1256 = vunpack.c.l.s4 1983009808
    %v1257 = vunpack.c.0.s8 %v1256
    %v1258 = vlaneseq
    %v1259 = vshrl.u32 %v1258, 7
    %v1260 = vsub.s32 %v1257, %v1259
    %v1261 = vrot.slane %v31, %v1260
    %v1263 = vunpack.c.l.s4 1983009808
    %v1264 = vunpack.c.0.s8 %v1263
    %v1265 = vlaneseq
    %v1266 = vshrl.u32 %v1265, 7
    %v1267 = vsub.s32 %v1264, %v1266
    %v1268 = vrot.slane %v1254, %v1267
    %v1269 = vcombine.high %v1261, %v1261
    %v1270 = vcombine.high %v1268, %v1268
    %v1271 = vcombine.high %v32, %v32
    %v1273 = vunpack.c.l.s4 1983009808
    %v1274 = vunpack.c.0.s8 %v1273
    %v1275 = vlaneseq
    %v1276 = vshrl.u32 %v1275, 7
    %v1277 = vsub.s32 %v1274, %v1276
    %v1278 = vrot.slane %v32, %v1277
    %v1280 = vunpack.c.l.s4 1983009808
    %v1281 = vunpack.c.0.s8 %v1280
    %v1282 = vlaneseq
    %v1283 = vshrl.u32 %v1282, 7
    %v1284 = vsub.s32 %v1281, %v1283
    %v1285 = vrot.slane %v1271, %v1284
    %v1286 = vcombine.high %v1278, %v1278
    %v1287 = vcombine.high %v1285, %v1285
    %v1288 = vcombine.high %v33, %v33
    %v1290 = vunpack.c.l.s4 1983009808
    %v1291 = vunpack.c.0.s8 %v1290
    %v1292 = vlaneseq
    %v1293 = vshrl.u32 %v1292, 7
    %v1294 = vsub.s32 %v1291, %v1293
    %v1295 = vrot.slane %v33, %v1294
    %v1297 = vunpack.c.l.s4 1983009808
    %v1298 = vunpack.c.0.s8 %v1297
    %v1299 = vlaneseq
    %v1300 = vshrl.u32 %v1299, 7
    %v1301 = vsub.s32 %v1298, %v1300
    %v1302 = vrot.slane %v1288, %v1301
    %v1303 = vcombine.high %v1295, %v1295
    %v1304 = vcombine.high %v1302, %v1302
    %v1305 = vcombine.high %v34, %v34
    %v1307 = vunpack.c.l.s4 1983009808
    %v1308 = vunpack.c.0.s8 %v1307
    %v1309 = vlaneseq
    %v1310 = vshrl.u32 %v1309, 7
    %v1311 = vsub.s32 %v1308, %v1310
    %v1312 = vrot.slane %v34, %v1311
    %v1314 = vunpack.c.l.s4 1983009808
    %v1315 = vunpack.c.0.s8 %v1314
    %v1316 = vlaneseq
    %v1317 = vshrl.u32 %v1316, 7
    %v1318 = vsub.s32 %v1315, %v1317
    %v1319 = vrot.slane %v1305, %v1318
    %v1320 = vcombine.high %v1312, %v1312
    %v1321 = vcombine.high %v1319, %v1319
    %v1322 = vcombine.high %v35, %v35
    %v1324 = vunpack.c.l.s4 1983009808
    %v1325 = vunpack.c.0.s8 %v1324
    %v1326 = vlaneseq
    %v1327 = vshrl.u32 %v1326, 7
    %v1328 = vsub.s32 %v1325, %v1327
    %v1329 = vrot.slane %v35, %v1328
    %v1331 = vunpack.c.l.s4 1983009808
    %v1332 = vunpack.c.0.s8 %v1331
    %v1333 = vlaneseq
    %v1334 = vshrl.u32 %v1333, 7
    %v1335 = vsub.s32 %v1332, %v1334
    %v1336 = vrot.slane %v1322, %v1335
    %v1337 = vcombine.high %v1329, %v1329
    %v1338 = vcombine.high %v1336, %v1336
    %v1339 = vcombine.high %v36, %v36
    %v1341 = vunpack.c.l.s4 1983009808
    %v1342 = vunpack.c.0.s8 %v1341
    %v1343 = vlaneseq
    %v1344 = vshrl.u32 %v1343, 7
    %v1345 = vsub.s32 %v1342, %v1344
    %v1346 = vrot.slane %v36, %v1345
    %v1348 = vunpack.c.l.s4 1983009808
    %v1349 = vunpack.c.0.s8 %v1348
    %v1350 = vlaneseq
    %v1351 = vshrl.u32 %v1350, 7
    %v1352 = vsub.s32 %v1349, %v1351
    %v1353 = vrot.slane %v1339, %v1352
    %v1354 = vcombine.high %v1346, %v1346
    %v1355 = vcombine.high %v1353, %v1353
    %1420 = vmatprep.subr.mxu0 0.0
    %1421 = vmatpush1.msra.mxu0 %v37
    %1422 = vmatprep.subr.mxu0 0.0
    %1423 = vmatpush1.msra.mxu0 %v38
    %1424 = vmatprep.subr.mxu0 0.0
    %1425 = vmatpush1.msra.mxu0 %v39
    %1426 = vmatprep.subr.mxu0 0.0
    %1427 = vmatpush1.msra.mxu0 %v40
    %1428 = vmatprep.subr.mxu0 0.0
    %1429 = vmatpush1.msra.mxu0 %v41
    %1430 = vmatprep.subr.mxu0 0.0
    %1431 = vmatpush1.msra.mxu0 %v42
    %1432 = vmatprep.subr.mxu0 0.0
    %1433 = vmatpush1.msra.mxu0 %v43
    %1434 = vmatprep.subr.mxu0 0.0
    %1435 = vmatpush1.msra.mxu0 %v44
    %1436 = vmatprep.subr.mxu0 0.0
    %1437 = vmatpush1.msra.mxu0 %v45
    %1438 = vmatprep.subr.mxu0 0.0
    %1439 = vmatpush1.msra.mxu0 %v46
    %1440 = vmatprep.subr.mxu0 0.0
    %1441 = vmatpush1.msra.mxu0 %v47
    %1442 = vmatprep.subr.mxu0 0.0
    %1443 = vmatpush1.msra.mxu0 %v48
    %1444 = vmatprep.subr.mxu0 0.0
    %1445 = vmatpush1.msra.mxu0 %v49
    %1446 = vmatprep.subr.mxu0 0.0
    %1447 = vmatpush1.msra.mxu0 %v50
    %1448 = vmatprep.subr.mxu0 0.0
    %1449 = vmatpush1.msra.mxu0 %v51
    %1450 = vmatprep.subr.mxu0 0.0
    %1451 = vmatpush1.msra.mxu0 %v52
    %1452 = vmatprep.subr.mxu0 0.0
    %1453 = vmatpush1.msra.mxu0 %v53
    %1454 = vmatprep.subr.mxu0 0.0
    %1455 = vmatpush1.msra.mxu0 %v54
    %1456 = vmatprep.subr.mxu0 0.0
    %1457 = vmatpush1.msra.mxu0 %v55
    %1458 = vmatprep.subr.mxu0 0.0
    %1459 = vmatpush1.msra.mxu0 %v56
    %1460 = vmatprep.subr.mxu0 0.0
    %1461 = vmatpush1.msra.mxu0 %v57
    %1462 = vmatprep.subr.mxu0 0.0
    %1463 = vmatpush1.msra.mxu0 %v58
    %1464 = vmatprep.subr.mxu0 0.0
    %1465 = vmatpush1.msra.mxu0 %v59
    %1466 = vmatprep.subr.mxu0 0.0
    %1467 = vmatpush1.msra.mxu0 %v60
    %1468 = vmatprep.subr.mxu0 0.0
    %1469 = vmatpush1.msra.mxu0 %v61
    %1470 = vmatprep.subr.mxu0 0.0
    %1471 = vmatpush1.msra.mxu0 %v62
    %1472 = vmatprep.subr.mxu0 0.0
    %1473 = vmatpush1.msra.mxu0 %v63
    %1474 = vmatprep.subr.mxu0 0.0
    %1475 = vmatpush1.msra.mxu0 %v64
    %1476 = vmatprep.subr.mxu0 0.0
    %1477 = vmatpush1.msra.mxu0 %v65
    %1478 = vmatprep.subr.mxu0 0.0
    %1479 = vmatpush1.msra.mxu0 %v66
    %1480 = vmatprep.subr.mxu0 0.0
    %1481 = vmatpush1.msra.mxu0 %v67
    %1482 = vmatprep.subr.mxu0 0.0
    %1483 = vmatpush1.msra.mxu0 %v68
    %1484 = vmatprep.mubr.f32.mxu0 %v1099
    %1485 = vmatmul.mubr.f32.gmra.mrb[0].mxu0 %v1091
    %v1486 = vpop.f32.mrb[0].mxu0
    %v1487 = vadd.f32 %v1066, %v1486
    %v1488 = vpop.f32.mrb[0].mxu0
    %1489 = vdwg.mxu0
    %1490 = vmatprep.subr.mxu0 0.0
    %1491 = vmatpush1.msra.mxu0 %v69
    %1492 = vmatprep.subr.mxu0 0.0
    %1493 = vmatpush1.msra.mxu0 %v70
    %1494 = vmatprep.subr.mxu0 0.0
    %1495 = vmatpush1.msra.mxu0 %v71
    %1496 = vmatprep.subr.mxu0 0.0
    %1497 = vmatpush1.msra.mxu0 %v72
    %1498 = vmatprep.subr.mxu0 0.0
    %1499 = vmatpush1.msra.mxu0 %v73
    %1500 = vmatprep.subr.mxu0 0.0
    %1501 = vmatpush1.msra.mxu0 %v74
    %1502 = vmatprep.subr.mxu0 0.0
    %1503 = vmatpush1.msra.mxu0 %v75
    %1504 = vmatprep.subr.mxu0 0.0
    %1505 = vmatpush1.msra.mxu0 %v76
    %1506 = vmatprep.subr.mxu0 0.0
    %1507 = vmatpush1.msra.mxu0 %v77
    %1508 = vmatprep.subr.mxu0 0.0
    %1509 = vmatpush1.msra.mxu0 %v78
    %1510 = vmatprep.subr.mxu0 0.0
    %1511 = vmatpush1.msra.mxu0 %v79
    %1512 = vmatprep.subr.mxu0 0.0
    %1513 = vmatpush1.msra.mxu0 %v80
    %1514 = vmatprep.subr.mxu0 0.0
    %1515 = vmatpush1.msra.mxu0 %v81
    %1516 = vmatprep.subr.mxu0 0.0
    %1517 = vmatpush1.msra.mxu0 %v82
    %1518 = vmatprep.subr.mxu0 0.0
    %1519 = vmatpush1.msra.mxu0 %v83
    %1520 = vmatprep.subr.mxu0 0.0
    %1521 = vmatpush1.msra.mxu0 %v84
    %1522 = vmatprep.subr.mxu0 0.0
    %1523 = vmatpush1.msra.mxu0 %v85
    %1524 = vmatprep.subr.mxu0 0.0
    %1525 = vmatpush1.msra.mxu0 %v86
    %1526 = vmatprep.subr.mxu0 0.0
    %1527 = vmatpush1.msra.mxu0 %v87
    %1528 = vmatprep.subr.mxu0 0.0
    %1529 = vmatpush1.msra.mxu0 %v88
    %1530 = vmatprep.subr.mxu0 0.0
    %1531 = vmatpush1.msra.mxu0 %v89
    %1532 = vmatprep.subr.mxu0 0.0
    %1533 = vmatpush1.msra.mxu0 %v90
    %1534 = vmatprep.subr.mxu0 0.0
    %1535 = vmatpush1.msra.mxu0 %v91
    %1536 = vmatprep.subr.mxu0 0.0
    %1537 = vmatpush1.msra.mxu0 %v92
    %1538 = vmatprep.subr.mxu0 0.0
    %1539 = vmatpush1.msra.mxu0 %v93
    %1540 = vmatprep.subr.mxu0 0.0
    %1541 = vmatpush1.msra.mxu0 %v94
    %1542 = vmatprep.subr.mxu0 0.0
    %1543 = vmatpush1.msra.mxu0 %v95
    %1544 = vmatprep.subr.mxu0 0.0
    %1545 = vmatpush1.msra.mxu0 %v96
    %1546 = vmatprep.subr.mxu0 0.0
    %1547 = vmatpush1.msra.mxu0 %v97
    %1548 = vmatprep.subr.mxu0 0.0
    %1549 = vmatpush1.msra.mxu0 %v98
    %1550 = vmatprep.subr.mxu0 0.0
    %1551 = vmatpush1.msra.mxu0 %v99
    %1552 = vmatprep.subr.mxu0 0.0
    %1553 = vmatpush1.msra.mxu0 %v100
    %1554 = vmatprep.mubr.f32.mxu0 %v1100
    %1555 = vmatmul.mubr.f32.gmra.mrb[0].mxu0 %v1098
    %v1556 = vpop.f32.mrb[0].mxu0
    %v1557 = vadd.f32 %v1487, %v1556
    %v1558 = vpop.f32.mrb[0].mxu0
    %1559 = vdwg.mxu0
    %1560 = vmatprep.subr.mxu0 0.0
    %1561 = vmatpush1.msra.mxu0 %v101
    %1562 = vmatprep.subr.mxu0 0.0
    %1563 = vmatpush1.msra.mxu0 %v102
    %1564 = vmatprep.subr.mxu0 0.0
    %1565 = vmatpush1.msra.mxu0 %v103
    %1566 = vmatprep.subr.mxu0 0.0
    %1567 = vmatpush1.msra.mxu0 %v104
    %1568 = vmatprep.subr.mxu0 0.0
    %1569 = vmatpush1.msra.mxu0 %v105
    %1570 = vmatprep.subr.mxu0 0.0
    %1571 = vmatpush1.msra.mxu0 %v106
    %1572 = vmatprep.subr.mxu0 0.0
    %1573 = vmatpush1.msra.mxu0 %v107
    %1574 = vmatprep.subr.mxu0 0.0
    %1575 = vmatpush1.msra.mxu0 %v108
    %1576 = vmatprep.subr.mxu0 0.0
    %1577 = vmatpush1.msra.mxu0 %v109
    %1578 = vmatprep.subr.mxu0 0.0
    %1579 = vmatpush1.msra.mxu0 %v110
    %1580 = vmatprep.subr.mxu0 0.0
    %1581 = vmatpush1.msra.mxu0 %v111
    %1582 = vmatprep.subr.mxu0 0.0
    %1583 = vmatpush1.msra.mxu0 %v112
    %1584 = vmatprep.subr.mxu0 0.0
    %1585 = vmatpush1.msra.mxu0 %v113
    %1586 = vmatprep.subr.mxu0 0.0
    %1587 = vmatpush1.msra.mxu0 %v114
    %1588 = vmatprep.subr.mxu0 0.0
    %1589 = vmatpush1.msra.mxu0 %v115
    %1590 = vmatprep.subr.mxu0 0.0
    %1591 = vmatpush1.msra.mxu0 %v116
    %1592 = vmatprep.subr.mxu0 0.0
    %1593 = vmatpush1.msra.mxu0 %v117
    %1594 = vmatprep.subr.mxu0 0.0
    %1595 = vmatpush1.msra.mxu0 %v118
    %1596 = vmatprep.subr.mxu0 0.0
    %1597 = vmatpush1.msra.mxu0 %v119
    %1598 = vmatprep.subr.mxu0 0.0
    %1599 = vmatpush1.msra.mxu0 %v120
    %1600 = vmatprep.subr.mxu0 0.0
    %1601 = vmatpush1.msra.mxu0 %v121
    %1602 = vmatprep.subr.mxu0 0.0
    %1603 = vmatpush1.msra.mxu0 %v122
    %1604 = vmatprep.subr.mxu0 0.0
    %1605 = vmatpush1.msra.mxu0 %v123
    %1606 = vmatprep.subr.mxu0 0.0
    %1607 = vmatpush1.msra.mxu0 %v124
    %1608 = vmatprep.subr.mxu0 0.0
    %1609 = vmatpush1.msra.mxu0 %v125
    %1610 = vmatprep.subr.mxu0 0.0
    %1611 = vmatpush1.msra.mxu0 %v126
    %1612 = vmatprep.subr.mxu0 0.0
    %1613 = vmatpush1.msra.mxu0 %v127
    %1614 = vmatprep.subr.mxu0 0.0
    %1615 = vmatpush1.msra.mxu0 %v128
    %1616 = vmatprep.subr.mxu0 0.0
    %1617 = vmatpush1.msra.mxu0 %v129
    %1618 = vmatprep.subr.mxu0 0.0
    %1619 = vmatpush1.msra.mxu0 %v130
    %1620 = vmatprep.subr.mxu0 0.0
    %1621 = vmatpush1.msra.mxu0 %v131
    %1622 = vmatprep.subr.mxu0 0.0
    %1623 = vmatpush1.msra.mxu0 %v132
    %1624 = vmatprep.mubr.f32.mxu0 %v1116
    %1625 = vmatmul.mubr.f32.gmra.mrb[0].mxu0 %v1108
    %v1626 = vpop.f32.mrb[0].mxu0
    %v1627 = vadd.f32 %v1557, %v1626
    %v1628 = vpop.f32.mrb[0].mxu0
    %1629 = vdwg.mxu0
    %1630 = vmatprep.subr.mxu0 0.0
    %1631 = vmatpush1.msra.mxu0 %v133
    %1632 = vmatprep.subr.mxu0 0.0
    %1633 = vmatpush1.msra.mxu0 %v134
    %1634 = vmatprep.subr.mxu0 0.0
    %1635 = vmatpush1.msra.mxu0 %v135
    %1636 = vmatprep.subr.mxu0 0.0
    %1637 = vmatpush1.msra.mxu0 %v136
    %1638 = vmatprep.subr.mxu0 0.0
    %1639 = vmatpush1.msra.mxu0 %v137
    %1640 = vmatprep.subr.mxu0 0.0
    %1641 = vmatpush1.msra.mxu0 %v138
    %1642 = vmatprep.subr.mxu0 0.0
    %1643 = vmatpush1.msra.mxu0 %v139
    %1644 = vmatprep.subr.mxu0 0.0
    %1645 = vmatpush1.msra.mxu0 %v140
    %1646 = vmatprep.subr.mxu0 0.0
    %1647 = vmatpush1.msra.mxu0 %v141
    %1648 = vmatprep.subr.mxu0 0.0
    %1649 = vmatpush1.msra.mxu0 %v142
    %1650 = vmatprep.subr.mxu0 0.0
    %1651 = vmatpush1.msra.mxu0 %v143
    %1652 = vmatprep.subr.mxu0 0.0
    %1653 = vmatpush1.msra.mxu0 %v144
    %1654 = vmatprep.subr.mxu0 0.0
    %1655 = vmatpush1.msra.mxu0 %v145
    %1656 = vmatprep.subr.mxu0 0.0
    %1657 = vmatpush1.msra.mxu0 %v146
    %1658 = vmatprep.subr.mxu0 0.0
    %1659 = vmatpush1.msra.mxu0 %v147
    %1660 = vmatprep.subr.mxu0 0.0
    %1661 = vmatpush1.msra.mxu0 %v148
    %1662 = vmatprep.subr.mxu0 0.0
    %1663 = vmatpush1.msra.mxu0 %v149
    %1664 = vmatprep.subr.mxu0 0.0
    %1665 = vmatpush1.msra.mxu0 %v150
    %1666 = vmatprep.subr.mxu0 0.0
    %1667 = vmatpush1.msra.mxu0 %v151
    %1668 = vmatprep.subr.mxu0 0.0
    %1669 = vmatpush1.msra.mxu0 %v152
    %1670 = vmatprep.subr.mxu0 0.0
    %1671 = vmatpush1.msra.mxu0 %v153
    %1672 = vmatprep.subr.mxu0 0.0
    %1673 = vmatpush1.msra.mxu0 %v154
    %1674 = vmatprep.subr.mxu0 0.0
    %1675 = vmatpush1.msra.mxu0 %v155
    %1676 = vmatprep.subr.mxu0 0.0
    %1677 = vmatpush1.msra.mxu0 %v156
    %1678 = vmatprep.subr.mxu0 0.0
    %1679 = vmatpush1.msra.mxu0 %v157
    %1680 = vmatprep.subr.mxu0 0.0
    %1681 = vmatpush1.msra.mxu0 %v158
    %1682 = vmatprep.subr.mxu0 0.0
    %1683 = vmatpush1.msra.mxu0 %v159
    %1684 = vmatprep.subr.mxu0 0.0
    %1685 = vmatpush1.msra.mxu0 %v160
    %1686 = vmatprep.subr.mxu0 0.0
    %1687 = vmatpush1.msra.mxu0 %v161
    %1688 = vmatprep.subr.mxu0 0.0
    %1689 = vmatpush1.msra.mxu0 %v162
    %1690 = vmatprep.subr.mxu0 0.0
    %1691 = vmatpush1.msra.mxu0 %v163
    %1692 = vmatprep.subr.mxu0 0.0
    %1693 = vmatpush1.msra.mxu0 %v164
    %1694 = vmatprep.mubr.f32.mxu0 %v1117
    %1695 = vmatmul.mubr.f32.gmra.mrb[0].mxu0 %v1115
    %v1696 = vpop.f32.mrb[0].mxu0
    %v1697 = vadd.f32 %v1627, %v1696
    %v1698 = vpop.f32.mrb[0].mxu0
    %1699 = vdwg.mxu0
    %1700 = vmatprep.subr.mxu0 0.0
    %1701 = vmatpush1.msra.mxu0 %v165
    %1702 = vmatprep.subr.mxu0 0.0
    %1703 = vmatpush1.msra.mxu0 %v166
    %1704 = vmatprep.subr.mxu0 0.0
    %1705 = vmatpush1.msra.mxu0 %v167
    %1706 = vmatprep.subr.mxu0 0.0
    %1707 = vmatpush1.msra.mxu0 %v168
    %1708 = vmatprep.subr.mxu0 0.0
    %1709 = vmatpush1.msra.mxu0 %v169
    %1710 = vmatprep.subr.mxu0 0.0
    %1711 = vmatpush1.msra.mxu0 %v170
    %1712 = vmatprep.subr.mxu0 0.0
    %1713 = vmatpush1.msra.mxu0 %v171
    %1714 = vmatprep.subr.mxu0 0.0
    %1715 = vmatpush1.msra.mxu0 %v172
    %1716 = vmatprep.subr.mxu0 0.0
    %1717 = vmatpush1.msra.mxu0 %v173
    %1718 = vmatprep.subr.mxu0 0.0
    %1719 = vmatpush1.msra.mxu0 %v174
    %1720 = vmatprep.subr.mxu0 0.0
    %1721 = vmatpush1.msra.mxu0 %v175
    %1722 = vmatprep.subr.mxu0 0.0
    %1723 = vmatpush1.msra.mxu0 %v176
    %1724 = vmatprep.subr.mxu0 0.0
    %1725 = vmatpush1.msra.mxu0 %v177
    %1726 = vmatprep.subr.mxu0 0.0
    %1727 = vmatpush1.msra.mxu0 %v178
    %1728 = vmatprep.subr.mxu0 0.0
    %1729 = vmatpush1.msra.mxu0 %v179
    %1730 = vmatprep.subr.mxu0 0.0
    %1731 = vmatpush1.msra.mxu0 %v180
    %1732 = vmatprep.subr.mxu0 0.0
    %1733 = vmatpush1.msra.mxu0 %v181
    %1734 = vmatprep.subr.mxu0 0.0
    %1735 = vmatpush1.msra.mxu0 %v182
    %1736 = vmatprep.subr.mxu0 0.0
    %1737 = vmatpush1.msra.mxu0 %v183
    %1738 = vmatprep.subr.mxu0 0.0
    %1739 = vmatpush1.msra.mxu0 %v184
    %1740 = vmatprep.subr.mxu0 0.0
    %1741 = vmatpush1.msra.mxu0 %v185
    %1742 = vmatprep.subr.mxu0 0.0
    %1743 = vmatpush1.msra.mxu0 %v186
    %1744 = vmatprep.subr.mxu0 0.0
    %1745 = vmatpush1.msra.mxu0 %v187
    %1746 = vmatprep.subr.mxu0 0.0
    %1747 = vmatpush1.msra.mxu0 %v188
    %1748 = vmatprep.subr.mxu0 0.0
    %1749 = vmatpush1.msra.mxu0 %v189
    %1750 = vmatprep.subr.mxu0 0.0
    %1751 = vmatpush1.msra.mxu0 %v190
    %1752 = vmatprep.subr.mxu0 0.0
    %1753 = vmatpush1.msra.mxu0 %v191
    %1754 = vmatprep.subr.mxu0 0.0
    %1755 = vmatpush1.msra.mxu0 %v192
    %1756 = vmatprep.subr.mxu0 0.0
    %1757 = vmatpush1.msra.mxu0 %v193
    %1758 = vmatprep.subr.mxu0 0.0
    %1759 = vmatpush1.msra.mxu0 %v194
    %1760 = vmatprep.subr.mxu0 0.0
    %1761 = vmatpush1.msra.mxu0 %v195
    %1762 = vmatprep.subr.mxu0 0.0
    %1763 = vmatpush1.msra.mxu0 %v196
    %1764 = vmatprep.mubr.f32.mxu0 %v1133
    %1765 = vmatmul.mubr.f32.gmra.mrb[0].mxu0 %v1125
    %v1766 = vpop.f32.mrb[0].mxu0
    %v1767 = vadd.f32 %v1697, %v1766
    %v1768 = vpop.f32.mrb[0].mxu0
    %1769 = vdwg.mxu0
    %1770 = vmatprep.subr.mxu0 0.0
    %1771 = vmatpush1.msra.mxu0 %v197
    %1772 = vmatprep.subr.mxu0 0.0
    %1773 = vmatpush1.msra.mxu0 %v198
    %1774 = vmatprep.subr.mxu0 0.0
    %1775 = vmatpush1.msra.mxu0 %v199
    %1776 = vmatprep.subr.mxu0 0.0
    %1777 = vmatpush1.msra.mxu0 %v200
    %1778 = vmatprep.subr.mxu0 0.0
    %1779 = vmatpush1.msra.mxu0 %v201
    %1780 = vmatprep.subr.mxu0 0.0
    %1781 = vmatpush1.msra.mxu0 %v202
    %1782 = vmatprep.subr.mxu0 0.0
    %1783 = vmatpush1.msra.mxu0 %v203
    %1784 = vmatprep.subr.mxu0 0.0
    %1785 = vmatpush1.msra.mxu0 %v204
    %1786 = vmatprep.subr.mxu0 0.0
    %1787 = vmatpush1.msra.mxu0 %v205
    %1788 = vmatprep.subr.mxu0 0.0
    %1789 = vmatpush1.msra.mxu0 %v206
    %1790 = vmatprep.subr.mxu0 0.0
    %1791 = vmatpush1.msra.mxu0 %v207
    %1792 = vmatprep.subr.mxu0 0.0
    %1793 = vmatpush1.msra.mxu0 %v208
    %1794 = vmatprep.subr.mxu0 0.0
    %1795 = vmatpush1.msra.mxu0 %v209
    %1796 = vmatprep.subr.mxu0 0.0
    %1797 = vmatpush1.msra.mxu0 %v210
    %1798 = vmatprep.subr.mxu0 0.0
    %1799 = vmatpush1.msra.mxu0 %v211
    %1800 = vmatprep.subr.mxu0 0.0
    %1801 = vmatpush1.msra.mxu0 %v212
    %1802 = vmatprep.subr.mxu0 0.0
    %1803 = vmatpush1.msra.mxu0 %v213
    %1804 = vmatprep.subr.mxu0 0.0
    %1805 = vmatpush1.msra.mxu0 %v214
    %1806 = vmatprep.subr.mxu0 0.0
    %1807 = vmatpush1.msra.mxu0 %v215
    %1808 = vmatprep.subr.mxu0 0.0
    %1809 = vmatpush1.msra.mxu0 %v216
    %1810 = vmatprep.subr.mxu0 0.0
    %1811 = vmatpush1.msra.mxu0 %v217
    %1812 = vmatprep.subr.mxu0 0.0
    %1813 = vmatpush1.msra.mxu0 %v218
    %1814 = vmatprep.subr.mxu0 0.0
    %1815 = vmatpush1.msra.mxu0 %v219
    %1816 = vmatprep.subr.mxu0 0.0
    %1817 = vmatpush1.msra.mxu0 %v220
    %1818 = vmatprep.subr.mxu0 0.0
    %1819 = vmatpush1.msra.mxu0 %v221
    %1820 = vmatprep.subr.mxu0 0.0
    %1821 = vmatpush1.msra.mxu0 %v222
    %1822 = vmatprep.subr.mxu0 0.0
    %1823 = vmatpush1.msra.mxu0 %v223
    %1824 = vmatprep.subr.mxu0 0.0
    %1825 = vmatpush1.msra.mxu0 %v224
    %1826 = vmatprep.subr.mxu0 0.0
    %1827 = vmatpush1.msra.mxu0 %v225
    %1828 = vmatprep.subr.mxu0 0.0
    %1829 = vmatpush1.msra.mxu0 %v226
    %1830 = vmatprep.subr.mxu0 0.0
    %1831 = vmatpush1.msra.mxu0 %v227
    %1832 = vmatprep.subr.mxu0 0.0
    %1833 = vmatpush1.msra.mxu0 %v228
    %1834 = vmatprep.mubr.f32.mxu0 %v1134
    %1835 = vmatmul.mubr.f32.gmra.mrb[0].mxu0 %v1132
    %v1836 = vpop.f32.mrb[0].mxu0
    %v1837 = vadd.f32 %v1767, %v1836
    %v1838 = vpop.f32.mrb[0].mxu0
    %1839 = vdwg.mxu0
    %1840 = vmatprep.subr.mxu0 0.0
    %1841 = vmatpush1.msra.mxu0 %v229
    %1842 = vmatprep.subr.mxu0 0.0
    %1843 = vmatpush1.msra.mxu0 %v230
    %1844 = vmatprep.subr.mxu0 0.0
    %1845 = vmatpush1.msra.mxu0 %v231
    %1846 = vmatprep.subr.mxu0 0.0
    %1847 = vmatpush1.msra.mxu0 %v232
    %1848 = vmatprep.subr.mxu0 0.0
    %1849 = vmatpush1.msra.mxu0 %v233
    %1850 = vmatprep.subr.mxu0 0.0
    %1851 = vmatpush1.msra.mxu0 %v234
    %1852 = vmatprep.subr.mxu0 0.0
    %1853 = vmatpush1.msra.mxu0 %v235
    %1854 = vmatprep.subr.mxu0 0.0
    %1855 = vmatpush1.msra.mxu0 %v236
    %1856 = vmatprep.subr.mxu0 0.0
    %1857 = vmatpush1.msra.mxu0 %v237
    %1858 = vmatprep.subr.mxu0 0.0
    %1859 = vmatpush1.msra.mxu0 %v238
    %1860 = vmatprep.subr.mxu0 0.0
    %1861 = vmatpush1.msra.mxu0 %v239
    %1862 = vmatprep.subr.mxu0 0.0
    %1863 = vmatpush1.msra.mxu0 %v240
    %1864 = vmatprep.subr.mxu0 0.0
    %1865 = vmatpush1.msra.mxu0 %v241
    %1866 = vmatprep.subr.mxu0 0.0
    %1867 = vmatpush1.msra.mxu0 %v242
    %1868 = vmatprep.subr.mxu0 0.0
    %1869 = vmatpush1.msra.mxu0 %v243
    %1870 = vmatprep.subr.mxu0 0.0
    %1871 = vmatpush1.msra.mxu0 %v244
    %1872 = vmatprep.subr.mxu0 0.0
    %1873 = vmatpush1.msra.mxu0 %v245
    %1874 = vmatprep.subr.mxu0 0.0
    %1875 = vmatpush1.msra.mxu0 %v246
    %1876 = vmatprep.subr.mxu0 0.0
    %1877 = vmatpush1.msra.mxu0 %v247
    %1878 = vmatprep.subr.mxu0 0.0
    %1879 = vmatpush1.msra.mxu0 %v248
    %1880 = vmatprep.subr.mxu0 0.0
    %1881 = vmatpush1.msra.mxu0 %v249
    %1882 = vmatprep.subr.mxu0 0.0
    %1883 = vmatpush1.msra.mxu0 %v250
    %1884 = vmatprep.subr.mxu0 0.0
    %1885 = vmatpush1.msra.mxu0 %v251
    %1886 = vmatprep.subr.mxu0 0.0
    %1887 = vmatpush1.msra.mxu0 %v252
    %1888 = vmatprep.subr.mxu0 0.0
    %1889 = vmatpush1.msra.mxu0 %v253
    %1890 = vmatprep.subr.mxu0 0.0
    %1891 = vmatpush1.msra.mxu0 %v254
    %1892 = vmatprep.subr.mxu0 0.0
    %1893 = vmatpush1.msra.mxu0 %v255
    %1894 = vmatprep.subr.mxu0 0.0
    %1895 = vmatpush1.msra.mxu0 %v256
    %1896 = vmatprep.subr.mxu0 0.0
    %1897 = vmatpush1.msra.mxu0 %v257
    %1898 = vmatprep.subr.mxu0 0.0
    %1899 = vmatpush1.msra.mxu0 %v258
    %1900 = vmatprep.subr.mxu0 0.0
    %1901 = vmatpush1.msra.mxu0 %v259
    %1902 = vmatprep.subr.mxu0 0.0
    %1903 = vmatpush1.msra.mxu0 %v260
    %1904 = vmatprep.mubr.f32.mxu0 %v1150
    %1905 = vmatmul.mubr.f32.gmra.mrb[0].mxu0 %v1142
    %v1906 = vpop.f32.mrb[0].mxu0
    %v1907 = vadd.f32 %v1837, %v1906
    %v1908 = vpop.f32.mrb[0].mxu0
    %1909 = vdwg.mxu0
    %1910 = vmatprep.subr.mxu0 0.0
    %1911 = vmatpush1.msra.mxu0 %v261
    %1912 = vmatprep.subr.mxu0 0.0
    %1913 = vmatpush1.msra.mxu0 %v262
    %1914 = vmatprep.subr.mxu0 0.0
    %1915 = vmatpush1.msra.mxu0 %v263
    %1916 = vmatprep.subr.mxu0 0.0
    %1917 = vmatpush1.msra.mxu0 %v264
    %1918 = vmatprep.subr.mxu0 0.0
    %1919 = vmatpush1.msra.mxu0 %v265
    %1920 = vmatprep.subr.mxu0 0.0
    %1921 = vmatpush1.msra.mxu0 %v266
    %1922 = vmatprep.subr.mxu0 0.0
    %1923 = vmatpush1.msra.mxu0 %v267
    %1924 = vmatprep.subr.mxu0 0.0
    %1925 = vmatpush1.msra.mxu0 %v268
    %1926 = vmatprep.subr.mxu0 0.0
    %1927 = vmatpush1.msra.mxu0 %v269
    %1928 = vmatprep.subr.mxu0 0.0
    %1929 = vmatpush1.msra.mxu0 %v270
    %1930 = vmatprep.subr.mxu0 0.0
    %1931 = vmatpush1.msra.mxu0 %v271
    %1932 = vmatprep.subr.mxu0 0.0
    %1933 = vmatpush1.msra.mxu0 %v272
    %1934 = vmatprep.subr.mxu0 0.0
    %1935 = vmatpush1.msra.mxu0 %v273
    %1936 = vmatprep.subr.mxu0 0.0
    %1937 = vmatpush1.msra.mxu0 %v274
    %1938 = vmatprep.subr.mxu0 0.0
    %1939 = vmatpush1.msra.mxu0 %v275
    %1940 = vmatprep.subr.mxu0 0.0
    %1941 = vmatpush1.msra.mxu0 %v276
    %1942 = vmatprep.subr.mxu0 0.0
    %1943 = vmatpush1.msra.mxu0 %v277
    %1944 = vmatprep.subr.mxu0 0.0
    %1945 = vmatpush1.msra.mxu0 %v278
    %1946 = vmatprep.subr.mxu0 0.0
    %1947 = vmatpush1.msra.mxu0 %v279
    %1948 = vmatprep.subr.mxu0 0.0
    %1949 = vmatpush1.msra.mxu0 %v280
    %1950 = vmatprep.subr.mxu0 0.0
    %1951 = vmatpush1.msra.mxu0 %v281
    %1952 = vmatprep.subr.mxu0 0.0
    %1953 = vmatpush1.msra.mxu0 %v282
    %1954 = vmatprep.subr.mxu0 0.0
    %1955 = vmatpush1.msra.mxu0 %v283
    %1956 = vmatprep.subr.mxu0 0.0
    %1957 = vmatpush1.msra.mxu0 %v284
    %1958 = vmatprep.subr.mxu0 0.0
    %1959 = vmatpush1.msra.mxu0 %v285
    %1960 = vmatprep.subr.mxu0 0.0
    %1961 = vmatpush1.msra.mxu0 %v286
    %1962 = vmatprep.subr.mxu0 0.0
    %1963 = vmatpush1.msra.mxu0 %v287
    %1964 = vmatprep.subr.mxu0 0.0
    %1965 = vmatpush1.msra.mxu0 %v288
    %1966 = vmatprep.subr.mxu0 0.0
    %1967 = vmatpush1.msra.mxu0 %v289
    %1968 = vmatprep.subr.mxu0 0.0
    %1969 = vmatpush1.msra.mxu0 %v290
    %1970 = vmatprep.subr.mxu0 0.0
    %1971 = vmatpush1.msra.mxu0 %v291
    %1972 = vmatprep.subr.mxu0 0.0
    %1973 = vmatpush1.msra.mxu0 %v292
    %1974 = vmatprep.mubr.f32.mxu0 %v1151
    %1975 = vmatmul.mubr.f32.gmra.mrb[0].mxu0 %v1149
    %v1976 = vpop.f32.mrb[0].mxu0
    %v1977 = vadd.f32 %v1907, %v1976
    %v1978 = vpop.f32.mrb[0].mxu0
    %1979 = vdwg.mxu0
    %1980 = vmatprep.subr.mxu0 0.0
    %1981 = vmatpush1.msra.mxu0 %v293
    %1982 = vmatprep.subr.mxu0 0.0
    %1983 = vmatpush1.msra.mxu0 %v294
    %1984 = vmatprep.subr.mxu0 0.0
    %1985 = vmatpush1.msra.mxu0 %v295
    %1986 = vmatprep.subr.mxu0 0.0
    %1987 = vmatpush1.msra.mxu0 %v296
    %1988 = vmatprep.subr.mxu0 0.0
    %1989 = vmatpush1.msra.mxu0 %v297
    %1990 = vmatprep.subr.mxu0 0.0
    %1991 = vmatpush1.msra.mxu0 %v298
    %1992 = vmatprep.subr.mxu0 0.0
    %1993 = vmatpush1.msra.mxu0 %v299
    %1994 = vmatprep.subr.mxu0 0.0
    %1995 = vmatpush1.msra.mxu0 %v300
    %1996 = vmatprep.subr.mxu0 0.0
    %1997 = vmatpush1.msra.mxu0 %v301
    %1998 = vmatprep.subr.mxu0 0.0
    %1999 = vmatpush1.msra.mxu0 %v302
    %2000 = vmatprep.subr.mxu0 0.0
    %2001 = vmatpush1.msra.mxu0 %v303
    %2002 = vmatprep.subr.mxu0 0.0
    %2003 = vmatpush1.msra.mxu0 %v304
    %2004 = vmatprep.subr.mxu0 0.0
    %2005 = vmatpush1.msra.mxu0 %v305
    %2006 = vmatprep.subr.mxu0 0.0
    %2007 = vmatpush1.msra.mxu0 %v306
    %2008 = vmatprep.subr.mxu0 0.0
    %2009 = vmatpush1.msra.mxu0 %v307
    %2010 = vmatprep.subr.mxu0 0.0
    %2011 = vmatpush1.msra.mxu0 %v308
    %2012 = vmatprep.subr.mxu0 0.0
    %2013 = vmatpush1.msra.mxu0 %v309
    %2014 = vmatprep.subr.mxu0 0.0
    %2015 = vmatpush1.msra.mxu0 %v310
    %2016 = vmatprep.subr.mxu0 0.0
    %2017 = vmatpush1.msra.mxu0 %v311
    %2018 = vmatprep.subr.mxu0 0.0
    %2019 = vmatpush1.msra.mxu0 %v312
    %2020 = vmatprep.subr.mxu0 0.0
    %2021 = vmatpush1.msra.mxu0 %v313
    %2022 = vmatprep.subr.mxu0 0.0
    %2023 = vmatpush1.msra.mxu0 %v314
    %2024 = vmatprep.subr.mxu0 0.0
    %2025 = vmatpush1.msra.mxu0 %v315
    %2026 = vmatprep.subr.mxu0 0.0
    %2027 = vmatpush1.msra.mxu0 %v316
    %2028 = vmatprep.subr.mxu0 0.0
    %2029 = vmatpush1.msra.mxu0 %v317
    %2030 = vmatprep.subr.mxu0 0.0
    %2031 = vmatpush1.msra.mxu0 %v318
    %2032 = vmatprep.subr.mxu0 0.0
    %2033 = vmatpush1.msra.mxu0 %v319
    %2034 = vmatprep.subr.mxu0 0.0
    %2035 = vmatpush1.msra.mxu0 %v320
    %2036 = vmatprep.subr.mxu0 0.0
    %2037 = vmatpush1.msra.mxu0 %v321
    %2038 = vmatprep.subr.mxu0 0.0
    %2039 = vmatpush1.msra.mxu0 %v322
    %2040 = vmatprep.subr.mxu0 0.0
    %2041 = vmatpush1.msra.mxu0 %v323
    %2042 = vmatprep.subr.mxu0 0.0
    %2043 = vmatpush1.msra.mxu0 %v324
    %2044 = vmatprep.mubr.f32.mxu0 %v1167
    %2045 = vmatmul.mubr.f32.gmra.mrb[0].mxu0 %v1159
    %v2046 = vpop.f32.mrb[0].mxu0
    %v2047 = vadd.f32 %v1977, %v2046
    %v2048 = vpop.f32.mrb[0].mxu0
    %2049 = vdwg.mxu0
    %2050 = vmatprep.subr.mxu0 0.0
    %2051 = vmatpush1.msra.mxu0 %v325
    %2052 = vmatprep.subr.mxu0 0.0
    %2053 = vmatpush1.msra.mxu0 %v326
    %2054 = vmatprep.subr.mxu0 0.0
    %2055 = vmatpush1.msra.mxu0 %v327
    %2056 = vmatprep.subr.mxu0 0.0
    %2057 = vmatpush1.msra.mxu0 %v328
    %2058 = vmatprep.subr.mxu0 0.0
    %2059 = vmatpush1.msra.mxu0 %v329
    %2060 = vmatprep.subr.mxu0 0.0
    %2061 = vmatpush1.msra.mxu0 %v330
    %2062 = vmatprep.subr.mxu0 0.0
    %2063 = vmatpush1.msra.mxu0 %v331
    %2064 = vmatprep.subr.mxu0 0.0
    %2065 = vmatpush1.msra.mxu0 %v332
    %2066 = vmatprep.subr.mxu0 0.0
    %2067 = vmatpush1.msra.mxu0 %v333
    %2068 = vmatprep.subr.mxu0 0.0
    %2069 = vmatpush1.msra.mxu0 %v334
    %2070 = vmatprep.subr.mxu0 0.0
    %2071 = vmatpush1.msra.mxu0 %v335
    %2072 = vmatprep.subr.mxu0 0.0
    %2073 = vmatpush1.msra.mxu0 %v336
    %2074 = vmatprep.subr.mxu0 0.0
    %2075 = vmatpush1.msra.mxu0 %v337
    %2076 = vmatprep.subr.mxu0 0.0
    %2077 = vmatpush1.msra.mxu0 %v338
    %2078 = vmatprep.subr.mxu0 0.0
    %2079 = vmatpush1.msra.mxu0 %v339
    %2080 = vmatprep.subr.mxu0 0.0
    %2081 = vmatpush1.msra.mxu0 %v340
    %2082 = vmatprep.subr.mxu0 0.0
    %2083 = vmatpush1.msra.mxu0 %v341
    %2084 = vmatprep.subr.mxu0 0.0
    %2085 = vmatpush1.msra.mxu0 %v342
    %2086 = vmatprep.subr.mxu0 0.0
    %2087 = vmatpush1.msra.mxu0 %v343
    %2088 = vmatprep.subr.mxu0 0.0
    %2089 = vmatpush1.msra.mxu0 %v344
    %2090 = vmatprep.subr.mxu0 0.0
    %2091 = vmatpush1.msra.mxu0 %v345
    %2092 = vmatprep.subr.mxu0 0.0
    %2093 = vmatpush1.msra.mxu0 %v346
    %2094 = vmatprep.subr.mxu0 0.0
    %2095 = vmatpush1.msra.mxu0 %v347
    %2096 = vmatprep.subr.mxu0 0.0
    %2097 = vmatpush1.msra.mxu0 %v348
    %2098 = vmatprep.subr.mxu0 0.0
    %2099 = vmatpush1.msra.mxu0 %v349
    %2100 = vmatprep.subr.mxu0 0.0
    %2101 = vmatpush1.msra.mxu0 %v350
    %2102 = vmatprep.subr.mxu0 0.0
    %2103 = vmatpush1.msra.mxu0 %v351
    %2104 = vmatprep.subr.mxu0 0.0
    %2105 = vmatpush1.msra.mxu0 %v352
    %2106 = vmatprep.subr.mxu0 0.0
    %2107 = vmatpush1.msra.mxu0 %v353
    %2108 = vmatprep.subr.mxu0 0.0
    %2109 = vmatpush1.msra.mxu0 %v354
    %2110 = vmatprep.subr.mxu0 0.0
    %2111 = vmatpush1.msra.mxu0 %v355
    %2112 = vmatprep.subr.mxu0 0.0
    %2113 = vmatpush1.msra.mxu0 %v356
    %2114 = vmatprep.mubr.f32.mxu0 %v1168
    %2115 = vmatmul.mubr.f32.gmra.mrb[0].mxu0 %v1166
    %v2116 = vpop.f32.mrb[0].mxu0
    %v2117 = vadd.f32 %v2047, %v2116
    %v2118 = vpop.f32.mrb[0].mxu0
    %2119 = vdwg.mxu0
    %2120 = vmatprep.subr.mxu0 0.0
    %2121 = vmatpush1.msra.mxu0 %v357
    %2122 = vmatprep.subr.mxu0 0.0
    %2123 = vmatpush1.msra.mxu0 %v358
    %2124 = vmatprep.subr.mxu0 0.0
    %2125 = vmatpush1.msra.mxu0 %v359
    %2126 = vmatprep.subr.mxu0 0.0
    %2127 = vmatpush1.msra.mxu0 %v360
    %2128 = vmatprep.subr.mxu0 0.0
    %2129 = vmatpush1.msra.mxu0 %v361
    %2130 = vmatprep.subr.mxu0 0.0
    %2131 = vmatpush1.msra.mxu0 %v362
    %2132 = vmatprep.subr.mxu0 0.0
    %2133 = vmatpush1.msra.mxu0 %v363
    %2134 = vmatprep.subr.mxu0 0.0
    %2135 = vmatpush1.msra.mxu0 %v364
    %2136 = vmatprep.subr.mxu0 0.0
    %2137 = vmatpush1.msra.mxu0 %v365
    %2138 = vmatprep.subr.mxu0 0.0
    %2139 = vmatpush1.msra.mxu0 %v366
    %2140 = vmatprep.subr.mxu0 0.0
    %2141 = vmatpush1.msra.mxu0 %v367
    %2142 = vmatprep.subr.mxu0 0.0
    %2143 = vmatpush1.msra.mxu0 %v368
    %2144 = vmatprep.subr.mxu0 0.0
    %2145 = vmatpush1.msra.mxu0 %v369
    %2146 = vmatprep.subr.mxu0 0.0
    %2147 = vmatpush1.msra.mxu0 %v370
    %2148 = vmatprep.subr.mxu0 0.0
    %2149 = vmatpush1.msra.mxu0 %v371
    %2150 = vmatprep.subr.mxu0 0.0
    %2151 = vmatpush1.msra.mxu0 %v372
    %2152 = vmatprep.subr.mxu0 0.0
    %2153 = vmatpush1.msra.mxu0 %v373
    %2154 = vmatprep.subr.mxu0 0.0
    %2155 = vmatpush1.msra.mxu0 %v374
    %2156 = vmatprep.subr.mxu0 0.0
    %2157 = vmatpush1.msra.mxu0 %v375
    %2158 = vmatprep.subr.mxu0 0.0
    %2159 = vmatpush1.msra.mxu0 %v376
    %2160 = vmatprep.subr.mxu0 0.0
    %2161 = vmatpush1.msra.mxu0 %v377
    %2162 = vmatprep.subr.mxu0 0.0
    %2163 = vmatpush1.msra.mxu0 %v378
    %2164 = vmatprep.subr.mxu0 0.0
    %2165 = vmatpush1.msra.mxu0 %v379
    %2166 = vmatprep.subr.mxu0 0.0
    %2167 = vmatpush1.msra.mxu0 %v380
    %2168 = vmatprep.subr.mxu0 0.0
    %2169 = vmatpush1.msra.mxu0 %v381
    %2170 = vmatprep.subr.mxu0 0.0
    %2171 = vmatpush1.msra.mxu0 %v382
    %2172 = vmatprep.subr.mxu0 0.0
    %2173 = vmatpush1.msra.mxu0 %v383
    %2174 = vmatprep.subr.mxu0 0.0
    %2175 = vmatpush1.msra.mxu0 %v384
    %2176 = vmatprep.subr.mxu0 0.0
    %2177 = vmatpush1.msra.mxu0 %v385
    %2178 = vmatprep.subr.mxu0 0.0
    %2179 = vmatpush1.msra.mxu0 %v386
    %2180 = vmatprep.subr.mxu0 0.0
    %2181 = vmatpush1.msra.mxu0 %v387
    %2182 = vmatprep.subr.mxu0 0.0
    %2183 = vmatpush1.msra.mxu0 %v388
    %2184 = vmatprep.mubr.f32.mxu0 %v1184
    %2185 = vmatmul.mubr.f32.gmra.mrb[0].mxu0 %v1176
    %v2186 = vpop.f32.mrb[0].mxu0
    %v2187 = vadd.f32 %v2117, %v2186
    %v2188 = vpop.f32.mrb[0].mxu0
    %2189 = vdwg.mxu0
    %2190 = vmatprep.subr.mxu0 0.0
    %2191 = vmatpush1.msra.mxu0 %v389
    %2192 = vmatprep.subr.mxu0 0.0
    %2193 = vmatpush1.msra.mxu0 %v390
    %2194 = vmatprep.subr.mxu0 0.0
    %2195 = vmatpush1.msra.mxu0 %v391
    %2196 = vmatprep.subr.mxu0 0.0
    %2197 = vmatpush1.msra.mxu0 %v392
    %2198 = vmatprep.subr.mxu0 0.0
    %2199 = vmatpush1.msra.mxu0 %v393
    %2200 = vmatprep.subr.mxu0 0.0
    %2201 = vmatpush1.msra.mxu0 %v394
    %2202 = vmatprep.subr.mxu0 0.0
    %2203 = vmatpush1.msra.mxu0 %v395
    %2204 = vmatprep.subr.mxu0 0.0
    %2205 = vmatpush1.msra.mxu0 %v396
    %2206 = vmatprep.subr.mxu0 0.0
    %2207 = vmatpush1.msra.mxu0 %v397
    %2208 = vmatprep.subr.mxu0 0.0
    %2209 = vmatpush1.msra.mxu0 %v398
    %2210 = vmatprep.subr.mxu0 0.0
    %2211 = vmatpush1.msra.mxu0 %v399
    %2212 = vmatprep.subr.mxu0 0.0
    %2213 = vmatpush1.msra.mxu0 %v400
    %2214 = vmatprep.subr.mxu0 0.0
    %2215 = vmatpush1.msra.mxu0 %v401
    %2216 = vmatprep.subr.mxu0 0.0
    %2217 = vmatpush1.msra.mxu0 %v402
    %2218 = vmatprep.subr.mxu0 0.0
    %2219 = vmatpush1.msra.mxu0 %v403
    %2220 = vmatprep.subr.mxu0 0.0
    %2221 = vmatpush1.msra.mxu0 %v404
    %2222 = vmatprep.subr.mxu0 0.0
    %2223 = vmatpush1.msra.mxu0 %v405
    %2224 = vmatprep.subr.mxu0 0.0
    %2225 = vmatpush1.msra.mxu0 %v406
    %2226 = vmatprep.subr.mxu0 0.0
    %2227 = vmatpush1.msra.mxu0 %v407
    %2228 = vmatprep.subr.mxu0 0.0
    %2229 = vmatpush1.msra.mxu0 %v408
    %2230 = vmatprep.subr.mxu0 0.0
    %2231 = vmatpush1.msra.mxu0 %v409
    %2232 = vmatprep.subr.mxu0 0.0
    %2233 = vmatpush1.msra.mxu0 %v410
    %2234 = vmatprep.subr.mxu0 0.0
    %2235 = vmatpush1.msra.mxu0 %v411
    %2236 = vmatprep.subr.mxu0 0.0
    %2237 = vmatpush1.msra.mxu0 %v412
    %2238 = vmatprep.subr.mxu0 0.0
    %2239 = vmatpush1.msra.mxu0 %v413
    %2240 = vmatprep.subr.mxu0 0.0
    %2241 = vmatpush1.msra.mxu0 %v414
    %2242 = vmatprep.subr.mxu0 0.0
    %2243 = vmatpush1.msra.mxu0 %v415
    %2244 = vmatprep.subr.mxu0 0.0
    %2245 = vmatpush1.msra.mxu0 %v416
    %2246 = vmatprep.subr.mxu0 0.0
    %2247 = vmatpush1.msra.mxu0 %v417
    %2248 = vmatprep.subr.mxu0 0.0
    %2249 = vmatpush1.msra.mxu0 %v418
    %2250 = vmatprep.subr.mxu0 0.0
    %2251 = vmatpush1.msra.mxu0 %v419
    %2252 = vmatprep.subr.mxu0 0.0
    %2253 = vmatpush1.msra.mxu0 %v420
    %2254 = vmatprep.mubr.f32.mxu0 %v1185
    %2255 = vmatmul.mubr.f32.gmra.mrb[0].mxu0 %v1183
    %v2256 = vpop.f32.mrb[0].mxu0
    %v2257 = vadd.f32 %v2187, %v2256
    %v2258 = vpop.f32.mrb[0].mxu0
    %2259 = vdwg.mxu0
    %2260 = vmatprep.subr.mxu0 0.0
    %2261 = vmatpush1.msra.mxu0 %v421
    %2262 = vmatprep.subr.mxu0 0.0
    %2263 = vmatpush1.msra.mxu0 %v422
    %2264 = vmatprep.subr.mxu0 0.0
    %2265 = vmatpush1.msra.mxu0 %v423
    %2266 = vmatprep.subr.mxu0 0.0
    %2267 = vmatpush1.msra.mxu0 %v424
    %2268 = vmatprep.subr.mxu0 0.0
    %2269 = vmatpush1.msra.mxu0 %v425
    %2270 = vmatprep.subr.mxu0 0.0
    %2271 = vmatpush1.msra.mxu0 %v426
    %2272 = vmatprep.subr.mxu0 0.0
    %2273 = vmatpush1.msra.mxu0 %v427
    %2274 = vmatprep.subr.mxu0 0.0
    %2275 = vmatpush1.msra.mxu0 %v428
    %2276 = vmatprep.subr.mxu0 0.0
    %2277 = vmatpush1.msra.mxu0 %v429
    %2278 = vmatprep.subr.mxu0 0.0
    %2279 = vmatpush1.msra.mxu0 %v430
    %2280 = vmatprep.subr.mxu0 0.0
    %2281 = vmatpush1.msra.mxu0 %v431
    %2282 = vmatprep.subr.mxu0 0.0
    %2283 = vmatpush1.msra.mxu0 %v432
    %2284 = vmatprep.subr.mxu0 0.0
    %2285 = vmatpush1.msra.mxu0 %v433
    %2286 = vmatprep.subr.mxu0 0.0
    %2287 = vmatpush1.msra.mxu0 %v434
    %2288 = vmatprep.subr.mxu0 0.0
    %2289 = vmatpush1.msra.mxu0 %v435
    %2290 = vmatprep.subr.mxu0 0.0
    %2291 = vmatpush1.msra.mxu0 %v436
    %2292 = vmatprep.subr.mxu0 0.0
    %2293 = vmatpush1.msra.mxu0 %v437
    %2294 = vmatprep.subr.mxu0 0.0
    %2295 = vmatpush1.msra.mxu0 %v438
    %2296 = vmatprep.subr.mxu0 0.0
    %2297 = vmatpush1.msra.mxu0 %v439
    %2298 = vmatprep.subr.mxu0 0.0
    %2299 = vmatpush1.msra.mxu0 %v440
    %2300 = vmatprep.subr.mxu0 0.0
    %2301 = vmatpush1.msra.mxu0 %v441
    %2302 = vmatprep.subr.mxu0 0.0
    %2303 = vmatpush1.msra.mxu0 %v442
    %2304 = vmatprep.subr.mxu0 0.0
    %2305 = vmatpush1.msra.mxu0 %v443
    %2306 = vmatprep.subr.mxu0 0.0
    %2307 = vmatpush1.msra.mxu0 %v444
    %2308 = vmatprep.subr.mxu0 0.0
    %2309 = vmatpush1.msra.mxu0 %v445
    %2310 = vmatprep.subr.mxu0 0.0
    %2311 = vmatpush1.msra.mxu0 %v446
    %2312 = vmatprep.subr.mxu0 0.0
    %2313 = vmatpush1.msra.mxu0 %v447
    %2314 = vmatprep.subr.mxu0 0.0
    %2315 = vmatpush1.msra.mxu0 %v448
    %2316 = vmatprep.subr.mxu0 0.0
    %2317 = vmatpush1.msra.mxu0 %v449
    %2318 = vmatprep.subr.mxu0 0.0
    %2319 = vmatpush1.msra.mxu0 %v450
    %2320 = vmatprep.subr.mxu0 0.0
    %2321 = vmatpush1.msra.mxu0 %v451
    %2322 = vmatprep.subr.mxu0 0.0
    %2323 = vmatpush1.msra.mxu0 %v452
    %2324 = vmatprep.mubr.f32.mxu0 %v1201
    %2325 = vmatmul.mubr.f32.gmra.mrb[0].mxu0 %v1193
    %v2326 = vpop.f32.mrb[0].mxu0
    %v2327 = vadd.f32 %v2257, %v2326
    %v2328 = vpop.f32.mrb[0].mxu0
    %2329 = vdwg.mxu0
    %2330 = vmatprep.subr.mxu0 0.0
    %2331 = vmatpush1.msra.mxu0 %v453
    %2332 = vmatprep.subr.mxu0 0.0
    %2333 = vmatpush1.msra.mxu0 %v454
    %2334 = vmatprep.subr.mxu0 0.0
    %2335 = vmatpush1.msra.mxu0 %v455
    %2336 = vmatprep.subr.mxu0 0.0
    %2337 = vmatpush1.msra.mxu0 %v456
    %2338 = vmatprep.subr.mxu0 0.0
    %2339 = vmatpush1.msra.mxu0 %v457
    %2340 = vmatprep.subr.mxu0 0.0
    %2341 = vmatpush1.msra.mxu0 %v458
    %2342 = vmatprep.subr.mxu0 0.0
    %2343 = vmatpush1.msra.mxu0 %v459
    %2344 = vmatprep.subr.mxu0 0.0
    %2345 = vmatpush1.msra.mxu0 %v460
    %2346 = vmatprep.subr.mxu0 0.0
    %2347 = vmatpush1.msra.mxu0 %v461
    %2348 = vmatprep.subr.mxu0 0.0
    %2349 = vmatpush1.msra.mxu0 %v462
    %2350 = vmatprep.subr.mxu0 0.0
    %2351 = vmatpush1.msra.mxu0 %v463
    %2352 = vmatprep.subr.mxu0 0.0
    %2353 = vmatpush1.msra.mxu0 %v464
    %2354 = vmatprep.subr.mxu0 0.0
    %2355 = vmatpush1.msra.mxu0 %v465
    %2356 = vmatprep.subr.mxu0 0.0
    %2357 = vmatpush1.msra.mxu0 %v466
    %2358 = vmatprep.subr.mxu0 0.0
    %2359 = vmatpush1.msra.mxu0 %v467
    %2360 = vmatprep.subr.mxu0 0.0
    %2361 = vmatpush1.msra.mxu0 %v468
    %2362 = vmatprep.subr.mxu0 0.0
    %2363 = vmatpush1.msra.mxu0 %v469
    %2364 = vmatprep.subr.mxu0 0.0
    %2365 = vmatpush1.msra.mxu0 %v470
    %2366 = vmatprep.subr.mxu0 0.0
    %2367 = vmatpush1.msra.mxu0 %v471
    %2368 = vmatprep.subr.mxu0 0.0
    %2369 = vmatpush1.msra.mxu0 %v472
    %2370 = vmatprep.subr.mxu0 0.0
    %2371 = vmatpush1.msra.mxu0 %v473
    %2372 = vmatprep.subr.mxu0 0.0
    %2373 = vmatpush1.msra.mxu0 %v474
    %2374 = vmatprep.subr.mxu0 0.0
    %2375 = vmatpush1.msra.mxu0 %v475
    %2376 = vmatprep.subr.mxu0 0.0
    %2377 = vmatpush1.msra.mxu0 %v476
    %2378 = vmatprep.subr.mxu0 0.0
    %2379 = vmatpush1.msra.mxu0 %v477
    %2380 = vmatprep.subr.mxu0 0.0
    %2381 = vmatpush1.msra.mxu0 %v478
    %2382 = vmatprep.subr.mxu0 0.0
    %2383 = vmatpush1.msra.mxu0 %v479
    %2384 = vmatprep.subr.mxu0 0.0
    %2385 = vmatpush1.msra.mxu0 %v480
    %2386 = vmatprep.subr.mxu0 0.0
    %2387 = vmatpush1.msra.mxu0 %v481
    %2388 = vmatprep.subr.mxu0 0.0
    %2389 = vmatpush1.msra.mxu0 %v482
    %2390 = vmatprep.subr.mxu0 0.0
    %2391 = vmatpush1.msra.mxu0 %v483
    %2392 = vmatprep.subr.mxu0 0.0
    %2393 = vmatpush1.msra.mxu0 %v484
    %2394 = vmatprep.mubr.f32.mxu0 %v1202
    %2395 = vmatmul.mubr.f32.gmra.mrb[0].mxu0 %v1200
    %v2396 = vpop.f32.mrb[0].mxu0
    %v2397 = vadd.f32 %v2327, %v2396
    %v2398 = vpop.f32.mrb[0].mxu0
    %2399 = vdwg.mxu0
    %2400 = vmatprep.subr.mxu0 0.0
    %2401 = vmatpush1.msra.mxu0 %v485
    %2402 = vmatprep.subr.mxu0 0.0
    %2403 = vmatpush1.msra.mxu0 %v486
    %2404 = vmatprep.subr.mxu0 0.0
    %2405 = vmatpush1.msra.mxu0 %v487
    %2406 = vmatprep.subr.mxu0 0.0
    %2407 = vmatpush1.msra.mxu0 %v488
    %2408 = vmatprep.subr.mxu0 0.0
    %2409 = vmatpush1.msra.mxu0 %v489
    %2410 = vmatprep.subr.mxu0 0.0
    %2411 = vmatpush1.msra.mxu0 %v490
    %2412 = vmatprep.subr.mxu0 0.0
    %2413 = vmatpush1.msra.mxu0 %v491
    %2414 = vmatprep.subr.mxu0 0.0
    %2415 = vmatpush1.msra.mxu0 %v492
    %2416 = vmatprep.subr.mxu0 0.0
    %2417 = vmatpush1.msra.mxu0 %v493
    %2418 = vmatprep.subr.mxu0 0.0
    %2419 = vmatpush1.msra.mxu0 %v494
    %2420 = vmatprep.subr.mxu0 0.0
    %2421 = vmatpush1.msra.mxu0 %v495
    %2422 = vmatprep.subr.mxu0 0.0
    %2423 = vmatpush1.msra.mxu0 %v496
    %2424 = vmatprep.subr.mxu0 0.0
    %2425 = vmatpush1.msra.mxu0 %v497
    %2426 = vmatprep.subr.mxu0 0.0
    %2427 = vmatpush1.msra.mxu0 %v498
    %2428 = vmatprep.subr.mxu0 0.0
    %2429 = vmatpush1.msra.mxu0 %v499
    %2430 = vmatprep.subr.mxu0 0.0
    %2431 = vmatpush1.msra.mxu0 %v500
    %2432 = vmatprep.subr.mxu0 0.0
    %2433 = vmatpush1.msra.mxu0 %v501
    %2434 = vmatprep.subr.mxu0 0.0
    %2435 = vmatpush1.msra.mxu0 %v502
    %2436 = vmatprep.subr.mxu0 0.0
    %2437 = vmatpush1.msra.mxu0 %v503
    %2438 = vmatprep.subr.mxu0 0.0
    %2439 = vmatpush1.msra.mxu0 %v504
    %2440 = vmatprep.subr.mxu0 0.0
    %2441 = vmatpush1.msra.mxu0 %v505
    %2442 = vmatprep.subr.mxu0 0.0
    %2443 = vmatpush1.msra.mxu0 %v506
    %2444 = vmatprep.subr.mxu0 0.0
    %2445 = vmatpush1.msra.mxu0 %v507
    %2446 = vmatprep.subr.mxu0 0.0
    %2447 = vmatpush1.msra.mxu0 %v508
    %2448 = vmatprep.subr.mxu0 0.0
    %2449 = vmatpush1.msra.mxu0 %v509
    %2450 = vmatprep.subr.mxu0 0.0
    %2451 = vmatpush1.msra.mxu0 %v510
    %2452 = vmatprep.subr.mxu0 0.0
    %2453 = vmatpush1.msra.mxu0 %v511
    %2454 = vmatprep.subr.mxu0 0.0
    %2455 = vmatpush1.msra.mxu0 %v512
    %2456 = vmatprep.subr.mxu0 0.0
    %2457 = vmatpush1.msra.mxu0 %v513
    %2458 = vmatprep.subr.mxu0 0.0
    %2459 = vmatpush1.msra.mxu0 %v514
    %2460 = vmatprep.subr.mxu0 0.0
    %2461 = vmatpush1.msra.mxu0 %v515
    %2462 = vmatprep.subr.mxu0 0.0
    %2463 = vmatpush1.msra.mxu0 %v516
    %2464 = vmatprep.mubr.f32.mxu0 %v1218
    %2465 = vmatmul.mubr.f32.gmra.mrb[0].mxu0 %v1210
    %v2466 = vpop.f32.mrb[0].mxu0
    %v2467 = vadd.f32 %v2397, %v2466
    %v2468 = vpop.f32.mrb[0].mxu0
    %2469 = vdwg.mxu0
    %2470 = vmatprep.subr.mxu0 0.0
    %2471 = vmatpush1.msra.mxu0 %v517
    %2472 = vmatprep.subr.mxu0 0.0
    %2473 = vmatpush1.msra.mxu0 %v518
    %2474 = vmatprep.subr.mxu0 0.0
    %2475 = vmatpush1.msra.mxu0 %v519
    %2476 = vmatprep.subr.mxu0 0.0
    %2477 = vmatpush1.msra.mxu0 %v520
    %2478 = vmatprep.subr.mxu0 0.0
    %2479 = vmatpush1.msra.mxu0 %v521
    %2480 = vmatprep.subr.mxu0 0.0
    %2481 = vmatpush1.msra.mxu0 %v522
    %2482 = vmatprep.subr.mxu0 0.0
    %2483 = vmatpush1.msra.mxu0 %v523
    %2484 = vmatprep.subr.mxu0 0.0
    %2485 = vmatpush1.msra.mxu0 %v524
    %2486 = vmatprep.subr.mxu0 0.0
    %2487 = vmatpush1.msra.mxu0 %v525
    %2488 = vmatprep.subr.mxu0 0.0
    %2489 = vmatpush1.msra.mxu0 %v526
    %2490 = vmatprep.subr.mxu0 0.0
    %2491 = vmatpush1.msra.mxu0 %v527
    %2492 = vmatprep.subr.mxu0 0.0
    %2493 = vmatpush1.msra.mxu0 %v528
    %2494 = vmatprep.subr.mxu0 0.0
    %2495 = vmatpush1.msra.mxu0 %v529
    %2496 = vmatprep.subr.mxu0 0.0
    %2497 = vmatpush1.msra.mxu0 %v530
    %2498 = vmatprep.subr.mxu0 0.0
    %2499 = vmatpush1.msra.mxu0 %v531
    %2500 = vmatprep.subr.mxu0 0.0
    %2501 = vmatpush1.msra.mxu0 %v532
    %2502 = vmatprep.subr.mxu0 0.0
    %2503 = vmatpush1.msra.mxu0 %v533
    %2504 = vmatprep.subr.mxu0 0.0
    %2505 = vmatpush1.msra.mxu0 %v534
    %2506 = vmatprep.subr.mxu0 0.0
    %2507 = vmatpush1.msra.mxu0 %v535
    %2508 = vmatprep.subr.mxu0 0.0
    %2509 = vmatpush1.msra.mxu0 %v536
    %2510 = vmatprep.subr.mxu0 0.0
    %2511 = vmatpush1.msra.mxu0 %v537
    %2512 = vmatprep.subr.mxu0 0.0
    %2513 = vmatpush1.msra.mxu0 %v538
    %2514 = vmatprep.subr.mxu0 0.0
    %2515 = vmatpush1.msra.mxu0 %v539
    %2516 = vmatprep.subr.mxu0 0.0
    %2517 = vmatpush1.msra.mxu0 %v540
    %2518 = vmatprep.subr.mxu0 0.0
    %2519 = vmatpush1.msra.mxu0 %v541
    %2520 = vmatprep.subr.mxu0 0.0
    %2521 = vmatpush1.msra.mxu0 %v542
    %2522 = vmatprep.subr.mxu0 0.0
    %2523 = vmatpush1.msra.mxu0 %v543
    %2524 = vmatprep.subr.mxu0 0.0
    %2525 = vmatpush1.msra.mxu0 %v544
    %2526 = vmatprep.subr.mxu0 0.0
    %2527 = vmatpush1.msra.mxu0 %v545
    %2528 = vmatprep.subr.mxu0 0.0
    %2529 = vmatpush1.msra.mxu0 %v546
    %2530 = vmatprep.subr.mxu0 0.0
    %2531 = vmatpush1.msra.mxu0 %v547
    %2532 = vmatprep.subr.mxu0 0.0
    %2533 = vmatpush1.msra.mxu0 %v548
    %2534 = vmatprep.mubr.f32.mxu0 %v1219
    %2535 = vmatmul.mubr.f32.gmra.mrb[0].mxu0 %v1217
    %v2536 = vpop.f32.mrb[0].mxu0
    %v2537 = vadd.f32 %v2467, %v2536
    %v2538 = vpop.f32.mrb[0].mxu0
    %2539 = vdwg.mxu0
    %2540 = vmatprep.subr.mxu0 0.0
    %2541 = vmatpush1.msra.mxu0 %v549
    %2542 = vmatprep.subr.mxu0 0.0
    %2543 = vmatpush1.msra.mxu0 %v550
    %2544 = vmatprep.subr.mxu0 0.0
    %2545 = vmatpush1.msra.mxu0 %v551
    %2546 = vmatprep.subr.mxu0 0.0
    %2547 = vmatpush1.msra.mxu0 %v552
    %2548 = vmatprep.subr.mxu0 0.0
    %2549 = vmatpush1.msra.mxu0 %v553
    %2550 = vmatprep.subr.mxu0 0.0
    %2551 = vmatpush1.msra.mxu0 %v554
    %2552 = vmatprep.subr.mxu0 0.0
    %2553 = vmatpush1.msra.mxu0 %v555
    %2554 = vmatprep.subr.mxu0 0.0
    %2555 = vmatpush1.msra.mxu0 %v556
    %2556 = vmatprep.subr.mxu0 0.0
    %2557 = vmatpush1.msra.mxu0 %v557
    %2558 = vmatprep.subr.mxu0 0.0
    %2559 = vmatpush1.msra.mxu0 %v558
    %2560 = vmatprep.subr.mxu0 0.0
    %2561 = vmatpush1.msra.mxu0 %v559
    %2562 = vmatprep.subr.mxu0 0.0
    %2563 = vmatpush1.msra.mxu0 %v560
    %2564 = vmatprep.subr.mxu0 0.0
    %2565 = vmatpush1.msra.mxu0 %v561
    %2566 = vmatprep.subr.mxu0 0.0
    %2567 = vmatpush1.msra.mxu0 %v562
    %2568 = vmatprep.subr.mxu0 0.0
    %2569 = vmatpush1.msra.mxu0 %v563
    %2570 = vmatprep.subr.mxu0 0.0
    %2571 = vmatpush1.msra.mxu0 %v564
    %2572 = vmatprep.subr.mxu0 0.0
    %2573 = vmatpush1.msra.mxu0 %v565
    %2574 = vmatprep.subr.mxu0 0.0
    %2575 = vmatpush1.msra.mxu0 %v566
    %2576 = vmatprep.subr.mxu0 0.0
    %2577 = vmatpush1.msra.mxu0 %v567
    %2578 = vmatprep.subr.mxu0 0.0
    %2579 = vmatpush1.msra.mxu0 %v568
    %2580 = vmatprep.subr.mxu0 0.0
    %2581 = vmatpush1.msra.mxu0 %v569
    %2582 = vmatprep.subr.mxu0 0.0
    %2583 = vmatpush1.msra.mxu0 %v570
    %2584 = vmatprep.subr.mxu0 0.0
    %2585 = vmatpush1.msra.mxu0 %v571
    %2586 = vmatprep.subr.mxu0 0.0
    %2587 = vmatpush1.msra.mxu0 %v572
    %2588 = vmatprep.subr.mxu0 0.0
    %2589 = vmatpush1.msra.mxu0 %v573
    %2590 = vmatprep.subr.mxu0 0.0
    %2591 = vmatpush1.msra.mxu0 %v574
    %2592 = vmatprep.subr.mxu0 0.0
    %2593 = vmatpush1.msra.mxu0 %v575
    %2594 = vmatprep.subr.mxu0 0.0
    %2595 = vmatpush1.msra.mxu0 %v576
    %2596 = vmatprep.subr.mxu0 0.0
    %2597 = vmatpush1.msra.mxu0 %v577
    %2598 = vmatprep.subr.mxu0 0.0
    %2599 = vmatpush1.msra.mxu0 %v578
    %2600 = vmatprep.subr.mxu0 0.0
    %2601 = vmatpush1.msra.mxu0 %v579
    %2602 = vmatprep.subr.mxu0 0.0
    %2603 = vmatpush1.msra.mxu0 %v580
    %2604 = vmatprep.mubr.f32.mxu0 %v1235
    %2605 = vmatmul.mubr.f32.gmra.mrb[0].mxu0 %v1227
    %v2606 = vpop.f32.mrb[0].mxu0
    %v2607 = vadd.f32 %v2537, %v2606
    %v2608 = vpop.f32.mrb[0].mxu0
    %2609 = vdwg.mxu0
    %2610 = vmatprep.subr.mxu0 0.0
    %2611 = vmatpush1.msra.mxu0 %v581
    %2612 = vmatprep.subr.mxu0 0.0
    %2613 = vmatpush1.msra.mxu0 %v582
    %2614 = vmatprep.subr.mxu0 0.0
    %2615 = vmatpush1.msra.mxu0 %v583
    %2616 = vmatprep.subr.mxu0 0.0
    %2617 = vmatpush1.msra.mxu0 %v584
    %2618 = vmatprep.subr.mxu0 0.0
    %2619 = vmatpush1.msra.mxu0 %v585
    %2620 = vmatprep.subr.mxu0 0.0
    %2621 = vmatpush1.msra.mxu0 %v586
    %2622 = vmatprep.subr.mxu0 0.0
    %2623 = vmatpush1.msra.mxu0 %v587
    %2624 = vmatprep.subr.mxu0 0.0
    %2625 = vmatpush1.msra.mxu0 %v588
    %2626 = vmatprep.subr.mxu0 0.0
    %2627 = vmatpush1.msra.mxu0 %v589
    %2628 = vmatprep.subr.mxu0 0.0
    %2629 = vmatpush1.msra.mxu0 %v590
    %2630 = vmatprep.subr.mxu0 0.0
    %2631 = vmatpush1.msra.mxu0 %v591
    %2632 = vmatprep.subr.mxu0 0.0
    %2633 = vmatpush1.msra.mxu0 %v592
    %2634 = vmatprep.subr.mxu0 0.0
    %2635 = vmatpush1.msra.mxu0 %v593
    %2636 = vmatprep.subr.mxu0 0.0
    %2637 = vmatpush1.msra.mxu0 %v594
    %2638 = vmatprep.subr.mxu0 0.0
    %2639 = vmatpush1.msra.mxu0 %v595
    %2640 = vmatprep.subr.mxu0 0.0
    %2641 = vmatpush1.msra.mxu0 %v596
    %2642 = vmatprep.subr.mxu0 0.0
    %2643 = vmatpush1.msra.mxu0 %v597
    %2644 = vmatprep.subr.mxu0 0.0
    %2645 = vmatpush1.msra.mxu0 %v598
    %2646 = vmatprep.subr.mxu0 0.0
    %2647 = vmatpush1.msra.mxu0 %v599
    %2648 = vmatprep.subr.mxu0 0.0
    %2649 = vmatpush1.msra.mxu0 %v600
    %2650 = vmatprep.subr.mxu0 0.0
    %2651 = vmatpush1.msra.mxu0 %v601
    %2652 = vmatprep.subr.mxu0 0.0
    %2653 = vmatpush1.msra.mxu0 %v602
    %2654 = vmatprep.subr.mxu0 0.0
    %2655 = vmatpush1.msra.mxu0 %v603
    %2656 = vmatprep.subr.mxu0 0.0
    %2657 = vmatpush1.msra.mxu0 %v604
    %2658 = vmatprep.subr.mxu0 0.0
    %2659 = vmatpush1.msra.mxu0 %v605
    %2660 = vmatprep.subr.mxu0 0.0
    %2661 = vmatpush1.msra.mxu0 %v606
    %2662 = vmatprep.subr.mxu0 0.0
    %2663 = vmatpush1.msra.mxu0 %v607
    %2664 = vmatprep.subr.mxu0 0.0
    %2665 = vmatpush1.msra.mxu0 %v608
    %2666 = vmatprep.subr.mxu0 0.0
    %2667 = vmatpush1.msra.mxu0 %v609
    %2668 = vmatprep.subr.mxu0 0.0
    %2669 = vmatpush1.msra.mxu0 %v610
    %2670 = vmatprep.subr.mxu0 0.0
    %2671 = vmatpush1.msra.mxu0 %v611
    %2672 = vmatprep.subr.mxu0 0.0
    %2673 = vmatpush1.msra.mxu0 %v612
    %2674 = vmatprep.mubr.f32.mxu0 %v1236
    %2675 = vmatmul.mubr.f32.gmra.mrb[0].mxu0 %v1234
    %v2676 = vpop.f32.mrb[0].mxu0
    %v2677 = vadd.f32 %v2607, %v2676
    %v2678 = vpop.f32.mrb[0].mxu0
    %2679 = vdwg.mxu0
    %2680 = vmatprep.subr.mxu0 0.0
    %2681 = vmatpush1.msra.mxu0 %v613
    %2682 = vmatprep.subr.mxu0 0.0
    %2683 = vmatpush1.msra.mxu0 %v614
    %2684 = vmatprep.subr.mxu0 0.0
    %2685 = vmatpush1.msra.mxu0 %v615
    %2686 = vmatprep.subr.mxu0 0.0
    %2687 = vmatpush1.msra.mxu0 %v616
    %2688 = vmatprep.subr.mxu0 0.0
    %2689 = vmatpush1.msra.mxu0 %v617
    %2690 = vmatprep.subr.mxu0 0.0
    %2691 = vmatpush1.msra.mxu0 %v618
    %2692 = vmatprep.subr.mxu0 0.0
    %2693 = vmatpush1.msra.mxu0 %v619
    %2694 = vmatprep.subr.mxu0 0.0
    %2695 = vmatpush1.msra.mxu0 %v620
    %2696 = vmatprep.subr.mxu0 0.0
    %2697 = vmatpush1.msra.mxu0 %v621
    %2698 = vmatprep.subr.mxu0 0.0
    %2699 = vmatpush1.msra.mxu0 %v622
    %2700 = vmatprep.subr.mxu0 0.0
    %2701 = vmatpush1.msra.mxu0 %v623
    %2702 = vmatprep.subr.mxu0 0.0
    %2703 = vmatpush1.msra.mxu0 %v624
    %2704 = vmatprep.subr.mxu0 0.0
    %2705 = vmatpush1.msra.mxu0 %v625
    %2706 = vmatprep.subr.mxu0 0.0
    %2707 = vmatpush1.msra.mxu0 %v626
    %2708 = vmatprep.subr.mxu0 0.0
    %2709 = vmatpush1.msra.mxu0 %v627
    %2710 = vmatprep.subr.mxu0 0.0
    %2711 = vmatpush1.msra.mxu0 %v628
    %2712 = vmatprep.subr.mxu0 0.0
    %2713 = vmatpush1.msra.mxu0 %v629
    %2714 = vmatprep.subr.mxu0 0.0
    %2715 = vmatpush1.msra.mxu0 %v630
    %2716 = vmatprep.subr.mxu0 0.0
    %2717 = vmatpush1.msra.mxu0 %v631
    %2718 = vmatprep.subr.mxu0 0.0
    %2719 = vmatpush1.msra.mxu0 %v632
    %2720 = vmatprep.subr.mxu0 0.0
    %2721 = vmatpush1.msra.mxu0 %v633
    %2722 = vmatprep.subr.mxu0 0.0
    %2723 = vmatpush1.msra.mxu0 %v634
    %2724 = vmatprep.subr.mxu0 0.0
    %2725 = vmatpush1.msra.mxu0 %v635
    %2726 = vmatprep.subr.mxu0 0.0
    %2727 = vmatpush1.msra.mxu0 %v636
    %2728 = vmatprep.subr.mxu0 0.0
    %2729 = vmatpush1.msra.mxu0 %v637
    %2730 = vmatprep.subr.mxu0 0.0
    %2731 = vmatpush1.msra.mxu0 %v638
    %2732 = vmatprep.subr.mxu0 0.0
    %2733 = vmatpush1.msra.mxu0 %v639
    %2734 = vmatprep.subr.mxu0 0.0
    %2735 = vmatpush1.msra.mxu0 %v640
    %2736 = vmatprep.subr.mxu0 0.0
    %2737 = vmatpush1.msra.mxu0 %v641
    %2738 = vmatprep.subr.mxu0 0.0
    %2739 = vmatpush1.msra.mxu0 %v642
    %2740 = vmatprep.subr.mxu0 0.0
    %2741 = vmatpush1.msra.mxu0 %v643
    %2742 = vmatprep.subr.mxu0 0.0
    %2743 = vmatpush1.msra.mxu0 %v644
    %2744 = vmatprep.mubr.f32.mxu0 %v1252
    %2745 = vmatmul.mubr.f32.gmra.mrb[0].mxu0 %v1244
    %v2746 = vpop.f32.mrb[0].mxu0
    %v2747 = vadd.f32 %v2677, %v2746
    %v2748 = vpop.f32.mrb[0].mxu0
    %2749 = vdwg.mxu0
    %2750 = vmatprep.subr.mxu0 0.0
    %2751 = vmatpush1.msra.mxu0 %v645
    %2752 = vmatprep.subr.mxu0 0.0
    %2753 = vmatpush1.msra.mxu0 %v646
    %2754 = vmatprep.subr.mxu0 0.0
    %2755 = vmatpush1.msra.mxu0 %v647
    %2756 = vmatprep.subr.mxu0 0.0
    %2757 = vmatpush1.msra.mxu0 %v648
    %2758 = vmatprep.subr.mxu0 0.0
    %2759 = vmatpush1.msra.mxu0 %v649
    %2760 = vmatprep.subr.mxu0 0.0
    %2761 = vmatpush1.msra.mxu0 %v650
    %2762 = vmatprep.subr.mxu0 0.0
    %2763 = vmatpush1.msra.mxu0 %v651
    %2764 = vmatprep.subr.mxu0 0.0
    %2765 = vmatpush1.msra.mxu0 %v652
    %2766 = vmatprep.subr.mxu0 0.0
    %2767 = vmatpush1.msra.mxu0 %v653
    %2768 = vmatprep.subr.mxu0 0.0
    %2769 = vmatpush1.msra.mxu0 %v654
    %2770 = vmatprep.subr.mxu0 0.0
    %2771 = vmatpush1.msra.mxu0 %v655
    %2772 = vmatprep.subr.mxu0 0.0
    %2773 = vmatpush1.msra.mxu0 %v656
    %2774 = vmatprep.subr.mxu0 0.0
    %2775 = vmatpush1.msra.mxu0 %v657
    %2776 = vmatprep.subr.mxu0 0.0
    %2777 = vmatpush1.msra.mxu0 %v658
    %2778 = vmatprep.subr.mxu0 0.0
    %2779 = vmatpush1.msra.mxu0 %v659
    %2780 = vmatprep.subr.mxu0 0.0
    %2781 = vmatpush1.msra.mxu0 %v660
    %2782 = vmatprep.subr.mxu0 0.0
    %2783 = vmatpush1.msra.mxu0 %v661
    %2784 = vmatprep.subr.mxu0 0.0
    %2785 = vmatpush1.msra.mxu0 %v662
    %2786 = vmatprep.subr.mxu0 0.0
    %2787 = vmatpush1.msra.mxu0 %v663
    %2788 = vmatprep.subr.mxu0 0.0
    %2789 = vmatpush1.msra.mxu0 %v664
    %2790 = vmatprep.subr.mxu0 0.0
    %2791 = vmatpush1.msra.mxu0 %v665
    %2792 = vmatprep.subr.mxu0 0.0
    %2793 = vmatpush1.msra.mxu0 %v666
    %2794 = vmatprep.subr.mxu0 0.0
    %2795 = vmatpush1.msra.mxu0 %v667
    %2796 = vmatprep.subr.mxu0 0.0
    %2797 = vmatpush1.msra.mxu0 %v668
    %2798 = vmatprep.subr.mxu0 0.0
    %2799 = vmatpush1.msra.mxu0 %v669
    %2800 = vmatprep.subr.mxu0 0.0
    %2801 = vmatpush1.msra.mxu0 %v670
    %2802 = vmatprep.subr.mxu0 0.0
    %2803 = vmatpush1.msra.mxu0 %v671
    %2804 = vmatprep.subr.mxu0 0.0
    %2805 = vmatpush1.msra.mxu0 %v672
    %2806 = vmatprep.subr.mxu0 0.0
    %2807 = vmatpush1.msra.mxu0 %v673
    %2808 = vmatprep.subr.mxu0 0.0
    %2809 = vmatpush1.msra.mxu0 %v674
    %2810 = vmatprep.subr.mxu0 0.0
    %2811 = vmatpush1.msra.mxu0 %v675
    %2812 = vmatprep.subr.mxu0 0.0
    %2813 = vmatpush1.msra.mxu0 %v676
    %2814 = vmatprep.mubr.f32.mxu0 %v1253
    %2815 = vmatmul.mubr.f32.gmra.mrb[0].mxu0 %v1251
    %v2816 = vpop.f32.mrb[0].mxu0
    %v2817 = vadd.f32 %v2747, %v2816
    %v2818 = vpop.f32.mrb[0].mxu0
    %2819 = vdwg.mxu0
    %2820 = vmatprep.subr.mxu0 0.0
    %2821 = vmatpush1.msra.mxu0 %v677
    %2822 = vmatprep.subr.mxu0 0.0
    %2823 = vmatpush1.msra.mxu0 %v678
    %2824 = vmatprep.subr.mxu0 0.0
    %2825 = vmatpush1.msra.mxu0 %v679
    %2826 = vmatprep.subr.mxu0 0.0
    %2827 = vmatpush1.msra.mxu0 %v680
    %2828 = vmatprep.subr.mxu0 0.0
    %2829 = vmatpush1.msra.mxu0 %v681
    %2830 = vmatprep.subr.mxu0 0.0
    %2831 = vmatpush1.msra.mxu0 %v682
    %2832 = vmatprep.subr.mxu0 0.0
    %2833 = vmatpush1.msra.mxu0 %v683
    %2834 = vmatprep.subr.mxu0 0.0
    %2835 = vmatpush1.msra.mxu0 %v684
    %2836 = vmatprep.subr.mxu0 0.0
    %2837 = vmatpush1.msra.mxu0 %v685
    %2838 = vmatprep.subr.mxu0 0.0
    %2839 = vmatpush1.msra.mxu0 %v686
    %2840 = vmatprep.subr.mxu0 0.0
    %2841 = vmatpush1.msra.mxu0 %v687
    %2842 = vmatprep.subr.mxu0 0.0
    %2843 = vmatpush1.msra.mxu0 %v688
    %2844 = vmatprep.subr.mxu0 0.0
    %2845 = vmatpush1.msra.mxu0 %v689
    %2846 = vmatprep.subr.mxu0 0.0
    %2847 = vmatpush1.msra.mxu0 %v690
    %2848 = vmatprep.subr.mxu0 0.0
    %2849 = vmatpush1.msra.mxu0 %v691
    %2850 = vmatprep.subr.mxu0 0.0
    %2851 = vmatpush1.msra.mxu0 %v692
    %2852 = vmatprep.subr.mxu0 0.0
    %2853 = vmatpush1.msra.mxu0 %v693
    %2854 = vmatprep.subr.mxu0 0.0
    %2855 = vmatpush1.msra.mxu0 %v694
    %2856 = vmatprep.subr.mxu0 0.0
    %2857 = vmatpush1.msra.mxu0 %v695
    %2858 = vmatprep.subr.mxu0 0.0
    %2859 = vmatpush1.msra.mxu0 %v696
    %2860 = vmatprep.subr.mxu0 0.0
    %2861 = vmatpush1.msra.mxu0 %v697
    %2862 = vmatprep.subr.mxu0 0.0
    %2863 = vmatpush1.msra.mxu0 %v698
    %2864 = vmatprep.subr.mxu0 0.0
    %2865 = vmatpush1.msra.mxu0 %v699
    %2866 = vmatprep.subr.mxu0 0.0
    %2867 = vmatpush1.msra.mxu0 %v700
    %2868 = vmatprep.subr.mxu0 0.0
    %2869 = vmatpush1.msra.mxu0 %v701
    %2870 = vmatprep.subr.mxu0 0.0
    %2871 = vmatpush1.msra.mxu0 %v702
    %2872 = vmatprep.subr.mxu0 0.0
    %2873 = vmatpush1.msra.mxu0 %v703
    %2874 = vmatprep.subr.mxu0 0.0
    %2875 = vmatpush1.msra.mxu0 %v704
    %2876 = vmatprep.subr.mxu0 0.0
    %2877 = vmatpush1.msra.mxu0 %v705
    %2878 = vmatprep.subr.mxu0 0.0
    %2879 = vmatpush1.msra.mxu0 %v706
    %2880 = vmatprep.subr.mxu0 0.0
    %2881 = vmatpush1.msra.mxu0 %v707
    %2882 = vmatprep.subr.mxu0 0.0
    %2883 = vmatpush1.msra.mxu0 %v708
    %2884 = vmatprep.mubr.f32.mxu0 %v1269
    %2885 = vmatmul.mubr.f32.gmra.mrb[0].mxu0 %v1261
    %v2886 = vpop.f32.mrb[0].mxu0
    %v2887 = vadd.f32 %v2817, %v2886
    %v2888 = vpop.f32.mrb[0].mxu0
    %2889 = vdwg.mxu0
    %2890 = vmatprep.subr.mxu0 0.0
    %2891 = vmatpush1.msra.mxu0 %v709
    %2892 = vmatprep.subr.mxu0 0.0
    %2893 = vmatpush1.msra.mxu0 %v710
    %2894 = vmatprep.subr.mxu0 0.0
    %2895 = vmatpush1.msra.mxu0 %v711
    %2896 = vmatprep.subr.mxu0 0.0
    %2897 = vmatpush1.msra.mxu0 %v712
    %2898 = vmatprep.subr.mxu0 0.0
    %2899 = vmatpush1.msra.mxu0 %v713
    %2900 = vmatprep.subr.mxu0 0.0
    %2901 = vmatpush1.msra.mxu0 %v714
    %2902 = vmatprep.subr.mxu0 0.0
    %2903 = vmatpush1.msra.mxu0 %v715
    %2904 = vmatprep.subr.mxu0 0.0
    %2905 = vmatpush1.msra.mxu0 %v716
    %2906 = vmatprep.subr.mxu0 0.0
    %2907 = vmatpush1.msra.mxu0 %v717
    %2908 = vmatprep.subr.mxu0 0.0
    %2909 = vmatpush1.msra.mxu0 %v718
    %2910 = vmatprep.subr.mxu0 0.0
    %2911 = vmatpush1.msra.mxu0 %v719
    %2912 = vmatprep.subr.mxu0 0.0
    %2913 = vmatpush1.msra.mxu0 %v720
    %2914 = vmatprep.subr.mxu0 0.0
    %2915 = vmatpush1.msra.mxu0 %v721
    %2916 = vmatprep.subr.mxu0 0.0
    %2917 = vmatpush1.msra.mxu0 %v722
    %2918 = vmatprep.subr.mxu0 0.0
    %2919 = vmatpush1.msra.mxu0 %v723
    %2920 = vmatprep.subr.mxu0 0.0
    %2921 = vmatpush1.msra.mxu0 %v724
    %2922 = vmatprep.subr.mxu0 0.0
    %2923 = vmatpush1.msra.mxu0 %v725
    %2924 = vmatprep.subr.mxu0 0.0
    %2925 = vmatpush1.msra.mxu0 %v726
    %2926 = vmatprep.subr.mxu0 0.0
    %2927 = vmatpush1.msra.mxu0 %v727
    %2928 = vmatprep.subr.mxu0 0.0
    %2929 = vmatpush1.msra.mxu0 %v728
    %2930 = vmatprep.subr.mxu0 0.0
    %2931 = vmatpush1.msra.mxu0 %v729
    %2932 = vmatprep.subr.mxu0 0.0
    %2933 = vmatpush1.msra.mxu0 %v730
    %2934 = vmatprep.subr.mxu0 0.0
    %2935 = vmatpush1.msra.mxu0 %v731
    %2936 = vmatprep.subr.mxu0 0.0
    %2937 = vmatpush1.msra.mxu0 %v732
    %2938 = vmatprep.subr.mxu0 0.0
    %2939 = vmatpush1.msra.mxu0 %v733
    %2940 = vmatprep.subr.mxu0 0.0
    %2941 = vmatpush1.msra.mxu0 %v734
    %2942 = vmatprep.subr.mxu0 0.0
    %2943 = vmatpush1.msra.mxu0 %v735
    %2944 = vmatprep.subr.mxu0 0.0
    %2945 = vmatpush1.msra.mxu0 %v736
    %2946 = vmatprep.subr.mxu0 0.0
    %2947 = vmatpush1.msra.mxu0 %v737
    %2948 = vmatprep.subr.mxu0 0.0
    %2949 = vmatpush1.msra.mxu0 %v738
    %2950 = vmatprep.subr.mxu0 0.0
    %2951 = vmatpush1.msra.mxu0 %v739
    %2952 = vmatprep.subr.mxu0 0.0
    %2953 = vmatpush1.msra.mxu0 %v740
    %2954 = vmatprep.mubr.f32.mxu0 %v1270
    %2955 = vmatmul.mubr.f32.gmra.mrb[0].mxu0 %v1268
    %v2956 = vpop.f32.mrb[0].mxu0
    %v2957 = vadd.f32 %v2887, %v2956
    %v2958 = vpop.f32.mrb[0].mxu0
    %2959 = vdwg.mxu0
    %2960 = vmatprep.subr.mxu0 0.0
    %2961 = vmatpush1.msra.mxu0 %v741
    %2962 = vmatprep.subr.mxu0 0.0
    %2963 = vmatpush1.msra.mxu0 %v742
    %2964 = vmatprep.subr.mxu0 0.0
    %2965 = vmatpush1.msra.mxu0 %v743
    %2966 = vmatprep.subr.mxu0 0.0
    %2967 = vmatpush1.msra.mxu0 %v744
    %2968 = vmatprep.subr.mxu0 0.0
    %2969 = vmatpush1.msra.mxu0 %v745
    %2970 = vmatprep.subr.mxu0 0.0
    %2971 = vmatpush1.msra.mxu0 %v746
    %2972 = vmatprep.subr.mxu0 0.0
    %2973 = vmatpush1.msra.mxu0 %v747
    %2974 = vmatprep.subr.mxu0 0.0
    %2975 = vmatpush1.msra.mxu0 %v748
    %2976 = vmatprep.subr.mxu0 0.0
    %2977 = vmatpush1.msra.mxu0 %v749
    %2978 = vmatprep.subr.mxu0 0.0
    %2979 = vmatpush1.msra.mxu0 %v750
    %2980 = vmatprep.subr.mxu0 0.0
    %2981 = vmatpush1.msra.mxu0 %v751
    %2982 = vmatprep.subr.mxu0 0.0
    %2983 = vmatpush1.msra.mxu0 %v752
    %2984 = vmatprep.subr.mxu0 0.0
    %2985 = vmatpush1.msra.mxu0 %v753
    %2986 = vmatprep.subr.mxu0 0.0
    %2987 = vmatpush1.msra.mxu0 %v754
    %2988 = vmatprep.subr.mxu0 0.0
    %2989 = vmatpush1.msra.mxu0 %v755
    %2990 = vmatprep.subr.mxu0 0.0
    %2991 = vmatpush1.msra.mxu0 %v756
    %2992 = vmatprep.subr.mxu0 0.0
    %2993 = vmatpush1.msra.mxu0 %v757
    %2994 = vmatprep.subr.mxu0 0.0
    %2995 = vmatpush1.msra.mxu0 %v758
    %2996 = vmatprep.subr.mxu0 0.0
    %2997 = vmatpush1.msra.mxu0 %v759
    %2998 = vmatprep.subr.mxu0 0.0
    %2999 = vmatpush1.msra.mxu0 %v760
    %3000 = vmatprep.subr.mxu0 0.0
    %3001 = vmatpush1.msra.mxu0 %v761
    %3002 = vmatprep.subr.mxu0 0.0
    %3003 = vmatpush1.msra.mxu0 %v762
    %3004 = vmatprep.subr.mxu0 0.0
    %3005 = vmatpush1.msra.mxu0 %v763
    %3006 = vmatprep.subr.mxu0 0.0
    %3007 = vmatpush1.msra.mxu0 %v764
    %3008 = vmatprep.subr.mxu0 0.0
    %3009 = vmatpush1.msra.mxu0 %v765
    %3010 = vmatprep.subr.mxu0 0.0
    %3011 = vmatpush1.msra.mxu0 %v766
    %3012 = vmatprep.subr.mxu0 0.0
    %3013 = vmatpush1.msra.mxu0 %v767
    %3014 = vmatprep.subr.mxu0 0.0
    %3015 = vmatpush1.msra.mxu0 %v768
    %3016 = vmatprep.subr.mxu0 0.0
    %3017 = vmatpush1.msra.mxu0 %v769
    %3018 = vmatprep.subr.mxu0 0.0
    %3019 = vmatpush1.msra.mxu0 %v770
    %3020 = vmatprep.subr.mxu0 0.0
    %3021 = vmatpush1.msra.mxu0 %v771
    %3022 = vmatprep.subr.mxu0 0.0
    %3023 = vmatpush1.msra.mxu0 %v772
    %3024 = vmatprep.mubr.f32.mxu0 %v1286
    %3025 = vmatmul.mubr.f32.gmra.mrb[0].mxu0 %v1278
    %v3026 = vpop.f32.mrb[0].mxu0
    %v3027 = vadd.f32 %v2957, %v3026
    %v3028 = vpop.f32.mrb[0].mxu0
    %3029 = vdwg.mxu0
    %3030 = vmatprep.subr.mxu0 0.0
    %3031 = vmatpush1.msra.mxu0 %v773
    %3032 = vmatprep.subr.mxu0 0.0
    %3033 = vmatpush1.msra.mxu0 %v774
    %3034 = vmatprep.subr.mxu0 0.0
    %3035 = vmatpush1.msra.mxu0 %v775
    %3036 = vmatprep.subr.mxu0 0.0
    %3037 = vmatpush1.msra.mxu0 %v776
    %3038 = vmatprep.subr.mxu0 0.0
    %3039 = vmatpush1.msra.mxu0 %v777
    %3040 = vmatprep.subr.mxu0 0.0
    %3041 = vmatpush1.msra.mxu0 %v778
    %3042 = vmatprep.subr.mxu0 0.0
    %3043 = vmatpush1.msra.mxu0 %v779
    %3044 = vmatprep.subr.mxu0 0.0
    %3045 = vmatpush1.msra.mxu0 %v780
    %3046 = vmatprep.subr.mxu0 0.0
    %3047 = vmatpush1.msra.mxu0 %v781
    %3048 = vmatprep.subr.mxu0 0.0
    %3049 = vmatpush1.msra.mxu0 %v782
    %3050 = vmatprep.subr.mxu0 0.0
    %3051 = vmatpush1.msra.mxu0 %v783
    %3052 = vmatprep.subr.mxu0 0.0
    %3053 = vmatpush1.msra.mxu0 %v784
    %3054 = vmatprep.subr.mxu0 0.0
    %3055 = vmatpush1.msra.mxu0 %v785
    %3056 = vmatprep.subr.mxu0 0.0
    %3057 = vmatpush1.msra.mxu0 %v786
    %3058 = vmatprep.subr.mxu0 0.0
    %3059 = vmatpush1.msra.mxu0 %v787
    %3060 = vmatprep.subr.mxu0 0.0
    %3061 = vmatpush1.msra.mxu0 %v788
    %3062 = vmatprep.subr.mxu0 0.0
    %3063 = vmatpush1.msra.mxu0 %v789
    %3064 = vmatprep.subr.mxu0 0.0
    %3065 = vmatpush1.msra.mxu0 %v790
    %3066 = vmatprep.subr.mxu0 0.0
    %3067 = vmatpush1.msra.mxu0 %v791
    %3068 = vmatprep.subr.mxu0 0.0
    %3069 = vmatpush1.msra.mxu0 %v792
    %3070 = vmatprep.subr.mxu0 0.0
    %3071 = vmatpush1.msra.mxu0 %v793
    %3072 = vmatprep.subr.mxu0 0.0
    %3073 = vmatpush1.msra.mxu0 %v794
    %3074 = vmatprep.subr.mxu0 0.0
    %3075 = vmatpush1.msra.mxu0 %v795
    %3076 = vmatprep.subr.mxu0 0.0
    %3077 = vmatpush1.msra.mxu0 %v796
    %3078 = vmatprep.subr.mxu0 0.0
    %3079 = vmatpush1.msra.mxu0 %v797
    %3080 = vmatprep.subr.mxu0 0.0
    %3081 = vmatpush1.msra.mxu0 %v798
    %3082 = vmatprep.subr.mxu0 0.0
    %3083 = vmatpush1.msra.mxu0 %v799
    %3084 = vmatprep.subr.mxu0 0.0
    %3085 = vmatpush1.msra.mxu0 %v800
    %3086 = vmatprep.subr.mxu0 0.0
    %3087 = vmatpush1.msra.mxu0 %v801
    %3088 = vmatprep.subr.mxu0 0.0
    %3089 = vmatpush1.msra.mxu0 %v802
    %3090 = vmatprep.subr.mxu0 0.0
    %3091 = vmatpush1.msra.mxu0 %v803
    %3092 = vmatprep.subr.mxu0 0.0
    %3093 = vmatpush1.msra.mxu0 %v804
    %3094 = vmatprep.mubr.f32.mxu0 %v1287
    %3095 = vmatmul.mubr.f32.gmra.mrb[0].mxu0 %v1285
    %v3096 = vpop.f32.mrb[0].mxu0
    %v3097 = vadd.f32 %v3027, %v3096
    %v3098 = vpop.f32.mrb[0].mxu0
    %3099 = vdwg.mxu0
    %3100 = vmatprep.subr.mxu0 0.0
    %3101 = vmatpush1.msra.mxu0 %v805
    %3102 = vmatprep.subr.mxu0 0.0
    %3103 = vmatpush1.msra.mxu0 %v806
    %3104 = vmatprep.subr.mxu0 0.0
    %3105 = vmatpush1.msra.mxu0 %v807
    %3106 = vmatprep.subr.mxu0 0.0
    %3107 = vmatpush1.msra.mxu0 %v808
    %3108 = vmatprep.subr.mxu0 0.0
    %3109 = vmatpush1.msra.mxu0 %v809
    %3110 = vmatprep.subr.mxu0 0.0
    %3111 = vmatpush1.msra.mxu0 %v810
    %3112 = vmatprep.subr.mxu0 0.0
    %3113 = vmatpush1.msra.mxu0 %v811
    %3114 = vmatprep.subr.mxu0 0.0
    %3115 = vmatpush1.msra.mxu0 %v812
    %3116 = vmatprep.subr.mxu0 0.0
    %3117 = vmatpush1.msra.mxu0 %v813
    %3118 = vmatprep.subr.mxu0 0.0
    %3119 = vmatpush1.msra.mxu0 %v814
    %3120 = vmatprep.subr.mxu0 0.0
    %3121 = vmatpush1.msra.mxu0 %v815
    %3122 = vmatprep.subr.mxu0 0.0
    %3123 = vmatpush1.msra.mxu0 %v816
    %3124 = vmatprep.subr.mxu0 0.0
    %3125 = vmatpush1.msra.mxu0 %v817
    %3126 = vmatprep.subr.mxu0 0.0
    %3127 = vmatpush1.msra.mxu0 %v818
    %3128 = vmatprep.subr.mxu0 0.0
    %3129 = vmatpush1.msra.mxu0 %v819
    %3130 = vmatprep.subr.mxu0 0.0
    %3131 = vmatpush1.msra.mxu0 %v820
    %3132 = vmatprep.subr.mxu0 0.0
    %3133 = vmatpush1.msra.mxu0 %v821
    %3134 = vmatprep.subr.mxu0 0.0
    %3135 = vmatpush1.msra.mxu0 %v822
    %3136 = vmatprep.subr.mxu0 0.0
    %3137 = vmatpush1.msra.mxu0 %v823
    %3138 = vmatprep.subr.mxu0 0.0
    %3139 = vmatpush1.msra.mxu0 %v824
    %3140 = vmatprep.subr.mxu0 0.0
    %3141 = vmatpush1.msra.mxu0 %v825
    %3142 = vmatprep.subr.mxu0 0.0
    %3143 = vmatpush1.msra.mxu0 %v826
    %3144 = vmatprep.subr.mxu0 0.0
    %3145 = vmatpush1.msra.mxu0 %v827
    %3146 = vmatprep.subr.mxu0 0.0
    %3147 = vmatpush1.msra.mxu0 %v828
    %3148 = vmatprep.subr.mxu0 0.0
    %3149 = vmatpush1.msra.mxu0 %v829
    %3150 = vmatprep.subr.mxu0 0.0
    %3151 = vmatpush1.msra.mxu0 %v830
    %3152 = vmatprep.subr.mxu0 0.0
    %3153 = vmatpush1.msra.mxu0 %v831
    %3154 = vmatprep.subr.mxu0 0.0
    %3155 = vmatpush1.msra.mxu0 %v832
    %3156 = vmatprep.subr.mxu0 0.0
    %3157 = vmatpush1.msra.mxu0 %v833
    %3158 = vmatprep.subr.mxu0 0.0
    %3159 = vmatpush1.msra.mxu0 %v834
    %3160 = vmatprep.subr.mxu0 0.0
    %3161 = vmatpush1.msra.mxu0 %v835
    %3162 = vmatprep.subr.mxu0 0.0
    %3163 = vmatpush1.msra.mxu0 %v836
    %3164 = vmatprep.mubr.f32.mxu0 %v1303
    %3165 = vmatmul.mubr.f32.gmra.mrb[0].mxu0 %v1295
    %v3166 = vpop.f32.mrb[0].mxu0
    %v3167 = vadd.f32 %v3097, %v3166
    %v3168 = vpop.f32.mrb[0].mxu0
    %3169 = vdwg.mxu0
    %3170 = vmatprep.subr.mxu0 0.0
    %3171 = vmatpush1.msra.mxu0 %v837
    %3172 = vmatprep.subr.mxu0 0.0
    %3173 = vmatpush1.msra.mxu0 %v838
    %3174 = vmatprep.subr.mxu0 0.0
    %3175 = vmatpush1.msra.mxu0 %v839
    %3176 = vmatprep.subr.mxu0 0.0
    %3177 = vmatpush1.msra.mxu0 %v840
    %3178 = vmatprep.subr.mxu0 0.0
    %3179 = vmatpush1.msra.mxu0 %v841
    %3180 = vmatprep.subr.mxu0 0.0
    %3181 = vmatpush1.msra.mxu0 %v842
    %3182 = vmatprep.subr.mxu0 0.0
    %3183 = vmatpush1.msra.mxu0 %v843
    %3184 = vmatprep.subr.mxu0 0.0
    %3185 = vmatpush1.msra.mxu0 %v844
    %3186 = vmatprep.subr.mxu0 0.0
    %3187 = vmatpush1.msra.mxu0 %v845
    %3188 = vmatprep.subr.mxu0 0.0
    %3189 = vmatpush1.msra.mxu0 %v846
    %3190 = vmatprep.subr.mxu0 0.0
    %3191 = vmatpush1.msra.mxu0 %v847
    %3192 = vmatprep.subr.mxu0 0.0
    %3193 = vmatpush1.msra.mxu0 %v848
    %3194 = vmatprep.subr.mxu0 0.0
    %3195 = vmatpush1.msra.mxu0 %v849
    %3196 = vmatprep.subr.mxu0 0.0
    %3197 = vmatpush1.msra.mxu0 %v850
    %3198 = vmatprep.subr.mxu0 0.0
    %3199 = vmatpush1.msra.mxu0 %v851
    %3200 = vmatprep.subr.mxu0 0.0
    %3201 = vmatpush1.msra.mxu0 %v852
    %3202 = vmatprep.subr.mxu0 0.0
    %3203 = vmatpush1.msra.mxu0 %v853
    %3204 = vmatprep.subr.mxu0 0.0
    %3205 = vmatpush1.msra.mxu0 %v854
    %3206 = vmatprep.subr.mxu0 0.0
    %3207 = vmatpush1.msra.mxu0 %v855
    %3208 = vmatprep.subr.mxu0 0.0
    %3209 = vmatpush1.msra.mxu0 %v856
    %3210 = vmatprep.subr.mxu0 0.0
    %3211 = vmatpush1.msra.mxu0 %v857
    %3212 = vmatprep.subr.mxu0 0.0
    %3213 = vmatpush1.msra.mxu0 %v858
    %3214 = vmatprep.subr.mxu0 0.0
    %3215 = vmatpush1.msra.mxu0 %v859
    %3216 = vmatprep.subr.mxu0 0.0
    %3217 = vmatpush1.msra.mxu0 %v860
    %3218 = vmatprep.subr.mxu0 0.0
    %3219 = vmatpush1.msra.mxu0 %v861
    %3220 = vmatprep.subr.mxu0 0.0
    %3221 = vmatpush1.msra.mxu0 %v862
    %3222 = vmatprep.subr.mxu0 0.0
    %3223 = vmatpush1.msra.mxu0 %v863
    %3224 = vmatprep.subr.mxu0 0.0
    %3225 = vmatpush1.msra.mxu0 %v864
    %3226 = vmatprep.subr.mxu0 0.0
    %3227 = vmatpush1.msra.mxu0 %v865
    %3228 = vmatprep.subr.mxu0 0.0
    %3229 = vmatpush1.msra.mxu0 %v866
    %3230 = vmatprep.subr.mxu0 0.0
    %3231 = vmatpush1.msra.mxu0 %v867
    %3232 = vmatprep.subr.mxu0 0.0
    %3233 = vmatpush1.msra.mxu0 %v868
    %3234 = vmatprep.mubr.f32.mxu0 %v1304
    %3235 = vmatmul.mubr.f32.gmra.mrb[0].mxu0 %v1302
    %v3236 = vpop.f32.mrb[0].mxu0
    %v3237 = vadd.f32 %v3167, %v3236
    %v3238 = vpop.f32.mrb[0].mxu0
    %3239 = vdwg.mxu0
    %3240 = vmatprep.subr.mxu0 0.0
    %3241 = vmatpush1.msra.mxu0 %v869
    %3242 = vmatprep.subr.mxu0 0.0
    %3243 = vmatpush1.msra.mxu0 %v870
    %3244 = vmatprep.subr.mxu0 0.0
    %3245 = vmatpush1.msra.mxu0 %v871
    %3246 = vmatprep.subr.mxu0 0.0
    %3247 = vmatpush1.msra.mxu0 %v872
    %3248 = vmatprep.subr.mxu0 0.0
    %3249 = vmatpush1.msra.mxu0 %v873
    %3250 = vmatprep.subr.mxu0 0.0
    %3251 = vmatpush1.msra.mxu0 %v874
    %3252 = vmatprep.subr.mxu0 0.0
    %3253 = vmatpush1.msra.mxu0 %v875
    %3254 = vmatprep.subr.mxu0 0.0
    %3255 = vmatpush1.msra.mxu0 %v876
    %3256 = vmatprep.subr.mxu0 0.0
    %3257 = vmatpush1.msra.mxu0 %v877
    %3258 = vmatprep.subr.mxu0 0.0
    %3259 = vmatpush1.msra.mxu0 %v878
    %3260 = vmatprep.subr.mxu0 0.0
    %3261 = vmatpush1.msra.mxu0 %v879
    %3262 = vmatprep.subr.mxu0 0.0
    %3263 = vmatpush1.msra.mxu0 %v880
    %3264 = vmatprep.subr.mxu0 0.0
    %3265 = vmatpush1.msra.mxu0 %v881
    %3266 = vmatprep.subr.mxu0 0.0
    %3267 = vmatpush1.msra.mxu0 %v882
    %3268 = vmatprep.subr.mxu0 0.0
    %3269 = vmatpush1.msra.mxu0 %v883
    %3270 = vmatprep.subr.mxu0 0.0
    %3271 = vmatpush1.msra.mxu0 %v884
    %3272 = vmatprep.subr.mxu0 0.0
    %3273 = vmatpush1.msra.mxu0 %v885
    %3274 = vmatprep.subr.mxu0 0.0
    %3275 = vmatpush1.msra.mxu0 %v886
    %3276 = vmatprep.subr.mxu0 0.0
    %3277 = vmatpush1.msra.mxu0 %v887
    %3278 = vmatprep.subr.mxu0 0.0
    %3279 = vmatpush1.msra.mxu0 %v888
    %3280 = vmatprep.subr.mxu0 0.0
    %3281 = vmatpush1.msra.mxu0 %v889
    %3282 = vmatprep.subr.mxu0 0.0
    %3283 = vmatpush1.msra.mxu0 %v890
    %3284 = vmatprep.subr.mxu0 0.0
    %3285 = vmatpush1.msra.mxu0 %v891
    %3286 = vmatprep.subr.mxu0 0.0
    %3287 = vmatpush1.msra.mxu0 %v892
    %3288 = vmatprep.subr.mxu0 0.0
    %3289 = vmatpush1.msra.mxu0 %v893
    %3290 = vmatprep.subr.mxu0 0.0
    %3291 = vmatpush1.msra.mxu0 %v894
    %3292 = vmatprep.subr.mxu0 0.0
    %3293 = vmatpush1.msra.mxu0 %v895
    %3294 = vmatprep.subr.mxu0 0.0
    %3295 = vmatpush1.msra.mxu0 %v896
    %3296 = vmatprep.subr.mxu0 0.0
    %3297 = vmatpush1.msra.mxu0 %v897
    %3298 = vmatprep.subr.mxu0 0.0
    %3299 = vmatpush1.msra.mxu0 %v898
    %3300 = vmatprep.subr.mxu0 0.0
    %3301 = vmatpush1.msra.mxu0 %v899
    %3302 = vmatprep.subr.mxu0 0.0
    %3303 = vmatpush1.msra.mxu0 %v900
    %3304 = vmatprep.mubr.f32.mxu0 %v1320
    %3305 = vmatmul.mubr.f32.gmra.mrb[0].mxu0 %v1312
    %v3306 = vpop.f32.mrb[0].mxu0
    %v3307 = vadd.f32 %v3237, %v3306
    %v3308 = vpop.f32.mrb[0].mxu0
    %3309 = vdwg.mxu0
    %3310 = vmatprep.subr.mxu0 0.0
    %3311 = vmatpush1.msra.mxu0 %v901
    %3312 = vmatprep.subr.mxu0 0.0
    %3313 = vmatpush1.msra.mxu0 %v902
    %3314 = vmatprep.subr.mxu0 0.0
    %3315 = vmatpush1.msra.mxu0 %v903
    %3316 = vmatprep.subr.mxu0 0.0
    %3317 = vmatpush1.msra.mxu0 %v904
    %3318 = vmatprep.subr.mxu0 0.0
    %3319 = vmatpush1.msra.mxu0 %v905
    %3320 = vmatprep.subr.mxu0 0.0
    %3321 = vmatpush1.msra.mxu0 %v906
    %3322 = vmatprep.subr.mxu0 0.0
    %3323 = vmatpush1.msra.mxu0 %v907
    %3324 = vmatprep.subr.mxu0 0.0
    %3325 = vmatpush1.msra.mxu0 %v908
    %3326 = vmatprep.subr.mxu0 0.0
    %3327 = vmatpush1.msra.mxu0 %v909
    %3328 = vmatprep.subr.mxu0 0.0
    %3329 = vmatpush1.msra.mxu0 %v910
    %3330 = vmatprep.subr.mxu0 0.0
    %3331 = vmatpush1.msra.mxu0 %v911
    %3332 = vmatprep.subr.mxu0 0.0
    %3333 = vmatpush1.msra.mxu0 %v912
    %3334 = vmatprep.subr.mxu0 0.0
    %3335 = vmatpush1.msra.mxu0 %v913
    %3336 = vmatprep.subr.mxu0 0.0
    %3337 = vmatpush1.msra.mxu0 %v914
    %3338 = vmatprep.subr.mxu0 0.0
    %3339 = vmatpush1.msra.mxu0 %v915
    %3340 = vmatprep.subr.mxu0 0.0
    %3341 = vmatpush1.msra.mxu0 %v916
    %3342 = vmatprep.subr.mxu0 0.0
    %3343 = vmatpush1.msra.mxu0 %v917
    %3344 = vmatprep.subr.mxu0 0.0
    %3345 = vmatpush1.msra.mxu0 %v918
    %3346 = vmatprep.subr.mxu0 0.0
    %3347 = vmatpush1.msra.mxu0 %v919
    %3348 = vmatprep.subr.mxu0 0.0
    %3349 = vmatpush1.msra.mxu0 %v920
    %3350 = vmatprep.subr.mxu0 0.0
    %3351 = vmatpush1.msra.mxu0 %v921
    %3352 = vmatprep.subr.mxu0 0.0
    %3353 = vmatpush1.msra.mxu0 %v922
    %3354 = vmatprep.subr.mxu0 0.0
    %3355 = vmatpush1.msra.mxu0 %v923
    %3356 = vmatprep.subr.mxu0 0.0
    %3357 = vmatpush1.msra.mxu0 %v924
    %3358 = vmatprep.subr.mxu0 0.0
    %3359 = vmatpush1.msra.mxu0 %v925
    %3360 = vmatprep.subr.mxu0 0.0
    %3361 = vmatpush1.msra.mxu0 %v926
    %3362 = vmatprep.subr.mxu0 0.0
    %3363 = vmatpush1.msra.mxu0 %v927
    %3364 = vmatprep.subr.mxu0 0.0
    %3365 = vmatpush1.msra.mxu0 %v928
    %3366 = vmatprep.subr.mxu0 0.0
    %3367 = vmatpush1.msra.mxu0 %v929
    %3368 = vmatprep.subr.mxu0 0.0
    %3369 = vmatpush1.msra.mxu0 %v930
    %3370 = vmatprep.subr.mxu0 0.0
    %3371 = vmatpush1.msra.mxu0 %v931
    %3372 = vmatprep.subr.mxu0 0.0
    %3373 = vmatpush1.msra.mxu0 %v932
    %3374 = vmatprep.mubr.f32.mxu0 %v1321
    %3375 = vmatmul.mubr.f32.gmra.mrb[0].mxu0 %v1319
    %v3376 = vpop.f32.mrb[0].mxu0
    %v3377 = vadd.f32 %v3307, %v3376
    %v3378 = vpop.f32.mrb[0].mxu0
    %3379 = vdwg.mxu0
    %3380 = vmatprep.subr.mxu0 0.0
    %3381 = vmatpush1.msra.mxu0 %v933
    %3382 = vmatprep.subr.mxu0 0.0
    %3383 = vmatpush1.msra.mxu0 %v934
    %3384 = vmatprep.subr.mxu0 0.0
    %3385 = vmatpush1.msra.mxu0 %v935
    %3386 = vmatprep.subr.mxu0 0.0
    %3387 = vmatpush1.msra.mxu0 %v936
    %3388 = vmatprep.subr.mxu0 0.0
    %3389 = vmatpush1.msra.mxu0 %v937
    %3390 = vmatprep.subr.mxu0 0.0
    %3391 = vmatpush1.msra.mxu0 %v938
    %3392 = vmatprep.subr.mxu0 0.0
    %3393 = vmatpush1.msra.mxu0 %v939
    %3394 = vmatprep.subr.mxu0 0.0
    %3395 = vmatpush1.msra.mxu0 %v940
    %3396 = vmatprep.subr.mxu0 0.0
    %3397 = vmatpush1.msra.mxu0 %v941
    %3398 = vmatprep.subr.mxu0 0.0
    %3399 = vmatpush1.msra.mxu0 %v942
    %3400 = vmatprep.subr.mxu0 0.0
    %3401 = vmatpush1.msra.mxu0 %v943
    %3402 = vmatprep.subr.mxu0 0.0
    %3403 = vmatpush1.msra.mxu0 %v944
    %3404 = vmatprep.subr.mxu0 0.0
    %3405 = vmatpush1.msra.mxu0 %v945
    %3406 = vmatprep.subr.mxu0 0.0
    %3407 = vmatpush1.msra.mxu0 %v946
    %3408 = vmatprep.subr.mxu0 0.0
    %3409 = vmatpush1.msra.mxu0 %v947
    %3410 = vmatprep.subr.mxu0 0.0
    %3411 = vmatpush1.msra.mxu0 %v948
    %3412 = vmatprep.subr.mxu0 0.0
    %3413 = vmatpush1.msra.mxu0 %v949
    %3414 = vmatprep.subr.mxu0 0.0
    %3415 = vmatpush1.msra.mxu0 %v950
    %3416 = vmatprep.subr.mxu0 0.0
    %3417 = vmatpush1.msra.mxu0 %v951
    %3418 = vmatprep.subr.mxu0 0.0
    %3419 = vmatpush1.msra.mxu0 %v952
    %3420 = vmatprep.subr.mxu0 0.0
    %3421 = vmatpush1.msra.mxu0 %v953
    %3422 = vmatprep.subr.mxu0 0.0
    %3423 = vmatpush1.msra.mxu0 %v954
    %3424 = vmatprep.subr.mxu0 0.0
    %3425 = vmatpush1.msra.mxu0 %v955
    %3426 = vmatprep.subr.mxu0 0.0
    %3427 = vmatpush1.msra.mxu0 %v956
    %3428 = vmatprep.subr.mxu0 0.0
    %3429 = vmatpush1.msra.mxu0 %v957
    %3430 = vmatprep.subr.mxu0 0.0
    %3431 = vmatpush1.msra.mxu0 %v958
    %3432 = vmatprep.subr.mxu0 0.0
    %3433 = vmatpush1.msra.mxu0 %v959
    %3434 = vmatprep.subr.mxu0 0.0
    %3435 = vmatpush1.msra.mxu0 %v960
    %3436 = vmatprep.subr.mxu0 0.0
    %3437 = vmatpush1.msra.mxu0 %v961
    %3438 = vmatprep.subr.mxu0 0.0
    %3439 = vmatpush1.msra.mxu0 %v962
    %3440 = vmatprep.subr.mxu0 0.0
    %3441 = vmatpush1.msra.mxu0 %v963
    %3442 = vmatprep.subr.mxu0 0.0
    %3443 = vmatpush1.msra.mxu0 %v964
    %3444 = vmatprep.mubr.f32.mxu0 %v1337
    %3445 = vmatmul.mubr.f32.gmra.mrb[0].mxu0 %v1329
    %v3446 = vpop.f32.mrb[0].mxu0
    %v3447 = vadd.f32 %v3377, %v3446
    %v3448 = vpop.f32.mrb[0].mxu0
    %3449 = vdwg.mxu0
    %3450 = vmatprep.subr.mxu0 0.0
    %3451 = vmatpush1.msra.mxu0 %v965
    %3452 = vmatprep.subr.mxu0 0.0
    %3453 = vmatpush1.msra.mxu0 %v966
    %3454 = vmatprep.subr.mxu0 0.0
    %3455 = vmatpush1.msra.mxu0 %v967
    %3456 = vmatprep.subr.mxu0 0.0
    %3457 = vmatpush1.msra.mxu0 %v968
    %3458 = vmatprep.subr.mxu0 0.0
    %3459 = vmatpush1.msra.mxu0 %v969
    %3460 = vmatprep.subr.mxu0 0.0
    %3461 = vmatpush1.msra.mxu0 %v970
    %3462 = vmatprep.subr.mxu0 0.0
    %3463 = vmatpush1.msra.mxu0 %v971
    %3464 = vmatprep.subr.mxu0 0.0
    %3465 = vmatpush1.msra.mxu0 %v972
    %3466 = vmatprep.subr.mxu0 0.0
    %3467 = vmatpush1.msra.mxu0 %v973
    %3468 = vmatprep.subr.mxu0 0.0
    %3469 = vmatpush1.msra.mxu0 %v974
    %3470 = vmatprep.subr.mxu0 0.0
    %3471 = vmatpush1.msra.mxu0 %v975
    %3472 = vmatprep.subr.mxu0 0.0
    %3473 = vmatpush1.msra.mxu0 %v976
    %3474 = vmatprep.subr.mxu0 0.0
    %3475 = vmatpush1.msra.mxu0 %v977
    %3476 = vmatprep.subr.mxu0 0.0
    %3477 = vmatpush1.msra.mxu0 %v978
    %3478 = vmatprep.subr.mxu0 0.0
    %3479 = vmatpush1.msra.mxu0 %v979
    %3480 = vmatprep.subr.mxu0 0.0
    %3481 = vmatpush1.msra.mxu0 %v980
    %3482 = vmatprep.subr.mxu0 0.0
    %3483 = vmatpush1.msra.mxu0 %v981
    %3484 = vmatprep.subr.mxu0 0.0
    %3485 = vmatpush1.msra.mxu0 %v982
    %3486 = vmatprep.subr.mxu0 0.0
    %3487 = vmatpush1.msra.mxu0 %v983
    %3488 = vmatprep.subr.mxu0 0.0
    %3489 = vmatpush1.msra.mxu0 %v984
    %3490 = vmatprep.subr.mxu0 0.0
    %3491 = vmatpush1.msra.mxu0 %v985
    %3492 = vmatprep.subr.mxu0 0.0
    %3493 = vmatpush1.msra.mxu0 %v986
    %3494 = vmatprep.subr.mxu0 0.0
    %3495 = vmatpush1.msra.mxu0 %v987
    %3496 = vmatprep.subr.mxu0 0.0
    %3497 = vmatpush1.msra.mxu0 %v988
    %3498 = vmatprep.subr.mxu0 0.0
    %3499 = vmatpush1.msra.mxu0 %v989
    %3500 = vmatprep.subr.mxu0 0.0
    %3501 = vmatpush1.msra.mxu0 %v990
    %3502 = vmatprep.subr.mxu0 0.0
    %3503 = vmatpush1.msra.mxu0 %v991
    %3504 = vmatprep.subr.mxu0 0.0
    %3505 = vmatpush1.msra.mxu0 %v992
    %3506 = vmatprep.subr.mxu0 0.0
    %3507 = vmatpush1.msra.mxu0 %v993
    %3508 = vmatprep.subr.mxu0 0.0
    %3509 = vmatpush1.msra.mxu0 %v994
    %3510 = vmatprep.subr.mxu0 0.0
    %3511 = vmatpush1.msra.mxu0 %v995
    %3512 = vmatprep.subr.mxu0 0.0
    %3513 = vmatpush1.msra.mxu0 %v996
    %3514 = vmatprep.mubr.f32.mxu0 %v1338
    %3515 = vmatmul.mubr.f32.gmra.mrb[0].mxu0 %v1336
    %v3516 = vpop.f32.mrb[0].mxu0
    %v3517 = vadd.f32 %v3447, %v3516
    %v3518 = vpop.f32.mrb[0].mxu0
    %3519 = vdwg.mxu0
    %3520 = vmatprep.subr.mxu0 0.0
    %3521 = vmatpush1.msra.mxu0 %v997
    %3522 = vmatprep.subr.mxu0 0.0
    %3523 = vmatpush1.msra.mxu0 %v998
    %3524 = vmatprep.subr.mxu0 0.0
    %3525 = vmatpush1.msra.mxu0 %v999
    %3526 = vmatprep.subr.mxu0 0.0
    %3527 = vmatpush1.msra.mxu0 %v1000
    %3528 = vmatprep.subr.mxu0 0.0
    %3529 = vmatpush1.msra.mxu0 %v1001
    %3530 = vmatprep.subr.mxu0 0.0
    %3531 = vmatpush1.msra.mxu0 %v1002
    %3532 = vmatprep.subr.mxu0 0.0
    %3533 = vmatpush1.msra.mxu0 %v1003
    %3534 = vmatprep.subr.mxu0 0.0
    %3535 = vmatpush1.msra.mxu0 %v1004
    %3536 = vmatprep.subr.mxu0 0.0
    %3537 = vmatpush1.msra.mxu0 %v1005
    %3538 = vmatprep.subr.mxu0 0.0
    %3539 = vmatpush1.msra.mxu0 %v1006
    %3540 = vmatprep.subr.mxu0 0.0
    %3541 = vmatpush1.msra.mxu0 %v1007
    %3542 = vmatprep.subr.mxu0 0.0
    %3543 = vmatpush1.msra.mxu0 %v1008
    %3544 = vmatprep.subr.mxu0 0.0
    %3545 = vmatpush1.msra.mxu0 %v1009
    %3546 = vmatprep.subr.mxu0 0.0
    %3547 = vmatpush1.msra.mxu0 %v1010
    %3548 = vmatprep.subr.mxu0 0.0
    %3549 = vmatpush1.msra.mxu0 %v1011
    %3550 = vmatprep.subr.mxu0 0.0
    %3551 = vmatpush1.msra.mxu0 %v1012
    %3552 = vmatprep.subr.mxu0 0.0
    %3553 = vmatpush1.msra.mxu0 %v1013
    %3554 = vmatprep.subr.mxu0 0.0
    %3555 = vmatpush1.msra.mxu0 %v1014
    %3556 = vmatprep.subr.mxu0 0.0
    %3557 = vmatpush1.msra.mxu0 %v1015
    %3558 = vmatprep.subr.mxu0 0.0
    %3559 = vmatpush1.msra.mxu0 %v1016
    %3560 = vmatprep.subr.mxu0 0.0
    %3561 = vmatpush1.msra.mxu0 %v1017
    %3562 = vmatprep.subr.mxu0 0.0
    %3563 = vmatpush1.msra.mxu0 %v1018
    %3564 = vmatprep.subr.mxu0 0.0
    %3565 = vmatpush1.msra.mxu0 %v1019
    %3566 = vmatprep.subr.mxu0 0.0
    %3567 = vmatpush1.msra.mxu0 %v1020
    %3568 = vmatprep.subr.mxu0 0.0
    %3569 = vmatpush1.msra.mxu0 %v1021
    %3570 = vmatprep.subr.mxu0 0.0
    %3571 = vmatpush1.msra.mxu0 %v1022
    %3572 = vmatprep.subr.mxu0 0.0
    %3573 = vmatpush1.msra.mxu0 %v1023
    %3574 = vmatprep.subr.mxu0 0.0
    %3575 = vmatpush1.msra.mxu0 %v1024
    %3576 = vmatprep.subr.mxu0 0.0
    %3577 = vmatpush1.msra.mxu0 %v1025
    %3578 = vmatprep.subr.mxu0 0.0
    %3579 = vmatpush1.msra.mxu0 %v1026
    %3580 = vmatprep.subr.mxu0 0.0
    %3581 = vmatpush1.msra.mxu0 %v1027
    %3582 = vmatprep.subr.mxu0 0.0
    %3583 = vmatpush1.msra.mxu0 %v1028
    %3584 = vmatprep.mubr.f32.mxu0 %v1354
    %3585 = vmatmul.mubr.f32.gmra.mrb[0].mxu0 %v1346
    %v3586 = vpop.f32.mrb[0].mxu0
    %v3587 = vadd.f32 %v3517, %v3586
    %v3588 = vpop.f32.mrb[0].mxu0
    %3589 = vdwg.mxu0
    %3590 = vmatprep.subr.mxu0 0.0
    %3591 = vmatpush1.msra.mxu0 %v1029
    %3592 = vmatprep.subr.mxu0 0.0
    %3593 = vmatpush1.msra.mxu0 %v1030
    %3594 = vmatprep.subr.mxu0 0.0
    %3595 = vmatpush1.msra.mxu0 %v1031
    %3596 = vmatprep.subr.mxu0 0.0
    %3597 = vmatpush1.msra.mxu0 %v1032
    %3598 = vmatprep.subr.mxu0 0.0
    %3599 = vmatpush1.msra.mxu0 %v1033
    %3600 = vmatprep.subr.mxu0 0.0
    %3601 = vmatpush1.msra.mxu0 %v1034
    %3602 = vmatprep.subr.mxu0 0.0
    %3603 = vmatpush1.msra.mxu0 %v1035
    %3604 = vmatprep.subr.mxu0 0.0
    %3605 = vmatpush1.msra.mxu0 %v1036
    %3606 = vmatprep.subr.mxu0 0.0
    %3607 = vmatpush1.msra.mxu0 %v1037
    %3608 = vmatprep.subr.mxu0 0.0
    %3609 = vmatpush1.msra.mxu0 %v1038
    %3610 = vmatprep.subr.mxu0 0.0
    %3611 = vmatpush1.msra.mxu0 %v1039
    %3612 = vmatprep.subr.mxu0 0.0
    %3613 = vmatpush1.msra.mxu0 %v1040
    %3614 = vmatprep.subr.mxu0 0.0
    %3615 = vmatpush1.msra.mxu0 %v1041
    %3616 = vmatprep.subr.mxu0 0.0
    %3617 = vmatpush1.msra.mxu0 %v1042
    %3618 = vmatprep.subr.mxu0 0.0
    %3619 = vmatpush1.msra.mxu0 %v1043
    %3620 = vmatprep.subr.mxu0 0.0
    %3621 = vmatpush1.msra.mxu0 %v1044
    %3622 = vmatprep.subr.mxu0 0.0
    %3623 = vmatpush1.msra.mxu0 %v1045
    %3624 = vmatprep.subr.mxu0 0.0
    %3625 = vmatpush1.msra.mxu0 %v1046
    %3626 = vmatprep.subr.mxu0 0.0
    %3627 = vmatpush1.msra.mxu0 %v1047
    %3628 = vmatprep.subr.mxu0 0.0
    %3629 = vmatpush1.msra.mxu0 %v1048
    %3630 = vmatprep.subr.mxu0 0.0
    %3631 = vmatpush1.msra.mxu0 %v1049
    %3632 = vmatprep.subr.mxu0 0.0
    %3633 = vmatpush1.msra.mxu0 %v1050
    %3634 = vmatprep.subr.mxu0 0.0
    %3635 = vmatpush1.msra.mxu0 %v1051
    %3636 = vmatprep.subr.mxu0 0.0
    %3637 = vmatpush1.msra.mxu0 %v1052
    %3638 = vmatprep.subr.mxu0 0.0
    %3639 = vmatpush1.msra.mxu0 %v1053
    %3640 = vmatprep.subr.mxu0 0.0
    %3641 = vmatpush1.msra.mxu0 %v1054
    %3642 = vmatprep.subr.mxu0 0.0
    %3643 = vmatpush1.msra.mxu0 %v1055
    %3644 = vmatprep.subr.mxu0 0.0
    %3645 = vmatpush1.msra.mxu0 %v1056
    %3646 = vmatprep.subr.mxu0 0.0
    %3647 = vmatpush1.msra.mxu0 %v1057
    %3648 = vmatprep.subr.mxu0 0.0
    %3649 = vmatpush1.msra.mxu0 %v1058
    %3650 = vmatprep.subr.mxu0 0.0
    %3651 = vmatpush1.msra.mxu0 %v1059
    %3652 = vmatprep.subr.mxu0 0.0
    %3653 = vmatpush1.msra.mxu0 %v1060
    %3654 = vmatprep.mubr.f32.mxu0 %v1355
    %3655 = vmatmul.mubr.f32.gmra.mrb[0].mxu0 %v1353
    %v3656 = vpop.f32.mrb[0].mxu0
    %v3657 = vadd.f32 %v3587, %v3656
    %v3658 = vpop.f32.mrb[0].mxu0
    %3659 = vdwg.mxu0
    %v3660 = vmax.f32 %v3657, 0.0
    %v3661 = vld [vmem:[%s3] sm:$0xff]
    %v3662 = vld [vmem:[%s3 + $0x8] sm:$0xff]
    %v3663 = vld [vmem:[%s3 + $0x10] sm:$0xff]
    %v3664 = vld [vmem:[%s3 + $0x18] sm:$0xff]
    %v3665 = vld [vmem:[%s3 + $0x20] sm:$0xff]
    %v3666 = vld [vmem:[%s3 + $0x28] sm:$0xff]
    %v3667 = vld [vmem:[%s3 + $0x30] sm:$0xff]
    %v3668 = vld [vmem:[%s3 + $0x38] sm:$0xff]
    %v3669 = vld [vmem:[%s3 + $0x40] sm:$0xff]
    %v3670 = vld [vmem:[%s3 + $0x48] sm:$0xff]
    %v3671 = vld [vmem:[%s3 + $0x50] sm:$0xff]
    %v3672 = vld [vmem:[%s3 + $0x58] sm:$0xff]
    %v3673 = vld [vmem:[%s3 + $0x60] sm:$0xff]
    %v3674 = vld [vmem:[%s3 + $0x68] sm:$0xff]
    %v3675 = vld [vmem:[%s3 + $0x70] sm:$0xff]
    %v3676 = vld [vmem:[%s3 + $0x78] sm:$0xff]
    %v3677 = vld [vmem:[%s4] sm:$0x1]
    %v3679 = vlaneseq
    %v3680 = vshrl.u32 %v3679, 7
    %v3681 = vsub.s32 0, %v3680
    %v3682 = vrot.slane %v3677, %v3681
    %3684 = vmatprep.subr.mxu0 0.0
    %3685 = vmatpush1.msra.mxu0 %v3661
    %3686 = vmatprep.subr.mxu0 0.0
    %3687 = vmatpush1.msra.mxu0 %v3662
    %3688 = vmatprep.subr.mxu0 0.0
    %3689 = vmatpush1.msra.mxu0 %v3663
    %3690 = vmatprep.subr.mxu0 0.0
    %3691 = vmatpush1.msra.mxu0 %v3664
    %3692 = vmatprep.subr.mxu0 0.0
    %3693 = vmatpush1.msra.mxu0 %v3665
    %3694 = vmatprep.subr.mxu0 0.0
    %3695 = vmatpush1.msra.mxu0 %v3666
    %3696 = vmatprep.subr.mxu0 0.0
    %3697 = vmatpush1.msra.mxu0 %v3667
    %3698 = vmatprep.subr.mxu0 0.0
    %3699 = vmatpush1.msra.mxu0 %v3668
    %3700 = vmatprep.subr.mxu0 0.0
    %3701 = vmatpush1.msra.mxu0 %v3669
    %3702 = vmatprep.subr.mxu0 0.0
    %3703 = vmatpush1.msra.mxu0 %v3670
    %3704 = vmatprep.subr.mxu0 0.0
    %3705 = vmatpush1.msra.mxu0 %v3671
    %3706 = vmatprep.subr.mxu0 0.0
    %3707 = vmatpush1.msra.mxu0 %v3672
    %3708 = vmatprep.subr.mxu0 0.0
    %3709 = vmatpush1.msra.mxu0 %v3673
    %3710 = vmatprep.subr.mxu0 0.0
    %3711 = vmatpush1.msra.mxu0 %v3674
    %3712 = vmatprep.subr.mxu0 0.0
    %3713 = vmatpush1.msra.mxu0 %v3675
    %3714 = vmatprep.subr.mxu0 0.0
    %3715 = vmatpush1.msra.mxu0 %v3676
    %3716 = vmatprep.subr.mxu0 0.0
    %3717 = vmatpush1.msra.mxu0 0.0
    %3718 = vmatprep.subr.mxu0 0.0
    %3719 = vmatpush1.msra.mxu0 0.0
    %3720 = vmatprep.subr.mxu0 0.0
    %3721 = vmatpush1.msra.mxu0 0.0
    %3722 = vmatprep.subr.mxu0 0.0
    %3723 = vmatpush1.msra.mxu0 0.0
    %3724 = vmatprep.subr.mxu0 0.0
    %3725 = vmatpush1.msra.mxu0 0.0
    %3726 = vmatprep.subr.mxu0 0.0
    %3727 = vmatpush1.msra.mxu0 0.0
    %3728 = vmatprep.subr.mxu0 0.0
    %3729 = vmatpush1.msra.mxu0 0.0
    %3730 = vmatprep.subr.mxu0 0.0
    %3731 = vmatpush1.msra.mxu0 0.0
    %3732 = vmatprep.subr.mxu0 0.0
    %3733 = vmatpush1.msra.mxu0 0.0
    %3734 = vmatprep.subr.mxu0 0.0
    %3735 = vmatpush1.msra.mxu0 0.0
    %3736 = vmatprep.subr.mxu0 0.0
    %3737 = vmatpush1.msra.mxu0 0.0
    %3738 = vmatprep.subr.mxu0 0.0
    %3739 = vmatpush1.msra.mxu0 0.0
    %3740 = vmatprep.subr.mxu0 0.0
    %3741 = vmatpush1.msra.mxu0 0.0
    %3742 = vmatprep.subr.mxu0 0.0
    %3743 = vmatpush1.msra.mxu0 0.0
    %3744 = vmatprep.subr.mxu0 0.0
    %3745 = vmatpush1.msra.mxu0 0.0
    %3746 = vmatprep.subr.mxu0 0.0
    %3747 = vmatpush1.msra.mxu0 0.0
    %3748 = vmatprep.mubr.f32.mxu0 0.0
    %3749 = vmatmul.mubr.f32.gmra.mrb[0].mxu0 %v3660
    %v3750 = vpop.f32.mrb[0].mxu0
    %v3751 = vadd.f32 %v3682, %v3750
    %v3752 = vpop.f32.mrb[0].mxu0
    %3753 = vdwg.mxu0
    %3754 = vst [vmem:[#allocation2] sm:$0x3] %v3751
    // Predicated region
    $region22: #{simple_cnn_forward.5} parent=1 // pred_check
      _
    $region23: #{simple_cnn_forward.5} parent=1 // pred_check_branch
      %3756 = sbr.rel (0) target = $region25
    $region24: #{simple_cnn_forward.5} parent=1 // pred_region
      %s3758 = ssub.s32 32, 32
      %3759 = vsyncadd [#allocation3], %s3758
      %s3761 = sshll.u32 [#allocation2], 4
      %s3762 = int_to_ptr.vmem [resolvable:$true] %s3761
      %3764 = dma.vmem_to_hbm [thread:$0]  %s3762, 32, %s5, [#allocation3]
    $region25: #{simple_cnn_forward.5} parent=1 // pred_fallthru
      _
    // Predicated region
    $region26: #{simple_cnn_forward.5} parent=1 // pred_check
      _
    $region27: #{simple_cnn_forward.5} parent=1 // pred_check_branch
      %3766 = sbr.rel (0) target = $region29
    $region28: #{simple_cnn_forward.5} parent=1 // pred_region
      %3767 = dma.done [#allocation3], 32
    $region29: #{simple_cnn_forward.5} parent=1 // pred_fallthru
      _
    %3768 = vsyncpa [#allocation3], 1

</llo_original>
